<compile_context>
chip_gen: v7x
topology: tpu7x:2x2x1
jax: 0.10.0
libtpu: 0.0.40
codegen_flags: <defaults>
</compile_context>

<pallas_src>
import functools

import jax
import jax.numpy as jnp
from jax.experimental import pallas as pl
from jax.experimental.pallas import tpu as pltpu

# Scaled-down hyper-params consistent with the PyTorch module's structure
# (module: n_embed=512, n_heads=32 -> head_size=16).  head_size=16 and the
# multi-head structure are preserved; n_embed=128 keeps every lane dimension
# a full 128-lane tile.
N_EMBED = 128
N_HEADS = 8
HEAD_SIZE = N_EMBED // N_HEADS      # = 16, same head size as the module
HIDDEN = 4 * N_EMBED
EPS = 1e-5                          # nn.LayerNorm default eps


def _layernorm(x, gamma, beta):
    # x: (rows, C) f32, gamma/beta: (1, C) f32 — stats always in f32.
    mean = jnp.mean(x, axis=-1, keepdims=True)
    var = jnp.mean((x - mean) ** 2, axis=-1, keepdims=True)
    return (x - mean) * jax.lax.rsqrt(var + EPS) * gamma + beta


def decoder_block_kernel(x_ref, mask_ref, wqkv_ref, wp_ref, bp_ref,
                         w1_ref, b1_ref, w2_ref, b2_ref,
                         g1_ref, be1_ref, g2_ref, be2_ref,
                         o_ref, *, seq_len, n_heads, head_size, approx_recip):
    n_embed = n_heads * head_size
    cdt = wqkv_ref.dtype            # MXU operand dtype (f32 or bf16)

    x = x_ref[...]                  # (T, C) f32, lane-dense slab

    # ---------------- x1 = x + MultiHead(LayerNorm1(x)) ----------------
    ln1 = _layernorm(x, g1_ref[...], be1_ref[...])
    # Single fused QKV matmul: (T, C) @ (C, 3C), f32 accumulation.
    qkv = jnp.dot(ln1.astype(cdt), wqkv_ref[...],
                  preferred_element_type=jnp.float32)            # (T, 3C) f32
    # Lane-tile-aligned (128-wide) slices, lanes split into heads once.
    q = qkv[:, :n_embed].reshape(seq_len, n_heads, head_size)
    k = qkv[:, n_embed:2 * n_embed].reshape(seq_len, n_heads, head_size)
    v = qkv[:, 2 * n_embed:].reshape(seq_len, n_heads, head_size)

    scale = head_size ** -0.5
    # Heads-batched (H, T, hs) layout; operands cast to compute_dtype so the
    # attention matmuls run single-pass on the MXU.  Scale folded onto q
    # (hs=16 wide) instead of the (T, T) scores.
    qh = (pltpu.einshape("mhd->hmd", q) * scale).astype(cdt)
    kh = pltpu.einshape("mhd->hmd", k).astype(cdt)
    vh = pltpu.einshape("mhd->hmd", v).astype(cdt)

    # Scores / softmax statistics in f32 (v5e VPU/EUP have no bf16).
    s = jnp.einsum("hqd,hkd->hqk", qh, kh,
                   preferred_element_type=jnp.float32)           # (H, T, T)
    s = s + mask_ref[...][None]          # additive causal mask (0 / -1e30)
    s = s - jnp.max(s, axis=-1, keepdims=True)
    p = jnp.exp(s)
    denom = jnp.sum(p, axis=-1, keepdims=True)                   # (H, T, 1)
    # PV matmul on the UNNORMALIZED bf16 p; normalize afterwards on the
    # smaller (H, T, hs) output.
    oh = jnp.einsum("hqk,hkd->hqd", p.astype(cdt), vh,
                    preferred_element_type=jnp.float32)          # (H, T, hs)
    if approx_recip:
        oh = oh * pl.reciprocal(denom, approx=True)   # EUP, frees VPU slots
    else:
        oh = oh / denom
    # TODO(synk): nn.Dropout(0.2) on the attention weights is identity (eval).

    # Relayout back to (T, C) and feed the projection matmul directly
    # (no VMEM scratch round-trip).
    attn = pltpu.einshape("hmd->mhd", oh).reshape(seq_len, n_embed)
    attn = jnp.dot(attn.astype(cdt), wp_ref[...],
                   preferred_element_type=jnp.float32) + bp_ref[...]
    # TODO(synk): nn.Dropout(0.2) after the projection is identity (eval).
    x1 = x + attn

    # ---------------- out = x1 + FForward(LayerNorm2(x1)) ----------------
    # FForward = Linear -> ReLU -> Linear -> ReLU -> Dropout (both ReLUs are
    # in the PyTorch spec; Dropout is identity in eval mode).
    ln2 = _layernorm(x1, g2_ref[...], be2_ref[...])
    h1 = jnp.dot(ln2.astype(cdt), w1_ref[...],
                 preferred_element_type=jnp.float32) + b1_ref[...]
    h1 = jnp.maximum(h1, 0.0)
    h2 = jnp.dot(h1.astype(cdt), w2_ref[...],
                 preferred_element_type=jnp.float32) + b2_ref[...]
    h2 = jnp.maximum(h2, 0.0)

    o_ref[...] = x1 + h2            # lane-dense (T, C) store


def transformer_decoder_block(x, params, *, compute_dtype=jnp.float32,
                              approx_recip=False):
    B, T, C = x.shape
    assert C == N_EMBED and T % 8 == 0
    BT = B * T

    # Lane-dense 2-D slab (last dim = C = 128); the (B, T, C) <-> (B*T, C)
    # reshapes are free XLA-side.
    x2d = x.reshape(BT, C)
    cd = compute_dtype
    wqkv = params["wqkv"].astype(cd)
    wp = params["wp"].astype(cd)
    w1 = params["w1"].astype(cd)
    w2 = params["w2"].astype(cd)

    # Precomputed additive causal mask (0 on/below diagonal, -1e30 above).
    mask = jnp.where(jnp.tril(jnp.ones((T, T), dtype=bool)),
                     jnp.float32(0.0), jnp.float32(-1e30))

    kernel = functools.partial(
        decoder_block_kernel, seq_len=T, n_heads=N_HEADS,
        head_size=HEAD_SIZE, approx_recip=approx_recip)

    def const(shape):
        # Whole-array block, constant index_map -> not re-DMA'd across steps.
        return pl.BlockSpec(shape, lambda b: (0, 0))

    in_specs = [
        pl.BlockSpec((T, C), lambda b: (b, 0)),   # x rows of batch element b
        const((T, T)),            # additive causal mask
        const((C, 3 * C)),        # fused Wqkv
        const((C, C)),            # Wproj
        const((1, C)),            # bproj
        const((C, HIDDEN)),       # W1
        const((1, HIDDEN)),       # b1
        const((HIDDEN, C)),       # W2
        const((1, C)),            # b2
        const((1, C)),            # ln1 gamma
        const((1, C)),            # ln1 beta
        const((1, C)),            # ln2 gamma
        const((1, C)),            # ln2 beta
    ]

    out2d = pl.pallas_call(
        kernel,
        out_shape=jax.ShapeDtypeStruct((BT, C), jnp.float32),
        grid=(B,),                                  # one step per batch element
        in_specs=in_specs,
        out_specs=pl.BlockSpec((T, C), lambda b: (b, 0)),
        compiler_params=pltpu.CompilerParams(
            dimension_semantics=("parallel",),      # megacore / v7x 2-TC split
            vmem_limit_bytes=64 << 20),
    )(x2d, mask, wqkv, wp, params["bp"], w1, params["b1"], w2, params["b2"],
      params["g1"], params["be1"], params["g2"], params["be2"])

    return out2d.reshape(B, T, C)


# ---------------- pure-JAX reference (mirror of the PyTorch forward) ---------
def reference_block(x, p):
    C = x.shape[-1]

    def ln(z, g, b):
        m = jnp.mean(z, -1, keepdims=True)
        v = jnp.mean((z - m) ** 2, -1, keepdims=True)
        return (z - m) * jax.lax.rsqrt(v + EPS) * g + b

    wq, wk, wv = p["wqkv"][:, :C], p["wqkv"][:, C:2 * C], p["wqkv"][:, 2 * C:]
    ln1 = ln(x, p["g1"], p["be1"])
    q, k, v = ln1 @ wq, ln1 @ wk, ln1 @ wv
    T = x.shape[1]
    mask = jnp.tril(jnp.ones((T, T), dtype=bool))
    outs = []
    for h in range(N_HEADS):
        sl = slice(h * HEAD_SIZE, (h + 1) * HEAD_SIZE)
        wei = jnp.einsum("btd,bsd->bts", q[..., sl], k[..., sl]) * HEAD_SIZE ** -0.5
        wei = jnp.where(mask, wei, -jnp.inf)
        wei = jax.nn.softmax(wei, axis=-1)
        outs.append(jnp.einsum("bts,bsd->btd", wei, v[..., sl]))
    attn = jnp.concatenate(outs, axis=-1) @ p["wp"] + p["bp"]
    x1 = x + attn
    ln2 = ln(x1, p["g2"], p["be2"])
    h1 = jnp.maximum(ln2 @ p["w1"] + p["b1"], 0.0)
    h2 = jnp.maximum(h1 @ p["w2"] + p["b2"], 0.0)   # second ReLU per the spec
    return x1 + h2


def make_params(key):
    ks = jax.random.split(key, 10)
    s = 0.05
    return {
        "wqkv": s * jax.random.normal(ks[0], (N_EMBED, 3 * N_EMBED), jnp.float32),
        "wp":   s * jax.random.normal(ks[1], (N_EMBED, N_EMBED), jnp.float32),
        "bp":   s * jax.random.normal(ks[2], (1, N_EMBED), jnp.float32),
        "w1":   s * jax.random.normal(ks[3], (N_EMBED, HIDDEN), jnp.float32),
        "b1":   s * jax.random.normal(ks[4], (1, HIDDEN), jnp.float32),
        "w2":   s * jax.random.normal(ks[5], (HIDDEN, N_EMBED), jnp.float32),
        "b2":   s * jax.random.normal(ks[6], (1, N_EMBED), jnp.float32),
        "g1":   jnp.ones((1, N_EMBED), jnp.float32),
        "be1":  jnp.zeros((1, N_EMBED), jnp.float32),
        "g2":   jnp.ones((1, N_EMBED), jnp.float32),
        "be2":  jnp.zeros((1, N_EMBED), jnp.float32),
    }


if __name__ == "__main__":
    key = jax.random.PRNGKey(0)
    kx, kp = jax.random.split(key)
    B, T = 2, 32
    x = jax.random.normal(kx, (B, T, N_EMBED), jnp.float32)
    params = make_params(kp)

    ref = reference_block(x, params)

    # f32 variant (exact softmax normalization).  Tolerance covers the TPU
    # MXU default-precision (bf16-pass) differences between the Pallas and
    # XLA lowerings of f32 matmuls, not kernel slack.
    out_f32 = jax.block_until_ready(transformer_decoder_block(x, params))
    assert out_f32.shape == (B, T, N_EMBED)
    err_f32 = float(jnp.max(jnp.abs(out_f32 - ref)))
    assert jnp.allclose(out_f32, ref, atol=1e-2, rtol=1e-2), (
        f"f32 max abs err {err_f32}")

    # bf16 MXU-operand variant (valid on v5e/v6e/v7x): weights + all matmul
    # operands (incl. attention q/k/p/v) in bf16, f32 accumulation, f32
    # LayerNorm/softmax stats, approx reciprocal for the PV normalization.
    out_bf16 = jax.block_until_ready(
        transformer_decoder_block(x, params, compute_dtype=jnp.bfloat16,
                                  approx_recip=True))
    err_bf16 = float(jnp.max(jnp.abs(out_bf16 - ref)))
    assert jnp.allclose(out_bf16, ref, atol=5e-2, rtol=5e-2), (
        f"bf16 max abs err {err_bf16}")

    print("KERNEL_OK")
</pallas_src>

<mosaic_0001>
module attributes {stable_mosaic.version = 11 : i64} {
  func.func @decoder_block_kernel(%arg0: i32, %arg1: memref<32x128xf32, #tpu.memory_space<vmem>>, %arg2: memref<32x32xf32, #tpu.memory_space<vmem>>, %arg3: memref<128x384xf32, #tpu.memory_space<vmem>>, %arg4: memref<128x128xf32, #tpu.memory_space<vmem>>, %arg5: memref<1x128xf32, #tpu.memory_space<vmem>>, %arg6: memref<128x512xf32, #tpu.memory_space<vmem>>, %arg7: memref<1x512xf32, #tpu.memory_space<vmem>>, %arg8: memref<512x128xf32, #tpu.memory_space<vmem>>, %arg9: memref<1x128xf32, #tpu.memory_space<vmem>>, %arg10: memref<1x128xf32, #tpu.memory_space<vmem>>, %arg11: memref<1x128xf32, #tpu.memory_space<vmem>>, %arg12: memref<1x128xf32, #tpu.memory_space<vmem>>, %arg13: memref<1x128xf32, #tpu.memory_space<vmem>>, %arg14: memref<32x128xf32, #tpu.memory_space<vmem>>) attributes {dimension_semantics = [#tpu.dimension_semantics<parallel>], iteration_bounds = array<i64: 2>, scalar_prefetch = 0 : i64, scratch_operands = 0 : i64, tpu.core_type = #tpu.core_type<tc>, window_params = [{transform_indices = @transform_0, window_bounds = array<i64: 32, 128>}, {pipeline_mode = #tpu.pipeline_mode<synchronous>, transform_indices = @transform_1, window_bounds = array<i64: 32, 32>}, {pipeline_mode = #tpu.pipeline_mode<synchronous>, transform_indices = @transform_2, window_bounds = array<i64: 128, 384>}, {pipeline_mode = #tpu.pipeline_mode<synchronous>, transform_indices = @transform_3, window_bounds = array<i64: 128, 128>}, {pipeline_mode = #tpu.pipeline_mode<synchronous>, transform_indices = @transform_4, window_bounds = array<i64: 1, 128>}, {pipeline_mode = #tpu.pipeline_mode<synchronous>, transform_indices = @transform_5, window_bounds = array<i64: 128, 512>}, {pipeline_mode = #tpu.pipeline_mode<synchronous>, transform_indices = @transform_6, window_bounds = array<i64: 1, 512>}, {pipeline_mode = #tpu.pipeline_mode<synchronous>, transform_indices = @transform_7, window_bounds = array<i64: 512, 128>}, {pipeline_mode = #tpu.pipeline_mode<synchronous>, transform_indices = @transform_8, window_bounds = array<i64: 1, 128>}, {pipeline_mode = #tpu.pipeline_mode<synchronous>, transform_indices = @transform_9, window_bounds = array<i64: 1, 128>}, {pipeline_mode = #tpu.pipeline_mode<synchronous>, transform_indices = @transform_10, window_bounds = array<i64: 1, 128>}, {pipeline_mode = #tpu.pipeline_mode<synchronous>, transform_indices = @transform_11, window_bounds = array<i64: 1, 128>}, {pipeline_mode = #tpu.pipeline_mode<synchronous>, transform_indices = @transform_12, window_bounds = array<i64: 1, 128>}, {transform_indices = @transform_13, window_bounds = array<i64: 32, 128>}]} {
    %c0 = arith.constant 0 : index
    %c0_0 = arith.constant 0 : index
    %0 = vector.load %arg1[%c0, %c0_0] : memref<32x128xf32, #tpu.memory_space<vmem>>, vector<32x128xf32>
    %c0_1 = arith.constant 0 : index
    %c0_2 = arith.constant 0 : index
    %1 = vector.load %arg10[%c0_1, %c0_2] : memref<1x128xf32, #tpu.memory_space<vmem>>, vector<1x128xf32>
    %c0_3 = arith.constant 0 : index
    %c0_4 = arith.constant 0 : index
    %2 = vector.load %arg11[%c0_3, %c0_4] : memref<1x128xf32, #tpu.memory_space<vmem>>, vector<1x128xf32>
    %cst = arith.constant dense<0.000000e+00> : vector<32xf32>
    %3 = vector.multi_reduction <add>, %0, %cst [1] : vector<32x128xf32> to vector<32xf32>
    %4 = vector.shape_cast %3 : vector<32xf32> to vector<32x1xf32>
    %cst_5 = arith.constant 1.280000e+02 : f32
    %5 = vector.broadcast %cst_5 : f32 to vector<32x1xf32>
    %6 = arith.divf %4, %5 : vector<32x1xf32>
    %7 = vector.broadcast %6 : vector<32x1xf32> to vector<32x128xf32>
    %8 = arith.subf %0, %7 : vector<32x128xf32>
    %9 = arith.mulf %8, %8 : vector<32x128xf32>
    %cst_6 = arith.constant dense<0.000000e+00> : vector<32xf32>
    %10 = vector.multi_reduction <add>, %9, %cst_6 [1] : vector<32x128xf32> to vector<32xf32>
    %11 = vector.shape_cast %10 : vector<32xf32> to vector<32x1xf32>
    %cst_7 = arith.constant 1.280000e+02 : f32
    %12 = vector.broadcast %cst_7 : f32 to vector<32x1xf32>
    %13 = arith.divf %11, %12 : vector<32x1xf32>
    %14 = vector.broadcast %6 : vector<32x1xf32> to vector<32x128xf32>
    %15 = arith.subf %0, %14 : vector<32x128xf32>
    %cst_8 = arith.constant 9.99999974E-6 : f32
    %16 = vector.broadcast %cst_8 : f32 to vector<32x1xf32>
    %17 = arith.addf %13, %16 : vector<32x1xf32>
    %18 = math.rsqrt %17 : vector<32x1xf32>
    %19 = vector.broadcast %18 : vector<32x1xf32> to vector<32x128xf32>
    %20 = arith.mulf %15, %19 : vector<32x128xf32>
    %21 = vector.broadcast %1 : vector<1x128xf32> to vector<32x128xf32>
    %22 = arith.mulf %20, %21 : vector<32x128xf32>
    %23 = vector.broadcast %2 : vector<1x128xf32> to vector<32x128xf32>
    %24 = arith.addf %22, %23 : vector<32x128xf32>
    %c0_9 = arith.constant 0 : index
    %c0_10 = arith.constant 0 : index
    %25 = vector.load %arg3[%c0_9, %c0_10] : memref<128x384xf32, #tpu.memory_space<vmem>>, vector<128x384xf32>
    %cst_11 = arith.constant dense<0.000000e+00> : vector<32x384xf32>
    %26 = tpu.matmul %24, %25, %cst_11 {dimension_numbers = #tpu.dot_dimension_numbers<[1], [0], [0], [1], [0, 0, 1, 1], [], []>} : vector<32x128xf32>, vector<128x384xf32>, vector<32x384xf32> -> vector<32x384xf32>
    %27 = vector.extract_strided_slice %26 {offsets = [0, 0], sizes = [32, 128], strides = [1, 1]} : vector<32x384xf32> to vector<32x128xf32>
    %28 = vector.shape_cast %27 : vector<32x128xf32> to vector<32x8x16xf32>
    %29 = vector.extract_strided_slice %26 {offsets = [0, 128], sizes = [32, 128], strides = [1, 1]} : vector<32x384xf32> to vector<32x128xf32>
    %30 = vector.shape_cast %29 : vector<32x128xf32> to vector<32x8x16xf32>
    %31 = vector.extract_strided_slice %26 {offsets = [0, 256], sizes = [32, 128], strides = [1, 1]} : vector<32x384xf32> to vector<32x128xf32>
    %32 = vector.shape_cast %31 : vector<32x128xf32> to vector<32x8x16xf32>
    %33 = tpu.transpose %28, [1, 0, 2] : vector<32x8x16xf32> -> vector<8x32x16xf32>
    %cst_12 = arith.constant 2.500000e-01 : f32
    %34 = vector.broadcast %cst_12 : f32 to vector<8x32x16xf32>
    %35 = arith.mulf %33, %34 : vector<8x32x16xf32>
    %36 = tpu.transpose %30, [1, 0, 2] : vector<32x8x16xf32> -> vector<8x32x16xf32>
    %37 = tpu.transpose %32, [1, 0, 2] : vector<32x8x16xf32> -> vector<8x32x16xf32>
    "tpu.trace_start"() <{level = 10 : i32, message = "hqd,hkd->hqk"}> : () -> ()
    %cst_13 = arith.constant dense<0.000000e+00> : vector<8x32x32xf32>
    %38 = tpu.matmul %35, %36, %cst_13 {dimension_numbers = #tpu.dot_dimension_numbers<[2], [2], [1], [1], [0, 0, 0, 1, 1, 1], [0], [0]>} : vector<8x32x16xf32>, vector<8x32x16xf32>, vector<8x32x32xf32> -> vector<8x32x32xf32>
    "tpu.trace_stop"() : () -> ()
    %c0_14 = arith.constant 0 : index
    %c0_15 = arith.constant 0 : index
    %39 = vector.load %arg2[%c0_14, %c0_15] : memref<32x32xf32, #tpu.memory_space<vmem>>, vector<32x32xf32>
    %40 = vector.shape_cast %39 : vector<32x32xf32> to vector<1x32x32xf32>
    %41 = vector.broadcast %40 : vector<1x32x32xf32> to vector<8x32x32xf32>
    %42 = arith.addf %38, %41 : vector<8x32x32xf32>
    %cst_16 = arith.constant dense<0xFF800000> : vector<8x32xf32>
    %43 = vector.multi_reduction <maximumf>, %42, %cst_16 [2] : vector<8x32x32xf32> to vector<8x32xf32>
    %44 = vector.shape_cast %43 : vector<8x32xf32> to vector<8x32x1xf32>
    %45 = vector.broadcast %44 : vector<8x32x1xf32> to vector<8x32x32xf32>
    %46 = arith.subf %42, %45 : vector<8x32x32xf32>
    %47 = math.exp %46 : vector<8x32x32xf32>
    %cst_17 = arith.constant dense<0.000000e+00> : vector<8x32xf32>
    %48 = vector.multi_reduction <add>, %47, %cst_17 [2] : vector<8x32x32xf32> to vector<8x32xf32>
    %49 = vector.shape_cast %48 : vector<8x32xf32> to vector<8x32x1xf32>
    "tpu.trace_start"() <{level = 10 : i32, message = "hqk,hkd->hqd"}> : () -> ()
    %cst_18 = arith.constant dense<0.000000e+00> : vector<8x32x16xf32>
    %50 = tpu.matmul %47, %37, %cst_18 {dimension_numbers = #tpu.dot_dimension_numbers<[2], [1], [1], [2], [0, 0, 0, 1, 1, 2], [0], [0]>} : vector<8x32x32xf32>, vector<8x32x16xf32>, vector<8x32x16xf32> -> vector<8x32x16xf32>
    "tpu.trace_stop"() : () -> ()
    %51 = vector.broadcast %49 : vector<8x32x1xf32> to vector<8x32x16xf32>
    %52 = arith.divf %50, %51 : vector<8x32x16xf32>
    %53 = tpu.transpose %52, [1, 0, 2] : vector<8x32x16xf32> -> vector<32x8x16xf32>
    %54 = vector.shape_cast %53 : vector<32x8x16xf32> to vector<32x128xf32>
    %c0_19 = arith.constant 0 : index
    %c0_20 = arith.constant 0 : index
    %55 = vector.load %arg4[%c0_19, %c0_20] : memref<128x128xf32, #tpu.memory_space<vmem>>, vector<128x128xf32>
    %cst_21 = arith.constant dense<0.000000e+00> : vector<32x128xf32>
    %56 = tpu.matmul %54, %55, %cst_21 {dimension_numbers = #tpu.dot_dimension_numbers<[1], [0], [0], [1], [0, 0, 1, 1], [], []>} : vector<32x128xf32>, vector<128x128xf32>, vector<32x128xf32> -> vector<32x128xf32>
    %c0_22 = arith.constant 0 : index
    %c0_23 = arith.constant 0 : index
    %57 = vector.load %arg5[%c0_22, %c0_23] : memref<1x128xf32, #tpu.memory_space<vmem>>, vector<1x128xf32>
    %58 = vector.broadcast %57 : vector<1x128xf32> to vector<32x128xf32>
    %59 = arith.addf %56, %58 : vector<32x128xf32>
    %60 = arith.addf %0, %59 : vector<32x128xf32>
    %c0_24 = arith.constant 0 : index
    %c0_25 = arith.constant 0 : index
    %61 = vector.load %arg12[%c0_24, %c0_25] : memref<1x128xf32, #tpu.memory_space<vmem>>, vector<1x128xf32>
    %c0_26 = arith.constant 0 : index
    %c0_27 = arith.constant 0 : index
    %62 = vector.load %arg13[%c0_26, %c0_27] : memref<1x128xf32, #tpu.memory_space<vmem>>, vector<1x128xf32>
    %cst_28 = arith.constant dense<0.000000e+00> : vector<32xf32>
    %63 = vector.multi_reduction <add>, %60, %cst_28 [1] : vector<32x128xf32> to vector<32xf32>
    %64 = vector.shape_cast %63 : vector<32xf32> to vector<32x1xf32>
    %cst_29 = arith.constant 1.280000e+02 : f32
    %65 = vector.broadcast %cst_29 : f32 to vector<32x1xf32>
    %66 = arith.divf %64, %65 : vector<32x1xf32>
    %67 = vector.broadcast %66 : vector<32x1xf32> to vector<32x128xf32>
    %68 = arith.subf %60, %67 : vector<32x128xf32>
    %69 = arith.mulf %68, %68 : vector<32x128xf32>
    %cst_30 = arith.constant dense<0.000000e+00> : vector<32xf32>
    %70 = vector.multi_reduction <add>, %69, %cst_30 [1] : vector<32x128xf32> to vector<32xf32>
    %71 = vector.shape_cast %70 : vector<32xf32> to vector<32x1xf32>
    %cst_31 = arith.constant 1.280000e+02 : f32
    %72 = vector.broadcast %cst_31 : f32 to vector<32x1xf32>
    %73 = arith.divf %71, %72 : vector<32x1xf32>
    %74 = vector.broadcast %66 : vector<32x1xf32> to vector<32x128xf32>
    %75 = arith.subf %60, %74 : vector<32x128xf32>
    %cst_32 = arith.constant 9.99999974E-6 : f32
    %76 = vector.broadcast %cst_32 : f32 to vector<32x1xf32>
    %77 = arith.addf %73, %76 : vector<32x1xf32>
    %78 = math.rsqrt %77 : vector<32x1xf32>
    %79 = vector.broadcast %78 : vector<32x1xf32> to vector<32x128xf32>
    %80 = arith.mulf %75, %79 : vector<32x128xf32>
    %81 = vector.broadcast %61 : vector<1x128xf32> to vector<32x128xf32>
    %82 = arith.mulf %80, %81 : vector<32x128xf32>
    %83 = vector.broadcast %62 : vector<1x128xf32> to vector<32x128xf32>
    %84 = arith.addf %82, %83 : vector<32x128xf32>
    %c0_33 = arith.constant 0 : index
    %c0_34 = arith.constant 0 : index
    %85 = vector.load %arg6[%c0_33, %c0_34] : memref<128x512xf32, #tpu.memory_space<vmem>>, vector<128x512xf32>
    %cst_35 = arith.constant dense<0.000000e+00> : vector<32x512xf32>
    %86 = tpu.matmul %84, %85, %cst_35 {dimension_numbers = #tpu.dot_dimension_numbers<[1], [0], [0], [1], [0, 0, 1, 1], [], []>} : vector<32x128xf32>, vector<128x512xf32>, vector<32x512xf32> -> vector<32x512xf32>
    %c0_36 = arith.constant 0 : index
    %c0_37 = arith.constant 0 : index
    %87 = vector.load %arg7[%c0_36, %c0_37] : memref<1x512xf32, #tpu.memory_space<vmem>>, vector<1x512xf32>
    %88 = vector.broadcast %87 : vector<1x512xf32> to vector<32x512xf32>
    %89 = arith.addf %86, %88 : vector<32x512xf32>
    %cst_38 = arith.constant 0.000000e+00 : f32
    %90 = vector.broadcast %cst_38 : f32 to vector<32x512xf32>
    %91 = arith.maximumf %89, %90 : vector<32x512xf32>
    %c0_39 = arith.constant 0 : index
    %c0_40 = arith.constant 0 : index
    %92 = vector.load %arg8[%c0_39, %c0_40] : memref<512x128xf32, #tpu.memory_space<vmem>>, vector<512x128xf32>
    %cst_41 = arith.constant dense<0.000000e+00> : vector<32x128xf32>
    %93 = tpu.matmul %91, %92, %cst_41 {dimension_numbers = #tpu.dot_dimension_numbers<[1], [0], [0], [1], [0, 0, 1, 1], [], []>} : vector<32x512xf32>, vector<512x128xf32>, vector<32x128xf32> -> vector<32x128xf32>
    %c0_42 = arith.constant 0 : index
    %c0_43 = arith.constant 0 : index
    %94 = vector.load %arg9[%c0_42, %c0_43] : memref<1x128xf32, #tpu.memory_space<vmem>>, vector<1x128xf32>
    %95 = vector.broadcast %94 : vector<1x128xf32> to vector<32x128xf32>
    %96 = arith.addf %93, %95 : vector<32x128xf32>
    %cst_44 = arith.constant 0.000000e+00 : f32
    %97 = vector.broadcast %cst_44 : f32 to vector<32x128xf32>
    %98 = arith.maximumf %96, %97 : vector<32x128xf32>
    %99 = arith.addf %60, %98 : vector<32x128xf32>
    %c0_45 = arith.constant 0 : index
    %c0_46 = arith.constant 0 : index
    %100 = vector.load %arg14[%c0_45, %c0_46] : memref<32x128xf32, #tpu.memory_space<vmem>>, vector<32x128xf32>
    tpu.vector_store %arg14[%c0_45, %c0_46], %99 {strides = array<i32>} : memref<32x128xf32, #tpu.memory_space<vmem>>, vector<32x128xf32>,
    return
  }
  func.func @transform_0(%arg0: i32) -> (i32, i32) {
    %c0_i32 = arith.constant 0 : i32
    %c0_i32_0 = arith.constant 0 : i32
    return %arg0, %c0_i32 : i32, i32
  }
  func.func @transform_1(%arg0: i32) -> (i32, i32) {
    %c0_i32 = arith.constant 0 : i32
    %c0_i32_0 = arith.constant 0 : i32
    %c0_i32_1 = arith.constant 0 : i32
    return %c0_i32, %c0_i32_0 : i32, i32
  }
  func.func @transform_2(%arg0: i32) -> (i32, i32) {
    %c0_i32 = arith.constant 0 : i32
    %c0_i32_0 = arith.constant 0 : i32
    %c0_i32_1 = arith.constant 0 : i32
    return %c0_i32, %c0_i32_0 : i32, i32
  }
  func.func @transform_3(%arg0: i32) -> (i32, i32) {
    %c0_i32 = arith.constant 0 : i32
    %c0_i32_0 = arith.constant 0 : i32
    %c0_i32_1 = arith.constant 0 : i32
    return %c0_i32, %c0_i32_0 : i32, i32
  }
  func.func @transform_4(%arg0: i32) -> (i32, i32) {
    %c0_i32 = arith.constant 0 : i32
    %c0_i32_0 = arith.constant 0 : i32
    %c0_i32_1 = arith.constant 0 : i32
    return %c0_i32, %c0_i32_0 : i32, i32
  }
  func.func @transform_5(%arg0: i32) -> (i32, i32) {
    %c0_i32 = arith.constant 0 : i32
    %c0_i32_0 = arith.constant 0 : i32
    %c0_i32_1 = arith.constant 0 : i32
    return %c0_i32, %c0_i32_0 : i32, i32
  }
  func.func @transform_6(%arg0: i32) -> (i32, i32) {
    %c0_i32 = arith.constant 0 : i32
    %c0_i32_0 = arith.constant 0 : i32
    %c0_i32_1 = arith.constant 0 : i32
    return %c0_i32, %c0_i32_0 : i32, i32
  }
  func.func @transform_7(%arg0: i32) -> (i32, i32) {
    %c0_i32 = arith.constant 0 : i32
    %c0_i32_0 = arith.constant 0 : i32
    %c0_i32_1 = arith.constant 0 : i32
    return %c0_i32, %c0_i32_0 : i32, i32
  }
  func.func @transform_8(%arg0: i32) -> (i32, i32) {
    %c0_i32 = arith.constant 0 : i32
    %c0_i32_0 = arith.constant 0 : i32
    %c0_i32_1 = arith.constant 0 : i32
    return %c0_i32, %c0_i32_0 : i32, i32
  }
  func.func @transform_9(%arg0: i32) -> (i32, i32) {
    %c0_i32 = arith.constant 0 : i32
    %c0_i32_0 = arith.constant 0 : i32
    %c0_i32_1 = arith.constant 0 : i32
    return %c0_i32, %c0_i32_0 : i32, i32
  }
  func.func @transform_10(%arg0: i32) -> (i32, i32) {
    %c0_i32 = arith.constant 0 : i32
    %c0_i32_0 = arith.constant 0 : i32
    %c0_i32_1 = arith.constant 0 : i32
    return %c0_i32, %c0_i32_0 : i32, i32
  }
  func.func @transform_11(%arg0: i32) -> (i32, i32) {
    %c0_i32 = arith.constant 0 : i32
    %c0_i32_0 = arith.constant 0 : i32
    %c0_i32_1 = arith.constant 0 : i32
    return %c0_i32, %c0_i32_0 : i32, i32
  }
  func.func @transform_12(%arg0: i32) -> (i32, i32) {
    %c0_i32 = arith.constant 0 : i32
    %c0_i32_0 = arith.constant 0 : i32
    %c0_i32_1 = arith.constant 0 : i32
    return %c0_i32, %c0_i32_0 : i32, i32
  }
  func.func @transform_13(%arg0: i32) -> (i32, i32) {
    %c0_i32 = arith.constant 0 : i32
    %c0_i32_0 = arith.constant 0 : i32
    return %arg0, %c0_i32 : i32, i32
  }
}

</mosaic_0001>

<llo_original>
// kernel: tpu_custom_call.1
$region0: #{tpu_custom_call.1}
  #allocation0 [shape = 'u32[]', space=smem, size = 0x4, offset = 0x4, fixed_abs, tag = 'smem constant byte address 0x4 - core index']
  #allocation1 [shape = 'u32[144,128]{1,0:T(1,128)}', space=vmem, size = 0x12000, scoped, tag = 'internal scratch']
  %s0 = inlined_call_operand.hbm [shape: f32[64,128], index: 0, kind: input, shape index: {}]
  %s1 = inlined_call_operand.hbm [shape: f32[32,32], index: 1, kind: input, shape index: {}]
  %s2 = inlined_call_operand.hbm [shape: f32[128,384], index: 2, kind: input, shape index: {}]
  %s3 = inlined_call_operand.hbm [shape: f32[128,128], index: 3, kind: input, shape index: {}]
  %s4 = inlined_call_operand.hbm [shape: f32[1,128], index: 4, kind: input, shape index: {}]
  %s5 = inlined_call_operand.hbm [shape: f32[128,512], index: 5, kind: input, shape index: {}]
  %s6 = inlined_call_operand.hbm [shape: f32[1,512], index: 6, kind: input, shape index: {}]
  %s7 = inlined_call_operand.hbm [shape: f32[512,128], index: 7, kind: input, shape index: {}]
  %s8 = inlined_call_operand.hbm [shape: f32[1,128], index: 8, kind: input, shape index: {}]
  %s9 = inlined_call_operand.hbm [shape: f32[1,128], index: 9, kind: input, shape index: {}]
  %s10 = inlined_call_operand.hbm [shape: f32[1,128], index: 10, kind: input, shape index: {}]
  %s11 = inlined_call_operand.hbm [shape: f32[1,128], index: 11, kind: input, shape index: {}]
  %s12 = inlined_call_operand.hbm [shape: f32[1,128], index: 12, kind: input, shape index: {}]
  %s13 = inlined_call_operand.hbm [shape: f32[64,128], index: 13, kind: output, shape index: {}]
  %s14 = sld [smem:[#allocation0]]
  $region137: #{tpu_custom_call.1} parent=0
    _
  %s16 = ssub.s32 1, %s14
  %s17 = scalar_select 0, %s16, %s14
  $region1: #{tpu_custom_call.1} parent=0
    #allocation2 [shape = 'u8[32768]{0}', space=vmem, size = 0x8000, scoped, tag = 'input window, operand 0']
    #allocation3 [shape = 's32[2]{0}', space=sflag, size = 0x8, scoped, tag = 'scoped memory for tpu_custom_call.1']
    #allocation4 [shape = 's32[2]{0}', space=sflag, size = 0x8, scoped, tag = 'scoped memory for tpu_custom_call.1']
    #allocation5 [shape = 'u8[16384]{0}', space=vmem, size = 0x4000, scoped, tag = 'input window, operand 1, single buffered']
    #allocation6 [shape = 's32[1]{0}', space=sflag, size = 0x4, scoped, tag = 'scoped memory for tpu_custom_call.1']
    #allocation7 [shape = 'u8[196608]{0}', space=vmem, size = 0x30000, scoped, tag = 'input window, operand 2, single buffered']
    #allocation8 [shape = 'u8[65536]{0}', space=vmem, size = 0x10000, scoped, tag = 'input window, operand 3, single buffered']
    #allocation9 [shape = 's32[1]{0}', space=sflag, size = 0x4, scoped, tag = 'scoped memory for tpu_custom_call.1']
    #allocation10 [shape = 'u8[512]{0}', space=vmem, size = 0x400, scoped, tag = 'input window, operand 4, single buffered']
    #allocation11 [shape = 'u8[262144]{0}', space=vmem, size = 0x40000, scoped, tag = 'input window, operand 5, single buffered']
    #allocation12 [shape = 's32[1]{0}', space=sflag, size = 0x4, scoped, tag = 'scoped memory for tpu_custom_call.1']
    #allocation13 [shape = 'u8[2048]{0}', space=vmem, size = 0x800, scoped, tag = 'input window, operand 6, single buffered']
    #allocation14 [shape = 'u8[262144]{0}', space=vmem, size = 0x40000, scoped, tag = 'input window, operand 7, single buffered']
    #allocation15 [shape = 's32[1]{0}', space=sflag, size = 0x4, scoped, tag = 'scoped memory for tpu_custom_call.1']
    #allocation16 [shape = 'u8[512]{0}', space=vmem, size = 0x400, scoped, tag = 'input window, operand 8, single buffered']
    #allocation17 [shape = 'u8[512]{0}', space=vmem, size = 0x400, scoped, tag = 'input window, operand 9, single buffered']
    #allocation18 [shape = 's32[1]{0}', space=sflag, size = 0x4, scoped, tag = 'scoped memory for tpu_custom_call.1']
    #allocation19 [shape = 'u8[512]{0}', space=vmem, size = 0x400, scoped, tag = 'input window, operand 10, single buffered']
    #allocation20 [shape = 'u8[512]{0}', space=vmem, size = 0x400, scoped, tag = 'input window, operand 11, single buffered']
    #allocation21 [shape = 's32[1]{0}', space=sflag, size = 0x4, scoped, tag = 'scoped memory for tpu_custom_call.1']
    #allocation22 [shape = 'u8[512]{0}', space=vmem, size = 0x400, scoped, tag = 'input window, operand 12, single buffered']
    #allocation23 [shape = 'u8[32768]{0}', space=vmem, size = 0x8000, scoped, tag = 'output window, operand 0']
    %18 = vsyncpa [#allocation3], 0
    %s19 = scalar_lea.sflag [#allocation3], 1
    %20 = vsyncpa %s19, 0
    %21 = vsyncpa [#allocation6], 0
    %22 = vsyncpa [#allocation9], 0
    %23 = vsyncpa [#allocation12], 0
    %24 = vsyncpa [#allocation15], 0
    %25 = vsyncpa [#allocation18], 0
    %26 = vsyncpa [#allocation21], 0
    %27 = vsyncpa [#allocation4], 0
    %s28 = scalar_lea.sflag [#allocation4], 1
    %29 = vsyncpa %s28, 0
    loop: start=0, step=1, limit=4
    $region2: #{tpu_custom_call.1} parent=1 // loop_pre_header
      _
    $region3: #{tpu_custom_call.1} parent=1 // loop_header
      %s31 = sphi 0, %s35
      %p32 = scmp.ge.s32.totalorder %s31, 4
      %s41 = sphi 0, %s43
      %s44 = sphi 0, %s41
      %s45 = sphi 0, %s44
      %s61 = sphi 0, %s45
      %s65 = sphi 0, %s65
      %s67 = sphi 0, %s65
      %s68 = sphi 0, %s67
      %s82 = sphi 0, %s68
      %s86 = sphi 0, %s86
      %s88 = sphi 0, %s86
      %s89 = sphi 0, %s88
      %s103 = sphi 0, %s89
      %s107 = sphi 0, %s107
      %s109 = sphi 0, %s107
      %s110 = sphi 0, %s109
      %s124 = sphi 0, %s110
      %s128 = sphi 0, %s128
      %s130 = sphi 0, %s128
      %s131 = sphi 0, %s130
      %s145 = sphi 0, %s131
      %s149 = sphi 0, %s149
      %s151 = sphi 0, %s149
      %s152 = sphi 0, %s151
      %s166 = sphi 0, %s152
      %s170 = sphi 0, %s170
      %s172 = sphi 0, %s170
      %s173 = sphi 0, %s172
      %s187 = sphi 0, %s173
      %s191 = sphi 0, %s191
      %s193 = sphi 0, %s191
      %s194 = sphi 0, %s193
      %s208 = sphi 0, %s194
      %s212 = sphi 0, %s212
      %s214 = sphi 0, %s212
      %s215 = sphi 0, %s214
      %s229 = sphi 0, %s215
      %s233 = sphi 0, %s233
      %s235 = sphi 0, %s233
      %s236 = sphi 0, %s235
      %s250 = sphi 0, %s236
      %s254 = sphi 0, %s254
      %s256 = sphi 0, %s254
      %s257 = sphi 0, %s256
      %s271 = sphi 0, %s257
      %s275 = sphi 0, %s275
      %s277 = sphi 0, %s275
      %s278 = sphi 0, %s277
      %s292 = sphi 0, %s278
      %s296 = sphi 0, %s296
      %s298 = sphi 0, %s296
      %s299 = sphi 0, %s298
      %s313 = sphi 0, %s299
      %s319 = sphi 0, %s321
      %s322 = sphi 0, %s319
      %s323 = sphi 0, %s322
      %s339 = sphi 0, %s323
    $region4: #{tpu_custom_call.1} parent=1 // loop_header_branch
      %34 = sbr.rel (%p32) target = $region8
    $region5: #{tpu_custom_call.1} parent=1 // loop_body
      %s36 = ssub.s32 %s31, 1
      %s37 = ssub.s32 %s31, 2
      %s38 = sadd.s32 %s31, 1
      %s39 = ssub.s32 %s31, %s38
      %p40 = scmp.eq.s32.totalorder %s39, 0
      %s42 = sadd.s32 %s41, 1
      %s43 = scalar_select %p40, %s41, %s42
      %p46 = pneg %p40
      %p47 = scmp.eq.s32.totalorder %s31, 1
      %p48 = por %p46, %p47
      %p49 = scmp.ne.s32.totalorder %s41, %s44
      %p50 = scmp.eq.s32.totalorder %s31, 0
      %p51 = por %p49, %p50
      %p52 = scmp.ne.s32.totalorder %s41, %s44
      %p53 = scmp.eq.s32.totalorder %s36, 1
      %p54 = por %p52, %p53
      %p55 = scmp.ne.s32.totalorder %s44, %s45
      %p56 = scmp.eq.s32.totalorder %s36, 0
      %p57 = por %p55, %p56
      %p58 = scmp.ne.s32.totalorder %s44, %s45
      %p59 = scmp.eq.s32.totalorder %s37, 1
      %p60 = por %p58, %p59
      %p62 = scmp.ne.s32.totalorder %s45, %s61
      %p63 = scmp.eq.s32.totalorder %s37, 0
      %p64 = por %p62, %p63
      %s66 = sadd.s32 %s65, 1
      %p69 = scmp.eq.s32.totalorder %s31, 1
      %p70 = scmp.ne.s32.totalorder %s65, %s67
      %p71 = scmp.eq.s32.totalorder %s31, 0
      %p72 = por %p70, %p71
      %p73 = scmp.ne.s32.totalorder %s65, %s67
      %p74 = scmp.eq.s32.totalorder %s36, 1
      %p75 = por %p73, %p74
      %p76 = scmp.ne.s32.totalorder %s67, %s68
      %p77 = scmp.eq.s32.totalorder %s36, 0
      %p78 = por %p76, %p77
      %p79 = scmp.ne.s32.totalorder %s67, %s68
      %p80 = scmp.eq.s32.totalorder %s37, 1
      %p81 = por %p79, %p80
      %p83 = scmp.ne.s32.totalorder %s68, %s82
      %p84 = scmp.eq.s32.totalorder %s37, 0
      %p85 = por %p83, %p84
      %s87 = sadd.s32 %s86, 1
      %p90 = scmp.eq.s32.totalorder %s31, 1
      %p91 = scmp.ne.s32.totalorder %s86, %s88
      %p92 = scmp.eq.s32.totalorder %s31, 0
      %p93 = por %p91, %p92
      %p94 = scmp.ne.s32.totalorder %s86, %s88
      %p95 = scmp.eq.s32.totalorder %s36, 1
      %p96 = por %p94, %p95
      %p97 = scmp.ne.s32.totalorder %s88, %s89
      %p98 = scmp.eq.s32.totalorder %s36, 0
      %p99 = por %p97, %p98
      %p100 = scmp.ne.s32.totalorder %s88, %s89
      %p101 = scmp.eq.s32.totalorder %s37, 1
      %p102 = por %p100, %p101
      %p104 = scmp.ne.s32.totalorder %s89, %s103
      %p105 = scmp.eq.s32.totalorder %s37, 0
      %p106 = por %p104, %p105
      %s108 = sadd.s32 %s107, 1
      %p111 = scmp.eq.s32.totalorder %s31, 1
      %p112 = scmp.ne.s32.totalorder %s107, %s109
      %p113 = scmp.eq.s32.totalorder %s31, 0
      %p114 = por %p112, %p113
      %p115 = scmp.ne.s32.totalorder %s107, %s109
      %p116 = scmp.eq.s32.totalorder %s36, 1
      %p117 = por %p115, %p116
      %p118 = scmp.ne.s32.totalorder %s109, %s110
      %p119 = scmp.eq.s32.totalorder %s36, 0
      %p120 = por %p118, %p119
      %p121 = scmp.ne.s32.totalorder %s109, %s110
      %p122 = scmp.eq.s32.totalorder %s37, 1
      %p123 = por %p121, %p122
      %p125 = scmp.ne.s32.totalorder %s110, %s124
      %p126 = scmp.eq.s32.totalorder %s37, 0
      %p127 = por %p125, %p126
      %s129 = sadd.s32 %s128, 1
      %p132 = scmp.eq.s32.totalorder %s31, 1
      %p133 = scmp.ne.s32.totalorder %s128, %s130
      %p134 = scmp.eq.s32.totalorder %s31, 0
      %p135 = por %p133, %p134
      %p136 = scmp.ne.s32.totalorder %s128, %s130
      %p137 = scmp.eq.s32.totalorder %s36, 1
      %p138 = por %p136, %p137
      %p139 = scmp.ne.s32.totalorder %s130, %s131
      %p140 = scmp.eq.s32.totalorder %s36, 0
      %p141 = por %p139, %p140
      %p142 = scmp.ne.s32.totalorder %s130, %s131
      %p143 = scmp.eq.s32.totalorder %s37, 1
      %p144 = por %p142, %p143
      %p146 = scmp.ne.s32.totalorder %s131, %s145
      %p147 = scmp.eq.s32.totalorder %s37, 0
      %p148 = por %p146, %p147
      %s150 = sadd.s32 %s149, 1
      %p153 = scmp.eq.s32.totalorder %s31, 1
      %p154 = scmp.ne.s32.totalorder %s149, %s151
      %p155 = scmp.eq.s32.totalorder %s31, 0
      %p156 = por %p154, %p155
      %p157 = scmp.ne.s32.totalorder %s149, %s151
      %p158 = scmp.eq.s32.totalorder %s36, 1
      %p159 = por %p157, %p158
      %p160 = scmp.ne.s32.totalorder %s151, %s152
      %p161 = scmp.eq.s32.totalorder %s36, 0
      %p162 = por %p160, %p161
      %p163 = scmp.ne.s32.totalorder %s151, %s152
      %p164 = scmp.eq.s32.totalorder %s37, 1
      %p165 = por %p163, %p164
      %p167 = scmp.ne.s32.totalorder %s152, %s166
      %p168 = scmp.eq.s32.totalorder %s37, 0
      %p169 = por %p167, %p168
      %s171 = sadd.s32 %s170, 1
      %p174 = scmp.eq.s32.totalorder %s31, 1
      %p175 = scmp.ne.s32.totalorder %s170, %s172
      %p176 = scmp.eq.s32.totalorder %s31, 0
      %p177 = por %p175, %p176
      %p178 = scmp.ne.s32.totalorder %s170, %s172
      %p179 = scmp.eq.s32.totalorder %s36, 1
      %p180 = por %p178, %p179
      %p181 = scmp.ne.s32.totalorder %s172, %s173
      %p182 = scmp.eq.s32.totalorder %s36, 0
      %p183 = por %p181, %p182
      %p184 = scmp.ne.s32.totalorder %s172, %s173
      %p185 = scmp.eq.s32.totalorder %s37, 1
      %p186 = por %p184, %p185
      %p188 = scmp.ne.s32.totalorder %s173, %s187
      %p189 = scmp.eq.s32.totalorder %s37, 0
      %p190 = por %p188, %p189
      %s192 = sadd.s32 %s191, 1
      %p195 = scmp.eq.s32.totalorder %s31, 1
      %p196 = scmp.ne.s32.totalorder %s191, %s193
      %p197 = scmp.eq.s32.totalorder %s31, 0
      %p198 = por %p196, %p197
      %p199 = scmp.ne.s32.totalorder %s191, %s193
      %p200 = scmp.eq.s32.totalorder %s36, 1
      %p201 = por %p199, %p200
      %p202 = scmp.ne.s32.totalorder %s193, %s194
      %p203 = scmp.eq.s32.totalorder %s36, 0
      %p204 = por %p202, %p203
      %p205 = scmp.ne.s32.totalorder %s193, %s194
      %p206 = scmp.eq.s32.totalorder %s37, 1
      %p207 = por %p205, %p206
      %p209 = scmp.ne.s32.totalorder %s194, %s208
      %p210 = scmp.eq.s32.totalorder %s37, 0
      %p211 = por %p209, %p210
      %s213 = sadd.s32 %s212, 1
      %p216 = scmp.eq.s32.totalorder %s31, 1
      %p217 = scmp.ne.s32.totalorder %s212, %s214
      %p218 = scmp.eq.s32.totalorder %s31, 0
      %p219 = por %p217, %p218
      %p220 = scmp.ne.s32.totalorder %s212, %s214
      %p221 = scmp.eq.s32.totalorder %s36, 1
      %p222 = por %p220, %p221
      %p223 = scmp.ne.s32.totalorder %s214, %s215
      %p224 = scmp.eq.s32.totalorder %s36, 0
      %p225 = por %p223, %p224
      %p226 = scmp.ne.s32.totalorder %s214, %s215
      %p227 = scmp.eq.s32.totalorder %s37, 1
      %p228 = por %p226, %p227
      %p230 = scmp.ne.s32.totalorder %s215, %s229
      %p231 = scmp.eq.s32.totalorder %s37, 0
      %p232 = por %p230, %p231
      %s234 = sadd.s32 %s233, 1
      %p237 = scmp.eq.s32.totalorder %s31, 1
      %p238 = scmp.ne.s32.totalorder %s233, %s235
      %p239 = scmp.eq.s32.totalorder %s31, 0
      %p240 = por %p238, %p239
      %p241 = scmp.ne.s32.totalorder %s233, %s235
      %p242 = scmp.eq.s32.totalorder %s36, 1
      %p243 = por %p241, %p242
      %p244 = scmp.ne.s32.totalorder %s235, %s236
      %p245 = scmp.eq.s32.totalorder %s36, 0
      %p246 = por %p244, %p245
      %p247 = scmp.ne.s32.totalorder %s235, %s236
      %p248 = scmp.eq.s32.totalorder %s37, 1
      %p249 = por %p247, %p248
      %p251 = scmp.ne.s32.totalorder %s236, %s250
      %p252 = scmp.eq.s32.totalorder %s37, 0
      %p253 = por %p251, %p252
      %s255 = sadd.s32 %s254, 1
      %p258 = scmp.eq.s32.totalorder %s31, 1
      %p259 = scmp.ne.s32.totalorder %s254, %s256
      %p260 = scmp.eq.s32.totalorder %s31, 0
      %p261 = por %p259, %p260
      %p262 = scmp.ne.s32.totalorder %s254, %s256
      %p263 = scmp.eq.s32.totalorder %s36, 1
      %p264 = por %p262, %p263
      %p265 = scmp.ne.s32.totalorder %s256, %s257
      %p266 = scmp.eq.s32.totalorder %s36, 0
      %p267 = por %p265, %p266
      %p268 = scmp.ne.s32.totalorder %s256, %s257
      %p269 = scmp.eq.s32.totalorder %s37, 1
      %p270 = por %p268, %p269
      %p272 = scmp.ne.s32.totalorder %s257, %s271
      %p273 = scmp.eq.s32.totalorder %s37, 0
      %p274 = por %p272, %p273
      %s276 = sadd.s32 %s275, 1
      %p279 = scmp.eq.s32.totalorder %s31, 1
      %p280 = scmp.ne.s32.totalorder %s275, %s277
      %p281 = scmp.eq.s32.totalorder %s31, 0
      %p282 = por %p280, %p281
      %p283 = scmp.ne.s32.totalorder %s275, %s277
      %p284 = scmp.eq.s32.totalorder %s36, 1
      %p285 = por %p283, %p284
      %p286 = scmp.ne.s32.totalorder %s277, %s278
      %p287 = scmp.eq.s32.totalorder %s36, 0
      %p288 = por %p286, %p287
      %p289 = scmp.ne.s32.totalorder %s277, %s278
      %p290 = scmp.eq.s32.totalorder %s37, 1
      %p291 = por %p289, %p290
      %p293 = scmp.ne.s32.totalorder %s278, %s292
      %p294 = scmp.eq.s32.totalorder %s37, 0
      %p295 = por %p293, %p294
      %s297 = sadd.s32 %s296, 1
      %p300 = scmp.eq.s32.totalorder %s31, 1
      %p301 = scmp.ne.s32.totalorder %s296, %s298
      %p302 = scmp.eq.s32.totalorder %s31, 0
      %p303 = por %p301, %p302
      %p304 = scmp.ne.s32.totalorder %s296, %s298
      %p305 = scmp.eq.s32.totalorder %s36, 1
      %p306 = por %p304, %p305
      %p307 = scmp.ne.s32.totalorder %s298, %s299
      %p308 = scmp.eq.s32.totalorder %s36, 0
      %p309 = por %p307, %p308
      %p310 = scmp.ne.s32.totalorder %s298, %s299
      %p311 = scmp.eq.s32.totalorder %s37, 1
      %p312 = por %p310, %p311
      %p314 = scmp.ne.s32.totalorder %s299, %s313
      %p315 = scmp.eq.s32.totalorder %s37, 0
      %p316 = por %p314, %p315
      %s317 = ssub.s32 %s31, %s38
      %p318 = scmp.eq.s32.totalorder %s317, 0
      %s320 = sadd.s32 %s319, 1
      %s321 = scalar_select %p318, %s319, %s320
      %p324 = pneg %p318
      %p325 = scmp.eq.s32.totalorder %s31, 1
      %p326 = por %p324, %p325
      %p327 = scmp.ne.s32.totalorder %s319, %s322
      %p328 = scmp.eq.s32.totalorder %s31, 0
      %p329 = por %p327, %p328
      %p330 = scmp.ne.s32.totalorder %s319, %s322
      %p331 = scmp.eq.s32.totalorder %s36, 1
      %p332 = por %p330, %p331
      %p333 = scmp.ne.s32.totalorder %s322, %s323
      %p334 = scmp.eq.s32.totalorder %s36, 0
      %p335 = por %p333, %p334
      %p336 = scmp.ne.s32.totalorder %s322, %s323
      %p337 = scmp.eq.s32.totalorder %s37, 1
      %p338 = por %p336, %p337
      %p340 = scmp.ne.s32.totalorder %s323, %s339
      %p341 = scmp.eq.s32.totalorder %s37, 0
      %p342 = por %p340, %p341
      %p343 = scmp.le.s32.totalorder 1, %s31
      %p344 = scmp.lt.s32.totalorder %s31, 3
      %p345 = pnand %p343, %p344
      %p346 = pneg %p345
      // Predicated region
      $region9: #{tpu_custom_call.1} parent=5 // pred_check
        _
      $region10: #{tpu_custom_call.1} parent=5 // pred_check_branch
        %348 = sbr.rel (%p345) target = $region12
      $region11: #{tpu_custom_call.1} parent=5 // pred_region
        %s349 = ssub.s32 %s31, 1
        // Predicated region
        $region13: #{tpu_custom_call.1} parent=11 // pred_check
          %p350 = pneg %p78
        $region14: #{tpu_custom_call.1} parent=11 // pred_check_branch
          %352 = sbr.rel (%p350) target = $region16
        $region15: #{tpu_custom_call.1} parent=11 // pred_region
          %s354 = ssub.s32 512, 512
          %355 = vsyncadd [#allocation6], %s354
          %s356 = sshll.u32 [#allocation5], 4
          %s357 = int_to_ptr.vmem [resolvable:$true] %s356
          %362 = dma.hbm_to_vmem [thread:$0]  %s1, 512, %s357, [#allocation6], 128, 128, 8
        $region16: #{tpu_custom_call.1} parent=11 // pred_fallthru
          _
        // Predicated region
        $region17: #{tpu_custom_call.1} parent=11 // pred_check
          %p363 = pneg %p99
        $region18: #{tpu_custom_call.1} parent=11 // pred_check_branch
          %365 = sbr.rel (%p363) target = $region20
        $region19: #{tpu_custom_call.1} parent=11 // pred_region
          %s367 = ssub.s32 6144, 6144
          %368 = vsyncadd [#allocation6], %s367
          %s369 = sshll.u32 [#allocation7], 4
          %s370 = int_to_ptr.vmem [resolvable:$true] %s369
          %375 = dma.hbm_to_vmem [thread:$0]  %s2, 6144, %s370, [#allocation6], 384, 384, 24
        $region20: #{tpu_custom_call.1} parent=11 // pred_fallthru
          _
        // Predicated region
        $region21: #{tpu_custom_call.1} parent=11 // pred_check
          %p376 = pneg %p120
        $region22: #{tpu_custom_call.1} parent=11 // pred_check_branch
          %378 = sbr.rel (%p376) target = $region24
        $region23: #{tpu_custom_call.1} parent=11 // pred_region
          %s380 = ssub.s32 2048, 2048
          %381 = vsyncadd [#allocation9], %s380
          %s382 = sshll.u32 [#allocation8], 4
          %s383 = int_to_ptr.vmem [resolvable:$true] %s382
          %388 = dma.hbm_to_vmem [thread:$0]  %s3, 2048, %s383, [#allocation9], 128, 128, 8
        $region24: #{tpu_custom_call.1} parent=11 // pred_fallthru
          _
        // Predicated region
        $region25: #{tpu_custom_call.1} parent=11 // pred_check
          %p389 = pneg %p141
        $region26: #{tpu_custom_call.1} parent=11 // pred_check_branch
          %391 = sbr.rel (%p389) target = $region28
        $region27: #{tpu_custom_call.1} parent=11 // pred_region
          %s393 = ssub.s32 16, 16
          %394 = vsyncadd [#allocation9], %s393
          %s396 = sshll.u32 [#allocation10], 4
          %s397 = int_to_ptr.vmem [resolvable:$true] %s396
          %399 = dma.hbm_to_vmem [thread:$0]  %s4, 16, %s397, [#allocation9]
        $region28: #{tpu_custom_call.1} parent=11 // pred_fallthru
          _
        // Predicated region
        $region29: #{tpu_custom_call.1} parent=11 // pred_check
          %p400 = pneg %p162
        $region30: #{tpu_custom_call.1} parent=11 // pred_check_branch
          %402 = sbr.rel (%p400) target = $region32
        $region31: #{tpu_custom_call.1} parent=11 // pred_region
          %s404 = ssub.s32 8192, 8192
          %405 = vsyncadd [#allocation12], %s404
          %s406 = sshll.u32 [#allocation11], 4
          %s407 = int_to_ptr.vmem [resolvable:$true] %s406
          %412 = dma.hbm_to_vmem [thread:$0]  %s5, 8192, %s407, [#allocation12], 512, 512, 32
        $region32: #{tpu_custom_call.1} parent=11 // pred_fallthru
          _
        // Predicated region
        $region33: #{tpu_custom_call.1} parent=11 // pred_check
          %p413 = pneg %p183
        $region34: #{tpu_custom_call.1} parent=11 // pred_check_branch
          %415 = sbr.rel (%p413) target = $region36
        $region35: #{tpu_custom_call.1} parent=11 // pred_region
          %s417 = ssub.s32 64, 64
          %418 = vsyncadd [#allocation12], %s417
          %s420 = sshll.u32 [#allocation13], 4
          %s421 = int_to_ptr.vmem [resolvable:$true] %s420
          %423 = dma.hbm_to_vmem [thread:$0]  %s6, 64, %s421, [#allocation12]
        $region36: #{tpu_custom_call.1} parent=11 // pred_fallthru
          _
        // Predicated region
        $region37: #{tpu_custom_call.1} parent=11 // pred_check
          %p424 = pneg %p204
        $region38: #{tpu_custom_call.1} parent=11 // pred_check_branch
          %426 = sbr.rel (%p424) target = $region40
        $region39: #{tpu_custom_call.1} parent=11 // pred_region
          %s428 = ssub.s32 8192, 8192
          %429 = vsyncadd [#allocation15], %s428
          %s430 = sshll.u32 [#allocation14], 4
          %s431 = int_to_ptr.vmem [resolvable:$true] %s430
          %436 = dma.hbm_to_vmem [thread:$0]  %s7, 8192, %s431, [#allocation15], 128, 128, 8
        $region40: #{tpu_custom_call.1} parent=11 // pred_fallthru
          _
        // Predicated region
        $region41: #{tpu_custom_call.1} parent=11 // pred_check
          %p437 = pneg %p225
        $region42: #{tpu_custom_call.1} parent=11 // pred_check_branch
          %439 = sbr.rel (%p437) target = $region44
        $region43: #{tpu_custom_call.1} parent=11 // pred_region
          %s441 = ssub.s32 16, 16
          %442 = vsyncadd [#allocation15], %s441
          %s444 = sshll.u32 [#allocation16], 4
          %s445 = int_to_ptr.vmem [resolvable:$true] %s444
          %447 = dma.hbm_to_vmem [thread:$0]  %s8, 16, %s445, [#allocation15]
        $region44: #{tpu_custom_call.1} parent=11 // pred_fallthru
          _
        // Predicated region
        $region45: #{tpu_custom_call.1} parent=11 // pred_check
          %p448 = pneg %p246
        $region46: #{tpu_custom_call.1} parent=11 // pred_check_branch
          %450 = sbr.rel (%p448) target = $region48
        $region47: #{tpu_custom_call.1} parent=11 // pred_region
          %s452 = ssub.s32 16, 16
          %453 = vsyncadd [#allocation18], %s452
          %s455 = sshll.u32 [#allocation17], 4
          %s456 = int_to_ptr.vmem [resolvable:$true] %s455
          %458 = dma.hbm_to_vmem [thread:$0]  %s9, 16, %s456, [#allocation18]
        $region48: #{tpu_custom_call.1} parent=11 // pred_fallthru
          _
        // Predicated region
        $region49: #{tpu_custom_call.1} parent=11 // pred_check
          %p459 = pneg %p267
        $region50: #{tpu_custom_call.1} parent=11 // pred_check_branch
          %461 = sbr.rel (%p459) target = $region52
        $region51: #{tpu_custom_call.1} parent=11 // pred_region
          %s463 = ssub.s32 16, 16
          %464 = vsyncadd [#allocation18], %s463
          %s466 = sshll.u32 [#allocation19], 4
          %s467 = int_to_ptr.vmem [resolvable:$true] %s466
          %469 = dma.hbm_to_vmem [thread:$0]  %s10, 16, %s467, [#allocation18]
        $region52: #{tpu_custom_call.1} parent=11 // pred_fallthru
          _
        // Predicated region
        $region53: #{tpu_custom_call.1} parent=11 // pred_check
          %p470 = pneg %p288
        $region54: #{tpu_custom_call.1} parent=11 // pred_check_branch
          %472 = sbr.rel (%p470) target = $region56
        $region55: #{tpu_custom_call.1} parent=11 // pred_region
          %s474 = ssub.s32 16, 16
          %475 = vsyncadd [#allocation21], %s474
          %s477 = sshll.u32 [#allocation20], 4
          %s478 = int_to_ptr.vmem [resolvable:$true] %s477
          %480 = dma.hbm_to_vmem [thread:$0]  %s11, 16, %s478, [#allocation21]
        $region56: #{tpu_custom_call.1} parent=11 // pred_fallthru
          _
        // Predicated region
        $region57: #{tpu_custom_call.1} parent=11 // pred_check
          %p481 = pneg %p309
        $region58: #{tpu_custom_call.1} parent=11 // pred_check_branch
          %483 = sbr.rel (%p481) target = $region60
        $region59: #{tpu_custom_call.1} parent=11 // pred_region
          %s485 = ssub.s32 16, 16
          %486 = vsyncadd [#allocation21], %s485
          %s488 = sshll.u32 [#allocation22], 4
          %s489 = int_to_ptr.vmem [resolvable:$true] %s488
          %491 = dma.hbm_to_vmem [thread:$0]  %s12, 16, %s489, [#allocation21]
        $region60: #{tpu_custom_call.1} parent=11 // pred_fallthru
          _
      $region12: #{tpu_custom_call.1} parent=5 // pred_fallthru
        _
      %p492 = scmp.lt.s32.totalorder %s31, 2
      // Predicated region
      $region61: #{tpu_custom_call.1} parent=5 // pred_check
        %p493 = pneg %p492
      $region62: #{tpu_custom_call.1} parent=5 // pred_check_branch
        %495 = sbr.rel (%p493) target = $region64
      $region63: #{tpu_custom_call.1} parent=5 // pred_region
        // Predicated region
        $region65: #{tpu_custom_call.1} parent=63 // pred_check
          %p496 = pneg %p51
        $region66: #{tpu_custom_call.1} parent=63 // pred_check_branch
          %498 = sbr.rel (%p496) target = $region68
        $region67: #{tpu_custom_call.1} parent=63 // pred_region
          %s499 = sand.u32 %s41, 1
          %s500 = scalar_lea.sflag [#allocation3], %s499
          %s501 = sand.u32 %s41, 1
          %s502 = smul.addr %s501, 32
          %s503 = scalar_lea.vmem [#allocation2], %s502
          %s504 = smul.u32 4, %s31
          %s506 = ssub.s32 512, 512
          %507 = vsyncadd %s500, %s506
          %s508 = smul.addr %s504, 128
          %s509 = scalar_lea.hbm %s0, %s508
          %s510 = sshll.u32 %s503, 4
          %s511 = int_to_ptr.vmem [resolvable:$true] %s510
          %516 = dma.hbm_to_vmem [thread:$0]  %s509, 512, %s511, %s500, 128, 128, 8
        $region68: #{tpu_custom_call.1} parent=63 // pred_fallthru
          _
      $region64: #{tpu_custom_call.1} parent=5 // pred_fallthru
        _
      %p517 = scmp.le.s32.totalorder 1, %s31
      %p518 = scmp.lt.s32.totalorder %s31, 3
      %p519 = pnand %p517, %p518
      %p520 = pneg %p519
      // Predicated region
      $region69: #{tpu_custom_call.1} parent=5 // pred_check
        _
      $region70: #{tpu_custom_call.1} parent=5 // pred_check_branch
        %522 = sbr.rel (%p519) target = $region72
      $region71: #{tpu_custom_call.1} parent=5 // pred_region
        %s523 = ssub.s32 %s31, 1
        %s524 = sand.u32 %s44, 1
        %s525 = scalar_lea.sflag [#allocation3], %s524
        %s526 = sand.u32 %s44, 1
        %s527 = smul.addr %s526, 32
        %s528 = scalar_lea.vmem [#allocation2], %s527
        // Predicated region
        $region73: #{tpu_custom_call.1} parent=71 // pred_check
          %p529 = pneg %p57
        $region74: #{tpu_custom_call.1} parent=71 // pred_check_branch
          %531 = sbr.rel (%p529) target = $region76
        $region75: #{tpu_custom_call.1} parent=71 // pred_region
          %532 = dma.done %s525, 512
        $region76: #{tpu_custom_call.1} parent=71 // pred_fallthru
          _
        // Predicated region
        $region77: #{tpu_custom_call.1} parent=71 // pred_check
          %p533 = pneg %p78
        $region78: #{tpu_custom_call.1} parent=71 // pred_check_branch
          %535 = sbr.rel (%p533) target = $region80
        $region79: #{tpu_custom_call.1} parent=71 // pred_region
          %536 = dma.done [#allocation6], 512
        $region80: #{tpu_custom_call.1} parent=71 // pred_fallthru
          _
        // Predicated region
        $region81: #{tpu_custom_call.1} parent=71 // pred_check
          %p537 = pneg %p99
        $region82: #{tpu_custom_call.1} parent=71 // pred_check_branch
          %539 = sbr.rel (%p537) target = $region84
        $region83: #{tpu_custom_call.1} parent=71 // pred_region
          %540 = dma.done [#allocation6], 6144
        $region84: #{tpu_custom_call.1} parent=71 // pred_fallthru
          _
        // Predicated region
        $region85: #{tpu_custom_call.1} parent=71 // pred_check
          %p541 = pneg %p120
        $region86: #{tpu_custom_call.1} parent=71 // pred_check_branch
          %543 = sbr.rel (%p541) target = $region88
        $region87: #{tpu_custom_call.1} parent=71 // pred_region
          %544 = dma.done [#allocation9], 2048
        $region88: #{tpu_custom_call.1} parent=71 // pred_fallthru
          _
        // Predicated region
        $region89: #{tpu_custom_call.1} parent=71 // pred_check
          %p545 = pneg %p141
        $region90: #{tpu_custom_call.1} parent=71 // pred_check_branch
          %547 = sbr.rel (%p545) target = $region92
        $region91: #{tpu_custom_call.1} parent=71 // pred_region
          %548 = dma.done [#allocation9], 16
        $region92: #{tpu_custom_call.1} parent=71 // pred_fallthru
          _
        // Predicated region
        $region93: #{tpu_custom_call.1} parent=71 // pred_check
          %p549 = pneg %p162
        $region94: #{tpu_custom_call.1} parent=71 // pred_check_branch
          %551 = sbr.rel (%p549) target = $region96
        $region95: #{tpu_custom_call.1} parent=71 // pred_region
          %552 = dma.done [#allocation12], 8192
        $region96: #{tpu_custom_call.1} parent=71 // pred_fallthru
          _
        // Predicated region
        $region97: #{tpu_custom_call.1} parent=71 // pred_check
          %p553 = pneg %p183
        $region98: #{tpu_custom_call.1} parent=71 // pred_check_branch
          %555 = sbr.rel (%p553) target = $region100
        $region99: #{tpu_custom_call.1} parent=71 // pred_region
          %556 = dma.done [#allocation12], 64
        $region100: #{tpu_custom_call.1} parent=71 // pred_fallthru
          _
        // Predicated region
        $region101: #{tpu_custom_call.1} parent=71 // pred_check
          %p557 = pneg %p204
        $region102: #{tpu_custom_call.1} parent=71 // pred_check_branch
          %559 = sbr.rel (%p557) target = $region104
        $region103: #{tpu_custom_call.1} parent=71 // pred_region
          %560 = dma.done [#allocation15], 8192
        $region104: #{tpu_custom_call.1} parent=71 // pred_fallthru
          _
        // Predicated region
        $region105: #{tpu_custom_call.1} parent=71 // pred_check
          %p561 = pneg %p225
        $region106: #{tpu_custom_call.1} parent=71 // pred_check_branch
          %563 = sbr.rel (%p561) target = $region108
        $region107: #{tpu_custom_call.1} parent=71 // pred_region
          %564 = dma.done [#allocation15], 16
        $region108: #{tpu_custom_call.1} parent=71 // pred_fallthru
          _
        // Predicated region
        $region109: #{tpu_custom_call.1} parent=71 // pred_check
          %p565 = pneg %p246
        $region110: #{tpu_custom_call.1} parent=71 // pred_check_branch
          %567 = sbr.rel (%p565) target = $region112
        $region111: #{tpu_custom_call.1} parent=71 // pred_region
          %568 = dma.done [#allocation18], 16
        $region112: #{tpu_custom_call.1} parent=71 // pred_fallthru
          _
        // Predicated region
        $region113: #{tpu_custom_call.1} parent=71 // pred_check
          %p569 = pneg %p267
        $region114: #{tpu_custom_call.1} parent=71 // pred_check_branch
          %571 = sbr.rel (%p569) target = $region116
        $region115: #{tpu_custom_call.1} parent=71 // pred_region
          %572 = dma.done [#allocation18], 16
        $region116: #{tpu_custom_call.1} parent=71 // pred_fallthru
          _
        // Predicated region
        $region117: #{tpu_custom_call.1} parent=71 // pred_check
          %p573 = pneg %p288
        $region118: #{tpu_custom_call.1} parent=71 // pred_check_branch
          %575 = sbr.rel (%p573) target = $region120
        $region119: #{tpu_custom_call.1} parent=71 // pred_region
          %576 = dma.done [#allocation21], 16
        $region120: #{tpu_custom_call.1} parent=71 // pred_fallthru
          _
        // Predicated region
        $region121: #{tpu_custom_call.1} parent=71 // pred_check
          %p577 = pneg %p309
        $region122: #{tpu_custom_call.1} parent=71 // pred_check_branch
          %579 = sbr.rel (%p577) target = $region124
        $region123: #{tpu_custom_call.1} parent=71 // pred_region
          %580 = dma.done [#allocation21], 16
        $region124: #{tpu_custom_call.1} parent=71 // pred_fallthru
          _
        %s581 = sand.u32 %s44, 1
        %s582 = scalar_lea.sflag [#allocation3], %s581
        %s583 = sand.u32 %s44, 1
        %s584 = smul.addr %s583, 32
        %s585 = scalar_lea.vmem [#allocation2], %s584
        %p586 = pneg %p57
        %p587 = pneg %p54
        %p588 = pneg %p78
        %p589 = pneg %p75
        %p590 = pneg %p99
        %p591 = pneg %p96
        %p592 = pneg %p120
        %p593 = pneg %p117
        %p594 = pneg %p141
        %p595 = pneg %p138
        %p596 = pneg %p162
        %p597 = pneg %p159
        %p598 = pneg %p183
        %p599 = pneg %p180
        %p600 = pneg %p204
        %p601 = pneg %p201
        %p602 = pneg %p225
        %p603 = pneg %p222
        %p604 = pneg %p246
        %p605 = pneg %p243
        %p606 = pneg %p267
        %p607 = pneg %p264
        %p608 = pneg %p288
        %p609 = pneg %p285
        %p610 = pneg %p309
        %p611 = pneg %p306
        %p612 = pneg %p335
        %p613 = pneg %p332
        %s614 = sand.u32 %s322, 1
        %s615 = scalar_lea.sflag [#allocation4], %s614
        %s616 = sand.u32 %s322, 1
        %s617 = smul.addr %s616, 32
        %s618 = scalar_lea.vmem [#allocation23], %s617
        %s619 = smul.u32 4, %s36
        %s620 = smul.u32 4, %s36
        %v621 = vld [vmem:[%s528] sm:$0xff]
        %v622 = vld [vmem:[%s528 + $0x8] sm:$0xff]
        %v623 = vld [vmem:[%s528 + $0x10] sm:$0xff]
        %v624 = vld [vmem:[%s528 + $0x18] sm:$0xff]
        %v625 = vld [vmem:[#allocation17] sm:$0x1]
        %v626 = vld [vmem:[#allocation19] sm:$0x1]
        %627 = vadd.xlane.f32.xlu0 %v621
        %v628 = vpop.xlane.xlu0 %627
        %629 = vadd.xlane.f32.xlu0 %v622
        %v630 = vpop.xlane.xlu0 %629
        %631 = vadd.xlane.f32.xlu0 %v623
        %v632 = vpop.xlane.xlu0 %631
        %633 = vadd.xlane.f32.xlu0 %v624
        %v634 = vpop.xlane.xlu0 %633
        %v635 = vrcp.pop 128.0
        %v636 = vmul.f32 %v628, %v635
        %v637 = vmul.f32 %v630, %v635
        %v638 = vmul.f32 %v632, %v635
        %v639 = vmul.f32 %v634, %v635
        %v640 = vsub.f32 %v621, %v636
        %v641 = vsub.f32 %v622, %v637
        %v642 = vsub.f32 %v623, %v638
        %v643 = vsub.f32 %v624, %v639
        %v644 = vmul.f32 %v640, %v640
        %v645 = vmul.f32 %v641, %v641
        %v646 = vmul.f32 %v642, %v642
        %v647 = vmul.f32 %v643, %v643
        %648 = vadd.xlane.f32.xlu0 %v644
        %v649 = vpop.xlane.xlu0 %648
        %650 = vadd.xlane.f32.xlu0 %v645
        %v651 = vpop.xlane.xlu0 %650
        %652 = vadd.xlane.f32.xlu0 %v646
        %v653 = vpop.xlane.xlu0 %652
        %654 = vadd.xlane.f32.xlu0 %v647
        %v655 = vpop.xlane.xlu0 %654
        %v656 = vmul.f32 %v649, %v635
        %v657 = vmul.f32 %v651, %v635
        %v658 = vmul.f32 %v653, %v635
        %v659 = vmul.f32 %v655, %v635
        %v660 = vadd.f32 %v656, 1e-05
        %v661 = vadd.f32 %v657, 1e-05
        %v662 = vadd.f32 %v658, 1e-05
        %v663 = vadd.f32 %v659, 1e-05
        %v664 = vrsqrt.pop %v660
        %v665 = vrsqrt.pop %v661
        %v666 = vrsqrt.pop %v662
        %v667 = vrsqrt.pop %v663
        %v668 = vmul.f32 %v640, %v664
        %v669 = vmul.f32 %v641, %v665
        %v670 = vmul.f32 %v642, %v666
        %v671 = vmul.f32 %v643, %v667
        %v673 = vlaneseq
        %v674 = vshrl.u32 %v673, 7
        %v675 = vsub.s32 0, %v674
        %v676 = vrot.slane %v625, %v675
        %v678 = vmul.f32 %v668, %v676
        %v679 = vmul.f32 %v669, %v676
        %v680 = vmul.f32 %v670, %v676
        %v681 = vmul.f32 %v671, %v676
        %v683 = vlaneseq
        %v684 = vshrl.u32 %v683, 7
        %v685 = vsub.s32 0, %v684
        %v686 = vrot.slane %v626, %v685
        %v688 = vadd.f32 %v678, %v686
        %v689 = vadd.f32 %v679, %v686
        %v690 = vadd.f32 %v680, %v686
        %v691 = vadd.f32 %v681, %v686
        %v692 = vld [vmem:[#allocation7] sm:$0xff]
        %v693 = vld [vmem:[#allocation7 + $0x8] sm:$0xff]
        %v694 = vld [vmem:[#allocation7 + $0x10] sm:$0xff]
        %v695 = vld [vmem:[#allocation7 + $0x18] sm:$0xff]
        %v696 = vld [vmem:[#allocation7 + $0x20] sm:$0xff]
        %v697 = vld [vmem:[#allocation7 + $0x28] sm:$0xff]
        %v698 = vld [vmem:[#allocation7 + $0x30] sm:$0xff]
        %v699 = vld [vmem:[#allocation7 + $0x38] sm:$0xff]
        %v700 = vld [vmem:[#allocation7 + $0x40] sm:$0xff]
        %v701 = vld [vmem:[#allocation7 + $0x48] sm:$0xff]
        %v702 = vld [vmem:[#allocation7 + $0x50] sm:$0xff]
        %v703 = vld [vmem:[#allocation7 + $0x58] sm:$0xff]
        %v704 = vld [vmem:[#allocation7 + $0x60] sm:$0xff]
        %v705 = vld [vmem:[#allocation7 + $0x68] sm:$0xff]
        %v706 = vld [vmem:[#allocation7 + $0x70] sm:$0xff]
        %v707 = vld [vmem:[#allocation7 + $0x78] sm:$0xff]
        %v708 = vld [vmem:[#allocation7 + $0x80] sm:$0xff]
        %v709 = vld [vmem:[#allocation7 + $0x88] sm:$0xff]
        %v710 = vld [vmem:[#allocation7 + $0x90] sm:$0xff]
        %v711 = vld [vmem:[#allocation7 + $0x98] sm:$0xff]
        %v712 = vld [vmem:[#allocation7 + $0xa0] sm:$0xff]
        %v713 = vld [vmem:[#allocation7 + $0xa8] sm:$0xff]
        %v714 = vld [vmem:[#allocation7 + $0xb0] sm:$0xff]
        %v715 = vld [vmem:[#allocation7 + $0xb8] sm:$0xff]
        %v716 = vld [vmem:[#allocation7 + $0xc0] sm:$0xff]
        %v717 = vld [vmem:[#allocation7 + $0xc8] sm:$0xff]
        %v718 = vld [vmem:[#allocation7 + $0xd0] sm:$0xff]
        %v719 = vld [vmem:[#allocation7 + $0xd8] sm:$0xff]
        %v720 = vld [vmem:[#allocation7 + $0xe0] sm:$0xff]
        %v721 = vld [vmem:[#allocation7 + $0xe8] sm:$0xff]
        %v722 = vld [vmem:[#allocation7 + $0xf0] sm:$0xff]
        %v723 = vld [vmem:[#allocation7 + $0xf8] sm:$0xff]
        %v724 = vld [vmem:[#allocation7 + $0x100] sm:$0xff]
        %v725 = vld [vmem:[#allocation7 + $0x108] sm:$0xff]
        %v726 = vld [vmem:[#allocation7 + $0x110] sm:$0xff]
        %v727 = vld [vmem:[#allocation7 + $0x118] sm:$0xff]
        %v728 = vld [vmem:[#allocation7 + $0x120] sm:$0xff]
        %v729 = vld [vmem:[#allocation7 + $0x128] sm:$0xff]
        %v730 = vld [vmem:[#allocation7 + $0x130] sm:$0xff]
        %v731 = vld [vmem:[#allocation7 + $0x138] sm:$0xff]
        %v732 = vld [vmem:[#allocation7 + $0x140] sm:$0xff]
        %v733 = vld [vmem:[#allocation7 + $0x148] sm:$0xff]
        %v734 = vld [vmem:[#allocation7 + $0x150] sm:$0xff]
        %v735 = vld [vmem:[#allocation7 + $0x158] sm:$0xff]
        %v736 = vld [vmem:[#allocation7 + $0x160] sm:$0xff]
        %v737 = vld [vmem:[#allocation7 + $0x168] sm:$0xff]
        %v738 = vld [vmem:[#allocation7 + $0x170] sm:$0xff]
        %v739 = vld [vmem:[#allocation7 + $0x178] sm:$0xff]
        %740 = vmatprep.subr.mxu0 %v693
        %741 = vmatpush1.msra.mxu0 %v692
        %742 = vmatprep.subr.mxu0 %v696
        %743 = vmatpush1.msra.mxu0 %v695
        %744 = vmatprep.subr.mxu0 %v699
        %745 = vmatpush1.msra.mxu0 %v698
        %746 = vmatprep.subr.mxu0 %v702
        %747 = vmatpush1.msra.mxu0 %v701
        %748 = vmatprep.subr.mxu0 %v705
        %749 = vmatpush1.msra.mxu0 %v704
        %750 = vmatprep.subr.mxu0 %v708
        %751 = vmatpush1.msra.mxu0 %v707
        %752 = vmatprep.subr.mxu0 %v711
        %753 = vmatpush1.msra.mxu0 %v710
        %754 = vmatprep.subr.mxu0 %v714
        %755 = vmatpush1.msra.mxu0 %v713
        %756 = vmatprep.subr.mxu0 %v717
        %757 = vmatpush1.msra.mxu0 %v716
        %758 = vmatprep.subr.mxu0 %v720
        %759 = vmatpush1.msra.mxu0 %v719
        %760 = vmatprep.subr.mxu0 %v723
        %761 = vmatpush1.msra.mxu0 %v722
        %762 = vmatprep.subr.mxu0 %v726
        %763 = vmatpush1.msra.mxu0 %v725
        %764 = vmatprep.subr.mxu0 %v729
        %765 = vmatpush1.msra.mxu0 %v728
        %766 = vmatprep.subr.mxu0 %v732
        %767 = vmatpush1.msra.mxu0 %v731
        %768 = vmatprep.subr.mxu0 %v735
        %769 = vmatpush1.msra.mxu0 %v734
        %770 = vmatprep.subr.mxu0 %v738
        %771 = vmatpush1.msra.mxu0 %v737
        %772 = vmatprep.subr.mxu0 0.0
        %773 = vmatpush1.msra.mxu0 0.0
        %774 = vmatprep.subr.mxu0 0.0
        %775 = vmatpush1.msra.mxu0 0.0
        %776 = vmatprep.subr.mxu0 0.0
        %777 = vmatpush1.msra.mxu0 0.0
        %778 = vmatprep.subr.mxu0 0.0
        %779 = vmatpush1.msra.mxu0 0.0
        %780 = vmatprep.subr.mxu0 0.0
        %781 = vmatpush1.msra.mxu0 0.0
        %782 = vmatprep.subr.mxu0 0.0
        %783 = vmatpush1.msra.mxu0 0.0
        %784 = vmatprep.subr.mxu0 0.0
        %785 = vmatpush1.msra.mxu0 0.0
        %786 = vmatprep.subr.mxu0 0.0
        %787 = vmatpush1.msra.mxu0 0.0
        %788 = vmatprep.subr.mxu0 0.0
        %789 = vmatpush1.msra.mxu0 0.0
        %790 = vmatprep.subr.mxu0 0.0
        %791 = vmatpush1.msra.mxu0 0.0
        %792 = vmatprep.subr.mxu0 0.0
        %793 = vmatpush1.msra.mxu0 0.0
        %794 = vmatprep.subr.mxu0 0.0
        %795 = vmatpush1.msra.mxu0 0.0
        %796 = vmatprep.subr.mxu0 0.0
        %797 = vmatpush1.msra.mxu0 0.0
        %798 = vmatprep.subr.mxu0 0.0
        %799 = vmatpush1.msra.mxu0 0.0
        %800 = vmatprep.subr.mxu0 0.0
        %801 = vmatpush1.msra.mxu0 0.0
        %802 = vmatprep.subr.mxu0 0.0
        %803 = vmatpush1.msra.mxu0 0.0
        %804 = vmatprep.mubr.f32.mxu0 0.0
        %805 = vmatmul.mubr.f32.gmra.mrb[0].mxu0 %v688
        %v806 = vpop.f32.mrb[0].mxu0
        %v807 = vadd.f32 0.0, %v806
        %v808 = vpop.f32.mrb[0].mxu0
        %v809 = vadd.f32 0.0, %v808
        %810 = vmatprep.mubr.f32.mxu0 0.0
        %811 = vmatmul.mubr.f32.gmra.mrb[0].mxu0 %v689
        %v812 = vpop.f32.mrb[0].mxu0
        %v813 = vadd.f32 0.0, %v812
        %v814 = vpop.f32.mrb[0].mxu0
        %v815 = vadd.f32 0.0, %v814
        %816 = vmatprep.mubr.f32.mxu0 0.0
        %817 = vmatmul.mubr.f32.gmra.mrb[0].mxu0 %v690
        %v818 = vpop.f32.mrb[0].mxu0
        %v819 = vadd.f32 0.0, %v818
        %v820 = vpop.f32.mrb[0].mxu0
        %v821 = vadd.f32 0.0, %v820
        %822 = vmatprep.mubr.f32.mxu0 0.0
        %823 = vmatmul.mubr.f32.gmra.mrb[0].mxu0 %v691
        %v824 = vpop.f32.mrb[0].mxu0
        %v825 = vadd.f32 0.0, %v824
        %v826 = vpop.f32.mrb[0].mxu0
        %v827 = vadd.f32 0.0, %v826
        %828 = vdwg.mxu0
        %829 = vmatprep.subr.mxu0 0.0
        %830 = vmatpush1.msra.mxu0 %v694
        %831 = vmatprep.subr.mxu0 0.0
        %832 = vmatpush1.msra.mxu0 %v697
        %833 = vmatprep.subr.mxu0 0.0
        %834 = vmatpush1.msra.mxu0 %v700
        %835 = vmatprep.subr.mxu0 0.0
        %836 = vmatpush1.msra.mxu0 %v703
        %837 = vmatprep.subr.mxu0 0.0
        %838 = vmatpush1.msra.mxu0 %v706
        %839 = vmatprep.subr.mxu0 0.0
        %840 = vmatpush1.msra.mxu0 %v709
        %841 = vmatprep.subr.mxu0 0.0
        %842 = vmatpush1.msra.mxu0 %v712
        %843 = vmatprep.subr.mxu0 0.0
        %844 = vmatpush1.msra.mxu0 %v715
        %845 = vmatprep.subr.mxu0 0.0
        %846 = vmatpush1.msra.mxu0 %v718
        %847 = vmatprep.subr.mxu0 0.0
        %848 = vmatpush1.msra.mxu0 %v721
        %849 = vmatprep.subr.mxu0 0.0
        %850 = vmatpush1.msra.mxu0 %v724
        %851 = vmatprep.subr.mxu0 0.0
        %852 = vmatpush1.msra.mxu0 %v727
        %853 = vmatprep.subr.mxu0 0.0
        %854 = vmatpush1.msra.mxu0 %v730
        %855 = vmatprep.subr.mxu0 0.0
        %856 = vmatpush1.msra.mxu0 %v733
        %857 = vmatprep.subr.mxu0 0.0
        %858 = vmatpush1.msra.mxu0 %v736
        %859 = vmatprep.subr.mxu0 0.0
        %860 = vmatpush1.msra.mxu0 %v739
        %861 = vmatprep.subr.mxu0 0.0
        %862 = vmatpush1.msra.mxu0 0.0
        %863 = vmatprep.subr.mxu0 0.0
        %864 = vmatpush1.msra.mxu0 0.0
        %865 = vmatprep.subr.mxu0 0.0
        %866 = vmatpush1.msra.mxu0 0.0
        %867 = vmatprep.subr.mxu0 0.0
        %868 = vmatpush1.msra.mxu0 0.0
        %869 = vmatprep.subr.mxu0 0.0
        %870 = vmatpush1.msra.mxu0 0.0
        %871 = vmatprep.subr.mxu0 0.0
        %872 = vmatpush1.msra.mxu0 0.0
        %873 = vmatprep.subr.mxu0 0.0
        %874 = vmatpush1.msra.mxu0 0.0
        %875 = vmatprep.subr.mxu0 0.0
        %876 = vmatpush1.msra.mxu0 0.0
        %877 = vmatprep.subr.mxu0 0.0
        %878 = vmatpush1.msra.mxu0 0.0
        %879 = vmatprep.subr.mxu0 0.0
        %880 = vmatpush1.msra.mxu0 0.0
        %881 = vmatprep.subr.mxu0 0.0
        %882 = vmatpush1.msra.mxu0 0.0
        %883 = vmatprep.subr.mxu0 0.0
        %884 = vmatpush1.msra.mxu0 0.0
        %885 = vmatprep.subr.mxu0 0.0
        %886 = vmatpush1.msra.mxu0 0.0
        %887 = vmatprep.subr.mxu0 0.0
        %888 = vmatpush1.msra.mxu0 0.0
        %889 = vmatprep.subr.mxu0 0.0
        %890 = vmatpush1.msra.mxu0 0.0
        %891 = vmatprep.subr.mxu0 0.0
        %892 = vmatpush1.msra.mxu0 0.0
        %893 = vmatprep.mubr.f32.mxu0 0.0
        %894 = vmatmul.mubr.f32.gmra.mrb[0].mxu0 %v688
        %v895 = vpop.f32.mrb[0].mxu0
        %v896 = vadd.f32 0.0, %v895
        %v897 = vpop.f32.mrb[0].mxu0
        %898 = vmatprep.mubr.f32.mxu0 0.0
        %899 = vmatmul.mubr.f32.gmra.mrb[0].mxu0 %v689
        %v900 = vpop.f32.mrb[0].mxu0
        %v901 = vadd.f32 0.0, %v900
        %v902 = vpop.f32.mrb[0].mxu0
        %903 = vmatprep.mubr.f32.mxu0 0.0
        %904 = vmatmul.mubr.f32.gmra.mrb[0].mxu0 %v690
        %v905 = vpop.f32.mrb[0].mxu0
        %v906 = vadd.f32 0.0, %v905
        %v907 = vpop.f32.mrb[0].mxu0
        %908 = vmatprep.mubr.f32.mxu0 0.0
        %909 = vmatmul.mubr.f32.gmra.mrb[0].mxu0 %v691
        %v910 = vpop.f32.mrb[0].mxu0
        %v911 = vadd.f32 0.0, %v910
        %v912 = vpop.f32.mrb[0].mxu0
        %913 = vdwg.mxu0
        %918 = vrot.lane.b32.xlu0 %v807, 112
        %v919 = vpop.permute.xlu0 %918
        %920 = vrot.lane.b32.xlu0 %v813, 112
        %v921 = vpop.permute.xlu0 %920
        %922 = vrot.lane.b32.xlu0 %v819, 112
        %v923 = vpop.permute.xlu0 %922
        %924 = vrot.lane.b32.xlu0 %v825, 112
        %v925 = vpop.permute.xlu0 %924
        %930 = vrot.lane.b32.xlu0 %v807, 96
        %v931 = vpop.permute.xlu0 %930
        %932 = vrot.lane.b32.xlu0 %v813, 96
        %v933 = vpop.permute.xlu0 %932
        %934 = vrot.lane.b32.xlu0 %v819, 96
        %v935 = vpop.permute.xlu0 %934
        %936 = vrot.lane.b32.xlu0 %v825, 96
        %v937 = vpop.permute.xlu0 %936
        %942 = vrot.lane.b32.xlu0 %v807, 80
        %v943 = vpop.permute.xlu0 %942
        %944 = vrot.lane.b32.xlu0 %v813, 80
        %v945 = vpop.permute.xlu0 %944
        %946 = vrot.lane.b32.xlu0 %v819, 80
        %v947 = vpop.permute.xlu0 %946
        %948 = vrot.lane.b32.xlu0 %v825, 80
        %v949 = vpop.permute.xlu0 %948
        %954 = vrot.lane.b32.xlu0 %v807, 64
        %v955 = vpop.permute.xlu0 %954
        %956 = vrot.lane.b32.xlu0 %v813, 64
        %v957 = vpop.permute.xlu0 %956
        %958 = vrot.lane.b32.xlu0 %v819, 64
        %v959 = vpop.permute.xlu0 %958
        %960 = vrot.lane.b32.xlu0 %v825, 64
        %v961 = vpop.permute.xlu0 %960
        %966 = vrot.lane.b32.xlu0 %v807, 48
        %v967 = vpop.permute.xlu0 %966
        %968 = vrot.lane.b32.xlu0 %v813, 48
        %v969 = vpop.permute.xlu0 %968
        %970 = vrot.lane.b32.xlu0 %v819, 48
        %v971 = vpop.permute.xlu0 %970
        %972 = vrot.lane.b32.xlu0 %v825, 48
        %v973 = vpop.permute.xlu0 %972
        %978 = vrot.lane.b32.xlu0 %v807, 32
        %v979 = vpop.permute.xlu0 %978
        %980 = vrot.lane.b32.xlu0 %v813, 32
        %v981 = vpop.permute.xlu0 %980
        %982 = vrot.lane.b32.xlu0 %v819, 32
        %v983 = vpop.permute.xlu0 %982
        %984 = vrot.lane.b32.xlu0 %v825, 32
        %v985 = vpop.permute.xlu0 %984
        %990 = vrot.lane.b32.xlu0 %v807, 16
        %v991 = vpop.permute.xlu0 %990
        %992 = vrot.lane.b32.xlu0 %v813, 16
        %v993 = vpop.permute.xlu0 %992
        %994 = vrot.lane.b32.xlu0 %v819, 16
        %v995 = vpop.permute.xlu0 %994
        %996 = vrot.lane.b32.xlu0 %v825, 16
        %v997 = vpop.permute.xlu0 %996
        %v1002 = vcombine.low %v807, %v931
        %v1003 = vcombine.high %v807, %v931
        %v1005 = vunpack.c.l.s4 1983009808
        %v1006 = vunpack.c.0.s8 %v1005
        %v1007 = vlaneseq
        %v1008 = vshrl.u32 %v1007, 7
        %v1009 = vsub.s32 %v1006, %v1008
        %v1010 = vrot.slane %v1002, %v1009
        %v1012 = vunpack.c.l.s4 1983009808
        %v1013 = vunpack.c.0.s8 %v1012
        %v1014 = vlaneseq
        %v1015 = vshrl.u32 %v1014, 7
        %v1016 = vsub.s32 %v1013, %v1015
        %v1017 = vrot.slane %v1003, %v1016
        %v1018 = vcombine.low %v919, %v943
        %v1019 = vcombine.high %v919, %v943
        %v1021 = vunpack.c.l.s4 1983009808
        %v1022 = vunpack.c.0.s8 %v1021
        %v1023 = vlaneseq
        %v1024 = vshrl.u32 %v1023, 7
        %v1025 = vsub.s32 %v1022, %v1024
        %v1026 = vrot.slane %v1018, %v1025
        %v1028 = vunpack.c.l.s4 1983009808
        %v1029 = vunpack.c.0.s8 %v1028
        %v1030 = vlaneseq
        %v1031 = vshrl.u32 %v1030, 7
        %v1032 = vsub.s32 %v1029, %v1031
        %v1033 = vrot.slane %v1019, %v1032
        %v1034 = vcombine.low %v955, %v979
        %v1035 = vcombine.high %v955, %v979
        %v1037 = vunpack.c.l.s4 1983009808
        %v1038 = vunpack.c.0.s8 %v1037
        %v1039 = vlaneseq
        %v1040 = vshrl.u32 %v1039, 7
        %v1041 = vsub.s32 %v1038, %v1040
        %v1042 = vrot.slane %v1034, %v1041
        %v1044 = vunpack.c.l.s4 1983009808
        %v1045 = vunpack.c.0.s8 %v1044
        %v1046 = vlaneseq
        %v1047 = vshrl.u32 %v1046, 7
        %v1048 = vsub.s32 %v1045, %v1047
        %v1049 = vrot.slane %v1035, %v1048
        %v1050 = vcombine.low %v967, %v991
        %v1051 = vcombine.high %v967, %v991
        %v1053 = vunpack.c.l.s4 1983009808
        %v1054 = vunpack.c.0.s8 %v1053
        %v1055 = vlaneseq
        %v1056 = vshrl.u32 %v1055, 7
        %v1057 = vsub.s32 %v1054, %v1056
        %v1058 = vrot.slane %v1050, %v1057
        %v1060 = vunpack.c.l.s4 1983009808
        %v1061 = vunpack.c.0.s8 %v1060
        %v1062 = vlaneseq
        %v1063 = vshrl.u32 %v1062, 7
        %v1064 = vsub.s32 %v1061, %v1063
        %v1065 = vrot.slane %v1051, %v1064
        %v1066 = vcombine.low %v1010, %v1026
        %v1067 = vcombine.high %v1010, %v1026
        %v1069 = vunpack.c.l.s4 1934713408
        %v1070 = vunpack.c.0.s8 %v1069
        %v1071 = vlaneseq
        %v1072 = vshrl.u32 %v1071, 7
        %v1073 = vsub.s32 %v1070, %v1072
        %v1074 = vrot.slane %v1066, %v1073
        %v1076 = vunpack.c.l.s4 1934713408
        %v1077 = vunpack.c.0.s8 %v1076
        %v1078 = vlaneseq
        %v1079 = vshrl.u32 %v1078, 7
        %v1080 = vsub.s32 %v1077, %v1079
        %v1081 = vrot.slane %v1067, %v1080
        %v1082 = vcombine.low %v1017, %v1033
        %v1083 = vcombine.high %v1017, %v1033
        %v1085 = vunpack.c.l.s4 1934713408
        %v1086 = vunpack.c.0.s8 %v1085
        %v1087 = vlaneseq
        %v1088 = vshrl.u32 %v1087, 7
        %v1089 = vsub.s32 %v1086, %v1088
        %v1090 = vrot.slane %v1082, %v1089
        %v1092 = vunpack.c.l.s4 1934713408
        %v1093 = vunpack.c.0.s8 %v1092
        %v1094 = vlaneseq
        %v1095 = vshrl.u32 %v1094, 7
        %v1096 = vsub.s32 %v1093, %v1095
        %v1097 = vrot.slane %v1083, %v1096
        %v1098 = vcombine.low %v1042, %v1058
        %v1099 = vcombine.high %v1042, %v1058
        %v1101 = vunpack.c.l.s4 1934713408
        %v1102 = vunpack.c.0.s8 %v1101
        %v1103 = vlaneseq
        %v1104 = vshrl.u32 %v1103, 7
        %v1105 = vsub.s32 %v1102, %v1104
        %v1106 = vrot.slane %v1098, %v1105
        %v1108 = vunpack.c.l.s4 1934713408
        %v1109 = vunpack.c.0.s8 %v1108
        %v1110 = vlaneseq
        %v1111 = vshrl.u32 %v1110, 7
        %v1112 = vsub.s32 %v1109, %v1111
        %v1113 = vrot.slane %v1099, %v1112
        %v1114 = vcombine.low %v1049, %v1065
        %v1115 = vcombine.high %v1049, %v1065
        %v1117 = vunpack.c.l.s4 1934713408
        %v1118 = vunpack.c.0.s8 %v1117
        %v1119 = vlaneseq
        %v1120 = vshrl.u32 %v1119, 7
        %v1121 = vsub.s32 %v1118, %v1120
        %v1122 = vrot.slane %v1114, %v1121
        %v1124 = vunpack.c.l.s4 1934713408
        %v1125 = vunpack.c.0.s8 %v1124
        %v1126 = vlaneseq
        %v1127 = vshrl.u32 %v1126, 7
        %v1128 = vsub.s32 %v1125, %v1127
        %v1129 = vrot.slane %v1115, %v1128
        %v1130 = vcombine.low %v1074, %v1106
        %v1131 = vcombine.high %v1074, %v1106
        %v1132 = vcombine.low %v1081, %v1113
        %v1133 = vcombine.high %v1081, %v1113
        %v1134 = vcombine.low %v1090, %v1122
        %v1135 = vcombine.high %v1090, %v1122
        %v1136 = vcombine.low %v1097, %v1129
        %v1137 = vcombine.high %v1097, %v1129
        %v1138 = vcombine.low %v813, %v933
        %v1139 = vcombine.high %v813, %v933
        %v1141 = vunpack.c.l.s4 1983009808
        %v1142 = vunpack.c.0.s8 %v1141
        %v1143 = vlaneseq
        %v1144 = vshrl.u32 %v1143, 7
        %v1145 = vsub.s32 %v1142, %v1144
        %v1146 = vrot.slane %v1138, %v1145
        %v1148 = vunpack.c.l.s4 1983009808
        %v1149 = vunpack.c.0.s8 %v1148
        %v1150 = vlaneseq
        %v1151 = vshrl.u32 %v1150, 7
        %v1152 = vsub.s32 %v1149, %v1151
        %v1153 = vrot.slane %v1139, %v1152
        %v1154 = vcombine.low %v921, %v945
        %v1155 = vcombine.high %v921, %v945
        %v1157 = vunpack.c.l.s4 1983009808
        %v1158 = vunpack.c.0.s8 %v1157
        %v1159 = vlaneseq
        %v1160 = vshrl.u32 %v1159, 7
        %v1161 = vsub.s32 %v1158, %v1160
        %v1162 = vrot.slane %v1154, %v1161
        %v1164 = vunpack.c.l.s4 1983009808
        %v1165 = vunpack.c.0.s8 %v1164
        %v1166 = vlaneseq
        %v1167 = vshrl.u32 %v1166, 7
        %v1168 = vsub.s32 %v1165, %v1167
        %v1169 = vrot.slane %v1155, %v1168
        %v1170 = vcombine.low %v957, %v981
        %v1171 = vcombine.high %v957, %v981
        %v1173 = vunpack.c.l.s4 1983009808
        %v1174 = vunpack.c.0.s8 %v1173
        %v1175 = vlaneseq
        %v1176 = vshrl.u32 %v1175, 7
        %v1177 = vsub.s32 %v1174, %v1176
        %v1178 = vrot.slane %v1170, %v1177
        %v1180 = vunpack.c.l.s4 1983009808
        %v1181 = vunpack.c.0.s8 %v1180
        %v1182 = vlaneseq
        %v1183 = vshrl.u32 %v1182, 7
        %v1184 = vsub.s32 %v1181, %v1183
        %v1185 = vrot.slane %v1171, %v1184
        %v1186 = vcombine.low %v969, %v993
        %v1187 = vcombine.high %v969, %v993
        %v1189 = vunpack.c.l.s4 1983009808
        %v1190 = vunpack.c.0.s8 %v1189
        %v1191 = vlaneseq
        %v1192 = vshrl.u32 %v1191, 7
        %v1193 = vsub.s32 %v1190, %v1192
        %v1194 = vrot.slane %v1186, %v1193
        %v1196 = vunpack.c.l.s4 1983009808
        %v1197 = vunpack.c.0.s8 %v1196
        %v1198 = vlaneseq
        %v1199 = vshrl.u32 %v1198, 7
        %v1200 = vsub.s32 %v1197, %v1199
        %v1201 = vrot.slane %v1187, %v1200
        %v1202 = vcombine.low %v1146, %v1162
        %v1203 = vcombine.high %v1146, %v1162
        %v1205 = vunpack.c.l.s4 1934713408
        %v1206 = vunpack.c.0.s8 %v1205
        %v1207 = vlaneseq
        %v1208 = vshrl.u32 %v1207, 7
        %v1209 = vsub.s32 %v1206, %v1208
        %v1210 = vrot.slane %v1202, %v1209
        %v1212 = vunpack.c.l.s4 1934713408
        %v1213 = vunpack.c.0.s8 %v1212
        %v1214 = vlaneseq
        %v1215 = vshrl.u32 %v1214, 7
        %v1216 = vsub.s32 %v1213, %v1215
        %v1217 = vrot.slane %v1203, %v1216
        %v1218 = vcombine.low %v1153, %v1169
        %v1219 = vcombine.high %v1153, %v1169
        %v1221 = vunpack.c.l.s4 1934713408
        %v1222 = vunpack.c.0.s8 %v1221
        %v1223 = vlaneseq
        %v1224 = vshrl.u32 %v1223, 7
        %v1225 = vsub.s32 %v1222, %v1224
        %v1226 = vrot.slane %v1218, %v1225
        %v1228 = vunpack.c.l.s4 1934713408
        %v1229 = vunpack.c.0.s8 %v1228
        %v1230 = vlaneseq
        %v1231 = vshrl.u32 %v1230, 7
        %v1232 = vsub.s32 %v1229, %v1231
        %v1233 = vrot.slane %v1219, %v1232
        %v1234 = vcombine.low %v1178, %v1194
        %v1235 = vcombine.high %v1178, %v1194
        %v1237 = vunpack.c.l.s4 1934713408
        %v1238 = vunpack.c.0.s8 %v1237
        %v1239 = vlaneseq
        %v1240 = vshrl.u32 %v1239, 7
        %v1241 = vsub.s32 %v1238, %v1240
        %v1242 = vrot.slane %v1234, %v1241
        %v1244 = vunpack.c.l.s4 1934713408
        %v1245 = vunpack.c.0.s8 %v1244
        %v1246 = vlaneseq
        %v1247 = vshrl.u32 %v1246, 7
        %v1248 = vsub.s32 %v1245, %v1247
        %v1249 = vrot.slane %v1235, %v1248
        %v1250 = vcombine.low %v1185, %v1201
        %v1251 = vcombine.high %v1185, %v1201
        %v1253 = vunpack.c.l.s4 1934713408
        %v1254 = vunpack.c.0.s8 %v1253
        %v1255 = vlaneseq
        %v1256 = vshrl.u32 %v1255, 7
        %v1257 = vsub.s32 %v1254, %v1256
        %v1258 = vrot.slane %v1250, %v1257
        %v1260 = vunpack.c.l.s4 1934713408
        %v1261 = vunpack.c.0.s8 %v1260
        %v1262 = vlaneseq
        %v1263 = vshrl.u32 %v1262, 7
        %v1264 = vsub.s32 %v1261, %v1263
        %v1265 = vrot.slane %v1251, %v1264
        %v1266 = vcombine.low %v1210, %v1242
        %v1267 = vcombine.high %v1210, %v1242
        %v1268 = vcombine.low %v1217, %v1249
        %v1269 = vcombine.high %v1217, %v1249
        %v1270 = vcombine.low %v1226, %v1258
        %v1271 = vcombine.high %v1226, %v1258
        %v1272 = vcombine.low %v1233, %v1265
        %v1273 = vcombine.high %v1233, %v1265
        %v1274 = vcombine.low %v819, %v935
        %v1275 = vcombine.high %v819, %v935
        %v1277 = vunpack.c.l.s4 1983009808
        %v1278 = vunpack.c.0.s8 %v1277
        %v1279 = vlaneseq
        %v1280 = vshrl.u32 %v1279, 7
        %v1281 = vsub.s32 %v1278, %v1280
        %v1282 = vrot.slane %v1274, %v1281
        %v1284 = vunpack.c.l.s4 1983009808
        %v1285 = vunpack.c.0.s8 %v1284
        %v1286 = vlaneseq
        %v1287 = vshrl.u32 %v1286, 7
        %v1288 = vsub.s32 %v1285, %v1287
        %v1289 = vrot.slane %v1275, %v1288
        %v1290 = vcombine.low %v923, %v947
        %v1291 = vcombine.high %v923, %v947
        %v1293 = vunpack.c.l.s4 1983009808
        %v1294 = vunpack.c.0.s8 %v1293
        %v1295 = vlaneseq
        %v1296 = vshrl.u32 %v1295, 7
        %v1297 = vsub.s32 %v1294, %v1296
        %v1298 = vrot.slane %v1290, %v1297
        %v1300 = vunpack.c.l.s4 1983009808
        %v1301 = vunpack.c.0.s8 %v1300
        %v1302 = vlaneseq
        %v1303 = vshrl.u32 %v1302, 7
        %v1304 = vsub.s32 %v1301, %v1303
        %v1305 = vrot.slane %v1291, %v1304
        %v1306 = vcombine.low %v959, %v983
        %v1307 = vcombine.high %v959, %v983
        %v1309 = vunpack.c.l.s4 1983009808
        %v1310 = vunpack.c.0.s8 %v1309
        %v1311 = vlaneseq
        %v1312 = vshrl.u32 %v1311, 7
        %v1313 = vsub.s32 %v1310, %v1312
        %v1314 = vrot.slane %v1306, %v1313
        %v1316 = vunpack.c.l.s4 1983009808
        %v1317 = vunpack.c.0.s8 %v1316
        %v1318 = vlaneseq
        %v1319 = vshrl.u32 %v1318, 7
        %v1320 = vsub.s32 %v1317, %v1319
        %v1321 = vrot.slane %v1307, %v1320
        %v1322 = vcombine.low %v971, %v995
        %v1323 = vcombine.high %v971, %v995
        %v1325 = vunpack.c.l.s4 1983009808
        %v1326 = vunpack.c.0.s8 %v1325
        %v1327 = vlaneseq
        %v1328 = vshrl.u32 %v1327, 7
        %v1329 = vsub.s32 %v1326, %v1328
        %v1330 = vrot.slane %v1322, %v1329
        %v1332 = vunpack.c.l.s4 1983009808
        %v1333 = vunpack.c.0.s8 %v1332
        %v1334 = vlaneseq
        %v1335 = vshrl.u32 %v1334, 7
        %v1336 = vsub.s32 %v1333, %v1335
        %v1337 = vrot.slane %v1323, %v1336
        %v1338 = vcombine.low %v1282, %v1298
        %v1339 = vcombine.high %v1282, %v1298
        %v1341 = vunpack.c.l.s4 1934713408
        %v1342 = vunpack.c.0.s8 %v1341
        %v1343 = vlaneseq
        %v1344 = vshrl.u32 %v1343, 7
        %v1345 = vsub.s32 %v1342, %v1344
        %v1346 = vrot.slane %v1338, %v1345
        %v1348 = vunpack.c.l.s4 1934713408
        %v1349 = vunpack.c.0.s8 %v1348
        %v1350 = vlaneseq
        %v1351 = vshrl.u32 %v1350, 7
        %v1352 = vsub.s32 %v1349, %v1351
        %v1353 = vrot.slane %v1339, %v1352
        %v1354 = vcombine.low %v1289, %v1305
        %v1355 = vcombine.high %v1289, %v1305
        %v1357 = vunpack.c.l.s4 1934713408
        %v1358 = vunpack.c.0.s8 %v1357
        %v1359 = vlaneseq
        %v1360 = vshrl.u32 %v1359, 7
        %v1361 = vsub.s32 %v1358, %v1360
        %v1362 = vrot.slane %v1354, %v1361
        %v1364 = vunpack.c.l.s4 1934713408
        %v1365 = vunpack.c.0.s8 %v1364
        %v1366 = vlaneseq
        %v1367 = vshrl.u32 %v1366, 7
        %v1368 = vsub.s32 %v1365, %v1367
        %v1369 = vrot.slane %v1355, %v1368
        %v1370 = vcombine.low %v1314, %v1330
        %v1371 = vcombine.high %v1314, %v1330
        %v1373 = vunpack.c.l.s4 1934713408
        %v1374 = vunpack.c.0.s8 %v1373
        %v1375 = vlaneseq
        %v1376 = vshrl.u32 %v1375, 7
        %v1377 = vsub.s32 %v1374, %v1376
        %v1378 = vrot.slane %v1370, %v1377
        %v1380 = vunpack.c.l.s4 1934713408
        %v1381 = vunpack.c.0.s8 %v1380
        %v1382 = vlaneseq
        %v1383 = vshrl.u32 %v1382, 7
        %v1384 = vsub.s32 %v1381, %v1383
        %v1385 = vrot.slane %v1371, %v1384
        %v1386 = vcombine.low %v1321, %v1337
        %v1387 = vcombine.high %v1321, %v1337
        %v1389 = vunpack.c.l.s4 1934713408
        %v1390 = vunpack.c.0.s8 %v1389
        %v1391 = vlaneseq
        %v1392 = vshrl.u32 %v1391, 7
        %v1393 = vsub.s32 %v1390, %v1392
        %v1394 = vrot.slane %v1386, %v1393
        %v1396 = vunpack.c.l.s4 1934713408
        %v1397 = vunpack.c.0.s8 %v1396
        %v1398 = vlaneseq
        %v1399 = vshrl.u32 %v1398, 7
        %v1400 = vsub.s32 %v1397, %v1399
        %v1401 = vrot.slane %v1387, %v1400
        %v1402 = vcombine.low %v1346, %v1378
        %v1403 = vcombine.high %v1346, %v1378
        %v1404 = vcombine.low %v1353, %v1385
        %v1405 = vcombine.high %v1353, %v1385
        %v1406 = vcombine.low %v1362, %v1394
        %v1407 = vcombine.high %v1362, %v1394
        %v1408 = vcombine.low %v1369, %v1401
        %v1409 = vcombine.high %v1369, %v1401
        %v1410 = vcombine.low %v825, %v937
        %v1411 = vcombine.high %v825, %v937
        %v1413 = vunpack.c.l.s4 1983009808
        %v1414 = vunpack.c.0.s8 %v1413
        %v1415 = vlaneseq
        %v1416 = vshrl.u32 %v1415, 7
        %v1417 = vsub.s32 %v1414, %v1416
        %v1418 = vrot.slane %v1410, %v1417
        %v1420 = vunpack.c.l.s4 1983009808
        %v1421 = vunpack.c.0.s8 %v1420
        %v1422 = vlaneseq
        %v1423 = vshrl.u32 %v1422, 7
        %v1424 = vsub.s32 %v1421, %v1423
        %v1425 = vrot.slane %v1411, %v1424
        %v1426 = vcombine.low %v925, %v949
        %v1427 = vcombine.high %v925, %v949
        %v1429 = vunpack.c.l.s4 1983009808
        %v1430 = vunpack.c.0.s8 %v1429
        %v1431 = vlaneseq
        %v1432 = vshrl.u32 %v1431, 7
        %v1433 = vsub.s32 %v1430, %v1432
        %v1434 = vrot.slane %v1426, %v1433
        %v1436 = vunpack.c.l.s4 1983009808
        %v1437 = vunpack.c.0.s8 %v1436
        %v1438 = vlaneseq
        %v1439 = vshrl.u32 %v1438, 7
        %v1440 = vsub.s32 %v1437, %v1439
        %v1441 = vrot.slane %v1427, %v1440
        %v1442 = vcombine.low %v961, %v985
        %v1443 = vcombine.high %v961, %v985
        %v1445 = vunpack.c.l.s4 1983009808
        %v1446 = vunpack.c.0.s8 %v1445
        %v1447 = vlaneseq
        %v1448 = vshrl.u32 %v1447, 7
        %v1449 = vsub.s32 %v1446, %v1448
        %v1450 = vrot.slane %v1442, %v1449
        %v1452 = vunpack.c.l.s4 1983009808
        %v1453 = vunpack.c.0.s8 %v1452
        %v1454 = vlaneseq
        %v1455 = vshrl.u32 %v1454, 7
        %v1456 = vsub.s32 %v1453, %v1455
        %v1457 = vrot.slane %v1443, %v1456
        %v1458 = vcombine.low %v973, %v997
        %v1459 = vcombine.high %v973, %v997
        %v1461 = vunpack.c.l.s4 1983009808
        %v1462 = vunpack.c.0.s8 %v1461
        %v1463 = vlaneseq
        %v1464 = vshrl.u32 %v1463, 7
        %v1465 = vsub.s32 %v1462, %v1464
        %v1466 = vrot.slane %v1458, %v1465
        %v1468 = vunpack.c.l.s4 1983009808
        %v1469 = vunpack.c.0.s8 %v1468
        %v1470 = vlaneseq
        %v1471 = vshrl.u32 %v1470, 7
        %v1472 = vsub.s32 %v1469, %v1471
        %v1473 = vrot.slane %v1459, %v1472
        %v1474 = vcombine.low %v1418, %v1434
        %v1475 = vcombine.high %v1418, %v1434
        %v1477 = vunpack.c.l.s4 1934713408
        %v1478 = vunpack.c.0.s8 %v1477
        %v1479 = vlaneseq
        %v1480 = vshrl.u32 %v1479, 7
        %v1481 = vsub.s32 %v1478, %v1480
        %v1482 = vrot.slane %v1474, %v1481
        %v1484 = vunpack.c.l.s4 1934713408
        %v1485 = vunpack.c.0.s8 %v1484
        %v1486 = vlaneseq
        %v1487 = vshrl.u32 %v1486, 7
        %v1488 = vsub.s32 %v1485, %v1487
        %v1489 = vrot.slane %v1475, %v1488
        %v1490 = vcombine.low %v1425, %v1441
        %v1491 = vcombine.high %v1425, %v1441
        %v1493 = vunpack.c.l.s4 1934713408
        %v1494 = vunpack.c.0.s8 %v1493
        %v1495 = vlaneseq
        %v1496 = vshrl.u32 %v1495, 7
        %v1497 = vsub.s32 %v1494, %v1496
        %v1498 = vrot.slane %v1490, %v1497
        %v1500 = vunpack.c.l.s4 1934713408
        %v1501 = vunpack.c.0.s8 %v1500
        %v1502 = vlaneseq
        %v1503 = vshrl.u32 %v1502, 7
        %v1504 = vsub.s32 %v1501, %v1503
        %v1505 = vrot.slane %v1491, %v1504
        %v1506 = vcombine.low %v1450, %v1466
        %v1507 = vcombine.high %v1450, %v1466
        %v1509 = vunpack.c.l.s4 1934713408
        %v1510 = vunpack.c.0.s8 %v1509
        %v1511 = vlaneseq
        %v1512 = vshrl.u32 %v1511, 7
        %v1513 = vsub.s32 %v1510, %v1512
        %v1514 = vrot.slane %v1506, %v1513
        %v1516 = vunpack.c.l.s4 1934713408
        %v1517 = vunpack.c.0.s8 %v1516
        %v1518 = vlaneseq
        %v1519 = vshrl.u32 %v1518, 7
        %v1520 = vsub.s32 %v1517, %v1519
        %v1521 = vrot.slane %v1507, %v1520
        %v1522 = vcombine.low %v1457, %v1473
        %v1523 = vcombine.high %v1457, %v1473
        %v1525 = vunpack.c.l.s4 1934713408
        %v1526 = vunpack.c.0.s8 %v1525
        %v1527 = vlaneseq
        %v1528 = vshrl.u32 %v1527, 7
        %v1529 = vsub.s32 %v1526, %v1528
        %v1530 = vrot.slane %v1522, %v1529
        %v1532 = vunpack.c.l.s4 1934713408
        %v1533 = vunpack.c.0.s8 %v1532
        %v1534 = vlaneseq
        %v1535 = vshrl.u32 %v1534, 7
        %v1536 = vsub.s32 %v1533, %v1535
        %v1537 = vrot.slane %v1523, %v1536
        %v1538 = vcombine.low %v1482, %v1514
        %v1539 = vcombine.high %v1482, %v1514
        %v1540 = vcombine.low %v1489, %v1521
        %v1541 = vcombine.high %v1489, %v1521
        %v1542 = vcombine.low %v1498, %v1530
        %v1543 = vcombine.high %v1498, %v1530
        %v1544 = vcombine.low %v1505, %v1537
        %v1545 = vcombine.high %v1505, %v1537
        %1550 = vrot.lane.b32.xlu0 %v809, 112
        %v1551 = vpop.permute.xlu0 %1550
        %1552 = vrot.lane.b32.xlu0 %v815, 112
        %v1553 = vpop.permute.xlu0 %1552
        %1554 = vrot.lane.b32.xlu0 %v821, 112
        %v1555 = vpop.permute.xlu0 %1554
        %1556 = vrot.lane.b32.xlu0 %v827, 112
        %v1557 = vpop.permute.xlu0 %1556
        %1562 = vrot.lane.b32.xlu0 %v809, 96
        %v1563 = vpop.permute.xlu0 %1562
        %1564 = vrot.lane.b32.xlu0 %v815, 96
        %v1565 = vpop.permute.xlu0 %1564
        %1566 = vrot.lane.b32.xlu0 %v821, 96
        %v1567 = vpop.permute.xlu0 %1566
        %1568 = vrot.lane.b32.xlu0 %v827, 96
        %v1569 = vpop.permute.xlu0 %1568
        %1574 = vrot.lane.b32.xlu0 %v809, 80
        %v1575 = vpop.permute.xlu0 %1574
        %1576 = vrot.lane.b32.xlu0 %v815, 80
        %v1577 = vpop.permute.xlu0 %1576
        %1578 = vrot.lane.b32.xlu0 %v821, 80
        %v1579 = vpop.permute.xlu0 %1578
        %1580 = vrot.lane.b32.xlu0 %v827, 80
        %v1581 = vpop.permute.xlu0 %1580
        %1586 = vrot.lane.b32.xlu0 %v809, 64
        %v1587 = vpop.permute.xlu0 %1586
        %1588 = vrot.lane.b32.xlu0 %v815, 64
        %v1589 = vpop.permute.xlu0 %1588
        %1590 = vrot.lane.b32.xlu0 %v821, 64
        %v1591 = vpop.permute.xlu0 %1590
        %1592 = vrot.lane.b32.xlu0 %v827, 64
        %v1593 = vpop.permute.xlu0 %1592
        %1598 = vrot.lane.b32.xlu0 %v809, 48
        %v1599 = vpop.permute.xlu0 %1598
        %1600 = vrot.lane.b32.xlu0 %v815, 48
        %v1601 = vpop.permute.xlu0 %1600
        %1602 = vrot.lane.b32.xlu0 %v821, 48
        %v1603 = vpop.permute.xlu0 %1602
        %1604 = vrot.lane.b32.xlu0 %v827, 48
        %v1605 = vpop.permute.xlu0 %1604
        %1610 = vrot.lane.b32.xlu0 %v809, 32
        %v1611 = vpop.permute.xlu0 %1610
        %1612 = vrot.lane.b32.xlu0 %v815, 32
        %v1613 = vpop.permute.xlu0 %1612
        %1614 = vrot.lane.b32.xlu0 %v821, 32
        %v1615 = vpop.permute.xlu0 %1614
        %1616 = vrot.lane.b32.xlu0 %v827, 32
        %v1617 = vpop.permute.xlu0 %1616
        %1622 = vrot.lane.b32.xlu0 %v809, 16
        %v1623 = vpop.permute.xlu0 %1622
        %1624 = vrot.lane.b32.xlu0 %v815, 16
        %v1625 = vpop.permute.xlu0 %1624
        %1626 = vrot.lane.b32.xlu0 %v821, 16
        %v1627 = vpop.permute.xlu0 %1626
        %1628 = vrot.lane.b32.xlu0 %v827, 16
        %v1629 = vpop.permute.xlu0 %1628
        %v1634 = vcombine.low %v809, %v1563
        %v1635 = vcombine.high %v809, %v1563
        %v1637 = vunpack.c.l.s4 1983009808
        %v1638 = vunpack.c.0.s8 %v1637
        %v1639 = vlaneseq
        %v1640 = vshrl.u32 %v1639, 7
        %v1641 = vsub.s32 %v1638, %v1640
        %v1642 = vrot.slane %v1634, %v1641
        %v1644 = vunpack.c.l.s4 1983009808
        %v1645 = vunpack.c.0.s8 %v1644
        %v1646 = vlaneseq
        %v1647 = vshrl.u32 %v1646, 7
        %v1648 = vsub.s32 %v1645, %v1647
        %v1649 = vrot.slane %v1635, %v1648
        %v1650 = vcombine.low %v1551, %v1575
        %v1651 = vcombine.high %v1551, %v1575
        %v1653 = vunpack.c.l.s4 1983009808
        %v1654 = vunpack.c.0.s8 %v1653
        %v1655 = vlaneseq
        %v1656 = vshrl.u32 %v1655, 7
        %v1657 = vsub.s32 %v1654, %v1656
        %v1658 = vrot.slane %v1650, %v1657
        %v1660 = vunpack.c.l.s4 1983009808
        %v1661 = vunpack.c.0.s8 %v1660
        %v1662 = vlaneseq
        %v1663 = vshrl.u32 %v1662, 7
        %v1664 = vsub.s32 %v1661, %v1663
        %v1665 = vrot.slane %v1651, %v1664
        %v1666 = vcombine.low %v1587, %v1611
        %v1667 = vcombine.high %v1587, %v1611
        %v1669 = vunpack.c.l.s4 1983009808
        %v1670 = vunpack.c.0.s8 %v1669
        %v1671 = vlaneseq
        %v1672 = vshrl.u32 %v1671, 7
        %v1673 = vsub.s32 %v1670, %v1672
        %v1674 = vrot.slane %v1666, %v1673
        %v1676 = vunpack.c.l.s4 1983009808
        %v1677 = vunpack.c.0.s8 %v1676
        %v1678 = vlaneseq
        %v1679 = vshrl.u32 %v1678, 7
        %v1680 = vsub.s32 %v1677, %v1679
        %v1681 = vrot.slane %v1667, %v1680
        %v1682 = vcombine.low %v1599, %v1623
        %v1683 = vcombine.high %v1599, %v1623
        %v1685 = vunpack.c.l.s4 1983009808
        %v1686 = vunpack.c.0.s8 %v1685
        %v1687 = vlaneseq
        %v1688 = vshrl.u32 %v1687, 7
        %v1689 = vsub.s32 %v1686, %v1688
        %v1690 = vrot.slane %v1682, %v1689
        %v1692 = vunpack.c.l.s4 1983009808
        %v1693 = vunpack.c.0.s8 %v1692
        %v1694 = vlaneseq
        %v1695 = vshrl.u32 %v1694, 7
        %v1696 = vsub.s32 %v1693, %v1695
        %v1697 = vrot.slane %v1683, %v1696
        %v1698 = vcombine.low %v1642, %v1658
        %v1699 = vcombine.high %v1642, %v1658
        %v1701 = vunpack.c.l.s4 1934713408
        %v1702 = vunpack.c.0.s8 %v1701
        %v1703 = vlaneseq
        %v1704 = vshrl.u32 %v1703, 7
        %v1705 = vsub.s32 %v1702, %v1704
        %v1706 = vrot.slane %v1698, %v1705
        %v1708 = vunpack.c.l.s4 1934713408
        %v1709 = vunpack.c.0.s8 %v1708
        %v1710 = vlaneseq
        %v1711 = vshrl.u32 %v1710, 7
        %v1712 = vsub.s32 %v1709, %v1711
        %v1713 = vrot.slane %v1699, %v1712
        %v1714 = vcombine.low %v1649, %v1665
        %v1715 = vcombine.high %v1649, %v1665
        %v1717 = vunpack.c.l.s4 1934713408
        %v1718 = vunpack.c.0.s8 %v1717
        %v1719 = vlaneseq
        %v1720 = vshrl.u32 %v1719, 7
        %v1721 = vsub.s32 %v1718, %v1720
        %v1722 = vrot.slane %v1714, %v1721
        %v1724 = vunpack.c.l.s4 1934713408
        %v1725 = vunpack.c.0.s8 %v1724
        %v1726 = vlaneseq
        %v1727 = vshrl.u32 %v1726, 7
        %v1728 = vsub.s32 %v1725, %v1727
        %v1729 = vrot.slane %v1715, %v1728
        %v1730 = vcombine.low %v1674, %v1690
        %v1731 = vcombine.high %v1674, %v1690
        %v1733 = vunpack.c.l.s4 1934713408
        %v1734 = vunpack.c.0.s8 %v1733
        %v1735 = vlaneseq
        %v1736 = vshrl.u32 %v1735, 7
        %v1737 = vsub.s32 %v1734, %v1736
        %v1738 = vrot.slane %v1730, %v1737
        %v1740 = vunpack.c.l.s4 1934713408
        %v1741 = vunpack.c.0.s8 %v1740
        %v1742 = vlaneseq
        %v1743 = vshrl.u32 %v1742, 7
        %v1744 = vsub.s32 %v1741, %v1743
        %v1745 = vrot.slane %v1731, %v1744
        %v1746 = vcombine.low %v1681, %v1697
        %v1747 = vcombine.high %v1681, %v1697
        %v1749 = vunpack.c.l.s4 1934713408
        %v1750 = vunpack.c.0.s8 %v1749
        %v1751 = vlaneseq
        %v1752 = vshrl.u32 %v1751, 7
        %v1753 = vsub.s32 %v1750, %v1752
        %v1754 = vrot.slane %v1746, %v1753
        %v1756 = vunpack.c.l.s4 1934713408
        %v1757 = vunpack.c.0.s8 %v1756
        %v1758 = vlaneseq
        %v1759 = vshrl.u32 %v1758, 7
        %v1760 = vsub.s32 %v1757, %v1759
        %v1761 = vrot.slane %v1747, %v1760
        %v1762 = vcombine.low %v1706, %v1738
        %v1763 = vcombine.high %v1706, %v1738
        %v1764 = vcombine.low %v1713, %v1745
        %v1765 = vcombine.high %v1713, %v1745
        %v1766 = vcombine.low %v1722, %v1754
        %v1767 = vcombine.high %v1722, %v1754
        %v1768 = vcombine.low %v1729, %v1761
        %v1769 = vcombine.high %v1729, %v1761
        %v1770 = vcombine.low %v815, %v1565
        %v1771 = vcombine.high %v815, %v1565
        %v1773 = vunpack.c.l.s4 1983009808
        %v1774 = vunpack.c.0.s8 %v1773
        %v1775 = vlaneseq
        %v1776 = vshrl.u32 %v1775, 7
        %v1777 = vsub.s32 %v1774, %v1776
        %v1778 = vrot.slane %v1770, %v1777
        %v1780 = vunpack.c.l.s4 1983009808
        %v1781 = vunpack.c.0.s8 %v1780
        %v1782 = vlaneseq
        %v1783 = vshrl.u32 %v1782, 7
        %v1784 = vsub.s32 %v1781, %v1783
        %v1785 = vrot.slane %v1771, %v1784
        %v1786 = vcombine.low %v1553, %v1577
        %v1787 = vcombine.high %v1553, %v1577
        %v1789 = vunpack.c.l.s4 1983009808
        %v1790 = vunpack.c.0.s8 %v1789
        %v1791 = vlaneseq
        %v1792 = vshrl.u32 %v1791, 7
        %v1793 = vsub.s32 %v1790, %v1792
        %v1794 = vrot.slane %v1786, %v1793
        %v1796 = vunpack.c.l.s4 1983009808
        %v1797 = vunpack.c.0.s8 %v1796
        %v1798 = vlaneseq
        %v1799 = vshrl.u32 %v1798, 7
        %v1800 = vsub.s32 %v1797, %v1799
        %v1801 = vrot.slane %v1787, %v1800
        %v1802 = vcombine.low %v1589, %v1613
        %v1803 = vcombine.high %v1589, %v1613
        %v1805 = vunpack.c.l.s4 1983009808
        %v1806 = vunpack.c.0.s8 %v1805
        %v1807 = vlaneseq
        %v1808 = vshrl.u32 %v1807, 7
        %v1809 = vsub.s32 %v1806, %v1808
        %v1810 = vrot.slane %v1802, %v1809
        %v1812 = vunpack.c.l.s4 1983009808
        %v1813 = vunpack.c.0.s8 %v1812
        %v1814 = vlaneseq
        %v1815 = vshrl.u32 %v1814, 7
        %v1816 = vsub.s32 %v1813, %v1815
        %v1817 = vrot.slane %v1803, %v1816
        %v1818 = vcombine.low %v1601, %v1625
        %v1819 = vcombine.high %v1601, %v1625
        %v1821 = vunpack.c.l.s4 1983009808
        %v1822 = vunpack.c.0.s8 %v1821
        %v1823 = vlaneseq
        %v1824 = vshrl.u32 %v1823, 7
        %v1825 = vsub.s32 %v1822, %v1824
        %v1826 = vrot.slane %v1818, %v1825
        %v1828 = vunpack.c.l.s4 1983009808
        %v1829 = vunpack.c.0.s8 %v1828
        %v1830 = vlaneseq
        %v1831 = vshrl.u32 %v1830, 7
        %v1832 = vsub.s32 %v1829, %v1831
        %v1833 = vrot.slane %v1819, %v1832
        %v1834 = vcombine.low %v1778, %v1794
        %v1835 = vcombine.high %v1778, %v1794
        %v1837 = vunpack.c.l.s4 1934713408
        %v1838 = vunpack.c.0.s8 %v1837
        %v1839 = vlaneseq
        %v1840 = vshrl.u32 %v1839, 7
        %v1841 = vsub.s32 %v1838, %v1840
        %v1842 = vrot.slane %v1834, %v1841
        %v1844 = vunpack.c.l.s4 1934713408
        %v1845 = vunpack.c.0.s8 %v1844
        %v1846 = vlaneseq
        %v1847 = vshrl.u32 %v1846, 7
        %v1848 = vsub.s32 %v1845, %v1847
        %v1849 = vrot.slane %v1835, %v1848
        %v1850 = vcombine.low %v1785, %v1801
        %v1851 = vcombine.high %v1785, %v1801
        %v1853 = vunpack.c.l.s4 1934713408
        %v1854 = vunpack.c.0.s8 %v1853
        %v1855 = vlaneseq
        %v1856 = vshrl.u32 %v1855, 7
        %v1857 = vsub.s32 %v1854, %v1856
        %v1858 = vrot.slane %v1850, %v1857
        %v1860 = vunpack.c.l.s4 1934713408
        %v1861 = vunpack.c.0.s8 %v1860
        %v1862 = vlaneseq
        %v1863 = vshrl.u32 %v1862, 7
        %v1864 = vsub.s32 %v1861, %v1863
        %v1865 = vrot.slane %v1851, %v1864
        %v1866 = vcombine.low %v1810, %v1826
        %v1867 = vcombine.high %v1810, %v1826
        %v1869 = vunpack.c.l.s4 1934713408
        %v1870 = vunpack.c.0.s8 %v1869
        %v1871 = vlaneseq
        %v1872 = vshrl.u32 %v1871, 7
        %v1873 = vsub.s32 %v1870, %v1872
        %v1874 = vrot.slane %v1866, %v1873
        %v1876 = vunpack.c.l.s4 1934713408
        %v1877 = vunpack.c.0.s8 %v1876
        %v1878 = vlaneseq
        %v1879 = vshrl.u32 %v1878, 7
        %v1880 = vsub.s32 %v1877, %v1879
        %v1881 = vrot.slane %v1867, %v1880
        %v1882 = vcombine.low %v1817, %v1833
        %v1883 = vcombine.high %v1817, %v1833
        %v1885 = vunpack.c.l.s4 1934713408
        %v1886 = vunpack.c.0.s8 %v1885
        %v1887 = vlaneseq
        %v1888 = vshrl.u32 %v1887, 7
        %v1889 = vsub.s32 %v1886, %v1888
        %v1890 = vrot.slane %v1882, %v1889
        %v1892 = vunpack.c.l.s4 1934713408
        %v1893 = vunpack.c.0.s8 %v1892
        %v1894 = vlaneseq
        %v1895 = vshrl.u32 %v1894, 7
        %v1896 = vsub.s32 %v1893, %v1895
        %v1897 = vrot.slane %v1883, %v1896
        %v1898 = vcombine.low %v1842, %v1874
        %v1899 = vcombine.high %v1842, %v1874
        %v1900 = vcombine.low %v1849, %v1881
        %v1901 = vcombine.high %v1849, %v1881
        %v1902 = vcombine.low %v1858, %v1890
        %v1903 = vcombine.high %v1858, %v1890
        %v1904 = vcombine.low %v1865, %v1897
        %v1905 = vcombine.high %v1865, %v1897
        %v1906 = vcombine.low %v821, %v1567
        %v1907 = vcombine.high %v821, %v1567
        %v1909 = vunpack.c.l.s4 1983009808
        %v1910 = vunpack.c.0.s8 %v1909
        %v1911 = vlaneseq
        %v1912 = vshrl.u32 %v1911, 7
        %v1913 = vsub.s32 %v1910, %v1912
        %v1914 = vrot.slane %v1906, %v1913
        %v1916 = vunpack.c.l.s4 1983009808
        %v1917 = vunpack.c.0.s8 %v1916
        %v1918 = vlaneseq
        %v1919 = vshrl.u32 %v1918, 7
        %v1920 = vsub.s32 %v1917, %v1919
        %v1921 = vrot.slane %v1907, %v1920
        %v1922 = vcombine.low %v1555, %v1579
        %v1923 = vcombine.high %v1555, %v1579
        %v1925 = vunpack.c.l.s4 1983009808
        %v1926 = vunpack.c.0.s8 %v1925
        %v1927 = vlaneseq
        %v1928 = vshrl.u32 %v1927, 7
        %v1929 = vsub.s32 %v1926, %v1928
        %v1930 = vrot.slane %v1922, %v1929
        %v1932 = vunpack.c.l.s4 1983009808
        %v1933 = vunpack.c.0.s8 %v1932
        %v1934 = vlaneseq
        %v1935 = vshrl.u32 %v1934, 7
        %v1936 = vsub.s32 %v1933, %v1935
        %v1937 = vrot.slane %v1923, %v1936
        %v1938 = vcombine.low %v1591, %v1615
        %v1939 = vcombine.high %v1591, %v1615
        %v1941 = vunpack.c.l.s4 1983009808
        %v1942 = vunpack.c.0.s8 %v1941
        %v1943 = vlaneseq
        %v1944 = vshrl.u32 %v1943, 7
        %v1945 = vsub.s32 %v1942, %v1944
        %v1946 = vrot.slane %v1938, %v1945
        %v1948 = vunpack.c.l.s4 1983009808
        %v1949 = vunpack.c.0.s8 %v1948
        %v1950 = vlaneseq
        %v1951 = vshrl.u32 %v1950, 7
        %v1952 = vsub.s32 %v1949, %v1951
        %v1953 = vrot.slane %v1939, %v1952
        %v1954 = vcombine.low %v1603, %v1627
        %v1955 = vcombine.high %v1603, %v1627
        %v1957 = vunpack.c.l.s4 1983009808
        %v1958 = vunpack.c.0.s8 %v1957
        %v1959 = vlaneseq
        %v1960 = vshrl.u32 %v1959, 7
        %v1961 = vsub.s32 %v1958, %v1960
        %v1962 = vrot.slane %v1954, %v1961
        %v1964 = vunpack.c.l.s4 1983009808
        %v1965 = vunpack.c.0.s8 %v1964
        %v1966 = vlaneseq
        %v1967 = vshrl.u32 %v1966, 7
        %v1968 = vsub.s32 %v1965, %v1967
        %v1969 = vrot.slane %v1955, %v1968
        %v1970 = vcombine.low %v1914, %v1930
        %v1971 = vcombine.high %v1914, %v1930
        %v1973 = vunpack.c.l.s4 1934713408
        %v1974 = vunpack.c.0.s8 %v1973
        %v1975 = vlaneseq
        %v1976 = vshrl.u32 %v1975, 7
        %v1977 = vsub.s32 %v1974, %v1976
        %v1978 = vrot.slane %v1970, %v1977
        %v1980 = vunpack.c.l.s4 1934713408
        %v1981 = vunpack.c.0.s8 %v1980
        %v1982 = vlaneseq
        %v1983 = vshrl.u32 %v1982, 7
        %v1984 = vsub.s32 %v1981, %v1983
        %v1985 = vrot.slane %v1971, %v1984
        %v1986 = vcombine.low %v1921, %v1937
        %v1987 = vcombine.high %v1921, %v1937
        %v1989 = vunpack.c.l.s4 1934713408
        %v1990 = vunpack.c.0.s8 %v1989
        %v1991 = vlaneseq
        %v1992 = vshrl.u32 %v1991, 7
        %v1993 = vsub.s32 %v1990, %v1992
        %v1994 = vrot.slane %v1986, %v1993
        %v1996 = vunpack.c.l.s4 1934713408
        %v1997 = vunpack.c.0.s8 %v1996
        %v1998 = vlaneseq
        %v1999 = vshrl.u32 %v1998, 7
        %v2000 = vsub.s32 %v1997, %v1999
        %v2001 = vrot.slane %v1987, %v2000
        %v2002 = vcombine.low %v1946, %v1962
        %v2003 = vcombine.high %v1946, %v1962
        %v2005 = vunpack.c.l.s4 1934713408
        %v2006 = vunpack.c.0.s8 %v2005
        %v2007 = vlaneseq
        %v2008 = vshrl.u32 %v2007, 7
        %v2009 = vsub.s32 %v2006, %v2008
        %v2010 = vrot.slane %v2002, %v2009
        %v2012 = vunpack.c.l.s4 1934713408
        %v2013 = vunpack.c.0.s8 %v2012
        %v2014 = vlaneseq
        %v2015 = vshrl.u32 %v2014, 7
        %v2016 = vsub.s32 %v2013, %v2015
        %v2017 = vrot.slane %v2003, %v2016
        %v2018 = vcombine.low %v1953, %v1969
        %v2019 = vcombine.high %v1953, %v1969
        %v2021 = vunpack.c.l.s4 1934713408
        %v2022 = vunpack.c.0.s8 %v2021
        %v2023 = vlaneseq
        %v2024 = vshrl.u32 %v2023, 7
        %v2025 = vsub.s32 %v2022, %v2024
        %v2026 = vrot.slane %v2018, %v2025
        %v2028 = vunpack.c.l.s4 1934713408
        %v2029 = vunpack.c.0.s8 %v2028
        %v2030 = vlaneseq
        %v2031 = vshrl.u32 %v2030, 7
        %v2032 = vsub.s32 %v2029, %v2031
        %v2033 = vrot.slane %v2019, %v2032
        %v2034 = vcombine.low %v1978, %v2010
        %v2035 = vcombine.high %v1978, %v2010
        %v2036 = vcombine.low %v1985, %v2017
        %v2037 = vcombine.high %v1985, %v2017
        %v2038 = vcombine.low %v1994, %v2026
        %v2039 = vcombine.high %v1994, %v2026
        %v2040 = vcombine.low %v2001, %v2033
        %v2041 = vcombine.high %v2001, %v2033
        %v2042 = vcombine.low %v827, %v1569
        %v2043 = vcombine.high %v827, %v1569
        %v2045 = vunpack.c.l.s4 1983009808
        %v2046 = vunpack.c.0.s8 %v2045
        %v2047 = vlaneseq
        %v2048 = vshrl.u32 %v2047, 7
        %v2049 = vsub.s32 %v2046, %v2048
        %v2050 = vrot.slane %v2042, %v2049
        %v2052 = vunpack.c.l.s4 1983009808
        %v2053 = vunpack.c.0.s8 %v2052
        %v2054 = vlaneseq
        %v2055 = vshrl.u32 %v2054, 7
        %v2056 = vsub.s32 %v2053, %v2055
        %v2057 = vrot.slane %v2043, %v2056
        %v2058 = vcombine.low %v1557, %v1581
        %v2059 = vcombine.high %v1557, %v1581
        %v2061 = vunpack.c.l.s4 1983009808
        %v2062 = vunpack.c.0.s8 %v2061
        %v2063 = vlaneseq
        %v2064 = vshrl.u32 %v2063, 7
        %v2065 = vsub.s32 %v2062, %v2064
        %v2066 = vrot.slane %v2058, %v2065
        %v2068 = vunpack.c.l.s4 1983009808
        %v2069 = vunpack.c.0.s8 %v2068
        %v2070 = vlaneseq
        %v2071 = vshrl.u32 %v2070, 7
        %v2072 = vsub.s32 %v2069, %v2071
        %v2073 = vrot.slane %v2059, %v2072
        %v2074 = vcombine.low %v1593, %v1617
        %v2075 = vcombine.high %v1593, %v1617
        %v2077 = vunpack.c.l.s4 1983009808
        %v2078 = vunpack.c.0.s8 %v2077
        %v2079 = vlaneseq
        %v2080 = vshrl.u32 %v2079, 7
        %v2081 = vsub.s32 %v2078, %v2080
        %v2082 = vrot.slane %v2074, %v2081
        %v2084 = vunpack.c.l.s4 1983009808
        %v2085 = vunpack.c.0.s8 %v2084
        %v2086 = vlaneseq
        %v2087 = vshrl.u32 %v2086, 7
        %v2088 = vsub.s32 %v2085, %v2087
        %v2089 = vrot.slane %v2075, %v2088
        %v2090 = vcombine.low %v1605, %v1629
        %v2091 = vcombine.high %v1605, %v1629
        %v2093 = vunpack.c.l.s4 1983009808
        %v2094 = vunpack.c.0.s8 %v2093
        %v2095 = vlaneseq
        %v2096 = vshrl.u32 %v2095, 7
        %v2097 = vsub.s32 %v2094, %v2096
        %v2098 = vrot.slane %v2090, %v2097
        %v2100 = vunpack.c.l.s4 1983009808
        %v2101 = vunpack.c.0.s8 %v2100
        %v2102 = vlaneseq
        %v2103 = vshrl.u32 %v2102, 7
        %v2104 = vsub.s32 %v2101, %v2103
        %v2105 = vrot.slane %v2091, %v2104
        %v2106 = vcombine.low %v2050, %v2066
        %v2107 = vcombine.high %v2050, %v2066
        %v2109 = vunpack.c.l.s4 1934713408
        %v2110 = vunpack.c.0.s8 %v2109
        %v2111 = vlaneseq
        %v2112 = vshrl.u32 %v2111, 7
        %v2113 = vsub.s32 %v2110, %v2112
        %v2114 = vrot.slane %v2106, %v2113
        %v2116 = vunpack.c.l.s4 1934713408
        %v2117 = vunpack.c.0.s8 %v2116
        %v2118 = vlaneseq
        %v2119 = vshrl.u32 %v2118, 7
        %v2120 = vsub.s32 %v2117, %v2119
        %v2121 = vrot.slane %v2107, %v2120
        %v2122 = vcombine.low %v2057, %v2073
        %v2123 = vcombine.high %v2057, %v2073
        %v2125 = vunpack.c.l.s4 1934713408
        %v2126 = vunpack.c.0.s8 %v2125
        %v2127 = vlaneseq
        %v2128 = vshrl.u32 %v2127, 7
        %v2129 = vsub.s32 %v2126, %v2128
        %v2130 = vrot.slane %v2122, %v2129
        %v2132 = vunpack.c.l.s4 1934713408
        %v2133 = vunpack.c.0.s8 %v2132
        %v2134 = vlaneseq
        %v2135 = vshrl.u32 %v2134, 7
        %v2136 = vsub.s32 %v2133, %v2135
        %v2137 = vrot.slane %v2123, %v2136
        %v2138 = vcombine.low %v2082, %v2098
        %v2139 = vcombine.high %v2082, %v2098
        %v2141 = vunpack.c.l.s4 1934713408
        %v2142 = vunpack.c.0.s8 %v2141
        %v2143 = vlaneseq
        %v2144 = vshrl.u32 %v2143, 7
        %v2145 = vsub.s32 %v2142, %v2144
        %v2146 = vrot.slane %v2138, %v2145
        %v2148 = vunpack.c.l.s4 1934713408
        %v2149 = vunpack.c.0.s8 %v2148
        %v2150 = vlaneseq
        %v2151 = vshrl.u32 %v2150, 7
        %v2152 = vsub.s32 %v2149, %v2151
        %v2153 = vrot.slane %v2139, %v2152
        %v2154 = vcombine.low %v2089, %v2105
        %v2155 = vcombine.high %v2089, %v2105
        %v2157 = vunpack.c.l.s4 1934713408
        %v2158 = vunpack.c.0.s8 %v2157
        %v2159 = vlaneseq
        %v2160 = vshrl.u32 %v2159, 7
        %v2161 = vsub.s32 %v2158, %v2160
        %v2162 = vrot.slane %v2154, %v2161
        %v2164 = vunpack.c.l.s4 1934713408
        %v2165 = vunpack.c.0.s8 %v2164
        %v2166 = vlaneseq
        %v2167 = vshrl.u32 %v2166, 7
        %v2168 = vsub.s32 %v2165, %v2167
        %v2169 = vrot.slane %v2155, %v2168
        %v2170 = vcombine.low %v2114, %v2146
        %v2171 = vcombine.high %v2114, %v2146
        %v2172 = vcombine.low %v2121, %v2153
        %v2173 = vcombine.high %v2121, %v2153
        %v2174 = vcombine.low %v2130, %v2162
        %v2175 = vcombine.high %v2130, %v2162
        %v2176 = vcombine.low %v2137, %v2169
        %v2177 = vcombine.high %v2137, %v2169
        %2182 = vrot.lane.b32.xlu0 %v896, 112
        %v2183 = vpop.permute.xlu0 %2182
        %2184 = vrot.lane.b32.xlu0 %v901, 112
        %v2185 = vpop.permute.xlu0 %2184
        %2186 = vrot.lane.b32.xlu0 %v906, 112
        %v2187 = vpop.permute.xlu0 %2186
        %2188 = vrot.lane.b32.xlu0 %v911, 112
        %v2189 = vpop.permute.xlu0 %2188
        %2194 = vrot.lane.b32.xlu0 %v896, 96
        %v2195 = vpop.permute.xlu0 %2194
        %2196 = vrot.lane.b32.xlu0 %v901, 96
        %v2197 = vpop.permute.xlu0 %2196
        %2198 = vrot.lane.b32.xlu0 %v906, 96
        %v2199 = vpop.permute.xlu0 %2198
        %2200 = vrot.lane.b32.xlu0 %v911, 96
        %v2201 = vpop.permute.xlu0 %2200
        %2206 = vrot.lane.b32.xlu0 %v896, 80
        %v2207 = vpop.permute.xlu0 %2206
        %2208 = vrot.lane.b32.xlu0 %v901, 80
        %v2209 = vpop.permute.xlu0 %2208
        %2210 = vrot.lane.b32.xlu0 %v906, 80
        %v2211 = vpop.permute.xlu0 %2210
        %2212 = vrot.lane.b32.xlu0 %v911, 80
        %v2213 = vpop.permute.xlu0 %2212
        %2218 = vrot.lane.b32.xlu0 %v896, 64
        %v2219 = vpop.permute.xlu0 %2218
        %2220 = vrot.lane.b32.xlu0 %v901, 64
        %v2221 = vpop.permute.xlu0 %2220
        %2222 = vrot.lane.b32.xlu0 %v906, 64
        %v2223 = vpop.permute.xlu0 %2222
        %2224 = vrot.lane.b32.xlu0 %v911, 64
        %v2225 = vpop.permute.xlu0 %2224
        %2230 = vrot.lane.b32.xlu0 %v896, 48
        %v2231 = vpop.permute.xlu0 %2230
        %2232 = vrot.lane.b32.xlu0 %v901, 48
        %v2233 = vpop.permute.xlu0 %2232
        %2234 = vrot.lane.b32.xlu0 %v906, 48
        %v2235 = vpop.permute.xlu0 %2234
        %2236 = vrot.lane.b32.xlu0 %v911, 48
        %v2237 = vpop.permute.xlu0 %2236
        %2242 = vrot.lane.b32.xlu0 %v896, 32
        %v2243 = vpop.permute.xlu0 %2242
        %2244 = vrot.lane.b32.xlu0 %v901, 32
        %v2245 = vpop.permute.xlu0 %2244
        %2246 = vrot.lane.b32.xlu0 %v906, 32
        %v2247 = vpop.permute.xlu0 %2246
        %2248 = vrot.lane.b32.xlu0 %v911, 32
        %v2249 = vpop.permute.xlu0 %2248
        %2254 = vrot.lane.b32.xlu0 %v896, 16
        %v2255 = vpop.permute.xlu0 %2254
        %2256 = vrot.lane.b32.xlu0 %v901, 16
        %v2257 = vpop.permute.xlu0 %2256
        %2258 = vrot.lane.b32.xlu0 %v906, 16
        %v2259 = vpop.permute.xlu0 %2258
        %2260 = vrot.lane.b32.xlu0 %v911, 16
        %v2261 = vpop.permute.xlu0 %2260
        %v2266 = vcombine.low %v896, %v2195
        %v2267 = vcombine.high %v896, %v2195
        %v2269 = vunpack.c.l.s4 1983009808
        %v2270 = vunpack.c.0.s8 %v2269
        %v2271 = vlaneseq
        %v2272 = vshrl.u32 %v2271, 7
        %v2273 = vsub.s32 %v2270, %v2272
        %v2274 = vrot.slane %v2266, %v2273
        %v2276 = vunpack.c.l.s4 1983009808
        %v2277 = vunpack.c.0.s8 %v2276
        %v2278 = vlaneseq
        %v2279 = vshrl.u32 %v2278, 7
        %v2280 = vsub.s32 %v2277, %v2279
        %v2281 = vrot.slane %v2267, %v2280
        %v2282 = vcombine.low %v2183, %v2207
        %v2283 = vcombine.high %v2183, %v2207
        %v2285 = vunpack.c.l.s4 1983009808
        %v2286 = vunpack.c.0.s8 %v2285
        %v2287 = vlaneseq
        %v2288 = vshrl.u32 %v2287, 7
        %v2289 = vsub.s32 %v2286, %v2288
        %v2290 = vrot.slane %v2282, %v2289
        %v2292 = vunpack.c.l.s4 1983009808
        %v2293 = vunpack.c.0.s8 %v2292
        %v2294 = vlaneseq
        %v2295 = vshrl.u32 %v2294, 7
        %v2296 = vsub.s32 %v2293, %v2295
        %v2297 = vrot.slane %v2283, %v2296
        %v2298 = vcombine.low %v2219, %v2243
        %v2299 = vcombine.high %v2219, %v2243
        %v2301 = vunpack.c.l.s4 1983009808
        %v2302 = vunpack.c.0.s8 %v2301
        %v2303 = vlaneseq
        %v2304 = vshrl.u32 %v2303, 7
        %v2305 = vsub.s32 %v2302, %v2304
        %v2306 = vrot.slane %v2298, %v2305
        %v2308 = vunpack.c.l.s4 1983009808
        %v2309 = vunpack.c.0.s8 %v2308
        %v2310 = vlaneseq
        %v2311 = vshrl.u32 %v2310, 7
        %v2312 = vsub.s32 %v2309, %v2311
        %v2313 = vrot.slane %v2299, %v2312
        %v2314 = vcombine.low %v2231, %v2255
        %v2315 = vcombine.high %v2231, %v2255
        %v2317 = vunpack.c.l.s4 1983009808
        %v2318 = vunpack.c.0.s8 %v2317
        %v2319 = vlaneseq
        %v2320 = vshrl.u32 %v2319, 7
        %v2321 = vsub.s32 %v2318, %v2320
        %v2322 = vrot.slane %v2314, %v2321
        %v2324 = vunpack.c.l.s4 1983009808
        %v2325 = vunpack.c.0.s8 %v2324
        %v2326 = vlaneseq
        %v2327 = vshrl.u32 %v2326, 7
        %v2328 = vsub.s32 %v2325, %v2327
        %v2329 = vrot.slane %v2315, %v2328
        %v2330 = vcombine.low %v2274, %v2290
        %v2331 = vcombine.high %v2274, %v2290
        %v2333 = vunpack.c.l.s4 1934713408
        %v2334 = vunpack.c.0.s8 %v2333
        %v2335 = vlaneseq
        %v2336 = vshrl.u32 %v2335, 7
        %v2337 = vsub.s32 %v2334, %v2336
        %v2338 = vrot.slane %v2330, %v2337
        %v2340 = vunpack.c.l.s4 1934713408
        %v2341 = vunpack.c.0.s8 %v2340
        %v2342 = vlaneseq
        %v2343 = vshrl.u32 %v2342, 7
        %v2344 = vsub.s32 %v2341, %v2343
        %v2345 = vrot.slane %v2331, %v2344
        %v2346 = vcombine.low %v2281, %v2297
        %v2347 = vcombine.high %v2281, %v2297
        %v2349 = vunpack.c.l.s4 1934713408
        %v2350 = vunpack.c.0.s8 %v2349
        %v2351 = vlaneseq
        %v2352 = vshrl.u32 %v2351, 7
        %v2353 = vsub.s32 %v2350, %v2352
        %v2354 = vrot.slane %v2346, %v2353
        %v2356 = vunpack.c.l.s4 1934713408
        %v2357 = vunpack.c.0.s8 %v2356
        %v2358 = vlaneseq
        %v2359 = vshrl.u32 %v2358, 7
        %v2360 = vsub.s32 %v2357, %v2359
        %v2361 = vrot.slane %v2347, %v2360
        %v2362 = vcombine.low %v2306, %v2322
        %v2363 = vcombine.high %v2306, %v2322
        %v2365 = vunpack.c.l.s4 1934713408
        %v2366 = vunpack.c.0.s8 %v2365
        %v2367 = vlaneseq
        %v2368 = vshrl.u32 %v2367, 7
        %v2369 = vsub.s32 %v2366, %v2368
        %v2370 = vrot.slane %v2362, %v2369
        %v2372 = vunpack.c.l.s4 1934713408
        %v2373 = vunpack.c.0.s8 %v2372
        %v2374 = vlaneseq
        %v2375 = vshrl.u32 %v2374, 7
        %v2376 = vsub.s32 %v2373, %v2375
        %v2377 = vrot.slane %v2363, %v2376
        %v2378 = vcombine.low %v2313, %v2329
        %v2379 = vcombine.high %v2313, %v2329
        %v2381 = vunpack.c.l.s4 1934713408
        %v2382 = vunpack.c.0.s8 %v2381
        %v2383 = vlaneseq
        %v2384 = vshrl.u32 %v2383, 7
        %v2385 = vsub.s32 %v2382, %v2384
        %v2386 = vrot.slane %v2378, %v2385
        %v2388 = vunpack.c.l.s4 1934713408
        %v2389 = vunpack.c.0.s8 %v2388
        %v2390 = vlaneseq
        %v2391 = vshrl.u32 %v2390, 7
        %v2392 = vsub.s32 %v2389, %v2391
        %v2393 = vrot.slane %v2379, %v2392
        %v2394 = vcombine.low %v2338, %v2370
        %v2395 = vcombine.high %v2338, %v2370
        %v2396 = vcombine.low %v2345, %v2377
        %v2397 = vcombine.high %v2345, %v2377
        %v2398 = vcombine.low %v2354, %v2386
        %v2399 = vcombine.high %v2354, %v2386
        %v2400 = vcombine.low %v2361, %v2393
        %v2401 = vcombine.high %v2361, %v2393
        %v2402 = vcombine.low %v901, %v2197
        %v2403 = vcombine.high %v901, %v2197
        %v2405 = vunpack.c.l.s4 1983009808
        %v2406 = vunpack.c.0.s8 %v2405
        %v2407 = vlaneseq
        %v2408 = vshrl.u32 %v2407, 7
        %v2409 = vsub.s32 %v2406, %v2408
        %v2410 = vrot.slane %v2402, %v2409
        %v2412 = vunpack.c.l.s4 1983009808
        %v2413 = vunpack.c.0.s8 %v2412
        %v2414 = vlaneseq
        %v2415 = vshrl.u32 %v2414, 7
        %v2416 = vsub.s32 %v2413, %v2415
        %v2417 = vrot.slane %v2403, %v2416
        %v2418 = vcombine.low %v2185, %v2209
        %v2419 = vcombine.high %v2185, %v2209
        %v2421 = vunpack.c.l.s4 1983009808
        %v2422 = vunpack.c.0.s8 %v2421
        %v2423 = vlaneseq
        %v2424 = vshrl.u32 %v2423, 7
        %v2425 = vsub.s32 %v2422, %v2424
        %v2426 = vrot.slane %v2418, %v2425
        %v2428 = vunpack.c.l.s4 1983009808
        %v2429 = vunpack.c.0.s8 %v2428
        %v2430 = vlaneseq
        %v2431 = vshrl.u32 %v2430, 7
        %v2432 = vsub.s32 %v2429, %v2431
        %v2433 = vrot.slane %v2419, %v2432
        %v2434 = vcombine.low %v2221, %v2245
        %v2435 = vcombine.high %v2221, %v2245
        %v2437 = vunpack.c.l.s4 1983009808
        %v2438 = vunpack.c.0.s8 %v2437
        %v2439 = vlaneseq
        %v2440 = vshrl.u32 %v2439, 7
        %v2441 = vsub.s32 %v2438, %v2440
        %v2442 = vrot.slane %v2434, %v2441
        %v2444 = vunpack.c.l.s4 1983009808
        %v2445 = vunpack.c.0.s8 %v2444
        %v2446 = vlaneseq
        %v2447 = vshrl.u32 %v2446, 7
        %v2448 = vsub.s32 %v2445, %v2447
        %v2449 = vrot.slane %v2435, %v2448
        %v2450 = vcombine.low %v2233, %v2257
        %v2451 = vcombine.high %v2233, %v2257
        %v2453 = vunpack.c.l.s4 1983009808
        %v2454 = vunpack.c.0.s8 %v2453
        %v2455 = vlaneseq
        %v2456 = vshrl.u32 %v2455, 7
        %v2457 = vsub.s32 %v2454, %v2456
        %v2458 = vrot.slane %v2450, %v2457
        %v2460 = vunpack.c.l.s4 1983009808
        %v2461 = vunpack.c.0.s8 %v2460
        %v2462 = vlaneseq
        %v2463 = vshrl.u32 %v2462, 7
        %v2464 = vsub.s32 %v2461, %v2463
        %v2465 = vrot.slane %v2451, %v2464
        %v2466 = vcombine.low %v2410, %v2426
        %v2467 = vcombine.high %v2410, %v2426
        %v2469 = vunpack.c.l.s4 1934713408
        %v2470 = vunpack.c.0.s8 %v2469
        %v2471 = vlaneseq
        %v2472 = vshrl.u32 %v2471, 7
        %v2473 = vsub.s32 %v2470, %v2472
        %v2474 = vrot.slane %v2466, %v2473
        %v2476 = vunpack.c.l.s4 1934713408
        %v2477 = vunpack.c.0.s8 %v2476
        %v2478 = vlaneseq
        %v2479 = vshrl.u32 %v2478, 7
        %v2480 = vsub.s32 %v2477, %v2479
        %v2481 = vrot.slane %v2467, %v2480
        %v2482 = vcombine.low %v2417, %v2433
        %v2483 = vcombine.high %v2417, %v2433
        %v2485 = vunpack.c.l.s4 1934713408
        %v2486 = vunpack.c.0.s8 %v2485
        %v2487 = vlaneseq
        %v2488 = vshrl.u32 %v2487, 7
        %v2489 = vsub.s32 %v2486, %v2488
        %v2490 = vrot.slane %v2482, %v2489
        %v2492 = vunpack.c.l.s4 1934713408
        %v2493 = vunpack.c.0.s8 %v2492
        %v2494 = vlaneseq
        %v2495 = vshrl.u32 %v2494, 7
        %v2496 = vsub.s32 %v2493, %v2495
        %v2497 = vrot.slane %v2483, %v2496
        %v2498 = vcombine.low %v2442, %v2458
        %v2499 = vcombine.high %v2442, %v2458
        %v2501 = vunpack.c.l.s4 1934713408
        %v2502 = vunpack.c.0.s8 %v2501
        %v2503 = vlaneseq
        %v2504 = vshrl.u32 %v2503, 7
        %v2505 = vsub.s32 %v2502, %v2504
        %v2506 = vrot.slane %v2498, %v2505
        %v2508 = vunpack.c.l.s4 1934713408
        %v2509 = vunpack.c.0.s8 %v2508
        %v2510 = vlaneseq
        %v2511 = vshrl.u32 %v2510, 7
        %v2512 = vsub.s32 %v2509, %v2511
        %v2513 = vrot.slane %v2499, %v2512
        %v2514 = vcombine.low %v2449, %v2465
        %v2515 = vcombine.high %v2449, %v2465
        %v2517 = vunpack.c.l.s4 1934713408
        %v2518 = vunpack.c.0.s8 %v2517
        %v2519 = vlaneseq
        %v2520 = vshrl.u32 %v2519, 7
        %v2521 = vsub.s32 %v2518, %v2520
        %v2522 = vrot.slane %v2514, %v2521
        %v2524 = vunpack.c.l.s4 1934713408
        %v2525 = vunpack.c.0.s8 %v2524
        %v2526 = vlaneseq
        %v2527 = vshrl.u32 %v2526, 7
        %v2528 = vsub.s32 %v2525, %v2527
        %v2529 = vrot.slane %v2515, %v2528
        %v2530 = vcombine.low %v2474, %v2506
        %v2531 = vcombine.high %v2474, %v2506
        %v2532 = vcombine.low %v2481, %v2513
        %v2533 = vcombine.high %v2481, %v2513
        %v2534 = vcombine.low %v2490, %v2522
        %v2535 = vcombine.high %v2490, %v2522
        %v2536 = vcombine.low %v2497, %v2529
        %v2537 = vcombine.high %v2497, %v2529
        %v2538 = vcombine.low %v906, %v2199
        %v2539 = vcombine.high %v906, %v2199
        %v2541 = vunpack.c.l.s4 1983009808
        %v2542 = vunpack.c.0.s8 %v2541
        %v2543 = vlaneseq
        %v2544 = vshrl.u32 %v2543, 7
        %v2545 = vsub.s32 %v2542, %v2544
        %v2546 = vrot.slane %v2538, %v2545
        %v2548 = vunpack.c.l.s4 1983009808
        %v2549 = vunpack.c.0.s8 %v2548
        %v2550 = vlaneseq
        %v2551 = vshrl.u32 %v2550, 7
        %v2552 = vsub.s32 %v2549, %v2551
        %v2553 = vrot.slane %v2539, %v2552
        %v2554 = vcombine.low %v2187, %v2211
        %v2555 = vcombine.high %v2187, %v2211
        %v2557 = vunpack.c.l.s4 1983009808
        %v2558 = vunpack.c.0.s8 %v2557
        %v2559 = vlaneseq
        %v2560 = vshrl.u32 %v2559, 7
        %v2561 = vsub.s32 %v2558, %v2560
        %v2562 = vrot.slane %v2554, %v2561
        %v2564 = vunpack.c.l.s4 1983009808
        %v2565 = vunpack.c.0.s8 %v2564
        %v2566 = vlaneseq
        %v2567 = vshrl.u32 %v2566, 7
        %v2568 = vsub.s32 %v2565, %v2567
        %v2569 = vrot.slane %v2555, %v2568
        %v2570 = vcombine.low %v2223, %v2247
        %v2571 = vcombine.high %v2223, %v2247
        %v2573 = vunpack.c.l.s4 1983009808
        %v2574 = vunpack.c.0.s8 %v2573
        %v2575 = vlaneseq
        %v2576 = vshrl.u32 %v2575, 7
        %v2577 = vsub.s32 %v2574, %v2576
        %v2578 = vrot.slane %v2570, %v2577
        %v2580 = vunpack.c.l.s4 1983009808
        %v2581 = vunpack.c.0.s8 %v2580
        %v2582 = vlaneseq
        %v2583 = vshrl.u32 %v2582, 7
        %v2584 = vsub.s32 %v2581, %v2583
        %v2585 = vrot.slane %v2571, %v2584
        %v2586 = vcombine.low %v2235, %v2259
        %v2587 = vcombine.high %v2235, %v2259
        %v2589 = vunpack.c.l.s4 1983009808
        %v2590 = vunpack.c.0.s8 %v2589
        %v2591 = vlaneseq
        %v2592 = vshrl.u32 %v2591, 7
        %v2593 = vsub.s32 %v2590, %v2592
        %v2594 = vrot.slane %v2586, %v2593
        %v2596 = vunpack.c.l.s4 1983009808
        %v2597 = vunpack.c.0.s8 %v2596
        %v2598 = vlaneseq
        %v2599 = vshrl.u32 %v2598, 7
        %v2600 = vsub.s32 %v2597, %v2599
        %v2601 = vrot.slane %v2587, %v2600
        %v2602 = vcombine.low %v2546, %v2562
        %v2603 = vcombine.high %v2546, %v2562
        %v2605 = vunpack.c.l.s4 1934713408
        %v2606 = vunpack.c.0.s8 %v2605
        %v2607 = vlaneseq
        %v2608 = vshrl.u32 %v2607, 7
        %v2609 = vsub.s32 %v2606, %v2608
        %v2610 = vrot.slane %v2602, %v2609
        %v2612 = vunpack.c.l.s4 1934713408
        %v2613 = vunpack.c.0.s8 %v2612
        %v2614 = vlaneseq
        %v2615 = vshrl.u32 %v2614, 7
        %v2616 = vsub.s32 %v2613, %v2615
        %v2617 = vrot.slane %v2603, %v2616
        %v2618 = vcombine.low %v2553, %v2569
        %v2619 = vcombine.high %v2553, %v2569
        %v2621 = vunpack.c.l.s4 1934713408
        %v2622 = vunpack.c.0.s8 %v2621
        %v2623 = vlaneseq
        %v2624 = vshrl.u32 %v2623, 7
        %v2625 = vsub.s32 %v2622, %v2624
        %v2626 = vrot.slane %v2618, %v2625
        %v2628 = vunpack.c.l.s4 1934713408
        %v2629 = vunpack.c.0.s8 %v2628
        %v2630 = vlaneseq
        %v2631 = vshrl.u32 %v2630, 7
        %v2632 = vsub.s32 %v2629, %v2631
        %v2633 = vrot.slane %v2619, %v2632
        %v2634 = vcombine.low %v2578, %v2594
        %v2635 = vcombine.high %v2578, %v2594
        %v2637 = vunpack.c.l.s4 1934713408
        %v2638 = vunpack.c.0.s8 %v2637
        %v2639 = vlaneseq
        %v2640 = vshrl.u32 %v2639, 7
        %v2641 = vsub.s32 %v2638, %v2640
        %v2642 = vrot.slane %v2634, %v2641
        %v2644 = vunpack.c.l.s4 1934713408
        %v2645 = vunpack.c.0.s8 %v2644
        %v2646 = vlaneseq
        %v2647 = vshrl.u32 %v2646, 7
        %v2648 = vsub.s32 %v2645, %v2647
        %v2649 = vrot.slane %v2635, %v2648
        %v2650 = vcombine.low %v2585, %v2601
        %v2651 = vcombine.high %v2585, %v2601
        %v2653 = vunpack.c.l.s4 1934713408
        %v2654 = vunpack.c.0.s8 %v2653
        %v2655 = vlaneseq
        %v2656 = vshrl.u32 %v2655, 7
        %v2657 = vsub.s32 %v2654, %v2656
        %v2658 = vrot.slane %v2650, %v2657
        %v2660 = vunpack.c.l.s4 1934713408
        %v2661 = vunpack.c.0.s8 %v2660
        %v2662 = vlaneseq
        %v2663 = vshrl.u32 %v2662, 7
        %v2664 = vsub.s32 %v2661, %v2663
        %v2665 = vrot.slane %v2651, %v2664
        %v2666 = vcombine.low %v2610, %v2642
        %v2667 = vcombine.high %v2610, %v2642
        %v2668 = vcombine.low %v2617, %v2649
        %v2669 = vcombine.high %v2617, %v2649
        %v2670 = vcombine.low %v2626, %v2658
        %v2671 = vcombine.high %v2626, %v2658
        %v2672 = vcombine.low %v2633, %v2665
        %v2673 = vcombine.high %v2633, %v2665
        %v2674 = vcombine.low %v911, %v2201
        %v2675 = vcombine.high %v911, %v2201
        %v2677 = vunpack.c.l.s4 1983009808
        %v2678 = vunpack.c.0.s8 %v2677
        %v2679 = vlaneseq
        %v2680 = vshrl.u32 %v2679, 7
        %v2681 = vsub.s32 %v2678, %v2680
        %v2682 = vrot.slane %v2674, %v2681
        %v2684 = vunpack.c.l.s4 1983009808
        %v2685 = vunpack.c.0.s8 %v2684
        %v2686 = vlaneseq
        %v2687 = vshrl.u32 %v2686, 7
        %v2688 = vsub.s32 %v2685, %v2687
        %v2689 = vrot.slane %v2675, %v2688
        %v2690 = vcombine.low %v2189, %v2213
        %v2691 = vcombine.high %v2189, %v2213
        %v2693 = vunpack.c.l.s4 1983009808
        %v2694 = vunpack.c.0.s8 %v2693
        %v2695 = vlaneseq
        %v2696 = vshrl.u32 %v2695, 7
        %v2697 = vsub.s32 %v2694, %v2696
        %v2698 = vrot.slane %v2690, %v2697
        %v2700 = vunpack.c.l.s4 1983009808
        %v2701 = vunpack.c.0.s8 %v2700
        %v2702 = vlaneseq
        %v2703 = vshrl.u32 %v2702, 7
        %v2704 = vsub.s32 %v2701, %v2703
        %v2705 = vrot.slane %v2691, %v2704
        %v2706 = vcombine.low %v2225, %v2249
        %v2707 = vcombine.high %v2225, %v2249
        %v2709 = vunpack.c.l.s4 1983009808
        %v2710 = vunpack.c.0.s8 %v2709
        %v2711 = vlaneseq
        %v2712 = vshrl.u32 %v2711, 7
        %v2713 = vsub.s32 %v2710, %v2712
        %v2714 = vrot.slane %v2706, %v2713
        %v2716 = vunpack.c.l.s4 1983009808
        %v2717 = vunpack.c.0.s8 %v2716
        %v2718 = vlaneseq
        %v2719 = vshrl.u32 %v2718, 7
        %v2720 = vsub.s32 %v2717, %v2719
        %v2721 = vrot.slane %v2707, %v2720
        %v2722 = vcombine.low %v2237, %v2261
        %v2723 = vcombine.high %v2237, %v2261
        %v2725 = vunpack.c.l.s4 1983009808
        %v2726 = vunpack.c.0.s8 %v2725
        %v2727 = vlaneseq
        %v2728 = vshrl.u32 %v2727, 7
        %v2729 = vsub.s32 %v2726, %v2728
        %v2730 = vrot.slane %v2722, %v2729
        %v2732 = vunpack.c.l.s4 1983009808
        %v2733 = vunpack.c.0.s8 %v2732
        %v2734 = vlaneseq
        %v2735 = vshrl.u32 %v2734, 7
        %v2736 = vsub.s32 %v2733, %v2735
        %v2737 = vrot.slane %v2723, %v2736
        %v2738 = vcombine.low %v2682, %v2698
        %v2739 = vcombine.high %v2682, %v2698
        %v2741 = vunpack.c.l.s4 1934713408
        %v2742 = vunpack.c.0.s8 %v2741
        %v2743 = vlaneseq
        %v2744 = vshrl.u32 %v2743, 7
        %v2745 = vsub.s32 %v2742, %v2744
        %v2746 = vrot.slane %v2738, %v2745
        %v2748 = vunpack.c.l.s4 1934713408
        %v2749 = vunpack.c.0.s8 %v2748
        %v2750 = vlaneseq
        %v2751 = vshrl.u32 %v2750, 7
        %v2752 = vsub.s32 %v2749, %v2751
        %v2753 = vrot.slane %v2739, %v2752
        %v2754 = vcombine.low %v2689, %v2705
        %v2755 = vcombine.high %v2689, %v2705
        %v2757 = vunpack.c.l.s4 1934713408
        %v2758 = vunpack.c.0.s8 %v2757
        %v2759 = vlaneseq
        %v2760 = vshrl.u32 %v2759, 7
        %v2761 = vsub.s32 %v2758, %v2760
        %v2762 = vrot.slane %v2754, %v2761
        %v2764 = vunpack.c.l.s4 1934713408
        %v2765 = vunpack.c.0.s8 %v2764
        %v2766 = vlaneseq
        %v2767 = vshrl.u32 %v2766, 7
        %v2768 = vsub.s32 %v2765, %v2767
        %v2769 = vrot.slane %v2755, %v2768
        %v2770 = vcombine.low %v2714, %v2730
        %v2771 = vcombine.high %v2714, %v2730
        %v2773 = vunpack.c.l.s4 1934713408
        %v2774 = vunpack.c.0.s8 %v2773
        %v2775 = vlaneseq
        %v2776 = vshrl.u32 %v2775, 7
        %v2777 = vsub.s32 %v2774, %v2776
        %v2778 = vrot.slane %v2770, %v2777
        %v2780 = vunpack.c.l.s4 1934713408
        %v2781 = vunpack.c.0.s8 %v2780
        %v2782 = vlaneseq
        %v2783 = vshrl.u32 %v2782, 7
        %v2784 = vsub.s32 %v2781, %v2783
        %v2785 = vrot.slane %v2771, %v2784
        %v2786 = vcombine.low %v2721, %v2737
        %v2787 = vcombine.high %v2721, %v2737
        %v2789 = vunpack.c.l.s4 1934713408
        %v2790 = vunpack.c.0.s8 %v2789
        %v2791 = vlaneseq
        %v2792 = vshrl.u32 %v2791, 7
        %v2793 = vsub.s32 %v2790, %v2792
        %v2794 = vrot.slane %v2786, %v2793
        %v2796 = vunpack.c.l.s4 1934713408
        %v2797 = vunpack.c.0.s8 %v2796
        %v2798 = vlaneseq
        %v2799 = vshrl.u32 %v2798, 7
        %v2800 = vsub.s32 %v2797, %v2799
        %v2801 = vrot.slane %v2787, %v2800
        %v2802 = vcombine.low %v2746, %v2778
        %v2803 = vcombine.high %v2746, %v2778
        %v2804 = vcombine.low %v2753, %v2785
        %v2805 = vcombine.high %v2753, %v2785
        %v2806 = vcombine.low %v2762, %v2794
        %v2807 = vcombine.high %v2762, %v2794
        %v2808 = vcombine.low %v2769, %v2801
        %v2809 = vcombine.high %v2769, %v2801
        %v2810 = vcombine.low %v1130, %v1132
        %v2811 = vcombine.high %v1130, %v1132
        %v2813 = vunpack.c.l.s4 1983009808
        %v2814 = vunpack.c.0.s8 %v2813
        %v2815 = vlaneseq
        %v2816 = vshrl.u32 %v2815, 7
        %v2817 = vsub.s32 %v2814, %v2816
        %v2818 = vrot.slane %v2810, %v2817
        %v2820 = vunpack.c.l.s4 1983009808
        %v2821 = vunpack.c.0.s8 %v2820
        %v2822 = vlaneseq
        %v2823 = vshrl.u32 %v2822, 7
        %v2824 = vsub.s32 %v2821, %v2823
        %v2825 = vrot.slane %v2811, %v2824
        %v2826 = vcombine.low %v1131, %v1133
        %v2827 = vcombine.high %v1131, %v1133
        %v2829 = vunpack.c.l.s4 1983009808
        %v2830 = vunpack.c.0.s8 %v2829
        %v2831 = vlaneseq
        %v2832 = vshrl.u32 %v2831, 7
        %v2833 = vsub.s32 %v2830, %v2832
        %v2834 = vrot.slane %v2826, %v2833
        %v2836 = vunpack.c.l.s4 1983009808
        %v2837 = vunpack.c.0.s8 %v2836
        %v2838 = vlaneseq
        %v2839 = vshrl.u32 %v2838, 7
        %v2840 = vsub.s32 %v2837, %v2839
        %v2841 = vrot.slane %v2827, %v2840
        %v2842 = vcombine.low %v1134, %v1136
        %v2843 = vcombine.high %v1134, %v1136
        %v2845 = vunpack.c.l.s4 1983009808
        %v2846 = vunpack.c.0.s8 %v2845
        %v2847 = vlaneseq
        %v2848 = vshrl.u32 %v2847, 7
        %v2849 = vsub.s32 %v2846, %v2848
        %v2850 = vrot.slane %v2842, %v2849
        %v2852 = vunpack.c.l.s4 1983009808
        %v2853 = vunpack.c.0.s8 %v2852
        %v2854 = vlaneseq
        %v2855 = vshrl.u32 %v2854, 7
        %v2856 = vsub.s32 %v2853, %v2855
        %v2857 = vrot.slane %v2843, %v2856
        %v2858 = vcombine.low %v1135, %v1137
        %v2859 = vcombine.high %v1135, %v1137
        %v2861 = vunpack.c.l.s4 1983009808
        %v2862 = vunpack.c.0.s8 %v2861
        %v2863 = vlaneseq
        %v2864 = vshrl.u32 %v2863, 7
        %v2865 = vsub.s32 %v2862, %v2864
        %v2866 = vrot.slane %v2858, %v2865
        %v2868 = vunpack.c.l.s4 1983009808
        %v2869 = vunpack.c.0.s8 %v2868
        %v2870 = vlaneseq
        %v2871 = vshrl.u32 %v2870, 7
        %v2872 = vsub.s32 %v2869, %v2871
        %v2873 = vrot.slane %v2859, %v2872
        %v2874 = vcombine.low %v2818, %v2834
        %v2875 = vcombine.high %v2818, %v2834
        %v2877 = vunpack.c.l.s4 1934713408
        %v2878 = vunpack.c.0.s8 %v2877
        %v2879 = vlaneseq
        %v2880 = vshrl.u32 %v2879, 7
        %v2881 = vsub.s32 %v2878, %v2880
        %v2882 = vrot.slane %v2874, %v2881
        %v2884 = vunpack.c.l.s4 1934713408
        %v2885 = vunpack.c.0.s8 %v2884
        %v2886 = vlaneseq
        %v2887 = vshrl.u32 %v2886, 7
        %v2888 = vsub.s32 %v2885, %v2887
        %v2889 = vrot.slane %v2875, %v2888
        %v2890 = vcombine.low %v2825, %v2841
        %v2891 = vcombine.high %v2825, %v2841
        %v2893 = vunpack.c.l.s4 1934713408
        %v2894 = vunpack.c.0.s8 %v2893
        %v2895 = vlaneseq
        %v2896 = vshrl.u32 %v2895, 7
        %v2897 = vsub.s32 %v2894, %v2896
        %v2898 = vrot.slane %v2890, %v2897
        %v2900 = vunpack.c.l.s4 1934713408
        %v2901 = vunpack.c.0.s8 %v2900
        %v2902 = vlaneseq
        %v2903 = vshrl.u32 %v2902, 7
        %v2904 = vsub.s32 %v2901, %v2903
        %v2905 = vrot.slane %v2891, %v2904
        %v2906 = vcombine.low %v2850, %v2866
        %v2907 = vcombine.high %v2850, %v2866
        %v2909 = vunpack.c.l.s4 1934713408
        %v2910 = vunpack.c.0.s8 %v2909
        %v2911 = vlaneseq
        %v2912 = vshrl.u32 %v2911, 7
        %v2913 = vsub.s32 %v2910, %v2912
        %v2914 = vrot.slane %v2906, %v2913
        %v2916 = vunpack.c.l.s4 1934713408
        %v2917 = vunpack.c.0.s8 %v2916
        %v2918 = vlaneseq
        %v2919 = vshrl.u32 %v2918, 7
        %v2920 = vsub.s32 %v2917, %v2919
        %v2921 = vrot.slane %v2907, %v2920
        %v2922 = vcombine.low %v2857, %v2873
        %v2923 = vcombine.high %v2857, %v2873
        %v2925 = vunpack.c.l.s4 1934713408
        %v2926 = vunpack.c.0.s8 %v2925
        %v2927 = vlaneseq
        %v2928 = vshrl.u32 %v2927, 7
        %v2929 = vsub.s32 %v2926, %v2928
        %v2930 = vrot.slane %v2922, %v2929
        %v2932 = vunpack.c.l.s4 1934713408
        %v2933 = vunpack.c.0.s8 %v2932
        %v2934 = vlaneseq
        %v2935 = vshrl.u32 %v2934, 7
        %v2936 = vsub.s32 %v2933, %v2935
        %v2937 = vrot.slane %v2923, %v2936
        %v2938 = vcombine.low %v2882, %v2914
        %v2939 = vcombine.high %v2882, %v2914
        %v2940 = vcombine.low %v2889, %v2921
        %v2941 = vcombine.high %v2889, %v2921
        %v2942 = vcombine.low %v2898, %v2930
        %v2943 = vcombine.high %v2898, %v2930
        %v2944 = vcombine.low %v2905, %v2937
        %v2945 = vcombine.high %v2905, %v2937
        %v2946 = vcombine.low %v1266, %v1268
        %v2947 = vcombine.high %v1266, %v1268
        %v2949 = vunpack.c.l.s4 1983009808
        %v2950 = vunpack.c.0.s8 %v2949
        %v2951 = vlaneseq
        %v2952 = vshrl.u32 %v2951, 7
        %v2953 = vsub.s32 %v2950, %v2952
        %v2954 = vrot.slane %v2946, %v2953
        %v2956 = vunpack.c.l.s4 1983009808
        %v2957 = vunpack.c.0.s8 %v2956
        %v2958 = vlaneseq
        %v2959 = vshrl.u32 %v2958, 7
        %v2960 = vsub.s32 %v2957, %v2959
        %v2961 = vrot.slane %v2947, %v2960
        %v2962 = vcombine.low %v1267, %v1269
        %v2963 = vcombine.high %v1267, %v1269
        %v2965 = vunpack.c.l.s4 1983009808
        %v2966 = vunpack.c.0.s8 %v2965
        %v2967 = vlaneseq
        %v2968 = vshrl.u32 %v2967, 7
        %v2969 = vsub.s32 %v2966, %v2968
        %v2970 = vrot.slane %v2962, %v2969
        %v2972 = vunpack.c.l.s4 1983009808
        %v2973 = vunpack.c.0.s8 %v2972
        %v2974 = vlaneseq
        %v2975 = vshrl.u32 %v2974, 7
        %v2976 = vsub.s32 %v2973, %v2975
        %v2977 = vrot.slane %v2963, %v2976
        %v2978 = vcombine.low %v1270, %v1272
        %v2979 = vcombine.high %v1270, %v1272
        %v2981 = vunpack.c.l.s4 1983009808
        %v2982 = vunpack.c.0.s8 %v2981
        %v2983 = vlaneseq
        %v2984 = vshrl.u32 %v2983, 7
        %v2985 = vsub.s32 %v2982, %v2984
        %v2986 = vrot.slane %v2978, %v2985
        %v2988 = vunpack.c.l.s4 1983009808
        %v2989 = vunpack.c.0.s8 %v2988
        %v2990 = vlaneseq
        %v2991 = vshrl.u32 %v2990, 7
        %v2992 = vsub.s32 %v2989, %v2991
        %v2993 = vrot.slane %v2979, %v2992
        %v2994 = vcombine.low %v1271, %v1273
        %v2995 = vcombine.high %v1271, %v1273
        %v2997 = vunpack.c.l.s4 1983009808
        %v2998 = vunpack.c.0.s8 %v2997
        %v2999 = vlaneseq
        %v3000 = vshrl.u32 %v2999, 7
        %v3001 = vsub.s32 %v2998, %v3000
        %v3002 = vrot.slane %v2994, %v3001
        %v3004 = vunpack.c.l.s4 1983009808
        %v3005 = vunpack.c.0.s8 %v3004
        %v3006 = vlaneseq
        %v3007 = vshrl.u32 %v3006, 7
        %v3008 = vsub.s32 %v3005, %v3007
        %v3009 = vrot.slane %v2995, %v3008
        %v3010 = vcombine.low %v2954, %v2970
        %v3011 = vcombine.high %v2954, %v2970
        %v3013 = vunpack.c.l.s4 1934713408
        %v3014 = vunpack.c.0.s8 %v3013
        %v3015 = vlaneseq
        %v3016 = vshrl.u32 %v3015, 7
        %v3017 = vsub.s32 %v3014, %v3016
        %v3018 = vrot.slane %v3010, %v3017
        %v3020 = vunpack.c.l.s4 1934713408
        %v3021 = vunpack.c.0.s8 %v3020
        %v3022 = vlaneseq
        %v3023 = vshrl.u32 %v3022, 7
        %v3024 = vsub.s32 %v3021, %v3023
        %v3025 = vrot.slane %v3011, %v3024
        %v3026 = vcombine.low %v2961, %v2977
        %v3027 = vcombine.high %v2961, %v2977
        %v3029 = vunpack.c.l.s4 1934713408
        %v3030 = vunpack.c.0.s8 %v3029
        %v3031 = vlaneseq
        %v3032 = vshrl.u32 %v3031, 7
        %v3033 = vsub.s32 %v3030, %v3032
        %v3034 = vrot.slane %v3026, %v3033
        %v3036 = vunpack.c.l.s4 1934713408
        %v3037 = vunpack.c.0.s8 %v3036
        %v3038 = vlaneseq
        %v3039 = vshrl.u32 %v3038, 7
        %v3040 = vsub.s32 %v3037, %v3039
        %v3041 = vrot.slane %v3027, %v3040
        %v3042 = vcombine.low %v2986, %v3002
        %v3043 = vcombine.high %v2986, %v3002
        %v3045 = vunpack.c.l.s4 1934713408
        %v3046 = vunpack.c.0.s8 %v3045
        %v3047 = vlaneseq
        %v3048 = vshrl.u32 %v3047, 7
        %v3049 = vsub.s32 %v3046, %v3048
        %v3050 = vrot.slane %v3042, %v3049
        %v3052 = vunpack.c.l.s4 1934713408
        %v3053 = vunpack.c.0.s8 %v3052
        %v3054 = vlaneseq
        %v3055 = vshrl.u32 %v3054, 7
        %v3056 = vsub.s32 %v3053, %v3055
        %v3057 = vrot.slane %v3043, %v3056
        %v3058 = vcombine.low %v2993, %v3009
        %v3059 = vcombine.high %v2993, %v3009
        %v3061 = vunpack.c.l.s4 1934713408
        %v3062 = vunpack.c.0.s8 %v3061
        %v3063 = vlaneseq
        %v3064 = vshrl.u32 %v3063, 7
        %v3065 = vsub.s32 %v3062, %v3064
        %v3066 = vrot.slane %v3058, %v3065
        %v3068 = vunpack.c.l.s4 1934713408
        %v3069 = vunpack.c.0.s8 %v3068
        %v3070 = vlaneseq
        %v3071 = vshrl.u32 %v3070, 7
        %v3072 = vsub.s32 %v3069, %v3071
        %v3073 = vrot.slane %v3059, %v3072
        %v3074 = vcombine.low %v3018, %v3050
        %v3075 = vcombine.high %v3018, %v3050
        %v3076 = vcombine.low %v3025, %v3057
        %v3077 = vcombine.high %v3025, %v3057
        %v3078 = vcombine.low %v3034, %v3066
        %v3079 = vcombine.high %v3034, %v3066
        %v3080 = vcombine.low %v3041, %v3073
        %v3081 = vcombine.high %v3041, %v3073
        %v3082 = vcombine.low %v1402, %v1404
        %v3083 = vcombine.high %v1402, %v1404
        %v3085 = vunpack.c.l.s4 1983009808
        %v3086 = vunpack.c.0.s8 %v3085
        %v3087 = vlaneseq
        %v3088 = vshrl.u32 %v3087, 7
        %v3089 = vsub.s32 %v3086, %v3088
        %v3090 = vrot.slane %v3082, %v3089
        %v3092 = vunpack.c.l.s4 1983009808
        %v3093 = vunpack.c.0.s8 %v3092
        %v3094 = vlaneseq
        %v3095 = vshrl.u32 %v3094, 7
        %v3096 = vsub.s32 %v3093, %v3095
        %v3097 = vrot.slane %v3083, %v3096
        %v3098 = vcombine.low %v1403, %v1405
        %v3099 = vcombine.high %v1403, %v1405
        %v3101 = vunpack.c.l.s4 1983009808
        %v3102 = vunpack.c.0.s8 %v3101
        %v3103 = vlaneseq
        %v3104 = vshrl.u32 %v3103, 7
        %v3105 = vsub.s32 %v3102, %v3104
        %v3106 = vrot.slane %v3098, %v3105
        %v3108 = vunpack.c.l.s4 1983009808
        %v3109 = vunpack.c.0.s8 %v3108
        %v3110 = vlaneseq
        %v3111 = vshrl.u32 %v3110, 7
        %v3112 = vsub.s32 %v3109, %v3111
        %v3113 = vrot.slane %v3099, %v3112
        %v3114 = vcombine.low %v1406, %v1408
        %v3115 = vcombine.high %v1406, %v1408
        %v3117 = vunpack.c.l.s4 1983009808
        %v3118 = vunpack.c.0.s8 %v3117
        %v3119 = vlaneseq
        %v3120 = vshrl.u32 %v3119, 7
        %v3121 = vsub.s32 %v3118, %v3120
        %v3122 = vrot.slane %v3114, %v3121
        %v3124 = vunpack.c.l.s4 1983009808
        %v3125 = vunpack.c.0.s8 %v3124
        %v3126 = vlaneseq
        %v3127 = vshrl.u32 %v3126, 7
        %v3128 = vsub.s32 %v3125, %v3127
        %v3129 = vrot.slane %v3115, %v3128
        %v3130 = vcombine.low %v1407, %v1409
        %v3131 = vcombine.high %v1407, %v1409
        %v3133 = vunpack.c.l.s4 1983009808
        %v3134 = vunpack.c.0.s8 %v3133
        %v3135 = vlaneseq
        %v3136 = vshrl.u32 %v3135, 7
        %v3137 = vsub.s32 %v3134, %v3136
        %v3138 = vrot.slane %v3130, %v3137
        %v3140 = vunpack.c.l.s4 1983009808
        %v3141 = vunpack.c.0.s8 %v3140
        %v3142 = vlaneseq
        %v3143 = vshrl.u32 %v3142, 7
        %v3144 = vsub.s32 %v3141, %v3143
        %v3145 = vrot.slane %v3131, %v3144
        %v3146 = vcombine.low %v3090, %v3106
        %v3147 = vcombine.high %v3090, %v3106
        %v3149 = vunpack.c.l.s4 1934713408
        %v3150 = vunpack.c.0.s8 %v3149
        %v3151 = vlaneseq
        %v3152 = vshrl.u32 %v3151, 7
        %v3153 = vsub.s32 %v3150, %v3152
        %v3154 = vrot.slane %v3146, %v3153
        %v3156 = vunpack.c.l.s4 1934713408
        %v3157 = vunpack.c.0.s8 %v3156
        %v3158 = vlaneseq
        %v3159 = vshrl.u32 %v3158, 7
        %v3160 = vsub.s32 %v3157, %v3159
        %v3161 = vrot.slane %v3147, %v3160
        %v3162 = vcombine.low %v3097, %v3113
        %v3163 = vcombine.high %v3097, %v3113
        %v3165 = vunpack.c.l.s4 1934713408
        %v3166 = vunpack.c.0.s8 %v3165
        %v3167 = vlaneseq
        %v3168 = vshrl.u32 %v3167, 7
        %v3169 = vsub.s32 %v3166, %v3168
        %v3170 = vrot.slane %v3162, %v3169
        %v3172 = vunpack.c.l.s4 1934713408
        %v3173 = vunpack.c.0.s8 %v3172
        %v3174 = vlaneseq
        %v3175 = vshrl.u32 %v3174, 7
        %v3176 = vsub.s32 %v3173, %v3175
        %v3177 = vrot.slane %v3163, %v3176
        %v3178 = vcombine.low %v3122, %v3138
        %v3179 = vcombine.high %v3122, %v3138
        %v3181 = vunpack.c.l.s4 1934713408
        %v3182 = vunpack.c.0.s8 %v3181
        %v3183 = vlaneseq
        %v3184 = vshrl.u32 %v3183, 7
        %v3185 = vsub.s32 %v3182, %v3184
        %v3186 = vrot.slane %v3178, %v3185
        %v3188 = vunpack.c.l.s4 1934713408
        %v3189 = vunpack.c.0.s8 %v3188
        %v3190 = vlaneseq
        %v3191 = vshrl.u32 %v3190, 7
        %v3192 = vsub.s32 %v3189, %v3191
        %v3193 = vrot.slane %v3179, %v3192
        %v3194 = vcombine.low %v3129, %v3145
        %v3195 = vcombine.high %v3129, %v3145
        %v3197 = vunpack.c.l.s4 1934713408
        %v3198 = vunpack.c.0.s8 %v3197
        %v3199 = vlaneseq
        %v3200 = vshrl.u32 %v3199, 7
        %v3201 = vsub.s32 %v3198, %v3200
        %v3202 = vrot.slane %v3194, %v3201
        %v3204 = vunpack.c.l.s4 1934713408
        %v3205 = vunpack.c.0.s8 %v3204
        %v3206 = vlaneseq
        %v3207 = vshrl.u32 %v3206, 7
        %v3208 = vsub.s32 %v3205, %v3207
        %v3209 = vrot.slane %v3195, %v3208
        %v3210 = vcombine.low %v3154, %v3186
        %v3211 = vcombine.high %v3154, %v3186
        %v3212 = vcombine.low %v3161, %v3193
        %v3213 = vcombine.high %v3161, %v3193
        %v3214 = vcombine.low %v3170, %v3202
        %v3215 = vcombine.high %v3170, %v3202
        %v3216 = vcombine.low %v3177, %v3209
        %v3217 = vcombine.high %v3177, %v3209
        %v3218 = vcombine.low %v1538, %v1540
        %v3219 = vcombine.high %v1538, %v1540
        %v3221 = vunpack.c.l.s4 1983009808
        %v3222 = vunpack.c.0.s8 %v3221
        %v3223 = vlaneseq
        %v3224 = vshrl.u32 %v3223, 7
        %v3225 = vsub.s32 %v3222, %v3224
        %v3226 = vrot.slane %v3218, %v3225
        %v3228 = vunpack.c.l.s4 1983009808
        %v3229 = vunpack.c.0.s8 %v3228
        %v3230 = vlaneseq
        %v3231 = vshrl.u32 %v3230, 7
        %v3232 = vsub.s32 %v3229, %v3231
        %v3233 = vrot.slane %v3219, %v3232
        %v3234 = vcombine.low %v1539, %v1541
        %v3235 = vcombine.high %v1539, %v1541
        %v3237 = vunpack.c.l.s4 1983009808
        %v3238 = vunpack.c.0.s8 %v3237
        %v3239 = vlaneseq
        %v3240 = vshrl.u32 %v3239, 7
        %v3241 = vsub.s32 %v3238, %v3240
        %v3242 = vrot.slane %v3234, %v3241
        %v3244 = vunpack.c.l.s4 1983009808
        %v3245 = vunpack.c.0.s8 %v3244
        %v3246 = vlaneseq
        %v3247 = vshrl.u32 %v3246, 7
        %v3248 = vsub.s32 %v3245, %v3247
        %v3249 = vrot.slane %v3235, %v3248
        %v3250 = vcombine.low %v1542, %v1544
        %v3251 = vcombine.high %v1542, %v1544
        %v3253 = vunpack.c.l.s4 1983009808
        %v3254 = vunpack.c.0.s8 %v3253
        %v3255 = vlaneseq
        %v3256 = vshrl.u32 %v3255, 7
        %v3257 = vsub.s32 %v3254, %v3256
        %v3258 = vrot.slane %v3250, %v3257
        %v3260 = vunpack.c.l.s4 1983009808
        %v3261 = vunpack.c.0.s8 %v3260
        %v3262 = vlaneseq
        %v3263 = vshrl.u32 %v3262, 7
        %v3264 = vsub.s32 %v3261, %v3263
        %v3265 = vrot.slane %v3251, %v3264
        %v3266 = vcombine.low %v1543, %v1545
        %v3267 = vcombine.high %v1543, %v1545
        %v3269 = vunpack.c.l.s4 1983009808
        %v3270 = vunpack.c.0.s8 %v3269
        %v3271 = vlaneseq
        %v3272 = vshrl.u32 %v3271, 7
        %v3273 = vsub.s32 %v3270, %v3272
        %v3274 = vrot.slane %v3266, %v3273
        %v3276 = vunpack.c.l.s4 1983009808
        %v3277 = vunpack.c.0.s8 %v3276
        %v3278 = vlaneseq
        %v3279 = vshrl.u32 %v3278, 7
        %v3280 = vsub.s32 %v3277, %v3279
        %v3281 = vrot.slane %v3267, %v3280
        %v3282 = vcombine.low %v3226, %v3242
        %v3283 = vcombine.high %v3226, %v3242
        %v3285 = vunpack.c.l.s4 1934713408
        %v3286 = vunpack.c.0.s8 %v3285
        %v3287 = vlaneseq
        %v3288 = vshrl.u32 %v3287, 7
        %v3289 = vsub.s32 %v3286, %v3288
        %v3290 = vrot.slane %v3282, %v3289
        %v3292 = vunpack.c.l.s4 1934713408
        %v3293 = vunpack.c.0.s8 %v3292
        %v3294 = vlaneseq
        %v3295 = vshrl.u32 %v3294, 7
        %v3296 = vsub.s32 %v3293, %v3295
        %v3297 = vrot.slane %v3283, %v3296
        %v3298 = vcombine.low %v3233, %v3249
        %v3299 = vcombine.high %v3233, %v3249
        %v3301 = vunpack.c.l.s4 1934713408
        %v3302 = vunpack.c.0.s8 %v3301
        %v3303 = vlaneseq
        %v3304 = vshrl.u32 %v3303, 7
        %v3305 = vsub.s32 %v3302, %v3304
        %v3306 = vrot.slane %v3298, %v3305
        %v3308 = vunpack.c.l.s4 1934713408
        %v3309 = vunpack.c.0.s8 %v3308
        %v3310 = vlaneseq
        %v3311 = vshrl.u32 %v3310, 7
        %v3312 = vsub.s32 %v3309, %v3311
        %v3313 = vrot.slane %v3299, %v3312
        %v3314 = vcombine.low %v3258, %v3274
        %v3315 = vcombine.high %v3258, %v3274
        %v3317 = vunpack.c.l.s4 1934713408
        %v3318 = vunpack.c.0.s8 %v3317
        %v3319 = vlaneseq
        %v3320 = vshrl.u32 %v3319, 7
        %v3321 = vsub.s32 %v3318, %v3320
        %v3322 = vrot.slane %v3314, %v3321
        %v3324 = vunpack.c.l.s4 1934713408
        %v3325 = vunpack.c.0.s8 %v3324
        %v3326 = vlaneseq
        %v3327 = vshrl.u32 %v3326, 7
        %v3328 = vsub.s32 %v3325, %v3327
        %v3329 = vrot.slane %v3315, %v3328
        %v3330 = vcombine.low %v3265, %v3281
        %v3331 = vcombine.high %v3265, %v3281
        %v3333 = vunpack.c.l.s4 1934713408
        %v3334 = vunpack.c.0.s8 %v3333
        %v3335 = vlaneseq
        %v3336 = vshrl.u32 %v3335, 7
        %v3337 = vsub.s32 %v3334, %v3336
        %v3338 = vrot.slane %v3330, %v3337
        %v3340 = vunpack.c.l.s4 1934713408
        %v3341 = vunpack.c.0.s8 %v3340
        %v3342 = vlaneseq
        %v3343 = vshrl.u32 %v3342, 7
        %v3344 = vsub.s32 %v3341, %v3343
        %v3345 = vrot.slane %v3331, %v3344
        %v3346 = vcombine.low %v3290, %v3322
        %v3347 = vcombine.high %v3290, %v3322
        %v3348 = vcombine.low %v3297, %v3329
        %v3349 = vcombine.high %v3297, %v3329
        %v3350 = vcombine.low %v3306, %v3338
        %v3351 = vcombine.high %v3306, %v3338
        %v3352 = vcombine.low %v3313, %v3345
        %v3353 = vcombine.high %v3313, %v3345
        %v3354 = vmul.f32 %v2938, 0.25
        %v3355 = vmul.f32 %v3074, 0.25
        %v3356 = vmul.f32 %v3210, 0.25
        %v3357 = vmul.f32 %v3346, 0.25
        %v3358 = vmul.f32 %v2939, 0.25
        %v3359 = vmul.f32 %v3075, 0.25
        %v3360 = vmul.f32 %v3211, 0.25
        %v3361 = vmul.f32 %v3347, 0.25
        %v3362 = vmul.f32 %v2940, 0.25
        %v3363 = vmul.f32 %v3076, 0.25
        %v3364 = vmul.f32 %v3212, 0.25
        %v3365 = vmul.f32 %v3348, 0.25
        %v3366 = vmul.f32 %v2941, 0.25
        %v3367 = vmul.f32 %v3077, 0.25
        %v3368 = vmul.f32 %v3213, 0.25
        %v3369 = vmul.f32 %v3349, 0.25
        %v3370 = vmul.f32 %v2942, 0.25
        %v3371 = vmul.f32 %v3078, 0.25
        %v3372 = vmul.f32 %v3214, 0.25
        %v3373 = vmul.f32 %v3350, 0.25
        %v3374 = vmul.f32 %v2943, 0.25
        %v3375 = vmul.f32 %v3079, 0.25
        %v3376 = vmul.f32 %v3215, 0.25
        %v3377 = vmul.f32 %v3351, 0.25
        %v3378 = vmul.f32 %v2944, 0.25
        %v3379 = vmul.f32 %v3080, 0.25
        %v3380 = vmul.f32 %v3216, 0.25
        %v3381 = vmul.f32 %v3352, 0.25
        %v3382 = vmul.f32 %v2945, 0.25
        %v3383 = vmul.f32 %v3081, 0.25
        %v3384 = vmul.f32 %v3217, 0.25
        %v3385 = vmul.f32 %v3353, 0.25
        %v3386 = vcombine.low %v1762, %v1764
        %v3387 = vcombine.high %v1762, %v1764
        %v3389 = vunpack.c.l.s4 1983009808
        %v3390 = vunpack.c.0.s8 %v3389
        %v3391 = vlaneseq
        %v3392 = vshrl.u32 %v3391, 7
        %v3393 = vsub.s32 %v3390, %v3392
        %v3394 = vrot.slane %v3386, %v3393
        %v3396 = vunpack.c.l.s4 1983009808
        %v3397 = vunpack.c.0.s8 %v3396
        %v3398 = vlaneseq
        %v3399 = vshrl.u32 %v3398, 7
        %v3400 = vsub.s32 %v3397, %v3399
        %v3401 = vrot.slane %v3387, %v3400
        %v3402 = vcombine.low %v1763, %v1765
        %v3403 = vcombine.high %v1763, %v1765
        %v3405 = vunpack.c.l.s4 1983009808
        %v3406 = vunpack.c.0.s8 %v3405
        %v3407 = vlaneseq
        %v3408 = vshrl.u32 %v3407, 7
        %v3409 = vsub.s32 %v3406, %v3408
        %v3410 = vrot.slane %v3402, %v3409
        %v3412 = vunpack.c.l.s4 1983009808
        %v3413 = vunpack.c.0.s8 %v3412
        %v3414 = vlaneseq
        %v3415 = vshrl.u32 %v3414, 7
        %v3416 = vsub.s32 %v3413, %v3415
        %v3417 = vrot.slane %v3403, %v3416
        %v3418 = vcombine.low %v1766, %v1768
        %v3419 = vcombine.high %v1766, %v1768
        %v3421 = vunpack.c.l.s4 1983009808
        %v3422 = vunpack.c.0.s8 %v3421
        %v3423 = vlaneseq
        %v3424 = vshrl.u32 %v3423, 7
        %v3425 = vsub.s32 %v3422, %v3424
        %v3426 = vrot.slane %v3418, %v3425
        %v3428 = vunpack.c.l.s4 1983009808
        %v3429 = vunpack.c.0.s8 %v3428
        %v3430 = vlaneseq
        %v3431 = vshrl.u32 %v3430, 7
        %v3432 = vsub.s32 %v3429, %v3431
        %v3433 = vrot.slane %v3419, %v3432
        %v3434 = vcombine.low %v1767, %v1769
        %v3435 = vcombine.high %v1767, %v1769
        %v3437 = vunpack.c.l.s4 1983009808
        %v3438 = vunpack.c.0.s8 %v3437
        %v3439 = vlaneseq
        %v3440 = vshrl.u32 %v3439, 7
        %v3441 = vsub.s32 %v3438, %v3440
        %v3442 = vrot.slane %v3434, %v3441
        %v3444 = vunpack.c.l.s4 1983009808
        %v3445 = vunpack.c.0.s8 %v3444
        %v3446 = vlaneseq
        %v3447 = vshrl.u32 %v3446, 7
        %v3448 = vsub.s32 %v3445, %v3447
        %v3449 = vrot.slane %v3435, %v3448
        %v3450 = vcombine.low %v3394, %v3410
        %v3451 = vcombine.high %v3394, %v3410
        %v3453 = vunpack.c.l.s4 1934713408
        %v3454 = vunpack.c.0.s8 %v3453
        %v3455 = vlaneseq
        %v3456 = vshrl.u32 %v3455, 7
        %v3457 = vsub.s32 %v3454, %v3456
        %v3458 = vrot.slane %v3450, %v3457
        %v3460 = vunpack.c.l.s4 1934713408
        %v3461 = vunpack.c.0.s8 %v3460
        %v3462 = vlaneseq
        %v3463 = vshrl.u32 %v3462, 7
        %v3464 = vsub.s32 %v3461, %v3463
        %v3465 = vrot.slane %v3451, %v3464
        %v3466 = vcombine.low %v3401, %v3417
        %v3467 = vcombine.high %v3401, %v3417
        %v3469 = vunpack.c.l.s4 1934713408
        %v3470 = vunpack.c.0.s8 %v3469
        %v3471 = vlaneseq
        %v3472 = vshrl.u32 %v3471, 7
        %v3473 = vsub.s32 %v3470, %v3472
        %v3474 = vrot.slane %v3466, %v3473
        %v3476 = vunpack.c.l.s4 1934713408
        %v3477 = vunpack.c.0.s8 %v3476
        %v3478 = vlaneseq
        %v3479 = vshrl.u32 %v3478, 7
        %v3480 = vsub.s32 %v3477, %v3479
        %v3481 = vrot.slane %v3467, %v3480
        %v3482 = vcombine.low %v3426, %v3442
        %v3483 = vcombine.high %v3426, %v3442
        %v3485 = vunpack.c.l.s4 1934713408
        %v3486 = vunpack.c.0.s8 %v3485
        %v3487 = vlaneseq
        %v3488 = vshrl.u32 %v3487, 7
        %v3489 = vsub.s32 %v3486, %v3488
        %v3490 = vrot.slane %v3482, %v3489
        %v3492 = vunpack.c.l.s4 1934713408
        %v3493 = vunpack.c.0.s8 %v3492
        %v3494 = vlaneseq
        %v3495 = vshrl.u32 %v3494, 7
        %v3496 = vsub.s32 %v3493, %v3495
        %v3497 = vrot.slane %v3483, %v3496
        %v3498 = vcombine.low %v3433, %v3449
        %v3499 = vcombine.high %v3433, %v3449
        %v3501 = vunpack.c.l.s4 1934713408
        %v3502 = vunpack.c.0.s8 %v3501
        %v3503 = vlaneseq
        %v3504 = vshrl.u32 %v3503, 7
        %v3505 = vsub.s32 %v3502, %v3504
        %v3506 = vrot.slane %v3498, %v3505
        %v3508 = vunpack.c.l.s4 1934713408
        %v3509 = vunpack.c.0.s8 %v3508
        %v3510 = vlaneseq
        %v3511 = vshrl.u32 %v3510, 7
        %v3512 = vsub.s32 %v3509, %v3511
        %v3513 = vrot.slane %v3499, %v3512
        %v3514 = vcombine.low %v3458, %v3490
        %v3515 = vcombine.high %v3458, %v3490
        %v3516 = vcombine.low %v3465, %v3497
        %v3517 = vcombine.high %v3465, %v3497
        %v3518 = vcombine.low %v3474, %v3506
        %v3519 = vcombine.high %v3474, %v3506
        %v3520 = vcombine.low %v3481, %v3513
        %v3521 = vcombine.high %v3481, %v3513
        %v3522 = vcombine.low %v1898, %v1900
        %v3523 = vcombine.high %v1898, %v1900
        %v3525 = vunpack.c.l.s4 1983009808
        %v3526 = vunpack.c.0.s8 %v3525
        %v3527 = vlaneseq
        %v3528 = vshrl.u32 %v3527, 7
        %v3529 = vsub.s32 %v3526, %v3528
        %v3530 = vrot.slane %v3522, %v3529
        %v3532 = vunpack.c.l.s4 1983009808
        %v3533 = vunpack.c.0.s8 %v3532
        %v3534 = vlaneseq
        %v3535 = vshrl.u32 %v3534, 7
        %v3536 = vsub.s32 %v3533, %v3535
        %v3537 = vrot.slane %v3523, %v3536
        %v3538 = vcombine.low %v1899, %v1901
        %v3539 = vcombine.high %v1899, %v1901
        %v3541 = vunpack.c.l.s4 1983009808
        %v3542 = vunpack.c.0.s8 %v3541
        %v3543 = vlaneseq
        %v3544 = vshrl.u32 %v3543, 7
        %v3545 = vsub.s32 %v3542, %v3544
        %v3546 = vrot.slane %v3538, %v3545
        %v3548 = vunpack.c.l.s4 1983009808
        %v3549 = vunpack.c.0.s8 %v3548
        %v3550 = vlaneseq
        %v3551 = vshrl.u32 %v3550, 7
        %v3552 = vsub.s32 %v3549, %v3551
        %v3553 = vrot.slane %v3539, %v3552
        %v3554 = vcombine.low %v1902, %v1904
        %v3555 = vcombine.high %v1902, %v1904
        %v3557 = vunpack.c.l.s4 1983009808
        %v3558 = vunpack.c.0.s8 %v3557
        %v3559 = vlaneseq
        %v3560 = vshrl.u32 %v3559, 7
        %v3561 = vsub.s32 %v3558, %v3560
        %v3562 = vrot.slane %v3554, %v3561
        %v3564 = vunpack.c.l.s4 1983009808
        %v3565 = vunpack.c.0.s8 %v3564
        %v3566 = vlaneseq
        %v3567 = vshrl.u32 %v3566, 7
        %v3568 = vsub.s32 %v3565, %v3567
        %v3569 = vrot.slane %v3555, %v3568
        %v3570 = vcombine.low %v1903, %v1905
        %v3571 = vcombine.high %v1903, %v1905
        %v3573 = vunpack.c.l.s4 1983009808
        %v3574 = vunpack.c.0.s8 %v3573
        %v3575 = vlaneseq
        %v3576 = vshrl.u32 %v3575, 7
        %v3577 = vsub.s32 %v3574, %v3576
        %v3578 = vrot.slane %v3570, %v3577
        %v3580 = vunpack.c.l.s4 1983009808
        %v3581 = vunpack.c.0.s8 %v3580
        %v3582 = vlaneseq
        %v3583 = vshrl.u32 %v3582, 7
        %v3584 = vsub.s32 %v3581, %v3583
        %v3585 = vrot.slane %v3571, %v3584
        %v3586 = vcombine.low %v3530, %v3546
        %v3587 = vcombine.high %v3530, %v3546
        %v3589 = vunpack.c.l.s4 1934713408
        %v3590 = vunpack.c.0.s8 %v3589
        %v3591 = vlaneseq
        %v3592 = vshrl.u32 %v3591, 7
        %v3593 = vsub.s32 %v3590, %v3592
        %v3594 = vrot.slane %v3586, %v3593
        %v3596 = vunpack.c.l.s4 1934713408
        %v3597 = vunpack.c.0.s8 %v3596
        %v3598 = vlaneseq
        %v3599 = vshrl.u32 %v3598, 7
        %v3600 = vsub.s32 %v3597, %v3599
        %v3601 = vrot.slane %v3587, %v3600
        %v3602 = vcombine.low %v3537, %v3553
        %v3603 = vcombine.high %v3537, %v3553
        %v3605 = vunpack.c.l.s4 1934713408
        %v3606 = vunpack.c.0.s8 %v3605
        %v3607 = vlaneseq
        %v3608 = vshrl.u32 %v3607, 7
        %v3609 = vsub.s32 %v3606, %v3608
        %v3610 = vrot.slane %v3602, %v3609
        %v3612 = vunpack.c.l.s4 1934713408
        %v3613 = vunpack.c.0.s8 %v3612
        %v3614 = vlaneseq
        %v3615 = vshrl.u32 %v3614, 7
        %v3616 = vsub.s32 %v3613, %v3615
        %v3617 = vrot.slane %v3603, %v3616
        %v3618 = vcombine.low %v3562, %v3578
        %v3619 = vcombine.high %v3562, %v3578
        %v3621 = vunpack.c.l.s4 1934713408
        %v3622 = vunpack.c.0.s8 %v3621
        %v3623 = vlaneseq
        %v3624 = vshrl.u32 %v3623, 7
        %v3625 = vsub.s32 %v3622, %v3624
        %v3626 = vrot.slane %v3618, %v3625
        %v3628 = vunpack.c.l.s4 1934713408
        %v3629 = vunpack.c.0.s8 %v3628
        %v3630 = vlaneseq
        %v3631 = vshrl.u32 %v3630, 7
        %v3632 = vsub.s32 %v3629, %v3631
        %v3633 = vrot.slane %v3619, %v3632
        %v3634 = vcombine.low %v3569, %v3585
        %v3635 = vcombine.high %v3569, %v3585
        %v3637 = vunpack.c.l.s4 1934713408
        %v3638 = vunpack.c.0.s8 %v3637
        %v3639 = vlaneseq
        %v3640 = vshrl.u32 %v3639, 7
        %v3641 = vsub.s32 %v3638, %v3640
        %v3642 = vrot.slane %v3634, %v3641
        %v3644 = vunpack.c.l.s4 1934713408
        %v3645 = vunpack.c.0.s8 %v3644
        %v3646 = vlaneseq
        %v3647 = vshrl.u32 %v3646, 7
        %v3648 = vsub.s32 %v3645, %v3647
        %v3649 = vrot.slane %v3635, %v3648
        %v3650 = vcombine.low %v3594, %v3626
        %v3651 = vcombine.high %v3594, %v3626
        %v3652 = vcombine.low %v3601, %v3633
        %v3653 = vcombine.high %v3601, %v3633
        %v3654 = vcombine.low %v3610, %v3642
        %v3655 = vcombine.high %v3610, %v3642
        %v3656 = vcombine.low %v3617, %v3649
        %v3657 = vcombine.high %v3617, %v3649
        %v3658 = vcombine.low %v2034, %v2036
        %v3659 = vcombine.high %v2034, %v2036
        %v3661 = vunpack.c.l.s4 1983009808
        %v3662 = vunpack.c.0.s8 %v3661
        %v3663 = vlaneseq
        %v3664 = vshrl.u32 %v3663, 7
        %v3665 = vsub.s32 %v3662, %v3664
        %v3666 = vrot.slane %v3658, %v3665
        %v3668 = vunpack.c.l.s4 1983009808
        %v3669 = vunpack.c.0.s8 %v3668
        %v3670 = vlaneseq
        %v3671 = vshrl.u32 %v3670, 7
        %v3672 = vsub.s32 %v3669, %v3671
        %v3673 = vrot.slane %v3659, %v3672
        %v3674 = vcombine.low %v2035, %v2037
        %v3675 = vcombine.high %v2035, %v2037
        %v3677 = vunpack.c.l.s4 1983009808
        %v3678 = vunpack.c.0.s8 %v3677
        %v3679 = vlaneseq
        %v3680 = vshrl.u32 %v3679, 7
        %v3681 = vsub.s32 %v3678, %v3680
        %v3682 = vrot.slane %v3674, %v3681
        %v3684 = vunpack.c.l.s4 1983009808
        %v3685 = vunpack.c.0.s8 %v3684
        %v3686 = vlaneseq
        %v3687 = vshrl.u32 %v3686, 7
        %v3688 = vsub.s32 %v3685, %v3687
        %v3689 = vrot.slane %v3675, %v3688
        %v3690 = vcombine.low %v2038, %v2040
        %v3691 = vcombine.high %v2038, %v2040
        %v3693 = vunpack.c.l.s4 1983009808
        %v3694 = vunpack.c.0.s8 %v3693
        %v3695 = vlaneseq
        %v3696 = vshrl.u32 %v3695, 7
        %v3697 = vsub.s32 %v3694, %v3696
        %v3698 = vrot.slane %v3690, %v3697
        %v3700 = vunpack.c.l.s4 1983009808
        %v3701 = vunpack.c.0.s8 %v3700
        %v3702 = vlaneseq
        %v3703 = vshrl.u32 %v3702, 7
        %v3704 = vsub.s32 %v3701, %v3703
        %v3705 = vrot.slane %v3691, %v3704
        %v3706 = vcombine.low %v2039, %v2041
        %v3707 = vcombine.high %v2039, %v2041
        %v3709 = vunpack.c.l.s4 1983009808
        %v3710 = vunpack.c.0.s8 %v3709
        %v3711 = vlaneseq
        %v3712 = vshrl.u32 %v3711, 7
        %v3713 = vsub.s32 %v3710, %v3712
        %v3714 = vrot.slane %v3706, %v3713
        %v3716 = vunpack.c.l.s4 1983009808
        %v3717 = vunpack.c.0.s8 %v3716
        %v3718 = vlaneseq
        %v3719 = vshrl.u32 %v3718, 7
        %v3720 = vsub.s32 %v3717, %v3719
        %v3721 = vrot.slane %v3707, %v3720
        %v3722 = vcombine.low %v3666, %v3682
        %v3723 = vcombine.high %v3666, %v3682
        %v3725 = vunpack.c.l.s4 1934713408
        %v3726 = vunpack.c.0.s8 %v3725
        %v3727 = vlaneseq
        %v3728 = vshrl.u32 %v3727, 7
        %v3729 = vsub.s32 %v3726, %v3728
        %v3730 = vrot.slane %v3722, %v3729
        %v3732 = vunpack.c.l.s4 1934713408
        %v3733 = vunpack.c.0.s8 %v3732
        %v3734 = vlaneseq
        %v3735 = vshrl.u32 %v3734, 7
        %v3736 = vsub.s32 %v3733, %v3735
        %v3737 = vrot.slane %v3723, %v3736
        %v3738 = vcombine.low %v3673, %v3689
        %v3739 = vcombine.high %v3673, %v3689
        %v3741 = vunpack.c.l.s4 1934713408
        %v3742 = vunpack.c.0.s8 %v3741
        %v3743 = vlaneseq
        %v3744 = vshrl.u32 %v3743, 7
        %v3745 = vsub.s32 %v3742, %v3744
        %v3746 = vrot.slane %v3738, %v3745
        %v3748 = vunpack.c.l.s4 1934713408
        %v3749 = vunpack.c.0.s8 %v3748
        %v3750 = vlaneseq
        %v3751 = vshrl.u32 %v3750, 7
        %v3752 = vsub.s32 %v3749, %v3751
        %v3753 = vrot.slane %v3739, %v3752
        %v3754 = vcombine.low %v3698, %v3714
        %v3755 = vcombine.high %v3698, %v3714
        %v3757 = vunpack.c.l.s4 1934713408
        %v3758 = vunpack.c.0.s8 %v3757
        %v3759 = vlaneseq
        %v3760 = vshrl.u32 %v3759, 7
        %v3761 = vsub.s32 %v3758, %v3760
        %v3762 = vrot.slane %v3754, %v3761
        %v3764 = vunpack.c.l.s4 1934713408
        %v3765 = vunpack.c.0.s8 %v3764
        %v3766 = vlaneseq
        %v3767 = vshrl.u32 %v3766, 7
        %v3768 = vsub.s32 %v3765, %v3767
        %v3769 = vrot.slane %v3755, %v3768
        %v3770 = vcombine.low %v3705, %v3721
        %v3771 = vcombine.high %v3705, %v3721
        %v3773 = vunpack.c.l.s4 1934713408
        %v3774 = vunpack.c.0.s8 %v3773
        %v3775 = vlaneseq
        %v3776 = vshrl.u32 %v3775, 7
        %v3777 = vsub.s32 %v3774, %v3776
        %v3778 = vrot.slane %v3770, %v3777
        %v3780 = vunpack.c.l.s4 1934713408
        %v3781 = vunpack.c.0.s8 %v3780
        %v3782 = vlaneseq
        %v3783 = vshrl.u32 %v3782, 7
        %v3784 = vsub.s32 %v3781, %v3783
        %v3785 = vrot.slane %v3771, %v3784
        %v3786 = vcombine.low %v3730, %v3762
        %v3787 = vcombine.high %v3730, %v3762
        %v3788 = vcombine.low %v3737, %v3769
        %v3789 = vcombine.high %v3737, %v3769
        %v3790 = vcombine.low %v3746, %v3778
        %v3791 = vcombine.high %v3746, %v3778
        %v3792 = vcombine.low %v3753, %v3785
        %v3793 = vcombine.high %v3753, %v3785
        %v3794 = vcombine.low %v2170, %v2172
        %v3795 = vcombine.high %v2170, %v2172
        %v3797 = vunpack.c.l.s4 1983009808
        %v3798 = vunpack.c.0.s8 %v3797
        %v3799 = vlaneseq
        %v3800 = vshrl.u32 %v3799, 7
        %v3801 = vsub.s32 %v3798, %v3800
        %v3802 = vrot.slane %v3794, %v3801
        %v3804 = vunpack.c.l.s4 1983009808
        %v3805 = vunpack.c.0.s8 %v3804
        %v3806 = vlaneseq
        %v3807 = vshrl.u32 %v3806, 7
        %v3808 = vsub.s32 %v3805, %v3807
        %v3809 = vrot.slane %v3795, %v3808
        %v3810 = vcombine.low %v2171, %v2173
        %v3811 = vcombine.high %v2171, %v2173
        %v3813 = vunpack.c.l.s4 1983009808
        %v3814 = vunpack.c.0.s8 %v3813
        %v3815 = vlaneseq
        %v3816 = vshrl.u32 %v3815, 7
        %v3817 = vsub.s32 %v3814, %v3816
        %v3818 = vrot.slane %v3810, %v3817
        %v3820 = vunpack.c.l.s4 1983009808
        %v3821 = vunpack.c.0.s8 %v3820
        %v3822 = vlaneseq
        %v3823 = vshrl.u32 %v3822, 7
        %v3824 = vsub.s32 %v3821, %v3823
        %v3825 = vrot.slane %v3811, %v3824
        %v3826 = vcombine.low %v2174, %v2176
        %v3827 = vcombine.high %v2174, %v2176
        %v3829 = vunpack.c.l.s4 1983009808
        %v3830 = vunpack.c.0.s8 %v3829
        %v3831 = vlaneseq
        %v3832 = vshrl.u32 %v3831, 7
        %v3833 = vsub.s32 %v3830, %v3832
        %v3834 = vrot.slane %v3826, %v3833
        %v3836 = vunpack.c.l.s4 1983009808
        %v3837 = vunpack.c.0.s8 %v3836
        %v3838 = vlaneseq
        %v3839 = vshrl.u32 %v3838, 7
        %v3840 = vsub.s32 %v3837, %v3839
        %v3841 = vrot.slane %v3827, %v3840
        %v3842 = vcombine.low %v2175, %v2177
        %v3843 = vcombine.high %v2175, %v2177
        %v3845 = vunpack.c.l.s4 1983009808
        %v3846 = vunpack.c.0.s8 %v3845
        %v3847 = vlaneseq
        %v3848 = vshrl.u32 %v3847, 7
        %v3849 = vsub.s32 %v3846, %v3848
        %v3850 = vrot.slane %v3842, %v3849
        %v3852 = vunpack.c.l.s4 1983009808
        %v3853 = vunpack.c.0.s8 %v3852
        %v3854 = vlaneseq
        %v3855 = vshrl.u32 %v3854, 7
        %v3856 = vsub.s32 %v3853, %v3855
        %v3857 = vrot.slane %v3843, %v3856
        %v3858 = vcombine.low %v3802, %v3818
        %v3859 = vcombine.high %v3802, %v3818
        %v3861 = vunpack.c.l.s4 1934713408
        %v3862 = vunpack.c.0.s8 %v3861
        %v3863 = vlaneseq
        %v3864 = vshrl.u32 %v3863, 7
        %v3865 = vsub.s32 %v3862, %v3864
        %v3866 = vrot.slane %v3858, %v3865
        %v3868 = vunpack.c.l.s4 1934713408
        %v3869 = vunpack.c.0.s8 %v3868
        %v3870 = vlaneseq
        %v3871 = vshrl.u32 %v3870, 7
        %v3872 = vsub.s32 %v3869, %v3871
        %v3873 = vrot.slane %v3859, %v3872
        %v3874 = vcombine.low %v3809, %v3825
        %v3875 = vcombine.high %v3809, %v3825
        %v3877 = vunpack.c.l.s4 1934713408
        %v3878 = vunpack.c.0.s8 %v3877
        %v3879 = vlaneseq
        %v3880 = vshrl.u32 %v3879, 7
        %v3881 = vsub.s32 %v3878, %v3880
        %v3882 = vrot.slane %v3874, %v3881
        %v3884 = vunpack.c.l.s4 1934713408
        %v3885 = vunpack.c.0.s8 %v3884
        %v3886 = vlaneseq
        %v3887 = vshrl.u32 %v3886, 7
        %v3888 = vsub.s32 %v3885, %v3887
        %v3889 = vrot.slane %v3875, %v3888
        %v3890 = vcombine.low %v3834, %v3850
        %v3891 = vcombine.high %v3834, %v3850
        %v3893 = vunpack.c.l.s4 1934713408
        %v3894 = vunpack.c.0.s8 %v3893
        %v3895 = vlaneseq
        %v3896 = vshrl.u32 %v3895, 7
        %v3897 = vsub.s32 %v3894, %v3896
        %v3898 = vrot.slane %v3890, %v3897
        %v3900 = vunpack.c.l.s4 1934713408
        %v3901 = vunpack.c.0.s8 %v3900
        %v3902 = vlaneseq
        %v3903 = vshrl.u32 %v3902, 7
        %v3904 = vsub.s32 %v3901, %v3903
        %v3905 = vrot.slane %v3891, %v3904
        %v3906 = vcombine.low %v3841, %v3857
        %v3907 = vcombine.high %v3841, %v3857
        %v3909 = vunpack.c.l.s4 1934713408
        %v3910 = vunpack.c.0.s8 %v3909
        %v3911 = vlaneseq
        %v3912 = vshrl.u32 %v3911, 7
        %v3913 = vsub.s32 %v3910, %v3912
        %v3914 = vrot.slane %v3906, %v3913
        %v3916 = vunpack.c.l.s4 1934713408
        %v3917 = vunpack.c.0.s8 %v3916
        %v3918 = vlaneseq
        %v3919 = vshrl.u32 %v3918, 7
        %v3920 = vsub.s32 %v3917, %v3919
        %v3921 = vrot.slane %v3907, %v3920
        %v3922 = vcombine.low %v3866, %v3898
        %v3923 = vcombine.high %v3866, %v3898
        %v3924 = vcombine.low %v3873, %v3905
        %v3925 = vcombine.high %v3873, %v3905
        %v3926 = vcombine.low %v3882, %v3914
        %v3927 = vcombine.high %v3882, %v3914
        %v3928 = vcombine.low %v3889, %v3921
        %v3929 = vcombine.high %v3889, %v3921
        %v3930 = vcombine.low %v2394, %v2396
        %v3931 = vcombine.high %v2394, %v2396
        %v3933 = vunpack.c.l.s4 1983009808
        %v3934 = vunpack.c.0.s8 %v3933
        %v3935 = vlaneseq
        %v3936 = vshrl.u32 %v3935, 7
        %v3937 = vsub.s32 %v3934, %v3936
        %v3938 = vrot.slane %v3930, %v3937
        %v3940 = vunpack.c.l.s4 1983009808
        %v3941 = vunpack.c.0.s8 %v3940
        %v3942 = vlaneseq
        %v3943 = vshrl.u32 %v3942, 7
        %v3944 = vsub.s32 %v3941, %v3943
        %v3945 = vrot.slane %v3931, %v3944
        %v3946 = vcombine.low %v2395, %v2397
        %v3947 = vcombine.high %v2395, %v2397
        %v3949 = vunpack.c.l.s4 1983009808
        %v3950 = vunpack.c.0.s8 %v3949
        %v3951 = vlaneseq
        %v3952 = vshrl.u32 %v3951, 7
        %v3953 = vsub.s32 %v3950, %v3952
        %v3954 = vrot.slane %v3946, %v3953
        %v3956 = vunpack.c.l.s4 1983009808
        %v3957 = vunpack.c.0.s8 %v3956
        %v3958 = vlaneseq
        %v3959 = vshrl.u32 %v3958, 7
        %v3960 = vsub.s32 %v3957, %v3959
        %v3961 = vrot.slane %v3947, %v3960
        %v3962 = vcombine.low %v2398, %v2400
        %v3963 = vcombine.high %v2398, %v2400
        %v3965 = vunpack.c.l.s4 1983009808
        %v3966 = vunpack.c.0.s8 %v3965
        %v3967 = vlaneseq
        %v3968 = vshrl.u32 %v3967, 7
        %v3969 = vsub.s32 %v3966, %v3968
        %v3970 = vrot.slane %v3962, %v3969
        %v3972 = vunpack.c.l.s4 1983009808
        %v3973 = vunpack.c.0.s8 %v3972
        %v3974 = vlaneseq
        %v3975 = vshrl.u32 %v3974, 7
        %v3976 = vsub.s32 %v3973, %v3975
        %v3977 = vrot.slane %v3963, %v3976
        %v3978 = vcombine.low %v2399, %v2401
        %v3979 = vcombine.high %v2399, %v2401
        %v3981 = vunpack.c.l.s4 1983009808
        %v3982 = vunpack.c.0.s8 %v3981
        %v3983 = vlaneseq
        %v3984 = vshrl.u32 %v3983, 7
        %v3985 = vsub.s32 %v3982, %v3984
        %v3986 = vrot.slane %v3978, %v3985
        %v3988 = vunpack.c.l.s4 1983009808
        %v3989 = vunpack.c.0.s8 %v3988
        %v3990 = vlaneseq
        %v3991 = vshrl.u32 %v3990, 7
        %v3992 = vsub.s32 %v3989, %v3991
        %v3993 = vrot.slane %v3979, %v3992
        %v3994 = vcombine.low %v3938, %v3954
        %v3995 = vcombine.high %v3938, %v3954
        %v3997 = vunpack.c.l.s4 1934713408
        %v3998 = vunpack.c.0.s8 %v3997
        %v3999 = vlaneseq
        %v4000 = vshrl.u32 %v3999, 7
        %v4001 = vsub.s32 %v3998, %v4000
        %v4002 = vrot.slane %v3994, %v4001
        %v4004 = vunpack.c.l.s4 1934713408
        %v4005 = vunpack.c.0.s8 %v4004
        %v4006 = vlaneseq
        %v4007 = vshrl.u32 %v4006, 7
        %v4008 = vsub.s32 %v4005, %v4007
        %v4009 = vrot.slane %v3995, %v4008
        %v4010 = vcombine.low %v3945, %v3961
        %v4011 = vcombine.high %v3945, %v3961
        %v4013 = vunpack.c.l.s4 1934713408
        %v4014 = vunpack.c.0.s8 %v4013
        %v4015 = vlaneseq
        %v4016 = vshrl.u32 %v4015, 7
        %v4017 = vsub.s32 %v4014, %v4016
        %v4018 = vrot.slane %v4010, %v4017
        %v4020 = vunpack.c.l.s4 1934713408
        %v4021 = vunpack.c.0.s8 %v4020
        %v4022 = vlaneseq
        %v4023 = vshrl.u32 %v4022, 7
        %v4024 = vsub.s32 %v4021, %v4023
        %v4025 = vrot.slane %v4011, %v4024
        %v4026 = vcombine.low %v3970, %v3986
        %v4027 = vcombine.high %v3970, %v3986
        %v4029 = vunpack.c.l.s4 1934713408
        %v4030 = vunpack.c.0.s8 %v4029
        %v4031 = vlaneseq
        %v4032 = vshrl.u32 %v4031, 7
        %v4033 = vsub.s32 %v4030, %v4032
        %v4034 = vrot.slane %v4026, %v4033
        %v4036 = vunpack.c.l.s4 1934713408
        %v4037 = vunpack.c.0.s8 %v4036
        %v4038 = vlaneseq
        %v4039 = vshrl.u32 %v4038, 7
        %v4040 = vsub.s32 %v4037, %v4039
        %v4041 = vrot.slane %v4027, %v4040
        %v4042 = vcombine.low %v3977, %v3993
        %v4043 = vcombine.high %v3977, %v3993
        %v4045 = vunpack.c.l.s4 1934713408
        %v4046 = vunpack.c.0.s8 %v4045
        %v4047 = vlaneseq
        %v4048 = vshrl.u32 %v4047, 7
        %v4049 = vsub.s32 %v4046, %v4048
        %v4050 = vrot.slane %v4042, %v4049
        %v4052 = vunpack.c.l.s4 1934713408
        %v4053 = vunpack.c.0.s8 %v4052
        %v4054 = vlaneseq
        %v4055 = vshrl.u32 %v4054, 7
        %v4056 = vsub.s32 %v4053, %v4055
        %v4057 = vrot.slane %v4043, %v4056
        %v4058 = vcombine.low %v4002, %v4034
        %v4059 = vcombine.high %v4002, %v4034
        %v4060 = vcombine.low %v4009, %v4041
        %v4061 = vcombine.high %v4009, %v4041
        %v4062 = vcombine.low %v4018, %v4050
        %v4063 = vcombine.high %v4018, %v4050
        %v4064 = vcombine.low %v4025, %v4057
        %v4065 = vcombine.high %v4025, %v4057
        %v4066 = vcombine.low %v2530, %v2532
        %v4067 = vcombine.high %v2530, %v2532
        %v4069 = vunpack.c.l.s4 1983009808
        %v4070 = vunpack.c.0.s8 %v4069
        %v4071 = vlaneseq
        %v4072 = vshrl.u32 %v4071, 7
        %v4073 = vsub.s32 %v4070, %v4072
        %v4074 = vrot.slane %v4066, %v4073
        %v4076 = vunpack.c.l.s4 1983009808
        %v4077 = vunpack.c.0.s8 %v4076
        %v4078 = vlaneseq
        %v4079 = vshrl.u32 %v4078, 7
        %v4080 = vsub.s32 %v4077, %v4079
        %v4081 = vrot.slane %v4067, %v4080
        %v4082 = vcombine.low %v2531, %v2533
        %v4083 = vcombine.high %v2531, %v2533
        %v4085 = vunpack.c.l.s4 1983009808
        %v4086 = vunpack.c.0.s8 %v4085
        %v4087 = vlaneseq
        %v4088 = vshrl.u32 %v4087, 7
        %v4089 = vsub.s32 %v4086, %v4088
        %v4090 = vrot.slane %v4082, %v4089
        %v4092 = vunpack.c.l.s4 1983009808
        %v4093 = vunpack.c.0.s8 %v4092
        %v4094 = vlaneseq
        %v4095 = vshrl.u32 %v4094, 7
        %v4096 = vsub.s32 %v4093, %v4095
        %v4097 = vrot.slane %v4083, %v4096
        %v4098 = vcombine.low %v2534, %v2536
        %v4099 = vcombine.high %v2534, %v2536
        %v4101 = vunpack.c.l.s4 1983009808
        %v4102 = vunpack.c.0.s8 %v4101
        %v4103 = vlaneseq
        %v4104 = vshrl.u32 %v4103, 7
        %v4105 = vsub.s32 %v4102, %v4104
        %v4106 = vrot.slane %v4098, %v4105
        %v4108 = vunpack.c.l.s4 1983009808
        %v4109 = vunpack.c.0.s8 %v4108
        %v4110 = vlaneseq
        %v4111 = vshrl.u32 %v4110, 7
        %v4112 = vsub.s32 %v4109, %v4111
        %v4113 = vrot.slane %v4099, %v4112
        %v4114 = vcombine.low %v2535, %v2537
        %v4115 = vcombine.high %v2535, %v2537
        %v4117 = vunpack.c.l.s4 1983009808
        %v4118 = vunpack.c.0.s8 %v4117
        %v4119 = vlaneseq
        %v4120 = vshrl.u32 %v4119, 7
        %v4121 = vsub.s32 %v4118, %v4120
        %v4122 = vrot.slane %v4114, %v4121
        %v4124 = vunpack.c.l.s4 1983009808
        %v4125 = vunpack.c.0.s8 %v4124
        %v4126 = vlaneseq
        %v4127 = vshrl.u32 %v4126, 7
        %v4128 = vsub.s32 %v4125, %v4127
        %v4129 = vrot.slane %v4115, %v4128
        %v4130 = vcombine.low %v4074, %v4090
        %v4131 = vcombine.high %v4074, %v4090
        %v4133 = vunpack.c.l.s4 1934713408
        %v4134 = vunpack.c.0.s8 %v4133
        %v4135 = vlaneseq
        %v4136 = vshrl.u32 %v4135, 7
        %v4137 = vsub.s32 %v4134, %v4136
        %v4138 = vrot.slane %v4130, %v4137
        %v4140 = vunpack.c.l.s4 1934713408
        %v4141 = vunpack.c.0.s8 %v4140
        %v4142 = vlaneseq
        %v4143 = vshrl.u32 %v4142, 7
        %v4144 = vsub.s32 %v4141, %v4143
        %v4145 = vrot.slane %v4131, %v4144
        %v4146 = vcombine.low %v4081, %v4097
        %v4147 = vcombine.high %v4081, %v4097
        %v4149 = vunpack.c.l.s4 1934713408
        %v4150 = vunpack.c.0.s8 %v4149
        %v4151 = vlaneseq
        %v4152 = vshrl.u32 %v4151, 7
        %v4153 = vsub.s32 %v4150, %v4152
        %v4154 = vrot.slane %v4146, %v4153
        %v4156 = vunpack.c.l.s4 1934713408
        %v4157 = vunpack.c.0.s8 %v4156
        %v4158 = vlaneseq
        %v4159 = vshrl.u32 %v4158, 7
        %v4160 = vsub.s32 %v4157, %v4159
        %v4161 = vrot.slane %v4147, %v4160
        %v4162 = vcombine.low %v4106, %v4122
        %v4163 = vcombine.high %v4106, %v4122
        %v4165 = vunpack.c.l.s4 1934713408
        %v4166 = vunpack.c.0.s8 %v4165
        %v4167 = vlaneseq
        %v4168 = vshrl.u32 %v4167, 7
        %v4169 = vsub.s32 %v4166, %v4168
        %v4170 = vrot.slane %v4162, %v4169
        %v4172 = vunpack.c.l.s4 1934713408
        %v4173 = vunpack.c.0.s8 %v4172
        %v4174 = vlaneseq
        %v4175 = vshrl.u32 %v4174, 7
        %v4176 = vsub.s32 %v4173, %v4175
        %v4177 = vrot.slane %v4163, %v4176
        %v4178 = vcombine.low %v4113, %v4129
        %v4179 = vcombine.high %v4113, %v4129
        %v4181 = vunpack.c.l.s4 1934713408
        %v4182 = vunpack.c.0.s8 %v4181
        %v4183 = vlaneseq
        %v4184 = vshrl.u32 %v4183, 7
        %v4185 = vsub.s32 %v4182, %v4184
        %v4186 = vrot.slane %v4178, %v4185
        %v4188 = vunpack.c.l.s4 1934713408
        %v4189 = vunpack.c.0.s8 %v4188
        %v4190 = vlaneseq
        %v4191 = vshrl.u32 %v4190, 7
        %v4192 = vsub.s32 %v4189, %v4191
        %v4193 = vrot.slane %v4179, %v4192
        %v4194 = vcombine.low %v4138, %v4170
        %v4195 = vcombine.high %v4138, %v4170
        %v4196 = vcombine.low %v4145, %v4177
        %v4197 = vcombine.high %v4145, %v4177
        %v4198 = vcombine.low %v4154, %v4186
        %v4199 = vcombine.high %v4154, %v4186
        %v4200 = vcombine.low %v4161, %v4193
        %v4201 = vcombine.high %v4161, %v4193
        %v4202 = vcombine.low %v2666, %v2668
        %v4203 = vcombine.high %v2666, %v2668
        %v4205 = vunpack.c.l.s4 1983009808
        %v4206 = vunpack.c.0.s8 %v4205
        %v4207 = vlaneseq
        %v4208 = vshrl.u32 %v4207, 7
        %v4209 = vsub.s32 %v4206, %v4208
        %v4210 = vrot.slane %v4202, %v4209
        %v4212 = vunpack.c.l.s4 1983009808
        %v4213 = vunpack.c.0.s8 %v4212
        %v4214 = vlaneseq
        %v4215 = vshrl.u32 %v4214, 7
        %v4216 = vsub.s32 %v4213, %v4215
        %v4217 = vrot.slane %v4203, %v4216
        %v4218 = vcombine.low %v2667, %v2669
        %v4219 = vcombine.high %v2667, %v2669
        %v4221 = vunpack.c.l.s4 1983009808
        %v4222 = vunpack.c.0.s8 %v4221
        %v4223 = vlaneseq
        %v4224 = vshrl.u32 %v4223, 7
        %v4225 = vsub.s32 %v4222, %v4224
        %v4226 = vrot.slane %v4218, %v4225
        %v4228 = vunpack.c.l.s4 1983009808
        %v4229 = vunpack.c.0.s8 %v4228
        %v4230 = vlaneseq
        %v4231 = vshrl.u32 %v4230, 7
        %v4232 = vsub.s32 %v4229, %v4231
        %v4233 = vrot.slane %v4219, %v4232
        %v4234 = vcombine.low %v2670, %v2672
        %v4235 = vcombine.high %v2670, %v2672
        %v4237 = vunpack.c.l.s4 1983009808
        %v4238 = vunpack.c.0.s8 %v4237
        %v4239 = vlaneseq
        %v4240 = vshrl.u32 %v4239, 7
        %v4241 = vsub.s32 %v4238, %v4240
        %v4242 = vrot.slane %v4234, %v4241
        %v4244 = vunpack.c.l.s4 1983009808
        %v4245 = vunpack.c.0.s8 %v4244
        %v4246 = vlaneseq
        %v4247 = vshrl.u32 %v4246, 7
        %v4248 = vsub.s32 %v4245, %v4247
        %v4249 = vrot.slane %v4235, %v4248
        %v4250 = vcombine.low %v2671, %v2673
        %v4251 = vcombine.high %v2671, %v2673
        %v4253 = vunpack.c.l.s4 1983009808
        %v4254 = vunpack.c.0.s8 %v4253
        %v4255 = vlaneseq
        %v4256 = vshrl.u32 %v4255, 7
        %v4257 = vsub.s32 %v4254, %v4256
        %v4258 = vrot.slane %v4250, %v4257
        %v4260 = vunpack.c.l.s4 1983009808
        %v4261 = vunpack.c.0.s8 %v4260
        %v4262 = vlaneseq
        %v4263 = vshrl.u32 %v4262, 7
        %v4264 = vsub.s32 %v4261, %v4263
        %v4265 = vrot.slane %v4251, %v4264
        %v4266 = vcombine.low %v4210, %v4226
        %v4267 = vcombine.high %v4210, %v4226
        %v4269 = vunpack.c.l.s4 1934713408
        %v4270 = vunpack.c.0.s8 %v4269
        %v4271 = vlaneseq
        %v4272 = vshrl.u32 %v4271, 7
        %v4273 = vsub.s32 %v4270, %v4272
        %v4274 = vrot.slane %v4266, %v4273
        %v4276 = vunpack.c.l.s4 1934713408
        %v4277 = vunpack.c.0.s8 %v4276
        %v4278 = vlaneseq
        %v4279 = vshrl.u32 %v4278, 7
        %v4280 = vsub.s32 %v4277, %v4279
        %v4281 = vrot.slane %v4267, %v4280
        %v4282 = vcombine.low %v4217, %v4233
        %v4283 = vcombine.high %v4217, %v4233
        %v4285 = vunpack.c.l.s4 1934713408
        %v4286 = vunpack.c.0.s8 %v4285
        %v4287 = vlaneseq
        %v4288 = vshrl.u32 %v4287, 7
        %v4289 = vsub.s32 %v4286, %v4288
        %v4290 = vrot.slane %v4282, %v4289
        %v4292 = vunpack.c.l.s4 1934713408
        %v4293 = vunpack.c.0.s8 %v4292
        %v4294 = vlaneseq
        %v4295 = vshrl.u32 %v4294, 7
        %v4296 = vsub.s32 %v4293, %v4295
        %v4297 = vrot.slane %v4283, %v4296
        %v4298 = vcombine.low %v4242, %v4258
        %v4299 = vcombine.high %v4242, %v4258
        %v4301 = vunpack.c.l.s4 1934713408
        %v4302 = vunpack.c.0.s8 %v4301
        %v4303 = vlaneseq
        %v4304 = vshrl.u32 %v4303, 7
        %v4305 = vsub.s32 %v4302, %v4304
        %v4306 = vrot.slane %v4298, %v4305
        %v4308 = vunpack.c.l.s4 1934713408
        %v4309 = vunpack.c.0.s8 %v4308
        %v4310 = vlaneseq
        %v4311 = vshrl.u32 %v4310, 7
        %v4312 = vsub.s32 %v4309, %v4311
        %v4313 = vrot.slane %v4299, %v4312
        %v4314 = vcombine.low %v4249, %v4265
        %v4315 = vcombine.high %v4249, %v4265
        %v4317 = vunpack.c.l.s4 1934713408
        %v4318 = vunpack.c.0.s8 %v4317
        %v4319 = vlaneseq
        %v4320 = vshrl.u32 %v4319, 7
        %v4321 = vsub.s32 %v4318, %v4320
        %v4322 = vrot.slane %v4314, %v4321
        %v4324 = vunpack.c.l.s4 1934713408
        %v4325 = vunpack.c.0.s8 %v4324
        %v4326 = vlaneseq
        %v4327 = vshrl.u32 %v4326, 7
        %v4328 = vsub.s32 %v4325, %v4327
        %v4329 = vrot.slane %v4315, %v4328
        %v4330 = vcombine.low %v4274, %v4306
        %v4331 = vcombine.high %v4274, %v4306
        %v4332 = vcombine.low %v4281, %v4313
        %v4333 = vcombine.high %v4281, %v4313
        %v4334 = vcombine.low %v4290, %v4322
        %v4335 = vcombine.high %v4290, %v4322
        %v4336 = vcombine.low %v4297, %v4329
        %v4337 = vcombine.high %v4297, %v4329
        %v4338 = vcombine.low %v2802, %v2804
        %v4339 = vcombine.high %v2802, %v2804
        %v4341 = vunpack.c.l.s4 1983009808
        %v4342 = vunpack.c.0.s8 %v4341
        %v4343 = vlaneseq
        %v4344 = vshrl.u32 %v4343, 7
        %v4345 = vsub.s32 %v4342, %v4344
        %v4346 = vrot.slane %v4338, %v4345
        %v4348 = vunpack.c.l.s4 1983009808
        %v4349 = vunpack.c.0.s8 %v4348
        %v4350 = vlaneseq
        %v4351 = vshrl.u32 %v4350, 7
        %v4352 = vsub.s32 %v4349, %v4351
        %v4353 = vrot.slane %v4339, %v4352
        %v4354 = vcombine.low %v2803, %v2805
        %v4355 = vcombine.high %v2803, %v2805
        %v4357 = vunpack.c.l.s4 1983009808
        %v4358 = vunpack.c.0.s8 %v4357
        %v4359 = vlaneseq
        %v4360 = vshrl.u32 %v4359, 7
        %v4361 = vsub.s32 %v4358, %v4360
        %v4362 = vrot.slane %v4354, %v4361
        %v4364 = vunpack.c.l.s4 1983009808
        %v4365 = vunpack.c.0.s8 %v4364
        %v4366 = vlaneseq
        %v4367 = vshrl.u32 %v4366, 7
        %v4368 = vsub.s32 %v4365, %v4367
        %v4369 = vrot.slane %v4355, %v4368
        %v4370 = vcombine.low %v2806, %v2808
        %v4371 = vcombine.high %v2806, %v2808
        %v4373 = vunpack.c.l.s4 1983009808
        %v4374 = vunpack.c.0.s8 %v4373
        %v4375 = vlaneseq
        %v4376 = vshrl.u32 %v4375, 7
        %v4377 = vsub.s32 %v4374, %v4376
        %v4378 = vrot.slane %v4370, %v4377
        %v4380 = vunpack.c.l.s4 1983009808
        %v4381 = vunpack.c.0.s8 %v4380
        %v4382 = vlaneseq
        %v4383 = vshrl.u32 %v4382, 7
        %v4384 = vsub.s32 %v4381, %v4383
        %v4385 = vrot.slane %v4371, %v4384
        %v4386 = vcombine.low %v2807, %v2809
        %v4387 = vcombine.high %v2807, %v2809
        %v4389 = vunpack.c.l.s4 1983009808
        %v4390 = vunpack.c.0.s8 %v4389
        %v4391 = vlaneseq
        %v4392 = vshrl.u32 %v4391, 7
        %v4393 = vsub.s32 %v4390, %v4392
        %v4394 = vrot.slane %v4386, %v4393
        %v4396 = vunpack.c.l.s4 1983009808
        %v4397 = vunpack.c.0.s8 %v4396
        %v4398 = vlaneseq
        %v4399 = vshrl.u32 %v4398, 7
        %v4400 = vsub.s32 %v4397, %v4399
        %v4401 = vrot.slane %v4387, %v4400
        %v4402 = vcombine.low %v4346, %v4362
        %v4403 = vcombine.high %v4346, %v4362
        %v4405 = vunpack.c.l.s4 1934713408
        %v4406 = vunpack.c.0.s8 %v4405
        %v4407 = vlaneseq
        %v4408 = vshrl.u32 %v4407, 7
        %v4409 = vsub.s32 %v4406, %v4408
        %v4410 = vrot.slane %v4402, %v4409
        %v4412 = vunpack.c.l.s4 1934713408
        %v4413 = vunpack.c.0.s8 %v4412
        %v4414 = vlaneseq
        %v4415 = vshrl.u32 %v4414, 7
        %v4416 = vsub.s32 %v4413, %v4415
        %v4417 = vrot.slane %v4403, %v4416
        %v4418 = vcombine.low %v4353, %v4369
        %v4419 = vcombine.high %v4353, %v4369
        %v4421 = vunpack.c.l.s4 1934713408
        %v4422 = vunpack.c.0.s8 %v4421
        %v4423 = vlaneseq
        %v4424 = vshrl.u32 %v4423, 7
        %v4425 = vsub.s32 %v4422, %v4424
        %v4426 = vrot.slane %v4418, %v4425
        %v4428 = vunpack.c.l.s4 1934713408
        %v4429 = vunpack.c.0.s8 %v4428
        %v4430 = vlaneseq
        %v4431 = vshrl.u32 %v4430, 7
        %v4432 = vsub.s32 %v4429, %v4431
        %v4433 = vrot.slane %v4419, %v4432
        %v4434 = vcombine.low %v4378, %v4394
        %v4435 = vcombine.high %v4378, %v4394
        %v4437 = vunpack.c.l.s4 1934713408
        %v4438 = vunpack.c.0.s8 %v4437
        %v4439 = vlaneseq
        %v4440 = vshrl.u32 %v4439, 7
        %v4441 = vsub.s32 %v4438, %v4440
        %v4442 = vrot.slane %v4434, %v4441
        %v4444 = vunpack.c.l.s4 1934713408
        %v4445 = vunpack.c.0.s8 %v4444
        %v4446 = vlaneseq
        %v4447 = vshrl.u32 %v4446, 7
        %v4448 = vsub.s32 %v4445, %v4447
        %v4449 = vrot.slane %v4435, %v4448
        %v4450 = vcombine.low %v4385, %v4401
        %v4451 = vcombine.high %v4385, %v4401
        %v4453 = vunpack.c.l.s4 1934713408
        %v4454 = vunpack.c.0.s8 %v4453
        %v4455 = vlaneseq
        %v4456 = vshrl.u32 %v4455, 7
        %v4457 = vsub.s32 %v4454, %v4456
        %v4458 = vrot.slane %v4450, %v4457
        %v4460 = vunpack.c.l.s4 1934713408
        %v4461 = vunpack.c.0.s8 %v4460
        %v4462 = vlaneseq
        %v4463 = vshrl.u32 %v4462, 7
        %v4464 = vsub.s32 %v4461, %v4463
        %v4465 = vrot.slane %v4451, %v4464
        %v4466 = vcombine.low %v4410, %v4442
        %v4467 = vcombine.high %v4410, %v4442
        %v4468 = vcombine.low %v4417, %v4449
        %v4469 = vcombine.high %v4417, %v4449
        %v4470 = vcombine.low %v4426, %v4458
        %v4471 = vcombine.high %v4426, %v4458
        %v4472 = vcombine.low %v4433, %v4465
        %v4473 = vcombine.high %v4433, %v4465
        %v4474 = vld [vmem:[#allocation5] sm:$0xff]
        %v4475 = vld [vmem:[#allocation5 + $0x8] sm:$0xff]
        %v4476 = vld [vmem:[#allocation5 + $0x10] sm:$0xff]
        %v4477 = vld [vmem:[#allocation5 + $0x18] sm:$0xff]
        %vm4478 = vcmask 130048
        %v4480 = vsel %vm4478, %v3354, 0
        %v4483 = vsel %vm4478, %v3355, 0
        %v4486 = vsel %vm4478, %v3356, 0
        %v4489 = vsel %vm4478, %v3357, 0
        %v4492 = vsel %vm4478, %v3514, 0
        %v4495 = vsel %vm4478, %v3650, 0
        %v4498 = vsel %vm4478, %v3786, 0
        %v4501 = vsel %vm4478, %v3922, 0
        %4503 = vmatprep.subr.mxu0 0.0
        %4504 = vmatpush1.xpose.msra.mxu0 %v4492
        %4505 = vmatprep.subr.mxu0 0.0
        %4506 = vmatpush1.xpose.msra.mxu0 %v4495
        %4507 = vmatprep.subr.mxu0 0.0
        %4508 = vmatpush1.xpose.msra.mxu0 %v4498
        %4509 = vmatprep.subr.mxu0 0.0
        %4510 = vmatpush1.xpose.msra.mxu0 %v4501
        %4511 = vmatprep.subr.mxu0 0.0
        %4512 = vmatpush1.xpose.msra.mxu0 0.0
        %4513 = vmatprep.subr.mxu0 0.0
        %4514 = vmatpush1.xpose.msra.mxu0 0.0
        %4515 = vmatprep.subr.mxu0 0.0
        %4516 = vmatpush1.xpose.msra.mxu0 0.0
        %4517 = vmatprep.subr.mxu0 0.0
        %4518 = vmatpush1.xpose.msra.mxu0 0.0
        %4519 = vmatprep.subr.mxu0 0.0
        %4520 = vmatpush1.xpose.msra.mxu0 0.0
        %4521 = vmatprep.subr.mxu0 0.0
        %4522 = vmatpush1.xpose.msra.mxu0 0.0
        %4523 = vmatprep.subr.mxu0 0.0
        %4524 = vmatpush1.xpose.msra.mxu0 0.0
        %4525 = vmatprep.subr.mxu0 0.0
        %4526 = vmatpush1.xpose.msra.mxu0 0.0
        %4527 = vmatprep.subr.mxu0 0.0
        %4528 = vmatpush1.xpose.msra.mxu0 0.0
        %4529 = vmatprep.subr.mxu0 0.0
        %4530 = vmatpush1.xpose.msra.mxu0 0.0
        %4531 = vmatprep.subr.mxu0 0.0
        %4532 = vmatpush1.xpose.msra.mxu0 0.0
        %4533 = vmatprep.subr.mxu0 0.0
        %4534 = vmatpush1.xpose.msra.mxu0 0.0
        %4535 = vmatprep.subr.mxu0 0.0
        %4536 = vmatpush1.xpose.msra.mxu0 0.0
        %4537 = vmatprep.subr.mxu0 0.0
        %4538 = vmatpush1.xpose.msra.mxu0 0.0
        %4539 = vmatprep.subr.mxu0 0.0
        %4540 = vmatpush1.xpose.msra.mxu0 0.0
        %4541 = vmatprep.subr.mxu0 0.0
        %4542 = vmatpush1.xpose.msra.mxu0 0.0
        %4543 = vmatprep.subr.mxu0 0.0
        %4544 = vmatpush1.xpose.msra.mxu0 0.0
        %4545 = vmatprep.subr.mxu0 0.0
        %4546 = vmatpush1.xpose.msra.mxu0 0.0
        %4547 = vmatprep.subr.mxu0 0.0
        %4548 = vmatpush1.xpose.msra.mxu0 0.0
        %4549 = vmatprep.subr.mxu0 0.0
        %4550 = vmatpush1.xpose.msra.mxu0 0.0
        %4551 = vmatprep.subr.mxu0 0.0
        %4552 = vmatpush1.xpose.msra.mxu0 0.0
        %4553 = vmatprep.subr.mxu0 0.0
        %4554 = vmatpush1.xpose.msra.mxu0 0.0
        %4555 = vmatprep.subr.mxu0 0.0
        %4556 = vmatpush1.xpose.msra.mxu0 0.0
        %4557 = vmatprep.subr.mxu0 0.0
        %4558 = vmatpush1.xpose.msra.mxu0 0.0
        %4559 = vmatprep.subr.mxu0 0.0
        %4560 = vmatpush1.xpose.msra.mxu0 0.0
        %4561 = vmatprep.subr.mxu0 0.0
        %4562 = vmatpush1.xpose.msra.mxu0 0.0
        %4563 = vmatprep.subr.mxu0 0.0
        %4564 = vmatpush1.xpose.msra.mxu0 0.0
        %4565 = vmatprep.subr.mxu0 0.0
        %4566 = vmatpush1.xpose.msra.mxu0 0.0
        %4567 = vmatprep.mubr.f32.mxu0 0.0
        %4568 = vmatmul.mubr.f32.gmra.mrb[0].mxu0 %v4480
        %v4569 = vpop.f32.mrb[0].mxu0
        %v4570 = vadd.f32 %v4474, %v4569
        %v4571 = vpop.f32.mrb[0].mxu0
        %4572 = vmatprep.mubr.f32.mxu0 0.0
        %4573 = vmatmul.mubr.f32.gmra.mrb[0].mxu0 %v4483
        %v4574 = vpop.f32.mrb[0].mxu0
        %v4575 = vadd.f32 %v4475, %v4574
        %v4576 = vpop.f32.mrb[0].mxu0
        %4577 = vmatprep.mubr.f32.mxu0 0.0
        %4578 = vmatmul.mubr.f32.gmra.mrb[0].mxu0 %v4486
        %v4579 = vpop.f32.mrb[0].mxu0
        %v4580 = vadd.f32 %v4476, %v4579
        %v4581 = vpop.f32.mrb[0].mxu0
        %4582 = vmatprep.mubr.f32.mxu0 0.0
        %4583 = vmatmul.mubr.f32.gmra.mrb[0].mxu0 %v4489
        %v4584 = vpop.f32.mrb[0].mxu0
        %v4585 = vadd.f32 %v4477, %v4584
        %v4586 = vpop.f32.mrb[0].mxu0
        %4587 = vdwg.mxu0
        %v4589 = vsel %vm4478, %v3358, 0
        %v4592 = vsel %vm4478, %v3359, 0
        %v4595 = vsel %vm4478, %v3360, 0
        %v4598 = vsel %vm4478, %v3361, 0
        %v4601 = vsel %vm4478, %v3515, 0
        %v4604 = vsel %vm4478, %v3651, 0
        %v4607 = vsel %vm4478, %v3787, 0
        %v4610 = vsel %vm4478, %v3923, 0
        %4612 = vmatprep.subr.mxu0 0.0
        %4613 = vmatpush1.xpose.msra.mxu0 %v4601
        %4614 = vmatprep.subr.mxu0 0.0
        %4615 = vmatpush1.xpose.msra.mxu0 %v4604
        %4616 = vmatprep.subr.mxu0 0.0
        %4617 = vmatpush1.xpose.msra.mxu0 %v4607
        %4618 = vmatprep.subr.mxu0 0.0
        %4619 = vmatpush1.xpose.msra.mxu0 %v4610
        %4620 = vmatprep.subr.mxu0 0.0
        %4621 = vmatpush1.xpose.msra.mxu0 0.0
        %4622 = vmatprep.subr.mxu0 0.0
        %4623 = vmatpush1.xpose.msra.mxu0 0.0
        %4624 = vmatprep.subr.mxu0 0.0
        %4625 = vmatpush1.xpose.msra.mxu0 0.0
        %4626 = vmatprep.subr.mxu0 0.0
        %4627 = vmatpush1.xpose.msra.mxu0 0.0
        %4628 = vmatprep.subr.mxu0 0.0
        %4629 = vmatpush1.xpose.msra.mxu0 0.0
        %4630 = vmatprep.subr.mxu0 0.0
        %4631 = vmatpush1.xpose.msra.mxu0 0.0
        %4632 = vmatprep.subr.mxu0 0.0
        %4633 = vmatpush1.xpose.msra.mxu0 0.0
        %4634 = vmatprep.subr.mxu0 0.0
        %4635 = vmatpush1.xpose.msra.mxu0 0.0
        %4636 = vmatprep.subr.mxu0 0.0
        %4637 = vmatpush1.xpose.msra.mxu0 0.0
        %4638 = vmatprep.subr.mxu0 0.0
        %4639 = vmatpush1.xpose.msra.mxu0 0.0
        %4640 = vmatprep.subr.mxu0 0.0
        %4641 = vmatpush1.xpose.msra.mxu0 0.0
        %4642 = vmatprep.subr.mxu0 0.0
        %4643 = vmatpush1.xpose.msra.mxu0 0.0
        %4644 = vmatprep.subr.mxu0 0.0
        %4645 = vmatpush1.xpose.msra.mxu0 0.0
        %4646 = vmatprep.subr.mxu0 0.0
        %4647 = vmatpush1.xpose.msra.mxu0 0.0
        %4648 = vmatprep.subr.mxu0 0.0
        %4649 = vmatpush1.xpose.msra.mxu0 0.0
        %4650 = vmatprep.subr.mxu0 0.0
        %4651 = vmatpush1.xpose.msra.mxu0 0.0
        %4652 = vmatprep.subr.mxu0 0.0
        %4653 = vmatpush1.xpose.msra.mxu0 0.0
        %4654 = vmatprep.subr.mxu0 0.0
        %4655 = vmatpush1.xpose.msra.mxu0 0.0
        %4656 = vmatprep.subr.mxu0 0.0
        %4657 = vmatpush1.xpose.msra.mxu0 0.0
        %4658 = vmatprep.subr.mxu0 0.0
        %4659 = vmatpush1.xpose.msra.mxu0 0.0
        %4660 = vmatprep.subr.mxu0 0.0
        %4661 = vmatpush1.xpose.msra.mxu0 0.0
        %4662 = vmatprep.subr.mxu0 0.0
        %4663 = vmatpush1.xpose.msra.mxu0 0.0
        %4664 = vmatprep.subr.mxu0 0.0
        %4665 = vmatpush1.xpose.msra.mxu0 0.0
        %4666 = vmatprep.subr.mxu0 0.0
        %4667 = vmatpush1.xpose.msra.mxu0 0.0
        %4668 = vmatprep.subr.mxu0 0.0
        %4669 = vmatpush1.xpose.msra.mxu0 0.0
        %4670 = vmatprep.subr.mxu0 0.0
        %4671 = vmatpush1.xpose.msra.mxu0 0.0
        %4672 = vmatprep.subr.mxu0 0.0
        %4673 = vmatpush1.xpose.msra.mxu0 0.0
        %4674 = vmatprep.subr.mxu0 0.0
        %4675 = vmatpush1.xpose.msra.mxu0 0.0
        %4676 = vmatprep.mubr.f32.mxu0 0.0
        %4677 = vmatmul.mubr.f32.gmra.mrb[0].mxu0 %v4589
        %v4678 = vpop.f32.mrb[0].mxu0
        %v4679 = vadd.f32 %v4474, %v4678
        %v4680 = vpop.f32.mrb[0].mxu0
        %4681 = vmatprep.mubr.f32.mxu0 0.0
        %4682 = vmatmul.mubr.f32.gmra.mrb[0].mxu0 %v4592
        %v4683 = vpop.f32.mrb[0].mxu0
        %v4684 = vadd.f32 %v4475, %v4683
        %v4685 = vpop.f32.mrb[0].mxu0
        %4686 = vmatprep.mubr.f32.mxu0 0.0
        %4687 = vmatmul.mubr.f32.gmra.mrb[0].mxu0 %v4595
        %v4688 = vpop.f32.mrb[0].mxu0
        %v4689 = vadd.f32 %v4476, %v4688
        %v4690 = vpop.f32.mrb[0].mxu0
        %4691 = vmatprep.mubr.f32.mxu0 0.0
        %4692 = vmatmul.mubr.f32.gmra.mrb[0].mxu0 %v4598
        %v4693 = vpop.f32.mrb[0].mxu0
        %v4694 = vadd.f32 %v4477, %v4693
        %v4695 = vpop.f32.mrb[0].mxu0
        %4696 = vdwg.mxu0
        %v4698 = vsel %vm4478, %v3362, 0
        %v4701 = vsel %vm4478, %v3363, 0
        %v4704 = vsel %vm4478, %v3364, 0
        %v4707 = vsel %vm4478, %v3365, 0
        %v4710 = vsel %vm4478, %v3516, 0
        %v4713 = vsel %vm4478, %v3652, 0
        %v4716 = vsel %vm4478, %v3788, 0
        %v4719 = vsel %vm4478, %v3924, 0
        %4721 = vmatprep.subr.mxu0 0.0
        %4722 = vmatpush1.xpose.msra.mxu0 %v4710
        %4723 = vmatprep.subr.mxu0 0.0
        %4724 = vmatpush1.xpose.msra.mxu0 %v4713
        %4725 = vmatprep.subr.mxu0 0.0
        %4726 = vmatpush1.xpose.msra.mxu0 %v4716
        %4727 = vmatprep.subr.mxu0 0.0
        %4728 = vmatpush1.xpose.msra.mxu0 %v4719
        %4729 = vmatprep.subr.mxu0 0.0
        %4730 = vmatpush1.xpose.msra.mxu0 0.0
        %4731 = vmatprep.subr.mxu0 0.0
        %4732 = vmatpush1.xpose.msra.mxu0 0.0
        %4733 = vmatprep.subr.mxu0 0.0
        %4734 = vmatpush1.xpose.msra.mxu0 0.0
        %4735 = vmatprep.subr.mxu0 0.0
        %4736 = vmatpush1.xpose.msra.mxu0 0.0
        %4737 = vmatprep.subr.mxu0 0.0
        %4738 = vmatpush1.xpose.msra.mxu0 0.0
        %4739 = vmatprep.subr.mxu0 0.0
        %4740 = vmatpush1.xpose.msra.mxu0 0.0
        %4741 = vmatprep.subr.mxu0 0.0
        %4742 = vmatpush1.xpose.msra.mxu0 0.0
        %4743 = vmatprep.subr.mxu0 0.0
        %4744 = vmatpush1.xpose.msra.mxu0 0.0
        %4745 = vmatprep.subr.mxu0 0.0
        %4746 = vmatpush1.xpose.msra.mxu0 0.0
        %4747 = vmatprep.subr.mxu0 0.0
        %4748 = vmatpush1.xpose.msra.mxu0 0.0
        %4749 = vmatprep.subr.mxu0 0.0
        %4750 = vmatpush1.xpose.msra.mxu0 0.0
        %4751 = vmatprep.subr.mxu0 0.0
        %4752 = vmatpush1.xpose.msra.mxu0 0.0
        %4753 = vmatprep.subr.mxu0 0.0
        %4754 = vmatpush1.xpose.msra.mxu0 0.0
        %4755 = vmatprep.subr.mxu0 0.0
        %4756 = vmatpush1.xpose.msra.mxu0 0.0
        %4757 = vmatprep.subr.mxu0 0.0
        %4758 = vmatpush1.xpose.msra.mxu0 0.0
        %4759 = vmatprep.subr.mxu0 0.0
        %4760 = vmatpush1.xpose.msra.mxu0 0.0
        %4761 = vmatprep.subr.mxu0 0.0
        %4762 = vmatpush1.xpose.msra.mxu0 0.0
        %4763 = vmatprep.subr.mxu0 0.0
        %4764 = vmatpush1.xpose.msra.mxu0 0.0
        %4765 = vmatprep.subr.mxu0 0.0
        %4766 = vmatpush1.xpose.msra.mxu0 0.0
        %4767 = vmatprep.subr.mxu0 0.0
        %4768 = vmatpush1.xpose.msra.mxu0 0.0
        %4769 = vmatprep.subr.mxu0 0.0
        %4770 = vmatpush1.xpose.msra.mxu0 0.0
        %4771 = vmatprep.subr.mxu0 0.0
        %4772 = vmatpush1.xpose.msra.mxu0 0.0
        %4773 = vmatprep.subr.mxu0 0.0
        %4774 = vmatpush1.xpose.msra.mxu0 0.0
        %4775 = vmatprep.subr.mxu0 0.0
        %4776 = vmatpush1.xpose.msra.mxu0 0.0
        %4777 = vmatprep.subr.mxu0 0.0
        %4778 = vmatpush1.xpose.msra.mxu0 0.0
        %4779 = vmatprep.subr.mxu0 0.0
        %4780 = vmatpush1.xpose.msra.mxu0 0.0
        %4781 = vmatprep.subr.mxu0 0.0
        %4782 = vmatpush1.xpose.msra.mxu0 0.0
        %4783 = vmatprep.subr.mxu0 0.0
        %4784 = vmatpush1.xpose.msra.mxu0 0.0
        %4785 = vmatprep.mubr.f32.mxu0 0.0
        %4786 = vmatmul.mubr.f32.gmra.mrb[0].mxu0 %v4698
        %v4787 = vpop.f32.mrb[0].mxu0
        %v4788 = vadd.f32 %v4474, %v4787
        %v4789 = vpop.f32.mrb[0].mxu0
        %4790 = vmatprep.mubr.f32.mxu0 0.0
        %4791 = vmatmul.mubr.f32.gmra.mrb[0].mxu0 %v4701
        %v4792 = vpop.f32.mrb[0].mxu0
        %v4793 = vadd.f32 %v4475, %v4792
        %v4794 = vpop.f32.mrb[0].mxu0
        %4795 = vmatprep.mubr.f32.mxu0 0.0
        %4796 = vmatmul.mubr.f32.gmra.mrb[0].mxu0 %v4704
        %v4797 = vpop.f32.mrb[0].mxu0
        %v4798 = vadd.f32 %v4476, %v4797
        %v4799 = vpop.f32.mrb[0].mxu0
        %4800 = vmatprep.mubr.f32.mxu0 0.0
        %4801 = vmatmul.mubr.f32.gmra.mrb[0].mxu0 %v4707
        %v4802 = vpop.f32.mrb[0].mxu0
        %v4803 = vadd.f32 %v4477, %v4802
        %v4804 = vpop.f32.mrb[0].mxu0
        %4805 = vdwg.mxu0
        %v4807 = vsel %vm4478, %v3366, 0
        %v4810 = vsel %vm4478, %v3367, 0
        %v4813 = vsel %vm4478, %v3368, 0
        %v4816 = vsel %vm4478, %v3369, 0
        %v4819 = vsel %vm4478, %v3517, 0
        %v4822 = vsel %vm4478, %v3653, 0
        %v4825 = vsel %vm4478, %v3789, 0
        %v4828 = vsel %vm4478, %v3925, 0
        %4830 = vmatprep.subr.mxu0 0.0
        %4831 = vmatpush1.xpose.msra.mxu0 %v4819
        %4832 = vmatprep.subr.mxu0 0.0
        %4833 = vmatpush1.xpose.msra.mxu0 %v4822
        %4834 = vmatprep.subr.mxu0 0.0
        %4835 = vmatpush1.xpose.msra.mxu0 %v4825
        %4836 = vmatprep.subr.mxu0 0.0
        %4837 = vmatpush1.xpose.msra.mxu0 %v4828
        %4838 = vmatprep.subr.mxu0 0.0
        %4839 = vmatpush1.xpose.msra.mxu0 0.0
        %4840 = vmatprep.subr.mxu0 0.0
        %4841 = vmatpush1.xpose.msra.mxu0 0.0
        %4842 = vmatprep.subr.mxu0 0.0
        %4843 = vmatpush1.xpose.msra.mxu0 0.0
        %4844 = vmatprep.subr.mxu0 0.0
        %4845 = vmatpush1.xpose.msra.mxu0 0.0
        %4846 = vmatprep.subr.mxu0 0.0
        %4847 = vmatpush1.xpose.msra.mxu0 0.0
        %4848 = vmatprep.subr.mxu0 0.0
        %4849 = vmatpush1.xpose.msra.mxu0 0.0
        %4850 = vmatprep.subr.mxu0 0.0
        %4851 = vmatpush1.xpose.msra.mxu0 0.0
        %4852 = vmatprep.subr.mxu0 0.0
        %4853 = vmatpush1.xpose.msra.mxu0 0.0
        %4854 = vmatprep.subr.mxu0 0.0
        %4855 = vmatpush1.xpose.msra.mxu0 0.0
        %4856 = vmatprep.subr.mxu0 0.0
        %4857 = vmatpush1.xpose.msra.mxu0 0.0
        %4858 = vmatprep.subr.mxu0 0.0
        %4859 = vmatpush1.xpose.msra.mxu0 0.0
        %4860 = vmatprep.subr.mxu0 0.0
        %4861 = vmatpush1.xpose.msra.mxu0 0.0
        %4862 = vmatprep.subr.mxu0 0.0
        %4863 = vmatpush1.xpose.msra.mxu0 0.0
        %4864 = vmatprep.subr.mxu0 0.0
        %4865 = vmatpush1.xpose.msra.mxu0 0.0
        %4866 = vmatprep.subr.mxu0 0.0
        %4867 = vmatpush1.xpose.msra.mxu0 0.0
        %4868 = vmatprep.subr.mxu0 0.0
        %4869 = vmatpush1.xpose.msra.mxu0 0.0
        %4870 = vmatprep.subr.mxu0 0.0
        %4871 = vmatpush1.xpose.msra.mxu0 0.0
        %4872 = vmatprep.subr.mxu0 0.0
        %4873 = vmatpush1.xpose.msra.mxu0 0.0
        %4874 = vmatprep.subr.mxu0 0.0
        %4875 = vmatpush1.xpose.msra.mxu0 0.0
        %4876 = vmatprep.subr.mxu0 0.0
        %4877 = vmatpush1.xpose.msra.mxu0 0.0
        %4878 = vmatprep.subr.mxu0 0.0
        %4879 = vmatpush1.xpose.msra.mxu0 0.0
        %4880 = vmatprep.subr.mxu0 0.0
        %4881 = vmatpush1.xpose.msra.mxu0 0.0
        %4882 = vmatprep.subr.mxu0 0.0
        %4883 = vmatpush1.xpose.msra.mxu0 0.0
        %4884 = vmatprep.subr.mxu0 0.0
        %4885 = vmatpush1.xpose.msra.mxu0 0.0
        %4886 = vmatprep.subr.mxu0 0.0
        %4887 = vmatpush1.xpose.msra.mxu0 0.0
        %4888 = vmatprep.subr.mxu0 0.0
        %4889 = vmatpush1.xpose.msra.mxu0 0.0
        %4890 = vmatprep.subr.mxu0 0.0
        %4891 = vmatpush1.xpose.msra.mxu0 0.0
        %4892 = vmatprep.subr.mxu0 0.0
        %4893 = vmatpush1.xpose.msra.mxu0 0.0
        %4894 = vmatprep.mubr.f32.mxu0 0.0
        %4895 = vmatmul.mubr.f32.gmra.mrb[0].mxu0 %v4807
        %v4896 = vpop.f32.mrb[0].mxu0
        %v4897 = vadd.f32 %v4474, %v4896
        %v4898 = vpop.f32.mrb[0].mxu0
        %4899 = vmatprep.mubr.f32.mxu0 0.0
        %4900 = vmatmul.mubr.f32.gmra.mrb[0].mxu0 %v4810
        %v4901 = vpop.f32.mrb[0].mxu0
        %v4902 = vadd.f32 %v4475, %v4901
        %v4903 = vpop.f32.mrb[0].mxu0
        %4904 = vmatprep.mubr.f32.mxu0 0.0
        %4905 = vmatmul.mubr.f32.gmra.mrb[0].mxu0 %v4813
        %v4906 = vpop.f32.mrb[0].mxu0
        %v4907 = vadd.f32 %v4476, %v4906
        %v4908 = vpop.f32.mrb[0].mxu0
        %4909 = vmatprep.mubr.f32.mxu0 0.0
        %4910 = vmatmul.mubr.f32.gmra.mrb[0].mxu0 %v4816
        %v4911 = vpop.f32.mrb[0].mxu0
        %v4912 = vadd.f32 %v4477, %v4911
        %v4913 = vpop.f32.mrb[0].mxu0
        %4914 = vdwg.mxu0
        %v4916 = vsel %vm4478, %v3370, 0
        %v4919 = vsel %vm4478, %v3371, 0
        %v4922 = vsel %vm4478, %v3372, 0
        %v4925 = vsel %vm4478, %v3373, 0
        %v4928 = vsel %vm4478, %v3518, 0
        %v4931 = vsel %vm4478, %v3654, 0
        %v4934 = vsel %vm4478, %v3790, 0
        %v4937 = vsel %vm4478, %v3926, 0
        %4939 = vmatprep.subr.mxu0 0.0
        %4940 = vmatpush1.xpose.msra.mxu0 %v4928
        %4941 = vmatprep.subr.mxu0 0.0
        %4942 = vmatpush1.xpose.msra.mxu0 %v4931
        %4943 = vmatprep.subr.mxu0 0.0
        %4944 = vmatpush1.xpose.msra.mxu0 %v4934
        %4945 = vmatprep.subr.mxu0 0.0
        %4946 = vmatpush1.xpose.msra.mxu0 %v4937
        %4947 = vmatprep.subr.mxu0 0.0
        %4948 = vmatpush1.xpose.msra.mxu0 0.0
        %4949 = vmatprep.subr.mxu0 0.0
        %4950 = vmatpush1.xpose.msra.mxu0 0.0
        %4951 = vmatprep.subr.mxu0 0.0
        %4952 = vmatpush1.xpose.msra.mxu0 0.0
        %4953 = vmatprep.subr.mxu0 0.0
        %4954 = vmatpush1.xpose.msra.mxu0 0.0
        %4955 = vmatprep.subr.mxu0 0.0
        %4956 = vmatpush1.xpose.msra.mxu0 0.0
        %4957 = vmatprep.subr.mxu0 0.0
        %4958 = vmatpush1.xpose.msra.mxu0 0.0
        %4959 = vmatprep.subr.mxu0 0.0
        %4960 = vmatpush1.xpose.msra.mxu0 0.0
        %4961 = vmatprep.subr.mxu0 0.0
        %4962 = vmatpush1.xpose.msra.mxu0 0.0
        %4963 = vmatprep.subr.mxu0 0.0
        %4964 = vmatpush1.xpose.msra.mxu0 0.0
        %4965 = vmatprep.subr.mxu0 0.0
        %4966 = vmatpush1.xpose.msra.mxu0 0.0
        %4967 = vmatprep.subr.mxu0 0.0
        %4968 = vmatpush1.xpose.msra.mxu0 0.0
        %4969 = vmatprep.subr.mxu0 0.0
        %4970 = vmatpush1.xpose.msra.mxu0 0.0
        %4971 = vmatprep.subr.mxu0 0.0
        %4972 = vmatpush1.xpose.msra.mxu0 0.0
        %4973 = vmatprep.subr.mxu0 0.0
        %4974 = vmatpush1.xpose.msra.mxu0 0.0
        %4975 = vmatprep.subr.mxu0 0.0
        %4976 = vmatpush1.xpose.msra.mxu0 0.0
        %4977 = vmatprep.subr.mxu0 0.0
        %4978 = vmatpush1.xpose.msra.mxu0 0.0
        %4979 = vmatprep.subr.mxu0 0.0
        %4980 = vmatpush1.xpose.msra.mxu0 0.0
        %4981 = vmatprep.subr.mxu0 0.0
        %4982 = vmatpush1.xpose.msra.mxu0 0.0
        %4983 = vmatprep.subr.mxu0 0.0
        %4984 = vmatpush1.xpose.msra.mxu0 0.0
        %4985 = vmatprep.subr.mxu0 0.0
        %4986 = vmatpush1.xpose.msra.mxu0 0.0
        %4987 = vmatprep.subr.mxu0 0.0
        %4988 = vmatpush1.xpose.msra.mxu0 0.0
        %4989 = vmatprep.subr.mxu0 0.0
        %4990 = vmatpush1.xpose.msra.mxu0 0.0
        %4991 = vmatprep.subr.mxu0 0.0
        %4992 = vmatpush1.xpose.msra.mxu0 0.0
        %4993 = vmatprep.subr.mxu0 0.0
        %4994 = vmatpush1.xpose.msra.mxu0 0.0
        %4995 = vmatprep.subr.mxu0 0.0
        %4996 = vmatpush1.xpose.msra.mxu0 0.0
        %4997 = vmatprep.subr.mxu0 0.0
        %4998 = vmatpush1.xpose.msra.mxu0 0.0
        %4999 = vmatprep.subr.mxu0 0.0
        %5000 = vmatpush1.xpose.msra.mxu0 0.0
        %5001 = vmatprep.subr.mxu0 0.0
        %5002 = vmatpush1.xpose.msra.mxu0 0.0
        %5003 = vmatprep.mubr.f32.mxu0 0.0
        %5004 = vmatmul.mubr.f32.gmra.mrb[0].mxu0 %v4916
        %v5005 = vpop.f32.mrb[0].mxu0
        %v5006 = vadd.f32 %v4474, %v5005
        %v5007 = vpop.f32.mrb[0].mxu0
        %5008 = vmatprep.mubr.f32.mxu0 0.0
        %5009 = vmatmul.mubr.f32.gmra.mrb[0].mxu0 %v4919
        %v5010 = vpop.f32.mrb[0].mxu0
        %v5011 = vadd.f32 %v4475, %v5010
        %v5012 = vpop.f32.mrb[0].mxu0
        %5013 = vmatprep.mubr.f32.mxu0 0.0
        %5014 = vmatmul.mubr.f32.gmra.mrb[0].mxu0 %v4922
        %v5015 = vpop.f32.mrb[0].mxu0
        %v5016 = vadd.f32 %v4476, %v5015
        %v5017 = vpop.f32.mrb[0].mxu0
        %5018 = vmatprep.mubr.f32.mxu0 0.0
        %5019 = vmatmul.mubr.f32.gmra.mrb[0].mxu0 %v4925
        %v5020 = vpop.f32.mrb[0].mxu0
        %v5021 = vadd.f32 %v4477, %v5020
        %v5022 = vpop.f32.mrb[0].mxu0
        %5023 = vdwg.mxu0
        %v5025 = vsel %vm4478, %v3374, 0
        %v5028 = vsel %vm4478, %v3375, 0
        %v5031 = vsel %vm4478, %v3376, 0
        %v5034 = vsel %vm4478, %v3377, 0
        %v5037 = vsel %vm4478, %v3519, 0
        %v5040 = vsel %vm4478, %v3655, 0
        %v5043 = vsel %vm4478, %v3791, 0
        %v5046 = vsel %vm4478, %v3927, 0
        %5048 = vmatprep.subr.mxu0 0.0
        %5049 = vmatpush1.xpose.msra.mxu0 %v5037
        %5050 = vmatprep.subr.mxu0 0.0
        %5051 = vmatpush1.xpose.msra.mxu0 %v5040
        %5052 = vmatprep.subr.mxu0 0.0
        %5053 = vmatpush1.xpose.msra.mxu0 %v5043
        %5054 = vmatprep.subr.mxu0 0.0
        %5055 = vmatpush1.xpose.msra.mxu0 %v5046
        %5056 = vmatprep.subr.mxu0 0.0
        %5057 = vmatpush1.xpose.msra.mxu0 0.0
        %5058 = vmatprep.subr.mxu0 0.0
        %5059 = vmatpush1.xpose.msra.mxu0 0.0
        %5060 = vmatprep.subr.mxu0 0.0
        %5061 = vmatpush1.xpose.msra.mxu0 0.0
        %5062 = vmatprep.subr.mxu0 0.0
        %5063 = vmatpush1.xpose.msra.mxu0 0.0
        %5064 = vmatprep.subr.mxu0 0.0
        %5065 = vmatpush1.xpose.msra.mxu0 0.0
        %5066 = vmatprep.subr.mxu0 0.0
        %5067 = vmatpush1.xpose.msra.mxu0 0.0
        %5068 = vmatprep.subr.mxu0 0.0
        %5069 = vmatpush1.xpose.msra.mxu0 0.0
        %5070 = vmatprep.subr.mxu0 0.0
        %5071 = vmatpush1.xpose.msra.mxu0 0.0
        %5072 = vmatprep.subr.mxu0 0.0
        %5073 = vmatpush1.xpose.msra.mxu0 0.0
        %5074 = vmatprep.subr.mxu0 0.0
        %5075 = vmatpush1.xpose.msra.mxu0 0.0
        %5076 = vmatprep.subr.mxu0 0.0
        %5077 = vmatpush1.xpose.msra.mxu0 0.0
        %5078 = vmatprep.subr.mxu0 0.0
        %5079 = vmatpush1.xpose.msra.mxu0 0.0
        %5080 = vmatprep.subr.mxu0 0.0
        %5081 = vmatpush1.xpose.msra.mxu0 0.0
        %5082 = vmatprep.subr.mxu0 0.0
        %5083 = vmatpush1.xpose.msra.mxu0 0.0
        %5084 = vmatprep.subr.mxu0 0.0
        %5085 = vmatpush1.xpose.msra.mxu0 0.0
        %5086 = vmatprep.subr.mxu0 0.0
        %5087 = vmatpush1.xpose.msra.mxu0 0.0
        %5088 = vmatprep.subr.mxu0 0.0
        %5089 = vmatpush1.xpose.msra.mxu0 0.0
        %5090 = vmatprep.subr.mxu0 0.0
        %5091 = vmatpush1.xpose.msra.mxu0 0.0
        %5092 = vmatprep.subr.mxu0 0.0
        %5093 = vmatpush1.xpose.msra.mxu0 0.0
        %5094 = vmatprep.subr.mxu0 0.0
        %5095 = vmatpush1.xpose.msra.mxu0 0.0
        %5096 = vmatprep.subr.mxu0 0.0
        %5097 = vmatpush1.xpose.msra.mxu0 0.0
        %5098 = vmatprep.subr.mxu0 0.0
        %5099 = vmatpush1.xpose.msra.mxu0 0.0
        %5100 = vmatprep.subr.mxu0 0.0
        %5101 = vmatpush1.xpose.msra.mxu0 0.0
        %5102 = vmatprep.subr.mxu0 0.0
        %5103 = vmatpush1.xpose.msra.mxu0 0.0
        %5104 = vmatprep.subr.mxu0 0.0
        %5105 = vmatpush1.xpose.msra.mxu0 0.0
        %5106 = vmatprep.subr.mxu0 0.0
        %5107 = vmatpush1.xpose.msra.mxu0 0.0
        %5108 = vmatprep.subr.mxu0 0.0
        %5109 = vmatpush1.xpose.msra.mxu0 0.0
        %5110 = vmatprep.subr.mxu0 0.0
        %5111 = vmatpush1.xpose.msra.mxu0 0.0
        %5112 = vmatprep.mubr.f32.mxu0 0.0
        %5113 = vmatmul.mubr.f32.gmra.mrb[0].mxu0 %v5025
        %v5114 = vpop.f32.mrb[0].mxu0
        %v5115 = vadd.f32 %v4474, %v5114
        %v5116 = vpop.f32.mrb[0].mxu0
        %5117 = vmatprep.mubr.f32.mxu0 0.0
        %5118 = vmatmul.mubr.f32.gmra.mrb[0].mxu0 %v5028
        %v5119 = vpop.f32.mrb[0].mxu0
        %v5120 = vadd.f32 %v4475, %v5119
        %v5121 = vpop.f32.mrb[0].mxu0
        %5122 = vmatprep.mubr.f32.mxu0 0.0
        %5123 = vmatmul.mubr.f32.gmra.mrb[0].mxu0 %v5031
        %v5124 = vpop.f32.mrb[0].mxu0
        %v5125 = vadd.f32 %v4476, %v5124
        %v5126 = vpop.f32.mrb[0].mxu0
        %5127 = vmatprep.mubr.f32.mxu0 0.0
        %5128 = vmatmul.mubr.f32.gmra.mrb[0].mxu0 %v5034
        %v5129 = vpop.f32.mrb[0].mxu0
        %v5130 = vadd.f32 %v4477, %v5129
        %v5131 = vpop.f32.mrb[0].mxu0
        %5132 = vdwg.mxu0
        %v5134 = vsel %vm4478, %v3378, 0
        %v5137 = vsel %vm4478, %v3379, 0
        %v5140 = vsel %vm4478, %v3380, 0
        %v5143 = vsel %vm4478, %v3381, 0
        %v5146 = vsel %vm4478, %v3520, 0
        %v5149 = vsel %vm4478, %v3656, 0
        %v5152 = vsel %vm4478, %v3792, 0
        %v5155 = vsel %vm4478, %v3928, 0
        %5157 = vmatprep.subr.mxu0 0.0
        %5158 = vmatpush1.xpose.msra.mxu0 %v5146
        %5159 = vmatprep.subr.mxu0 0.0
        %5160 = vmatpush1.xpose.msra.mxu0 %v5149
        %5161 = vmatprep.subr.mxu0 0.0
        %5162 = vmatpush1.xpose.msra.mxu0 %v5152
        %5163 = vmatprep.subr.mxu0 0.0
        %5164 = vmatpush1.xpose.msra.mxu0 %v5155
        %5165 = vmatprep.subr.mxu0 0.0
        %5166 = vmatpush1.xpose.msra.mxu0 0.0
        %5167 = vmatprep.subr.mxu0 0.0
        %5168 = vmatpush1.xpose.msra.mxu0 0.0
        %5169 = vmatprep.subr.mxu0 0.0
        %5170 = vmatpush1.xpose.msra.mxu0 0.0
        %5171 = vmatprep.subr.mxu0 0.0
        %5172 = vmatpush1.xpose.msra.mxu0 0.0
        %5173 = vmatprep.subr.mxu0 0.0
        %5174 = vmatpush1.xpose.msra.mxu0 0.0
        %5175 = vmatprep.subr.mxu0 0.0
        %5176 = vmatpush1.xpose.msra.mxu0 0.0
        %5177 = vmatprep.subr.mxu0 0.0
        %5178 = vmatpush1.xpose.msra.mxu0 0.0
        %5179 = vmatprep.subr.mxu0 0.0
        %5180 = vmatpush1.xpose.msra.mxu0 0.0
        %5181 = vmatprep.subr.mxu0 0.0
        %5182 = vmatpush1.xpose.msra.mxu0 0.0
        %5183 = vmatprep.subr.mxu0 0.0
        %5184 = vmatpush1.xpose.msra.mxu0 0.0
        %5185 = vmatprep.subr.mxu0 0.0
        %5186 = vmatpush1.xpose.msra.mxu0 0.0
        %5187 = vmatprep.subr.mxu0 0.0
        %5188 = vmatpush1.xpose.msra.mxu0 0.0
        %5189 = vmatprep.subr.mxu0 0.0
        %5190 = vmatpush1.xpose.msra.mxu0 0.0
        %5191 = vmatprep.subr.mxu0 0.0
        %5192 = vmatpush1.xpose.msra.mxu0 0.0
        %5193 = vmatprep.subr.mxu0 0.0
        %5194 = vmatpush1.xpose.msra.mxu0 0.0
        %5195 = vmatprep.subr.mxu0 0.0
        %5196 = vmatpush1.xpose.msra.mxu0 0.0
        %5197 = vmatprep.subr.mxu0 0.0
        %5198 = vmatpush1.xpose.msra.mxu0 0.0
        %5199 = vmatprep.subr.mxu0 0.0
        %5200 = vmatpush1.xpose.msra.mxu0 0.0
        %5201 = vmatprep.subr.mxu0 0.0
        %5202 = vmatpush1.xpose.msra.mxu0 0.0
        %5203 = vmatprep.subr.mxu0 0.0
        %5204 = vmatpush1.xpose.msra.mxu0 0.0
        %5205 = vmatprep.subr.mxu0 0.0
        %5206 = vmatpush1.xpose.msra.mxu0 0.0
        %5207 = vmatprep.subr.mxu0 0.0
        %5208 = vmatpush1.xpose.msra.mxu0 0.0
        %5209 = vmatprep.subr.mxu0 0.0
        %5210 = vmatpush1.xpose.msra.mxu0 0.0
        %5211 = vmatprep.subr.mxu0 0.0
        %5212 = vmatpush1.xpose.msra.mxu0 0.0
        %5213 = vmatprep.subr.mxu0 0.0
        %5214 = vmatpush1.xpose.msra.mxu0 0.0
        %5215 = vmatprep.subr.mxu0 0.0
        %5216 = vmatpush1.xpose.msra.mxu0 0.0
        %5217 = vmatprep.subr.mxu0 0.0
        %5218 = vmatpush1.xpose.msra.mxu0 0.0
        %5219 = vmatprep.subr.mxu0 0.0
        %5220 = vmatpush1.xpose.msra.mxu0 0.0
        %5221 = vmatprep.mubr.f32.mxu0 0.0
        %5222 = vmatmul.mubr.f32.gmra.mrb[0].mxu0 %v5134
        %v5223 = vpop.f32.mrb[0].mxu0
        %v5224 = vadd.f32 %v4474, %v5223
        %v5225 = vpop.f32.mrb[0].mxu0
        %5226 = vmatprep.mubr.f32.mxu0 0.0
        %5227 = vmatmul.mubr.f32.gmra.mrb[0].mxu0 %v5137
        %v5228 = vpop.f32.mrb[0].mxu0
        %v5229 = vadd.f32 %v4475, %v5228
        %v5230 = vpop.f32.mrb[0].mxu0
        %5231 = vmatprep.mubr.f32.mxu0 0.0
        %5232 = vmatmul.mubr.f32.gmra.mrb[0].mxu0 %v5140
        %v5233 = vpop.f32.mrb[0].mxu0
        %v5234 = vadd.f32 %v4476, %v5233
        %v5235 = vpop.f32.mrb[0].mxu0
        %5236 = vmatprep.mubr.f32.mxu0 0.0
        %5237 = vmatmul.mubr.f32.gmra.mrb[0].mxu0 %v5143
        %v5238 = vpop.f32.mrb[0].mxu0
        %v5239 = vadd.f32 %v4477, %v5238
        %v5240 = vpop.f32.mrb[0].mxu0
        %5241 = vdwg.mxu0
        %v5243 = vsel %vm4478, %v3382, 0
        %v5246 = vsel %vm4478, %v3383, 0
        %v5249 = vsel %vm4478, %v3384, 0
        %v5252 = vsel %vm4478, %v3385, 0
        %v5255 = vsel %vm4478, %v3521, 0
        %v5258 = vsel %vm4478, %v3657, 0
        %v5261 = vsel %vm4478, %v3793, 0
        %v5264 = vsel %vm4478, %v3929, 0
        %5266 = vmatprep.subr.mxu0 0.0
        %5267 = vmatpush1.xpose.msra.mxu0 %v5255
        %5268 = vmatprep.subr.mxu0 0.0
        %5269 = vmatpush1.xpose.msra.mxu0 %v5258
        %5270 = vmatprep.subr.mxu0 0.0
        %5271 = vmatpush1.xpose.msra.mxu0 %v5261
        %5272 = vmatprep.subr.mxu0 0.0
        %5273 = vmatpush1.xpose.msra.mxu0 %v5264
        %5274 = vmatprep.subr.mxu0 0.0
        %5275 = vmatpush1.xpose.msra.mxu0 0.0
        %5276 = vmatprep.subr.mxu0 0.0
        %5277 = vmatpush1.xpose.msra.mxu0 0.0
        %5278 = vmatprep.subr.mxu0 0.0
        %5279 = vmatpush1.xpose.msra.mxu0 0.0
        %5280 = vmatprep.subr.mxu0 0.0
        %5281 = vmatpush1.xpose.msra.mxu0 0.0
        %5282 = vmatprep.subr.mxu0 0.0
        %5283 = vmatpush1.xpose.msra.mxu0 0.0
        %5284 = vmatprep.subr.mxu0 0.0
        %5285 = vmatpush1.xpose.msra.mxu0 0.0
        %5286 = vmatprep.subr.mxu0 0.0
        %5287 = vmatpush1.xpose.msra.mxu0 0.0
        %5288 = vmatprep.subr.mxu0 0.0
        %5289 = vmatpush1.xpose.msra.mxu0 0.0
        %5290 = vmatprep.subr.mxu0 0.0
        %5291 = vmatpush1.xpose.msra.mxu0 0.0
        %5292 = vmatprep.subr.mxu0 0.0
        %5293 = vmatpush1.xpose.msra.mxu0 0.0
        %5294 = vmatprep.subr.mxu0 0.0
        %5295 = vmatpush1.xpose.msra.mxu0 0.0
        %5296 = vmatprep.subr.mxu0 0.0
        %5297 = vmatpush1.xpose.msra.mxu0 0.0
        %5298 = vmatprep.subr.mxu0 0.0
        %5299 = vmatpush1.xpose.msra.mxu0 0.0
        %5300 = vmatprep.subr.mxu0 0.0
        %5301 = vmatpush1.xpose.msra.mxu0 0.0
        %5302 = vmatprep.subr.mxu0 0.0
        %5303 = vmatpush1.xpose.msra.mxu0 0.0
        %5304 = vmatprep.subr.mxu0 0.0
        %5305 = vmatpush1.xpose.msra.mxu0 0.0
        %5306 = vmatprep.subr.mxu0 0.0
        %5307 = vmatpush1.xpose.msra.mxu0 0.0
        %5308 = vmatprep.subr.mxu0 0.0
        %5309 = vmatpush1.xpose.msra.mxu0 0.0
        %5310 = vmatprep.subr.mxu0 0.0
        %5311 = vmatpush1.xpose.msra.mxu0 0.0
        %5312 = vmatprep.subr.mxu0 0.0
        %5313 = vmatpush1.xpose.msra.mxu0 0.0
        %5314 = vmatprep.subr.mxu0 0.0
        %5315 = vmatpush1.xpose.msra.mxu0 0.0
        %5316 = vmatprep.subr.mxu0 0.0
        %5317 = vmatpush1.xpose.msra.mxu0 0.0
        %5318 = vmatprep.subr.mxu0 0.0
        %5319 = vmatpush1.xpose.msra.mxu0 0.0
        %5320 = vmatprep.subr.mxu0 0.0
        %5321 = vmatpush1.xpose.msra.mxu0 0.0
        %5322 = vmatprep.subr.mxu0 0.0
        %5323 = vmatpush1.xpose.msra.mxu0 0.0
        %5324 = vmatprep.subr.mxu0 0.0
        %5325 = vmatpush1.xpose.msra.mxu0 0.0
        %5326 = vmatprep.subr.mxu0 0.0
        %5327 = vmatpush1.xpose.msra.mxu0 0.0
        %5328 = vmatprep.subr.mxu0 0.0
        %5329 = vmatpush1.xpose.msra.mxu0 0.0
        %5330 = vmatprep.mubr.f32.mxu0 0.0
        %5331 = vmatmul.mubr.f32.gmra.mrb[0].mxu0 %v5243
        %v5332 = vpop.f32.mrb[0].mxu0
        %v5333 = vadd.f32 %v4474, %v5332
        %v5334 = vpop.f32.mrb[0].mxu0
        %5335 = vmatprep.mubr.f32.mxu0 0.0
        %5336 = vmatmul.mubr.f32.gmra.mrb[0].mxu0 %v5246
        %v5337 = vpop.f32.mrb[0].mxu0
        %v5338 = vadd.f32 %v4475, %v5337
        %v5339 = vpop.f32.mrb[0].mxu0
        %5340 = vmatprep.mubr.f32.mxu0 0.0
        %5341 = vmatmul.mubr.f32.gmra.mrb[0].mxu0 %v5249
        %v5342 = vpop.f32.mrb[0].mxu0
        %v5343 = vadd.f32 %v4476, %v5342
        %v5344 = vpop.f32.mrb[0].mxu0
        %5345 = vmatprep.mubr.f32.mxu0 0.0
        %5346 = vmatmul.mubr.f32.gmra.mrb[0].mxu0 %v5252
        %v5347 = vpop.f32.mrb[0].mxu0
        %v5348 = vadd.f32 %v4477, %v5347
        %v5349 = vpop.f32.mrb[0].mxu0
        %5350 = vdwg.mxu0
        %vm5351 = vcmask 261120
        %v5352 = vsel %vm5351, %v4570, -inf
        %5353 = vmax.xlane.f32.xlu0 %v5352
        %v5354 = vpop.xlane.xlu0 %5353
        %v5355 = vsel %vm5351, %v4575, -inf
        %5356 = vmax.xlane.f32.xlu0 %v5355
        %v5357 = vpop.xlane.xlu0 %5356
        %v5358 = vsel %vm5351, %v4580, -inf
        %5359 = vmax.xlane.f32.xlu0 %v5358
        %v5360 = vpop.xlane.xlu0 %5359
        %v5361 = vsel %vm5351, %v4585, -inf
        %5362 = vmax.xlane.f32.xlu0 %v5361
        %v5363 = vpop.xlane.xlu0 %5362
        %v5364 = vsel %vm5351, %v4679, -inf
        %5365 = vmax.xlane.f32.xlu0 %v5364
        %v5366 = vpop.xlane.xlu0 %5365
        %v5367 = vsel %vm5351, %v4684, -inf
        %5368 = vmax.xlane.f32.xlu0 %v5367
        %v5369 = vpop.xlane.xlu0 %5368
        %v5370 = vsel %vm5351, %v4689, -inf
        %5371 = vmax.xlane.f32.xlu0 %v5370
        %v5372 = vpop.xlane.xlu0 %5371
        %v5373 = vsel %vm5351, %v4694, -inf
        %5374 = vmax.xlane.f32.xlu0 %v5373
        %v5375 = vpop.xlane.xlu0 %5374
        %v5376 = vsel %vm5351, %v4788, -inf
        %5377 = vmax.xlane.f32.xlu0 %v5376
        %v5378 = vpop.xlane.xlu0 %5377
        %v5379 = vsel %vm5351, %v4793, -inf
        %5380 = vmax.xlane.f32.xlu0 %v5379
        %v5381 = vpop.xlane.xlu0 %5380
        %v5382 = vsel %vm5351, %v4798, -inf
        %5383 = vmax.xlane.f32.xlu0 %v5382
        %v5384 = vpop.xlane.xlu0 %5383
        %v5385 = vsel %vm5351, %v4803, -inf
        %5386 = vmax.xlane.f32.xlu0 %v5385
        %v5387 = vpop.xlane.xlu0 %5386
        %v5388 = vsel %vm5351, %v4897, -inf
        %5389 = vmax.xlane.f32.xlu0 %v5388
        %v5390 = vpop.xlane.xlu0 %5389
        %v5391 = vsel %vm5351, %v4902, -inf
        %5392 = vmax.xlane.f32.xlu0 %v5391
        %v5393 = vpop.xlane.xlu0 %5392
        %v5394 = vsel %vm5351, %v4907, -inf
        %5395 = vmax.xlane.f32.xlu0 %v5394
        %v5396 = vpop.xlane.xlu0 %5395
        %v5397 = vsel %vm5351, %v4912, -inf
        %5398 = vmax.xlane.f32.xlu0 %v5397
        %v5399 = vpop.xlane.xlu0 %5398
        %v5400 = vsel %vm5351, %v5006, -inf
        %5401 = vmax.xlane.f32.xlu0 %v5400
        %v5402 = vpop.xlane.xlu0 %5401
        %v5403 = vsel %vm5351, %v5011, -inf
        %5404 = vmax.xlane.f32.xlu0 %v5403
        %v5405 = vpop.xlane.xlu0 %5404
        %v5406 = vsel %vm5351, %v5016, -inf
        %5407 = vmax.xlane.f32.xlu0 %v5406
        %v5408 = vpop.xlane.xlu0 %5407
        %v5409 = vsel %vm5351, %v5021, -inf
        %5410 = vmax.xlane.f32.xlu0 %v5409
        %v5411 = vpop.xlane.xlu0 %5410
        %v5412 = vsel %vm5351, %v5115, -inf
        %5413 = vmax.xlane.f32.xlu0 %v5412
        %v5414 = vpop.xlane.xlu0 %5413
        %v5415 = vsel %vm5351, %v5120, -inf
        %5416 = vmax.xlane.f32.xlu0 %v5415
        %v5417 = vpop.xlane.xlu0 %5416
        %v5418 = vsel %vm5351, %v5125, -inf
        %5419 = vmax.xlane.f32.xlu0 %v5418
        %v5420 = vpop.xlane.xlu0 %5419
        %v5421 = vsel %vm5351, %v5130, -inf
        %5422 = vmax.xlane.f32.xlu0 %v5421
        %v5423 = vpop.xlane.xlu0 %5422
        %v5424 = vsel %vm5351, %v5224, -inf
        %5425 = vmax.xlane.f32.xlu0 %v5424
        %v5426 = vpop.xlane.xlu0 %5425
        %v5427 = vsel %vm5351, %v5229, -inf
        %5428 = vmax.xlane.f32.xlu0 %v5427
        %v5429 = vpop.xlane.xlu0 %5428
        %v5430 = vsel %vm5351, %v5234, -inf
        %5431 = vmax.xlane.f32.xlu0 %v5430
        %v5432 = vpop.xlane.xlu0 %5431
        %v5433 = vsel %vm5351, %v5239, -inf
        %5434 = vmax.xlane.f32.xlu0 %v5433
        %v5435 = vpop.xlane.xlu0 %5434
        %v5436 = vsel %vm5351, %v5333, -inf
        %5437 = vmax.xlane.f32.xlu0 %v5436
        %v5438 = vpop.xlane.xlu0 %5437
        %v5439 = vsel %vm5351, %v5338, -inf
        %5440 = vmax.xlane.f32.xlu0 %v5439
        %v5441 = vpop.xlane.xlu0 %5440
        %v5442 = vsel %vm5351, %v5343, -inf
        %5443 = vmax.xlane.f32.xlu0 %v5442
        %v5444 = vpop.xlane.xlu0 %5443
        %v5445 = vsel %vm5351, %v5348, -inf
        %5446 = vmax.xlane.f32.xlu0 %v5445
        %v5447 = vpop.xlane.xlu0 %5446
        %v5448 = vsub.f32 %v4570, %v5354
        %v5449 = vsub.f32 %v4575, %v5357
        %v5450 = vsub.f32 %v4580, %v5360
        %v5451 = vsub.f32 %v4585, %v5363
        %v5452 = vsub.f32 %v4679, %v5366
        %v5453 = vsub.f32 %v4684, %v5369
        %v5454 = vsub.f32 %v4689, %v5372
        %v5455 = vsub.f32 %v4694, %v5375
        %v5456 = vsub.f32 %v4788, %v5378
        %v5457 = vsub.f32 %v4793, %v5381
        %v5458 = vsub.f32 %v4798, %v5384
        %v5459 = vsub.f32 %v4803, %v5387
        %v5460 = vsub.f32 %v4897, %v5390
        %v5461 = vsub.f32 %v4902, %v5393
        %v5462 = vsub.f32 %v4907, %v5396
        %v5463 = vsub.f32 %v4912, %v5399
        %v5464 = vsub.f32 %v5006, %v5402
        %v5465 = vsub.f32 %v5011, %v5405
        %v5466 = vsub.f32 %v5016, %v5408
        %v5467 = vsub.f32 %v5021, %v5411
        %v5468 = vsub.f32 %v5115, %v5414
        %v5469 = vsub.f32 %v5120, %v5417
        %v5470 = vsub.f32 %v5125, %v5420
        %v5471 = vsub.f32 %v5130, %v5423
        %v5472 = vsub.f32 %v5224, %v5426
        %v5473 = vsub.f32 %v5229, %v5429
        %v5474 = vsub.f32 %v5234, %v5432
        %v5475 = vsub.f32 %v5239, %v5435
        %v5476 = vsub.f32 %v5333, %v5438
        %v5477 = vsub.f32 %v5338, %v5441
        %v5478 = vsub.f32 %v5343, %v5444
        %v5479 = vsub.f32 %v5348, %v5447
        %v5480 = vmul.f32 %v5448, 1.442695
        %v5481 = vpow.pop %v5480
        %v5482 = vmul.f32 %v5449, 1.442695
        %v5483 = vpow.pop %v5482
        %v5484 = vmul.f32 %v5450, 1.442695
        %v5485 = vpow.pop %v5484
        %v5486 = vmul.f32 %v5451, 1.442695
        %v5487 = vpow.pop %v5486
        %v5488 = vmul.f32 %v5452, 1.442695
        %v5489 = vpow.pop %v5488
        %v5490 = vmul.f32 %v5453, 1.442695
        %v5491 = vpow.pop %v5490
        %v5492 = vmul.f32 %v5454, 1.442695
        %v5493 = vpow.pop %v5492
        %v5494 = vmul.f32 %v5455, 1.442695
        %v5495 = vpow.pop %v5494
        %v5496 = vmul.f32 %v5456, 1.442695
        %v5497 = vpow.pop %v5496
        %v5498 = vmul.f32 %v5457, 1.442695
        %v5499 = vpow.pop %v5498
        %v5500 = vmul.f32 %v5458, 1.442695
        %v5501 = vpow.pop %v5500
        %v5502 = vmul.f32 %v5459, 1.442695
        %v5503 = vpow.pop %v5502
        %v5504 = vmul.f32 %v5460, 1.442695
        %v5505 = vpow.pop %v5504
        %v5506 = vmul.f32 %v5461, 1.442695
        %v5507 = vpow.pop %v5506
        %v5508 = vmul.f32 %v5462, 1.442695
        %v5509 = vpow.pop %v5508
        %v5510 = vmul.f32 %v5463, 1.442695
        %v5511 = vpow.pop %v5510
        %v5512 = vmul.f32 %v5464, 1.442695
        %v5513 = vpow.pop %v5512
        %v5514 = vmul.f32 %v5465, 1.442695
        %v5515 = vpow.pop %v5514
        %v5516 = vmul.f32 %v5466, 1.442695
        %v5517 = vpow.pop %v5516
        %v5518 = vmul.f32 %v5467, 1.442695
        %v5519 = vpow.pop %v5518
        %v5520 = vmul.f32 %v5468, 1.442695
        %v5521 = vpow.pop %v5520
        %v5522 = vmul.f32 %v5469, 1.442695
        %v5523 = vpow.pop %v5522
        %v5524 = vmul.f32 %v5470, 1.442695
        %v5525 = vpow.pop %v5524
        %v5526 = vmul.f32 %v5471, 1.442695
        %v5527 = vpow.pop %v5526
        %v5528 = vmul.f32 %v5472, 1.442695
        %v5529 = vpow.pop %v5528
        %v5530 = vmul.f32 %v5473, 1.442695
        %v5531 = vpow.pop %v5530
        %v5532 = vmul.f32 %v5474, 1.442695
        %v5533 = vpow.pop %v5532
        %v5534 = vmul.f32 %v5475, 1.442695
        %v5535 = vpow.pop %v5534
        %v5536 = vmul.f32 %v5476, 1.442695
        %v5537 = vpow.pop %v5536
        %v5538 = vmul.f32 %v5477, 1.442695
        %v5539 = vpow.pop %v5538
        %v5540 = vmul.f32 %v5478, 1.442695
        %v5541 = vpow.pop %v5540
        %v5542 = vmul.f32 %v5479, 1.442695
        %v5543 = vpow.pop %v5542
        %v5544 = vsel %vm5351, %v5481, 0.0
        %5545 = vadd.xlane.f32.xlu0 %v5544
        %v5546 = vpop.xlane.xlu0 %5545
        %v5547 = vsel %vm5351, %v5483, 0.0
        %5548 = vadd.xlane.f32.xlu0 %v5547
        %v5549 = vpop.xlane.xlu0 %5548
        %v5550 = vsel %vm5351, %v5485, 0.0
        %5551 = vadd.xlane.f32.xlu0 %v5550
        %v5552 = vpop.xlane.xlu0 %5551
        %v5553 = vsel %vm5351, %v5487, 0.0
        %5554 = vadd.xlane.f32.xlu0 %v5553
        %v5555 = vpop.xlane.xlu0 %5554
        %v5556 = vsel %vm5351, %v5489, 0.0
        %5557 = vadd.xlane.f32.xlu0 %v5556
        %v5558 = vpop.xlane.xlu0 %5557
        %v5559 = vsel %vm5351, %v5491, 0.0
        %5560 = vadd.xlane.f32.xlu0 %v5559
        %v5561 = vpop.xlane.xlu0 %5560
        %v5562 = vsel %vm5351, %v5493, 0.0
        %5563 = vadd.xlane.f32.xlu0 %v5562
        %v5564 = vpop.xlane.xlu0 %5563
        %v5565 = vsel %vm5351, %v5495, 0.0
        %5566 = vadd.xlane.f32.xlu0 %v5565
        %v5567 = vpop.xlane.xlu0 %5566
        %v5568 = vsel %vm5351, %v5497, 0.0
        %5569 = vadd.xlane.f32.xlu0 %v5568
        %v5570 = vpop.xlane.xlu0 %5569
        %v5571 = vsel %vm5351, %v5499, 0.0
        %5572 = vadd.xlane.f32.xlu0 %v5571
        %v5573 = vpop.xlane.xlu0 %5572
        %v5574 = vsel %vm5351, %v5501, 0.0
        %5575 = vadd.xlane.f32.xlu0 %v5574
        %v5576 = vpop.xlane.xlu0 %5575
        %v5577 = vsel %vm5351, %v5503, 0.0
        %5578 = vadd.xlane.f32.xlu0 %v5577
        %v5579 = vpop.xlane.xlu0 %5578
        %v5580 = vsel %vm5351, %v5505, 0.0
        %5581 = vadd.xlane.f32.xlu0 %v5580
        %v5582 = vpop.xlane.xlu0 %5581
        %v5583 = vsel %vm5351, %v5507, 0.0
        %5584 = vadd.xlane.f32.xlu0 %v5583
        %v5585 = vpop.xlane.xlu0 %5584
        %v5586 = vsel %vm5351, %v5509, 0.0
        %5587 = vadd.xlane.f32.xlu0 %v5586
        %v5588 = vpop.xlane.xlu0 %5587
        %v5589 = vsel %vm5351, %v5511, 0.0
        %5590 = vadd.xlane.f32.xlu0 %v5589
        %v5591 = vpop.xlane.xlu0 %5590
        %v5592 = vsel %vm5351, %v5513, 0.0
        %5593 = vadd.xlane.f32.xlu0 %v5592
        %v5594 = vpop.xlane.xlu0 %5593
        %v5595 = vsel %vm5351, %v5515, 0.0
        %5596 = vadd.xlane.f32.xlu0 %v5595
        %v5597 = vpop.xlane.xlu0 %5596
        %v5598 = vsel %vm5351, %v5517, 0.0
        %5599 = vadd.xlane.f32.xlu0 %v5598
        %v5600 = vpop.xlane.xlu0 %5599
        %v5601 = vsel %vm5351, %v5519, 0.0
        %5602 = vadd.xlane.f32.xlu0 %v5601
        %v5603 = vpop.xlane.xlu0 %5602
        %v5604 = vsel %vm5351, %v5521, 0.0
        %5605 = vadd.xlane.f32.xlu0 %v5604
        %v5606 = vpop.xlane.xlu0 %5605
        %v5607 = vsel %vm5351, %v5523, 0.0
        %5608 = vadd.xlane.f32.xlu0 %v5607
        %v5609 = vpop.xlane.xlu0 %5608
        %v5610 = vsel %vm5351, %v5525, 0.0
        %5611 = vadd.xlane.f32.xlu0 %v5610
        %v5612 = vpop.xlane.xlu0 %5611
        %v5613 = vsel %vm5351, %v5527, 0.0
        %5614 = vadd.xlane.f32.xlu0 %v5613
        %v5615 = vpop.xlane.xlu0 %5614
        %v5616 = vsel %vm5351, %v5529, 0.0
        %5617 = vadd.xlane.f32.xlu0 %v5616
        %v5618 = vpop.xlane.xlu0 %5617
        %v5619 = vsel %vm5351, %v5531, 0.0
        %5620 = vadd.xlane.f32.xlu0 %v5619
        %v5621 = vpop.xlane.xlu0 %5620
        %v5622 = vsel %vm5351, %v5533, 0.0
        %5623 = vadd.xlane.f32.xlu0 %v5622
        %v5624 = vpop.xlane.xlu0 %5623
        %v5625 = vsel %vm5351, %v5535, 0.0
        %5626 = vadd.xlane.f32.xlu0 %v5625
        %v5627 = vpop.xlane.xlu0 %5626
        %v5628 = vsel %vm5351, %v5537, 0.0
        %5629 = vadd.xlane.f32.xlu0 %v5628
        %v5630 = vpop.xlane.xlu0 %5629
        %v5631 = vsel %vm5351, %v5539, 0.0
        %5632 = vadd.xlane.f32.xlu0 %v5631
        %v5633 = vpop.xlane.xlu0 %5632
        %v5634 = vsel %vm5351, %v5541, 0.0
        %5635 = vadd.xlane.f32.xlu0 %v5634
        %v5636 = vpop.xlane.xlu0 %5635
        %v5637 = vsel %vm5351, %v5543, 0.0
        %5638 = vadd.xlane.f32.xlu0 %v5637
        %v5639 = vpop.xlane.xlu0 %5638
        %v5641 = vsel %vm5351, %v5481, 0
        %v5644 = vsel %vm5351, %v5483, 0
        %v5647 = vsel %vm5351, %v5485, 0
        %v5650 = vsel %vm5351, %v5487, 0
        %5652 = vmatprep.subr.mxu0 0.0
        %5653 = vmatpush1.msra.mxu0 %v4058
        %5654 = vmatprep.subr.mxu0 0.0
        %5655 = vmatpush1.msra.mxu0 %v4194
        %5656 = vmatprep.subr.mxu0 0.0
        %5657 = vmatpush1.msra.mxu0 %v4330
        %5658 = vmatprep.subr.mxu0 0.0
        %5659 = vmatpush1.msra.mxu0 %v4466
        %5660 = vmatprep.subr.mxu0 0.0
        %5661 = vmatpush1.msra.mxu0 0.0
        %5662 = vmatprep.subr.mxu0 0.0
        %5663 = vmatpush1.msra.mxu0 0.0
        %5664 = vmatprep.subr.mxu0 0.0
        %5665 = vmatpush1.msra.mxu0 0.0
        %5666 = vmatprep.subr.mxu0 0.0
        %5667 = vmatpush1.msra.mxu0 0.0
        %5668 = vmatprep.subr.mxu0 0.0
        %5669 = vmatpush1.msra.mxu0 0.0
        %5670 = vmatprep.subr.mxu0 0.0
        %5671 = vmatpush1.msra.mxu0 0.0
        %5672 = vmatprep.subr.mxu0 0.0
        %5673 = vmatpush1.msra.mxu0 0.0
        %5674 = vmatprep.subr.mxu0 0.0
        %5675 = vmatpush1.msra.mxu0 0.0
        %5676 = vmatprep.subr.mxu0 0.0
        %5677 = vmatpush1.msra.mxu0 0.0
        %5678 = vmatprep.subr.mxu0 0.0
        %5679 = vmatpush1.msra.mxu0 0.0
        %5680 = vmatprep.subr.mxu0 0.0
        %5681 = vmatpush1.msra.mxu0 0.0
        %5682 = vmatprep.subr.mxu0 0.0
        %5683 = vmatpush1.msra.mxu0 0.0
        %5684 = vmatprep.subr.mxu0 0.0
        %5685 = vmatpush1.msra.mxu0 0.0
        %5686 = vmatprep.subr.mxu0 0.0
        %5687 = vmatpush1.msra.mxu0 0.0
        %5688 = vmatprep.subr.mxu0 0.0
        %5689 = vmatpush1.msra.mxu0 0.0
        %5690 = vmatprep.subr.mxu0 0.0
        %5691 = vmatpush1.msra.mxu0 0.0
        %5692 = vmatprep.subr.mxu0 0.0
        %5693 = vmatpush1.msra.mxu0 0.0
        %5694 = vmatprep.subr.mxu0 0.0
        %5695 = vmatpush1.msra.mxu0 0.0
        %5696 = vmatprep.subr.mxu0 0.0
        %5697 = vmatpush1.msra.mxu0 0.0
        %5698 = vmatprep.subr.mxu0 0.0
        %5699 = vmatpush1.msra.mxu0 0.0
        %5700 = vmatprep.subr.mxu0 0.0
        %5701 = vmatpush1.msra.mxu0 0.0
        %5702 = vmatprep.subr.mxu0 0.0
        %5703 = vmatpush1.msra.mxu0 0.0
        %5704 = vmatprep.subr.mxu0 0.0
        %5705 = vmatpush1.msra.mxu0 0.0
        %5706 = vmatprep.subr.mxu0 0.0
        %5707 = vmatpush1.msra.mxu0 0.0
        %5708 = vmatprep.subr.mxu0 0.0
        %5709 = vmatpush1.msra.mxu0 0.0
        %5710 = vmatprep.subr.mxu0 0.0
        %5711 = vmatpush1.msra.mxu0 0.0
        %5712 = vmatprep.subr.mxu0 0.0
        %5713 = vmatpush1.msra.mxu0 0.0
        %5714 = vmatprep.subr.mxu0 0.0
        %5715 = vmatpush1.msra.mxu0 0.0
        %5716 = vmatprep.mubr.f32.mxu0 0.0
        %5717 = vmatmul.mubr.f32.gmra.mrb[0].mxu0 %v5641
        %v5718 = vpop.f32.mrb[0].mxu0
        %v5719 = vadd.f32 0.0, %v5718
        %v5720 = vpop.f32.mrb[0].mxu0
        %5721 = vmatprep.mubr.f32.mxu0 0.0
        %5722 = vmatmul.mubr.f32.gmra.mrb[0].mxu0 %v5644
        %v5723 = vpop.f32.mrb[0].mxu0
        %v5724 = vadd.f32 0.0, %v5723
        %v5725 = vpop.f32.mrb[0].mxu0
        %5726 = vmatprep.mubr.f32.mxu0 0.0
        %5727 = vmatmul.mubr.f32.gmra.mrb[0].mxu0 %v5647
        %v5728 = vpop.f32.mrb[0].mxu0
        %v5729 = vadd.f32 0.0, %v5728
        %v5730 = vpop.f32.mrb[0].mxu0
        %5731 = vmatprep.mubr.f32.mxu0 0.0
        %5732 = vmatmul.mubr.f32.gmra.mrb[0].mxu0 %v5650
        %v5733 = vpop.f32.mrb[0].mxu0
        %v5734 = vadd.f32 0.0, %v5733
        %v5735 = vpop.f32.mrb[0].mxu0
        %5736 = vdwg.mxu0
        %v5738 = vsel %vm5351, %v5489, 0
        %v5741 = vsel %vm5351, %v5491, 0
        %v5744 = vsel %vm5351, %v5493, 0
        %v5747 = vsel %vm5351, %v5495, 0
        %5749 = vmatprep.subr.mxu0 0.0
        %5750 = vmatpush1.msra.mxu0 %v4059
        %5751 = vmatprep.subr.mxu0 0.0
        %5752 = vmatpush1.msra.mxu0 %v4195
        %5753 = vmatprep.subr.mxu0 0.0
        %5754 = vmatpush1.msra.mxu0 %v4331
        %5755 = vmatprep.subr.mxu0 0.0
        %5756 = vmatpush1.msra.mxu0 %v4467
        %5757 = vmatprep.subr.mxu0 0.0
        %5758 = vmatpush1.msra.mxu0 0.0
        %5759 = vmatprep.subr.mxu0 0.0
        %5760 = vmatpush1.msra.mxu0 0.0
        %5761 = vmatprep.subr.mxu0 0.0
        %5762 = vmatpush1.msra.mxu0 0.0
        %5763 = vmatprep.subr.mxu0 0.0
        %5764 = vmatpush1.msra.mxu0 0.0
        %5765 = vmatprep.subr.mxu0 0.0
        %5766 = vmatpush1.msra.mxu0 0.0
        %5767 = vmatprep.subr.mxu0 0.0
        %5768 = vmatpush1.msra.mxu0 0.0
        %5769 = vmatprep.subr.mxu0 0.0
        %5770 = vmatpush1.msra.mxu0 0.0
        %5771 = vmatprep.subr.mxu0 0.0
        %5772 = vmatpush1.msra.mxu0 0.0
        %5773 = vmatprep.subr.mxu0 0.0
        %5774 = vmatpush1.msra.mxu0 0.0
        %5775 = vmatprep.subr.mxu0 0.0
        %5776 = vmatpush1.msra.mxu0 0.0
        %5777 = vmatprep.subr.mxu0 0.0
        %5778 = vmatpush1.msra.mxu0 0.0
        %5779 = vmatprep.subr.mxu0 0.0
        %5780 = vmatpush1.msra.mxu0 0.0
        %5781 = vmatprep.subr.mxu0 0.0
        %5782 = vmatpush1.msra.mxu0 0.0
        %5783 = vmatprep.subr.mxu0 0.0
        %5784 = vmatpush1.msra.mxu0 0.0
        %5785 = vmatprep.subr.mxu0 0.0
        %5786 = vmatpush1.msra.mxu0 0.0
        %5787 = vmatprep.subr.mxu0 0.0
        %5788 = vmatpush1.msra.mxu0 0.0
        %5789 = vmatprep.subr.mxu0 0.0
        %5790 = vmatpush1.msra.mxu0 0.0
        %5791 = vmatprep.subr.mxu0 0.0
        %5792 = vmatpush1.msra.mxu0 0.0
        %5793 = vmatprep.subr.mxu0 0.0
        %5794 = vmatpush1.msra.mxu0 0.0
        %5795 = vmatprep.subr.mxu0 0.0
        %5796 = vmatpush1.msra.mxu0 0.0
        %5797 = vmatprep.subr.mxu0 0.0
        %5798 = vmatpush1.msra.mxu0 0.0
        %5799 = vmatprep.subr.mxu0 0.0
        %5800 = vmatpush1.msra.mxu0 0.0
        %5801 = vmatprep.subr.mxu0 0.0
        %5802 = vmatpush1.msra.mxu0 0.0
        %5803 = vmatprep.subr.mxu0 0.0
        %5804 = vmatpush1.msra.mxu0 0.0
        %5805 = vmatprep.subr.mxu0 0.0
        %5806 = vmatpush1.msra.mxu0 0.0
        %5807 = vmatprep.subr.mxu0 0.0
        %5808 = vmatpush1.msra.mxu0 0.0
        %5809 = vmatprep.subr.mxu0 0.0
        %5810 = vmatpush1.msra.mxu0 0.0
        %5811 = vmatprep.subr.mxu0 0.0
        %5812 = vmatpush1.msra.mxu0 0.0
        %5813 = vmatprep.mubr.f32.mxu0 0.0
        %5814 = vmatmul.mubr.f32.gmra.mrb[0].mxu0 %v5738
        %v5815 = vpop.f32.mrb[0].mxu0
        %v5816 = vadd.f32 0.0, %v5815
        %v5817 = vpop.f32.mrb[0].mxu0
        %5818 = vmatprep.mubr.f32.mxu0 0.0
        %5819 = vmatmul.mubr.f32.gmra.mrb[0].mxu0 %v5741
        %v5820 = vpop.f32.mrb[0].mxu0
        %v5821 = vadd.f32 0.0, %v5820
        %v5822 = vpop.f32.mrb[0].mxu0
        %5823 = vmatprep.mubr.f32.mxu0 0.0
        %5824 = vmatmul.mubr.f32.gmra.mrb[0].mxu0 %v5744
        %v5825 = vpop.f32.mrb[0].mxu0
        %v5826 = vadd.f32 0.0, %v5825
        %v5827 = vpop.f32.mrb[0].mxu0
        %5828 = vmatprep.mubr.f32.mxu0 0.0
        %5829 = vmatmul.mubr.f32.gmra.mrb[0].mxu0 %v5747
        %v5830 = vpop.f32.mrb[0].mxu0
        %v5831 = vadd.f32 0.0, %v5830
        %v5832 = vpop.f32.mrb[0].mxu0
        %5833 = vdwg.mxu0
        %v5835 = vsel %vm5351, %v5497, 0
        %v5838 = vsel %vm5351, %v5499, 0
        %v5841 = vsel %vm5351, %v5501, 0
        %v5844 = vsel %vm5351, %v5503, 0
        %5846 = vmatprep.subr.mxu0 0.0
        %5847 = vmatpush1.msra.mxu0 %v4060
        %5848 = vmatprep.subr.mxu0 0.0
        %5849 = vmatpush1.msra.mxu0 %v4196
        %5850 = vmatprep.subr.mxu0 0.0
        %5851 = vmatpush1.msra.mxu0 %v4332
        %5852 = vmatprep.subr.mxu0 0.0
        %5853 = vmatpush1.msra.mxu0 %v4468
        %5854 = vmatprep.subr.mxu0 0.0
        %5855 = vmatpush1.msra.mxu0 0.0
        %5856 = vmatprep.subr.mxu0 0.0
        %5857 = vmatpush1.msra.mxu0 0.0
        %5858 = vmatprep.subr.mxu0 0.0
        %5859 = vmatpush1.msra.mxu0 0.0
        %5860 = vmatprep.subr.mxu0 0.0
        %5861 = vmatpush1.msra.mxu0 0.0
        %5862 = vmatprep.subr.mxu0 0.0
        %5863 = vmatpush1.msra.mxu0 0.0
        %5864 = vmatprep.subr.mxu0 0.0
        %5865 = vmatpush1.msra.mxu0 0.0
        %5866 = vmatprep.subr.mxu0 0.0
        %5867 = vmatpush1.msra.mxu0 0.0
        %5868 = vmatprep.subr.mxu0 0.0
        %5869 = vmatpush1.msra.mxu0 0.0
        %5870 = vmatprep.subr.mxu0 0.0
        %5871 = vmatpush1.msra.mxu0 0.0
        %5872 = vmatprep.subr.mxu0 0.0
        %5873 = vmatpush1.msra.mxu0 0.0
        %5874 = vmatprep.subr.mxu0 0.0
        %5875 = vmatpush1.msra.mxu0 0.0
        %5876 = vmatprep.subr.mxu0 0.0
        %5877 = vmatpush1.msra.mxu0 0.0
        %5878 = vmatprep.subr.mxu0 0.0
        %5879 = vmatpush1.msra.mxu0 0.0
        %5880 = vmatprep.subr.mxu0 0.0
        %5881 = vmatpush1.msra.mxu0 0.0
        %5882 = vmatprep.subr.mxu0 0.0
        %5883 = vmatpush1.msra.mxu0 0.0
        %5884 = vmatprep.subr.mxu0 0.0
        %5885 = vmatpush1.msra.mxu0 0.0
        %5886 = vmatprep.subr.mxu0 0.0
        %5887 = vmatpush1.msra.mxu0 0.0
        %5888 = vmatprep.subr.mxu0 0.0
        %5889 = vmatpush1.msra.mxu0 0.0
        %5890 = vmatprep.subr.mxu0 0.0
        %5891 = vmatpush1.msra.mxu0 0.0
        %5892 = vmatprep.subr.mxu0 0.0
        %5893 = vmatpush1.msra.mxu0 0.0
        %5894 = vmatprep.subr.mxu0 0.0
        %5895 = vmatpush1.msra.mxu0 0.0
        %5896 = vmatprep.subr.mxu0 0.0
        %5897 = vmatpush1.msra.mxu0 0.0
        %5898 = vmatprep.subr.mxu0 0.0
        %5899 = vmatpush1.msra.mxu0 0.0
        %5900 = vmatprep.subr.mxu0 0.0
        %5901 = vmatpush1.msra.mxu0 0.0
        %5902 = vmatprep.subr.mxu0 0.0
        %5903 = vmatpush1.msra.mxu0 0.0
        %5904 = vmatprep.subr.mxu0 0.0
        %5905 = vmatpush1.msra.mxu0 0.0
        %5906 = vmatprep.subr.mxu0 0.0
        %5907 = vmatpush1.msra.mxu0 0.0
        %5908 = vmatprep.subr.mxu0 0.0
        %5909 = vmatpush1.msra.mxu0 0.0
        %5910 = vmatprep.mubr.f32.mxu0 0.0
        %5911 = vmatmul.mubr.f32.gmra.mrb[0].mxu0 %v5835
        %v5912 = vpop.f32.mrb[0].mxu0
        %v5913 = vadd.f32 0.0, %v5912
        %v5914 = vpop.f32.mrb[0].mxu0
        %5915 = vmatprep.mubr.f32.mxu0 0.0
        %5916 = vmatmul.mubr.f32.gmra.mrb[0].mxu0 %v5838
        %v5917 = vpop.f32.mrb[0].mxu0
        %v5918 = vadd.f32 0.0, %v5917
        %v5919 = vpop.f32.mrb[0].mxu0
        %5920 = vmatprep.mubr.f32.mxu0 0.0
        %5921 = vmatmul.mubr.f32.gmra.mrb[0].mxu0 %v5841
        %v5922 = vpop.f32.mrb[0].mxu0
        %v5923 = vadd.f32 0.0, %v5922
        %v5924 = vpop.f32.mrb[0].mxu0
        %5925 = vmatprep.mubr.f32.mxu0 0.0
        %5926 = vmatmul.mubr.f32.gmra.mrb[0].mxu0 %v5844
        %v5927 = vpop.f32.mrb[0].mxu0
        %v5928 = vadd.f32 0.0, %v5927
        %v5929 = vpop.f32.mrb[0].mxu0
        %5930 = vdwg.mxu0
        %v5932 = vsel %vm5351, %v5505, 0
        %v5935 = vsel %vm5351, %v5507, 0
        %v5938 = vsel %vm5351, %v5509, 0
        %v5941 = vsel %vm5351, %v5511, 0
        %5943 = vmatprep.subr.mxu0 0.0
        %5944 = vmatpush1.msra.mxu0 %v4061
        %5945 = vmatprep.subr.mxu0 0.0
        %5946 = vmatpush1.msra.mxu0 %v4197
        %5947 = vmatprep.subr.mxu0 0.0
        %5948 = vmatpush1.msra.mxu0 %v4333
        %5949 = vmatprep.subr.mxu0 0.0
        %5950 = vmatpush1.msra.mxu0 %v4469
        %5951 = vmatprep.subr.mxu0 0.0
        %5952 = vmatpush1.msra.mxu0 0.0
        %5953 = vmatprep.subr.mxu0 0.0
        %5954 = vmatpush1.msra.mxu0 0.0
        %5955 = vmatprep.subr.mxu0 0.0
        %5956 = vmatpush1.msra.mxu0 0.0
        %5957 = vmatprep.subr.mxu0 0.0
        %5958 = vmatpush1.msra.mxu0 0.0
        %5959 = vmatprep.subr.mxu0 0.0
        %5960 = vmatpush1.msra.mxu0 0.0
        %5961 = vmatprep.subr.mxu0 0.0
        %5962 = vmatpush1.msra.mxu0 0.0
        %5963 = vmatprep.subr.mxu0 0.0
        %5964 = vmatpush1.msra.mxu0 0.0
        %5965 = vmatprep.subr.mxu0 0.0
        %5966 = vmatpush1.msra.mxu0 0.0
        %5967 = vmatprep.subr.mxu0 0.0
        %5968 = vmatpush1.msra.mxu0 0.0
        %5969 = vmatprep.subr.mxu0 0.0
        %5970 = vmatpush1.msra.mxu0 0.0
        %5971 = vmatprep.subr.mxu0 0.0
        %5972 = vmatpush1.msra.mxu0 0.0
        %5973 = vmatprep.subr.mxu0 0.0
        %5974 = vmatpush1.msra.mxu0 0.0
        %5975 = vmatprep.subr.mxu0 0.0
        %5976 = vmatpush1.msra.mxu0 0.0
        %5977 = vmatprep.subr.mxu0 0.0
        %5978 = vmatpush1.msra.mxu0 0.0
        %5979 = vmatprep.subr.mxu0 0.0
        %5980 = vmatpush1.msra.mxu0 0.0
        %5981 = vmatprep.subr.mxu0 0.0
        %5982 = vmatpush1.msra.mxu0 0.0
        %5983 = vmatprep.subr.mxu0 0.0
        %5984 = vmatpush1.msra.mxu0 0.0
        %5985 = vmatprep.subr.mxu0 0.0
        %5986 = vmatpush1.msra.mxu0 0.0
        %5987 = vmatprep.subr.mxu0 0.0
        %5988 = vmatpush1.msra.mxu0 0.0
        %5989 = vmatprep.subr.mxu0 0.0
        %5990 = vmatpush1.msra.mxu0 0.0
        %5991 = vmatprep.subr.mxu0 0.0
        %5992 = vmatpush1.msra.mxu0 0.0
        %5993 = vmatprep.subr.mxu0 0.0
        %5994 = vmatpush1.msra.mxu0 0.0
        %5995 = vmatprep.subr.mxu0 0.0
        %5996 = vmatpush1.msra.mxu0 0.0
        %5997 = vmatprep.subr.mxu0 0.0
        %5998 = vmatpush1.msra.mxu0 0.0
        %5999 = vmatprep.subr.mxu0 0.0
        %6000 = vmatpush1.msra.mxu0 0.0
        %6001 = vmatprep.subr.mxu0 0.0
        %6002 = vmatpush1.msra.mxu0 0.0
        %6003 = vmatprep.subr.mxu0 0.0
        %6004 = vmatpush1.msra.mxu0 0.0
        %6005 = vmatprep.subr.mxu0 0.0
        %6006 = vmatpush1.msra.mxu0 0.0
        %6007 = vmatprep.mubr.f32.mxu0 0.0
        %6008 = vmatmul.mubr.f32.gmra.mrb[0].mxu0 %v5932
        %v6009 = vpop.f32.mrb[0].mxu0
        %v6010 = vadd.f32 0.0, %v6009
        %v6011 = vpop.f32.mrb[0].mxu0
        %6012 = vmatprep.mubr.f32.mxu0 0.0
        %6013 = vmatmul.mubr.f32.gmra.mrb[0].mxu0 %v5935
        %v6014 = vpop.f32.mrb[0].mxu0
        %v6015 = vadd.f32 0.0, %v6014
        %v6016 = vpop.f32.mrb[0].mxu0
        %6017 = vmatprep.mubr.f32.mxu0 0.0
        %6018 = vmatmul.mubr.f32.gmra.mrb[0].mxu0 %v5938
        %v6019 = vpop.f32.mrb[0].mxu0
        %v6020 = vadd.f32 0.0, %v6019
        %v6021 = vpop.f32.mrb[0].mxu0
        %6022 = vmatprep.mubr.f32.mxu0 0.0
        %6023 = vmatmul.mubr.f32.gmra.mrb[0].mxu0 %v5941
        %v6024 = vpop.f32.mrb[0].mxu0
        %v6025 = vadd.f32 0.0, %v6024
        %v6026 = vpop.f32.mrb[0].mxu0
        %6027 = vdwg.mxu0
        %v6029 = vsel %vm5351, %v5513, 0
        %v6032 = vsel %vm5351, %v5515, 0
        %v6035 = vsel %vm5351, %v5517, 0
        %v6038 = vsel %vm5351, %v5519, 0
        %6040 = vmatprep.subr.mxu0 0.0
        %6041 = vmatpush1.msra.mxu0 %v4062
        %6042 = vmatprep.subr.mxu0 0.0
        %6043 = vmatpush1.msra.mxu0 %v4198
        %6044 = vmatprep.subr.mxu0 0.0
        %6045 = vmatpush1.msra.mxu0 %v4334
        %6046 = vmatprep.subr.mxu0 0.0
        %6047 = vmatpush1.msra.mxu0 %v4470
        %6048 = vmatprep.subr.mxu0 0.0
        %6049 = vmatpush1.msra.mxu0 0.0
        %6050 = vmatprep.subr.mxu0 0.0
        %6051 = vmatpush1.msra.mxu0 0.0
        %6052 = vmatprep.subr.mxu0 0.0
        %6053 = vmatpush1.msra.mxu0 0.0
        %6054 = vmatprep.subr.mxu0 0.0
        %6055 = vmatpush1.msra.mxu0 0.0
        %6056 = vmatprep.subr.mxu0 0.0
        %6057 = vmatpush1.msra.mxu0 0.0
        %6058 = vmatprep.subr.mxu0 0.0
        %6059 = vmatpush1.msra.mxu0 0.0
        %6060 = vmatprep.subr.mxu0 0.0
        %6061 = vmatpush1.msra.mxu0 0.0
        %6062 = vmatprep.subr.mxu0 0.0
        %6063 = vmatpush1.msra.mxu0 0.0
        %6064 = vmatprep.subr.mxu0 0.0
        %6065 = vmatpush1.msra.mxu0 0.0
        %6066 = vmatprep.subr.mxu0 0.0
        %6067 = vmatpush1.msra.mxu0 0.0
        %6068 = vmatprep.subr.mxu0 0.0
        %6069 = vmatpush1.msra.mxu0 0.0
        %6070 = vmatprep.subr.mxu0 0.0
        %6071 = vmatpush1.msra.mxu0 0.0
        %6072 = vmatprep.subr.mxu0 0.0
        %6073 = vmatpush1.msra.mxu0 0.0
        %6074 = vmatprep.subr.mxu0 0.0
        %6075 = vmatpush1.msra.mxu0 0.0
        %6076 = vmatprep.subr.mxu0 0.0
        %6077 = vmatpush1.msra.mxu0 0.0
        %6078 = vmatprep.subr.mxu0 0.0
        %6079 = vmatpush1.msra.mxu0 0.0
        %6080 = vmatprep.subr.mxu0 0.0
        %6081 = vmatpush1.msra.mxu0 0.0
        %6082 = vmatprep.subr.mxu0 0.0
        %6083 = vmatpush1.msra.mxu0 0.0
        %6084 = vmatprep.subr.mxu0 0.0
        %6085 = vmatpush1.msra.mxu0 0.0
        %6086 = vmatprep.subr.mxu0 0.0
        %6087 = vmatpush1.msra.mxu0 0.0
        %6088 = vmatprep.subr.mxu0 0.0
        %6089 = vmatpush1.msra.mxu0 0.0
        %6090 = vmatprep.subr.mxu0 0.0
        %6091 = vmatpush1.msra.mxu0 0.0
        %6092 = vmatprep.subr.mxu0 0.0
        %6093 = vmatpush1.msra.mxu0 0.0
        %6094 = vmatprep.subr.mxu0 0.0
        %6095 = vmatpush1.msra.mxu0 0.0
        %6096 = vmatprep.subr.mxu0 0.0
        %6097 = vmatpush1.msra.mxu0 0.0
        %6098 = vmatprep.subr.mxu0 0.0
        %6099 = vmatpush1.msra.mxu0 0.0
        %6100 = vmatprep.subr.mxu0 0.0
        %6101 = vmatpush1.msra.mxu0 0.0
        %6102 = vmatprep.subr.mxu0 0.0
        %6103 = vmatpush1.msra.mxu0 0.0
        %6104 = vmatprep.mubr.f32.mxu0 0.0
        %6105 = vmatmul.mubr.f32.gmra.mrb[0].mxu0 %v6029
        %v6106 = vpop.f32.mrb[0].mxu0
        %v6107 = vadd.f32 0.0, %v6106
        %v6108 = vpop.f32.mrb[0].mxu0
        %6109 = vmatprep.mubr.f32.mxu0 0.0
        %6110 = vmatmul.mubr.f32.gmra.mrb[0].mxu0 %v6032
        %v6111 = vpop.f32.mrb[0].mxu0
        %v6112 = vadd.f32 0.0, %v6111
        %v6113 = vpop.f32.mrb[0].mxu0
        %6114 = vmatprep.mubr.f32.mxu0 0.0
        %6115 = vmatmul.mubr.f32.gmra.mrb[0].mxu0 %v6035
        %v6116 = vpop.f32.mrb[0].mxu0
        %v6117 = vadd.f32 0.0, %v6116
        %v6118 = vpop.f32.mrb[0].mxu0
        %6119 = vmatprep.mubr.f32.mxu0 0.0
        %6120 = vmatmul.mubr.f32.gmra.mrb[0].mxu0 %v6038
        %v6121 = vpop.f32.mrb[0].mxu0
        %v6122 = vadd.f32 0.0, %v6121
        %v6123 = vpop.f32.mrb[0].mxu0
        %6124 = vdwg.mxu0
        %v6126 = vsel %vm5351, %v5521, 0
        %v6129 = vsel %vm5351, %v5523, 0
        %v6132 = vsel %vm5351, %v5525, 0
        %v6135 = vsel %vm5351, %v5527, 0
        %6137 = vmatprep.subr.mxu0 0.0
        %6138 = vmatpush1.msra.mxu0 %v4063
        %6139 = vmatprep.subr.mxu0 0.0
        %6140 = vmatpush1.msra.mxu0 %v4199
        %6141 = vmatprep.subr.mxu0 0.0
        %6142 = vmatpush1.msra.mxu0 %v4335
        %6143 = vmatprep.subr.mxu0 0.0
        %6144 = vmatpush1.msra.mxu0 %v4471
        %6145 = vmatprep.subr.mxu0 0.0
        %6146 = vmatpush1.msra.mxu0 0.0
        %6147 = vmatprep.subr.mxu0 0.0
        %6148 = vmatpush1.msra.mxu0 0.0
        %6149 = vmatprep.subr.mxu0 0.0
        %6150 = vmatpush1.msra.mxu0 0.0
        %6151 = vmatprep.subr.mxu0 0.0
        %6152 = vmatpush1.msra.mxu0 0.0
        %6153 = vmatprep.subr.mxu0 0.0
        %6154 = vmatpush1.msra.mxu0 0.0
        %6155 = vmatprep.subr.mxu0 0.0
        %6156 = vmatpush1.msra.mxu0 0.0
        %6157 = vmatprep.subr.mxu0 0.0
        %6158 = vmatpush1.msra.mxu0 0.0
        %6159 = vmatprep.subr.mxu0 0.0
        %6160 = vmatpush1.msra.mxu0 0.0
        %6161 = vmatprep.subr.mxu0 0.0
        %6162 = vmatpush1.msra.mxu0 0.0
        %6163 = vmatprep.subr.mxu0 0.0
        %6164 = vmatpush1.msra.mxu0 0.0
        %6165 = vmatprep.subr.mxu0 0.0
        %6166 = vmatpush1.msra.mxu0 0.0
        %6167 = vmatprep.subr.mxu0 0.0
        %6168 = vmatpush1.msra.mxu0 0.0
        %6169 = vmatprep.subr.mxu0 0.0
        %6170 = vmatpush1.msra.mxu0 0.0
        %6171 = vmatprep.subr.mxu0 0.0
        %6172 = vmatpush1.msra.mxu0 0.0
        %6173 = vmatprep.subr.mxu0 0.0
        %6174 = vmatpush1.msra.mxu0 0.0
        %6175 = vmatprep.subr.mxu0 0.0
        %6176 = vmatpush1.msra.mxu0 0.0
        %6177 = vmatprep.subr.mxu0 0.0
        %6178 = vmatpush1.msra.mxu0 0.0
        %6179 = vmatprep.subr.mxu0 0.0
        %6180 = vmatpush1.msra.mxu0 0.0
        %6181 = vmatprep.subr.mxu0 0.0
        %6182 = vmatpush1.msra.mxu0 0.0
        %6183 = vmatprep.subr.mxu0 0.0
        %6184 = vmatpush1.msra.mxu0 0.0
        %6185 = vmatprep.subr.mxu0 0.0
        %6186 = vmatpush1.msra.mxu0 0.0
        %6187 = vmatprep.subr.mxu0 0.0
        %6188 = vmatpush1.msra.mxu0 0.0
        %6189 = vmatprep.subr.mxu0 0.0
        %6190 = vmatpush1.msra.mxu0 0.0
        %6191 = vmatprep.subr.mxu0 0.0
        %6192 = vmatpush1.msra.mxu0 0.0
        %6193 = vmatprep.subr.mxu0 0.0
        %6194 = vmatpush1.msra.mxu0 0.0
        %6195 = vmatprep.subr.mxu0 0.0
        %6196 = vmatpush1.msra.mxu0 0.0
        %6197 = vmatprep.subr.mxu0 0.0
        %6198 = vmatpush1.msra.mxu0 0.0
        %6199 = vmatprep.subr.mxu0 0.0
        %6200 = vmatpush1.msra.mxu0 0.0
        %6201 = vmatprep.mubr.f32.mxu0 0.0
        %6202 = vmatmul.mubr.f32.gmra.mrb[0].mxu0 %v6126
        %v6203 = vpop.f32.mrb[0].mxu0
        %v6204 = vadd.f32 0.0, %v6203
        %v6205 = vpop.f32.mrb[0].mxu0
        %6206 = vmatprep.mubr.f32.mxu0 0.0
        %6207 = vmatmul.mubr.f32.gmra.mrb[0].mxu0 %v6129
        %v6208 = vpop.f32.mrb[0].mxu0
        %v6209 = vadd.f32 0.0, %v6208
        %v6210 = vpop.f32.mrb[0].mxu0
        %6211 = vmatprep.mubr.f32.mxu0 0.0
        %6212 = vmatmul.mubr.f32.gmra.mrb[0].mxu0 %v6132
        %v6213 = vpop.f32.mrb[0].mxu0
        %v6214 = vadd.f32 0.0, %v6213
        %v6215 = vpop.f32.mrb[0].mxu0
        %6216 = vmatprep.mubr.f32.mxu0 0.0
        %6217 = vmatmul.mubr.f32.gmra.mrb[0].mxu0 %v6135
        %v6218 = vpop.f32.mrb[0].mxu0
        %v6219 = vadd.f32 0.0, %v6218
        %v6220 = vpop.f32.mrb[0].mxu0
        %6221 = vdwg.mxu0
        %v6223 = vsel %vm5351, %v5529, 0
        %v6226 = vsel %vm5351, %v5531, 0
        %v6229 = vsel %vm5351, %v5533, 0
        %v6232 = vsel %vm5351, %v5535, 0
        %6234 = vmatprep.subr.mxu0 0.0
        %6235 = vmatpush1.msra.mxu0 %v4064
        %6236 = vmatprep.subr.mxu0 0.0
        %6237 = vmatpush1.msra.mxu0 %v4200
        %6238 = vmatprep.subr.mxu0 0.0
        %6239 = vmatpush1.msra.mxu0 %v4336
        %6240 = vmatprep.subr.mxu0 0.0
        %6241 = vmatpush1.msra.mxu0 %v4472
        %6242 = vmatprep.subr.mxu0 0.0
        %6243 = vmatpush1.msra.mxu0 0.0
        %6244 = vmatprep.subr.mxu0 0.0
        %6245 = vmatpush1.msra.mxu0 0.0
        %6246 = vmatprep.subr.mxu0 0.0
        %6247 = vmatpush1.msra.mxu0 0.0
        %6248 = vmatprep.subr.mxu0 0.0
        %6249 = vmatpush1.msra.mxu0 0.0
        %6250 = vmatprep.subr.mxu0 0.0
        %6251 = vmatpush1.msra.mxu0 0.0
        %6252 = vmatprep.subr.mxu0 0.0
        %6253 = vmatpush1.msra.mxu0 0.0
        %6254 = vmatprep.subr.mxu0 0.0
        %6255 = vmatpush1.msra.mxu0 0.0
        %6256 = vmatprep.subr.mxu0 0.0
        %6257 = vmatpush1.msra.mxu0 0.0
        %6258 = vmatprep.subr.mxu0 0.0
        %6259 = vmatpush1.msra.mxu0 0.0
        %6260 = vmatprep.subr.mxu0 0.0
        %6261 = vmatpush1.msra.mxu0 0.0
        %6262 = vmatprep.subr.mxu0 0.0
        %6263 = vmatpush1.msra.mxu0 0.0
        %6264 = vmatprep.subr.mxu0 0.0
        %6265 = vmatpush1.msra.mxu0 0.0
        %6266 = vmatprep.subr.mxu0 0.0
        %6267 = vmatpush1.msra.mxu0 0.0
        %6268 = vmatprep.subr.mxu0 0.0
        %6269 = vmatpush1.msra.mxu0 0.0
        %6270 = vmatprep.subr.mxu0 0.0
        %6271 = vmatpush1.msra.mxu0 0.0
        %6272 = vmatprep.subr.mxu0 0.0
        %6273 = vmatpush1.msra.mxu0 0.0
        %6274 = vmatprep.subr.mxu0 0.0
        %6275 = vmatpush1.msra.mxu0 0.0
        %6276 = vmatprep.subr.mxu0 0.0
        %6277 = vmatpush1.msra.mxu0 0.0
        %6278 = vmatprep.subr.mxu0 0.0
        %6279 = vmatpush1.msra.mxu0 0.0
        %6280 = vmatprep.subr.mxu0 0.0
        %6281 = vmatpush1.msra.mxu0 0.0
        %6282 = vmatprep.subr.mxu0 0.0
        %6283 = vmatpush1.msra.mxu0 0.0
        %6284 = vmatprep.subr.mxu0 0.0
        %6285 = vmatpush1.msra.mxu0 0.0
        %6286 = vmatprep.subr.mxu0 0.0
        %6287 = vmatpush1.msra.mxu0 0.0
        %6288 = vmatprep.subr.mxu0 0.0
        %6289 = vmatpush1.msra.mxu0 0.0
        %6290 = vmatprep.subr.mxu0 0.0
        %6291 = vmatpush1.msra.mxu0 0.0
        %6292 = vmatprep.subr.mxu0 0.0
        %6293 = vmatpush1.msra.mxu0 0.0
        %6294 = vmatprep.subr.mxu0 0.0
        %6295 = vmatpush1.msra.mxu0 0.0
        %6296 = vmatprep.subr.mxu0 0.0
        %6297 = vmatpush1.msra.mxu0 0.0
        %6298 = vmatprep.mubr.f32.mxu0 0.0
        %6299 = vmatmul.mubr.f32.gmra.mrb[0].mxu0 %v6223
        %v6300 = vpop.f32.mrb[0].mxu0
        %v6301 = vadd.f32 0.0, %v6300
        %v6302 = vpop.f32.mrb[0].mxu0
        %6303 = vmatprep.mubr.f32.mxu0 0.0
        %6304 = vmatmul.mubr.f32.gmra.mrb[0].mxu0 %v6226
        %v6305 = vpop.f32.mrb[0].mxu0
        %v6306 = vadd.f32 0.0, %v6305
        %v6307 = vpop.f32.mrb[0].mxu0
        %6308 = vmatprep.mubr.f32.mxu0 0.0
        %6309 = vmatmul.mubr.f32.gmra.mrb[0].mxu0 %v6229
        %v6310 = vpop.f32.mrb[0].mxu0
        %v6311 = vadd.f32 0.0, %v6310
        %v6312 = vpop.f32.mrb[0].mxu0
        %6313 = vmatprep.mubr.f32.mxu0 0.0
        %6314 = vmatmul.mubr.f32.gmra.mrb[0].mxu0 %v6232
        %v6315 = vpop.f32.mrb[0].mxu0
        %v6316 = vadd.f32 0.0, %v6315
        %v6317 = vpop.f32.mrb[0].mxu0
        %6318 = vdwg.mxu0
        %v6320 = vsel %vm5351, %v5537, 0
        %v6323 = vsel %vm5351, %v5539, 0
        %v6326 = vsel %vm5351, %v5541, 0
        %v6329 = vsel %vm5351, %v5543, 0
        %6331 = vmatprep.subr.mxu0 0.0
        %6332 = vmatpush1.msra.mxu0 %v4065
        %6333 = vmatprep.subr.mxu0 0.0
        %6334 = vmatpush1.msra.mxu0 %v4201
        %6335 = vmatprep.subr.mxu0 0.0
        %6336 = vmatpush1.msra.mxu0 %v4337
        %6337 = vmatprep.subr.mxu0 0.0
        %6338 = vmatpush1.msra.mxu0 %v4473
        %6339 = vmatprep.subr.mxu0 0.0
        %6340 = vmatpush1.msra.mxu0 0.0
        %6341 = vmatprep.subr.mxu0 0.0
        %6342 = vmatpush1.msra.mxu0 0.0
        %6343 = vmatprep.subr.mxu0 0.0
        %6344 = vmatpush1.msra.mxu0 0.0
        %6345 = vmatprep.subr.mxu0 0.0
        %6346 = vmatpush1.msra.mxu0 0.0
        %6347 = vmatprep.subr.mxu0 0.0
        %6348 = vmatpush1.msra.mxu0 0.0
        %6349 = vmatprep.subr.mxu0 0.0
        %6350 = vmatpush1.msra.mxu0 0.0
        %6351 = vmatprep.subr.mxu0 0.0
        %6352 = vmatpush1.msra.mxu0 0.0
        %6353 = vmatprep.subr.mxu0 0.0
        %6354 = vmatpush1.msra.mxu0 0.0
        %6355 = vmatprep.subr.mxu0 0.0
        %6356 = vmatpush1.msra.mxu0 0.0
        %6357 = vmatprep.subr.mxu0 0.0
        %6358 = vmatpush1.msra.mxu0 0.0
        %6359 = vmatprep.subr.mxu0 0.0
        %6360 = vmatpush1.msra.mxu0 0.0
        %6361 = vmatprep.subr.mxu0 0.0
        %6362 = vmatpush1.msra.mxu0 0.0
        %6363 = vmatprep.subr.mxu0 0.0
        %6364 = vmatpush1.msra.mxu0 0.0
        %6365 = vmatprep.subr.mxu0 0.0
        %6366 = vmatpush1.msra.mxu0 0.0
        %6367 = vmatprep.subr.mxu0 0.0
        %6368 = vmatpush1.msra.mxu0 0.0
        %6369 = vmatprep.subr.mxu0 0.0
        %6370 = vmatpush1.msra.mxu0 0.0
        %6371 = vmatprep.subr.mxu0 0.0
        %6372 = vmatpush1.msra.mxu0 0.0
        %6373 = vmatprep.subr.mxu0 0.0
        %6374 = vmatpush1.msra.mxu0 0.0
        %6375 = vmatprep.subr.mxu0 0.0
        %6376 = vmatpush1.msra.mxu0 0.0
        %6377 = vmatprep.subr.mxu0 0.0
        %6378 = vmatpush1.msra.mxu0 0.0
        %6379 = vmatprep.subr.mxu0 0.0
        %6380 = vmatpush1.msra.mxu0 0.0
        %6381 = vmatprep.subr.mxu0 0.0
        %6382 = vmatpush1.msra.mxu0 0.0
        %6383 = vmatprep.subr.mxu0 0.0
        %6384 = vmatpush1.msra.mxu0 0.0
        %6385 = vmatprep.subr.mxu0 0.0
        %6386 = vmatpush1.msra.mxu0 0.0
        %6387 = vmatprep.subr.mxu0 0.0
        %6388 = vmatpush1.msra.mxu0 0.0
        %6389 = vmatprep.subr.mxu0 0.0
        %6390 = vmatpush1.msra.mxu0 0.0
        %6391 = vmatprep.subr.mxu0 0.0
        %6392 = vmatpush1.msra.mxu0 0.0
        %6393 = vmatprep.subr.mxu0 0.0
        %6394 = vmatpush1.msra.mxu0 0.0
        %6395 = vmatprep.mubr.f32.mxu0 0.0
        %6396 = vmatmul.mubr.f32.gmra.mrb[0].mxu0 %v6320
        %v6397 = vpop.f32.mrb[0].mxu0
        %v6398 = vadd.f32 0.0, %v6397
        %v6399 = vpop.f32.mrb[0].mxu0
        %6400 = vmatprep.mubr.f32.mxu0 0.0
        %6401 = vmatmul.mubr.f32.gmra.mrb[0].mxu0 %v6323
        %v6402 = vpop.f32.mrb[0].mxu0
        %v6403 = vadd.f32 0.0, %v6402
        %v6404 = vpop.f32.mrb[0].mxu0
        %6405 = vmatprep.mubr.f32.mxu0 0.0
        %6406 = vmatmul.mubr.f32.gmra.mrb[0].mxu0 %v6326
        %v6407 = vpop.f32.mrb[0].mxu0
        %v6408 = vadd.f32 0.0, %v6407
        %v6409 = vpop.f32.mrb[0].mxu0
        %6410 = vmatprep.mubr.f32.mxu0 0.0
        %6411 = vmatmul.mubr.f32.gmra.mrb[0].mxu0 %v6329
        %v6412 = vpop.f32.mrb[0].mxu0
        %v6413 = vadd.f32 0.0, %v6412
        %v6414 = vpop.f32.mrb[0].mxu0
        %6415 = vdwg.mxu0
        %v6416 = vrcp.pop %v5546
        %v6417 = vmul.f32 %v5719, %v6416
        %v6418 = vrcp.pop %v5549
        %v6419 = vmul.f32 %v5724, %v6418
        %v6420 = vrcp.pop %v5552
        %v6421 = vmul.f32 %v5729, %v6420
        %v6422 = vrcp.pop %v5555
        %v6423 = vmul.f32 %v5734, %v6422
        %v6424 = vrcp.pop %v5558
        %v6425 = vmul.f32 %v5816, %v6424
        %v6426 = vrcp.pop %v5561
        %v6427 = vmul.f32 %v5821, %v6426
        %v6428 = vrcp.pop %v5564
        %v6429 = vmul.f32 %v5826, %v6428
        %v6430 = vrcp.pop %v5567
        %v6431 = vmul.f32 %v5831, %v6430
        %v6432 = vrcp.pop %v5570
        %v6433 = vmul.f32 %v5913, %v6432
        %v6434 = vrcp.pop %v5573
        %v6435 = vmul.f32 %v5918, %v6434
        %v6436 = vrcp.pop %v5576
        %v6437 = vmul.f32 %v5923, %v6436
        %v6438 = vrcp.pop %v5579
        %v6439 = vmul.f32 %v5928, %v6438
        %v6440 = vrcp.pop %v5582
        %v6441 = vmul.f32 %v6010, %v6440
        %v6442 = vrcp.pop %v5585
        %v6443 = vmul.f32 %v6015, %v6442
        %v6444 = vrcp.pop %v5588
        %v6445 = vmul.f32 %v6020, %v6444
        %v6446 = vrcp.pop %v5591
        %v6447 = vmul.f32 %v6025, %v6446
        %v6448 = vrcp.pop %v5594
        %v6449 = vmul.f32 %v6107, %v6448
        %v6450 = vrcp.pop %v5597
        %v6451 = vmul.f32 %v6112, %v6450
        %v6452 = vrcp.pop %v5600
        %v6453 = vmul.f32 %v6117, %v6452
        %v6454 = vrcp.pop %v5603
        %v6455 = vmul.f32 %v6122, %v6454
        %v6456 = vrcp.pop %v5606
        %v6457 = vmul.f32 %v6204, %v6456
        %v6458 = vrcp.pop %v5609
        %v6459 = vmul.f32 %v6209, %v6458
        %v6460 = vrcp.pop %v5612
        %v6461 = vmul.f32 %v6214, %v6460
        %v6462 = vrcp.pop %v5615
        %v6463 = vmul.f32 %v6219, %v6462
        %v6464 = vrcp.pop %v5618
        %v6465 = vmul.f32 %v6301, %v6464
        %v6466 = vrcp.pop %v5621
        %v6467 = vmul.f32 %v6306, %v6466
        %v6468 = vrcp.pop %v5624
        %v6469 = vmul.f32 %v6311, %v6468
        %v6470 = vrcp.pop %v5627
        %v6471 = vmul.f32 %v6316, %v6470
        %v6472 = vrcp.pop %v5630
        %v6473 = vmul.f32 %v6398, %v6472
        %v6474 = vrcp.pop %v5633
        %v6475 = vmul.f32 %v6403, %v6474
        %v6476 = vrcp.pop %v5636
        %v6477 = vmul.f32 %v6408, %v6476
        %v6478 = vrcp.pop %v5639
        %v6479 = vmul.f32 %v6413, %v6478
        %v6480 = vcombine.low %v6417, %v6433
        %v6481 = vcombine.high %v6417, %v6433
        %v6483 = vunpack.c.l.s4 1983009808
        %v6484 = vunpack.c.0.s8 %v6483
        %v6485 = vlaneseq
        %v6486 = vshrl.u32 %v6485, 7
        %v6487 = vsub.s32 %v6484, %v6486
        %v6488 = vrot.slane %v6480, %v6487
        %v6490 = vunpack.c.l.s4 1983009808
        %v6491 = vunpack.c.0.s8 %v6490
        %v6492 = vlaneseq
        %v6493 = vshrl.u32 %v6492, 7
        %v6494 = vsub.s32 %v6491, %v6493
        %v6495 = vrot.slane %v6481, %v6494
        %v6496 = vcombine.low %v6425, %v6441
        %v6497 = vcombine.high %v6425, %v6441
        %v6499 = vunpack.c.l.s4 1983009808
        %v6500 = vunpack.c.0.s8 %v6499
        %v6501 = vlaneseq
        %v6502 = vshrl.u32 %v6501, 7
        %v6503 = vsub.s32 %v6500, %v6502
        %v6504 = vrot.slane %v6496, %v6503
        %v6506 = vunpack.c.l.s4 1983009808
        %v6507 = vunpack.c.0.s8 %v6506
        %v6508 = vlaneseq
        %v6509 = vshrl.u32 %v6508, 7
        %v6510 = vsub.s32 %v6507, %v6509
        %v6511 = vrot.slane %v6497, %v6510
        %v6512 = vcombine.low %v6449, %v6465
        %v6513 = vcombine.high %v6449, %v6465
        %v6515 = vunpack.c.l.s4 1983009808
        %v6516 = vunpack.c.0.s8 %v6515
        %v6517 = vlaneseq
        %v6518 = vshrl.u32 %v6517, 7
        %v6519 = vsub.s32 %v6516, %v6518
        %v6520 = vrot.slane %v6512, %v6519
        %v6522 = vunpack.c.l.s4 1983009808
        %v6523 = vunpack.c.0.s8 %v6522
        %v6524 = vlaneseq
        %v6525 = vshrl.u32 %v6524, 7
        %v6526 = vsub.s32 %v6523, %v6525
        %v6527 = vrot.slane %v6513, %v6526
        %v6528 = vcombine.low %v6457, %v6473
        %v6529 = vcombine.high %v6457, %v6473
        %v6531 = vunpack.c.l.s4 1983009808
        %v6532 = vunpack.c.0.s8 %v6531
        %v6533 = vlaneseq
        %v6534 = vshrl.u32 %v6533, 7
        %v6535 = vsub.s32 %v6532, %v6534
        %v6536 = vrot.slane %v6528, %v6535
        %v6538 = vunpack.c.l.s4 1983009808
        %v6539 = vunpack.c.0.s8 %v6538
        %v6540 = vlaneseq
        %v6541 = vshrl.u32 %v6540, 7
        %v6542 = vsub.s32 %v6539, %v6541
        %v6543 = vrot.slane %v6529, %v6542
        %v6544 = vcombine.low %v6488, %v6504
        %v6545 = vcombine.high %v6488, %v6504
        %v6547 = vunpack.c.l.s4 1934713408
        %v6548 = vunpack.c.0.s8 %v6547
        %v6549 = vlaneseq
        %v6550 = vshrl.u32 %v6549, 7
        %v6551 = vsub.s32 %v6548, %v6550
        %v6552 = vrot.slane %v6544, %v6551
        %v6554 = vunpack.c.l.s4 1934713408
        %v6555 = vunpack.c.0.s8 %v6554
        %v6556 = vlaneseq
        %v6557 = vshrl.u32 %v6556, 7
        %v6558 = vsub.s32 %v6555, %v6557
        %v6559 = vrot.slane %v6545, %v6558
        %v6560 = vcombine.low %v6495, %v6511
        %v6561 = vcombine.high %v6495, %v6511
        %v6563 = vunpack.c.l.s4 1934713408
        %v6564 = vunpack.c.0.s8 %v6563
        %v6565 = vlaneseq
        %v6566 = vshrl.u32 %v6565, 7
        %v6567 = vsub.s32 %v6564, %v6566
        %v6568 = vrot.slane %v6560, %v6567
        %v6570 = vunpack.c.l.s4 1934713408
        %v6571 = vunpack.c.0.s8 %v6570
        %v6572 = vlaneseq
        %v6573 = vshrl.u32 %v6572, 7
        %v6574 = vsub.s32 %v6571, %v6573
        %v6575 = vrot.slane %v6561, %v6574
        %v6576 = vcombine.low %v6520, %v6536
        %v6577 = vcombine.high %v6520, %v6536
        %v6579 = vunpack.c.l.s4 1934713408
        %v6580 = vunpack.c.0.s8 %v6579
        %v6581 = vlaneseq
        %v6582 = vshrl.u32 %v6581, 7
        %v6583 = vsub.s32 %v6580, %v6582
        %v6584 = vrot.slane %v6576, %v6583
        %v6586 = vunpack.c.l.s4 1934713408
        %v6587 = vunpack.c.0.s8 %v6586
        %v6588 = vlaneseq
        %v6589 = vshrl.u32 %v6588, 7
        %v6590 = vsub.s32 %v6587, %v6589
        %v6591 = vrot.slane %v6577, %v6590
        %v6592 = vcombine.low %v6527, %v6543
        %v6593 = vcombine.high %v6527, %v6543
        %v6595 = vunpack.c.l.s4 1934713408
        %v6596 = vunpack.c.0.s8 %v6595
        %v6597 = vlaneseq
        %v6598 = vshrl.u32 %v6597, 7
        %v6599 = vsub.s32 %v6596, %v6598
        %v6600 = vrot.slane %v6592, %v6599
        %v6602 = vunpack.c.l.s4 1934713408
        %v6603 = vunpack.c.0.s8 %v6602
        %v6604 = vlaneseq
        %v6605 = vshrl.u32 %v6604, 7
        %v6606 = vsub.s32 %v6603, %v6605
        %v6607 = vrot.slane %v6593, %v6606
        %v6608 = vcombine.low %v6552, %v6584
        %v6609 = vcombine.high %v6552, %v6584
        %v6610 = vcombine.low %v6559, %v6591
        %v6611 = vcombine.high %v6559, %v6591
        %v6612 = vcombine.low %v6568, %v6600
        %v6613 = vcombine.high %v6568, %v6600
        %v6614 = vcombine.low %v6575, %v6607
        %v6615 = vcombine.high %v6575, %v6607
        %v6616 = vcombine.low %v6419, %v6435
        %v6617 = vcombine.high %v6419, %v6435
        %v6619 = vunpack.c.l.s4 1983009808
        %v6620 = vunpack.c.0.s8 %v6619
        %v6621 = vlaneseq
        %v6622 = vshrl.u32 %v6621, 7
        %v6623 = vsub.s32 %v6620, %v6622
        %v6624 = vrot.slane %v6616, %v6623
        %v6626 = vunpack.c.l.s4 1983009808
        %v6627 = vunpack.c.0.s8 %v6626
        %v6628 = vlaneseq
        %v6629 = vshrl.u32 %v6628, 7
        %v6630 = vsub.s32 %v6627, %v6629
        %v6631 = vrot.slane %v6617, %v6630
        %v6632 = vcombine.low %v6427, %v6443
        %v6633 = vcombine.high %v6427, %v6443
        %v6635 = vunpack.c.l.s4 1983009808
        %v6636 = vunpack.c.0.s8 %v6635
        %v6637 = vlaneseq
        %v6638 = vshrl.u32 %v6637, 7
        %v6639 = vsub.s32 %v6636, %v6638
        %v6640 = vrot.slane %v6632, %v6639
        %v6642 = vunpack.c.l.s4 1983009808
        %v6643 = vunpack.c.0.s8 %v6642
        %v6644 = vlaneseq
        %v6645 = vshrl.u32 %v6644, 7
        %v6646 = vsub.s32 %v6643, %v6645
        %v6647 = vrot.slane %v6633, %v6646
        %v6648 = vcombine.low %v6451, %v6467
        %v6649 = vcombine.high %v6451, %v6467
        %v6651 = vunpack.c.l.s4 1983009808
        %v6652 = vunpack.c.0.s8 %v6651
        %v6653 = vlaneseq
        %v6654 = vshrl.u32 %v6653, 7
        %v6655 = vsub.s32 %v6652, %v6654
        %v6656 = vrot.slane %v6648, %v6655
        %v6658 = vunpack.c.l.s4 1983009808
        %v6659 = vunpack.c.0.s8 %v6658
        %v6660 = vlaneseq
        %v6661 = vshrl.u32 %v6660, 7
        %v6662 = vsub.s32 %v6659, %v6661
        %v6663 = vrot.slane %v6649, %v6662
        %v6664 = vcombine.low %v6459, %v6475
        %v6665 = vcombine.high %v6459, %v6475
        %v6667 = vunpack.c.l.s4 1983009808
        %v6668 = vunpack.c.0.s8 %v6667
        %v6669 = vlaneseq
        %v6670 = vshrl.u32 %v6669, 7
        %v6671 = vsub.s32 %v6668, %v6670
        %v6672 = vrot.slane %v6664, %v6671
        %v6674 = vunpack.c.l.s4 1983009808
        %v6675 = vunpack.c.0.s8 %v6674
        %v6676 = vlaneseq
        %v6677 = vshrl.u32 %v6676, 7
        %v6678 = vsub.s32 %v6675, %v6677
        %v6679 = vrot.slane %v6665, %v6678
        %v6680 = vcombine.low %v6624, %v6640
        %v6681 = vcombine.high %v6624, %v6640
        %v6683 = vunpack.c.l.s4 1934713408
        %v6684 = vunpack.c.0.s8 %v6683
        %v6685 = vlaneseq
        %v6686 = vshrl.u32 %v6685, 7
        %v6687 = vsub.s32 %v6684, %v6686
        %v6688 = vrot.slane %v6680, %v6687
        %v6690 = vunpack.c.l.s4 1934713408
        %v6691 = vunpack.c.0.s8 %v6690
        %v6692 = vlaneseq
        %v6693 = vshrl.u32 %v6692, 7
        %v6694 = vsub.s32 %v6691, %v6693
        %v6695 = vrot.slane %v6681, %v6694
        %v6696 = vcombine.low %v6631, %v6647
        %v6697 = vcombine.high %v6631, %v6647
        %v6699 = vunpack.c.l.s4 1934713408
        %v6700 = vunpack.c.0.s8 %v6699
        %v6701 = vlaneseq
        %v6702 = vshrl.u32 %v6701, 7
        %v6703 = vsub.s32 %v6700, %v6702
        %v6704 = vrot.slane %v6696, %v6703
        %v6706 = vunpack.c.l.s4 1934713408
        %v6707 = vunpack.c.0.s8 %v6706
        %v6708 = vlaneseq
        %v6709 = vshrl.u32 %v6708, 7
        %v6710 = vsub.s32 %v6707, %v6709
        %v6711 = vrot.slane %v6697, %v6710
        %v6712 = vcombine.low %v6656, %v6672
        %v6713 = vcombine.high %v6656, %v6672
        %v6715 = vunpack.c.l.s4 1934713408
        %v6716 = vunpack.c.0.s8 %v6715
        %v6717 = vlaneseq
        %v6718 = vshrl.u32 %v6717, 7
        %v6719 = vsub.s32 %v6716, %v6718
        %v6720 = vrot.slane %v6712, %v6719
        %v6722 = vunpack.c.l.s4 1934713408
        %v6723 = vunpack.c.0.s8 %v6722
        %v6724 = vlaneseq
        %v6725 = vshrl.u32 %v6724, 7
        %v6726 = vsub.s32 %v6723, %v6725
        %v6727 = vrot.slane %v6713, %v6726
        %v6728 = vcombine.low %v6663, %v6679
        %v6729 = vcombine.high %v6663, %v6679
        %v6731 = vunpack.c.l.s4 1934713408
        %v6732 = vunpack.c.0.s8 %v6731
        %v6733 = vlaneseq
        %v6734 = vshrl.u32 %v6733, 7
        %v6735 = vsub.s32 %v6732, %v6734
        %v6736 = vrot.slane %v6728, %v6735
        %v6738 = vunpack.c.l.s4 1934713408
        %v6739 = vunpack.c.0.s8 %v6738
        %v6740 = vlaneseq
        %v6741 = vshrl.u32 %v6740, 7
        %v6742 = vsub.s32 %v6739, %v6741
        %v6743 = vrot.slane %v6729, %v6742
        %v6744 = vcombine.low %v6688, %v6720
        %v6745 = vcombine.high %v6688, %v6720
        %v6746 = vcombine.low %v6695, %v6727
        %v6747 = vcombine.high %v6695, %v6727
        %v6748 = vcombine.low %v6704, %v6736
        %v6749 = vcombine.high %v6704, %v6736
        %v6750 = vcombine.low %v6711, %v6743
        %v6751 = vcombine.high %v6711, %v6743
        %v6752 = vcombine.low %v6421, %v6437
        %v6753 = vcombine.high %v6421, %v6437
        %v6755 = vunpack.c.l.s4 1983009808
        %v6756 = vunpack.c.0.s8 %v6755
        %v6757 = vlaneseq
        %v6758 = vshrl.u32 %v6757, 7
        %v6759 = vsub.s32 %v6756, %v6758
        %v6760 = vrot.slane %v6752, %v6759
        %v6762 = vunpack.c.l.s4 1983009808
        %v6763 = vunpack.c.0.s8 %v6762
        %v6764 = vlaneseq
        %v6765 = vshrl.u32 %v6764, 7
        %v6766 = vsub.s32 %v6763, %v6765
        %v6767 = vrot.slane %v6753, %v6766
        %v6768 = vcombine.low %v6429, %v6445
        %v6769 = vcombine.high %v6429, %v6445
        %v6771 = vunpack.c.l.s4 1983009808
        %v6772 = vunpack.c.0.s8 %v6771
        %v6773 = vlaneseq
        %v6774 = vshrl.u32 %v6773, 7
        %v6775 = vsub.s32 %v6772, %v6774
        %v6776 = vrot.slane %v6768, %v6775
        %v6778 = vunpack.c.l.s4 1983009808
        %v6779 = vunpack.c.0.s8 %v6778
        %v6780 = vlaneseq
        %v6781 = vshrl.u32 %v6780, 7
        %v6782 = vsub.s32 %v6779, %v6781
        %v6783 = vrot.slane %v6769, %v6782
        %v6784 = vcombine.low %v6453, %v6469
        %v6785 = vcombine.high %v6453, %v6469
        %v6787 = vunpack.c.l.s4 1983009808
        %v6788 = vunpack.c.0.s8 %v6787
        %v6789 = vlaneseq
        %v6790 = vshrl.u32 %v6789, 7
        %v6791 = vsub.s32 %v6788, %v6790
        %v6792 = vrot.slane %v6784, %v6791
        %v6794 = vunpack.c.l.s4 1983009808
        %v6795 = vunpack.c.0.s8 %v6794
        %v6796 = vlaneseq
        %v6797 = vshrl.u32 %v6796, 7
        %v6798 = vsub.s32 %v6795, %v6797
        %v6799 = vrot.slane %v6785, %v6798
        %v6800 = vcombine.low %v6461, %v6477
        %v6801 = vcombine.high %v6461, %v6477
        %v6803 = vunpack.c.l.s4 1983009808
        %v6804 = vunpack.c.0.s8 %v6803
        %v6805 = vlaneseq
        %v6806 = vshrl.u32 %v6805, 7
        %v6807 = vsub.s32 %v6804, %v6806
        %v6808 = vrot.slane %v6800, %v6807
        %v6810 = vunpack.c.l.s4 1983009808
        %v6811 = vunpack.c.0.s8 %v6810
        %v6812 = vlaneseq
        %v6813 = vshrl.u32 %v6812, 7
        %v6814 = vsub.s32 %v6811, %v6813
        %v6815 = vrot.slane %v6801, %v6814
        %v6816 = vcombine.low %v6760, %v6776
        %v6817 = vcombine.high %v6760, %v6776
        %v6819 = vunpack.c.l.s4 1934713408
        %v6820 = vunpack.c.0.s8 %v6819
        %v6821 = vlaneseq
        %v6822 = vshrl.u32 %v6821, 7
        %v6823 = vsub.s32 %v6820, %v6822
        %v6824 = vrot.slane %v6816, %v6823
        %v6826 = vunpack.c.l.s4 1934713408
        %v6827 = vunpack.c.0.s8 %v6826
        %v6828 = vlaneseq
        %v6829 = vshrl.u32 %v6828, 7
        %v6830 = vsub.s32 %v6827, %v6829
        %v6831 = vrot.slane %v6817, %v6830
        %v6832 = vcombine.low %v6767, %v6783
        %v6833 = vcombine.high %v6767, %v6783
        %v6835 = vunpack.c.l.s4 1934713408
        %v6836 = vunpack.c.0.s8 %v6835
        %v6837 = vlaneseq
        %v6838 = vshrl.u32 %v6837, 7
        %v6839 = vsub.s32 %v6836, %v6838
        %v6840 = vrot.slane %v6832, %v6839
        %v6842 = vunpack.c.l.s4 1934713408
        %v6843 = vunpack.c.0.s8 %v6842
        %v6844 = vlaneseq
        %v6845 = vshrl.u32 %v6844, 7
        %v6846 = vsub.s32 %v6843, %v6845
        %v6847 = vrot.slane %v6833, %v6846
        %v6848 = vcombine.low %v6792, %v6808
        %v6849 = vcombine.high %v6792, %v6808
        %v6851 = vunpack.c.l.s4 1934713408
        %v6852 = vunpack.c.0.s8 %v6851
        %v6853 = vlaneseq
        %v6854 = vshrl.u32 %v6853, 7
        %v6855 = vsub.s32 %v6852, %v6854
        %v6856 = vrot.slane %v6848, %v6855
        %v6858 = vunpack.c.l.s4 1934713408
        %v6859 = vunpack.c.0.s8 %v6858
        %v6860 = vlaneseq
        %v6861 = vshrl.u32 %v6860, 7
        %v6862 = vsub.s32 %v6859, %v6861
        %v6863 = vrot.slane %v6849, %v6862
        %v6864 = vcombine.low %v6799, %v6815
        %v6865 = vcombine.high %v6799, %v6815
        %v6867 = vunpack.c.l.s4 1934713408
        %v6868 = vunpack.c.0.s8 %v6867
        %v6869 = vlaneseq
        %v6870 = vshrl.u32 %v6869, 7
        %v6871 = vsub.s32 %v6868, %v6870
        %v6872 = vrot.slane %v6864, %v6871
        %v6874 = vunpack.c.l.s4 1934713408
        %v6875 = vunpack.c.0.s8 %v6874
        %v6876 = vlaneseq
        %v6877 = vshrl.u32 %v6876, 7
        %v6878 = vsub.s32 %v6875, %v6877
        %v6879 = vrot.slane %v6865, %v6878
        %v6880 = vcombine.low %v6824, %v6856
        %v6881 = vcombine.high %v6824, %v6856
        %v6882 = vcombine.low %v6831, %v6863
        %v6883 = vcombine.high %v6831, %v6863
        %v6884 = vcombine.low %v6840, %v6872
        %v6885 = vcombine.high %v6840, %v6872
        %v6886 = vcombine.low %v6847, %v6879
        %v6887 = vcombine.high %v6847, %v6879
        %v6888 = vcombine.low %v6423, %v6439
        %v6889 = vcombine.high %v6423, %v6439
        %v6891 = vunpack.c.l.s4 1983009808
        %v6892 = vunpack.c.0.s8 %v6891
        %v6893 = vlaneseq
        %v6894 = vshrl.u32 %v6893, 7
        %v6895 = vsub.s32 %v6892, %v6894
        %v6896 = vrot.slane %v6888, %v6895
        %v6898 = vunpack.c.l.s4 1983009808
        %v6899 = vunpack.c.0.s8 %v6898
        %v6900 = vlaneseq
        %v6901 = vshrl.u32 %v6900, 7
        %v6902 = vsub.s32 %v6899, %v6901
        %v6903 = vrot.slane %v6889, %v6902
        %v6904 = vcombine.low %v6431, %v6447
        %v6905 = vcombine.high %v6431, %v6447
        %v6907 = vunpack.c.l.s4 1983009808
        %v6908 = vunpack.c.0.s8 %v6907
        %v6909 = vlaneseq
        %v6910 = vshrl.u32 %v6909, 7
        %v6911 = vsub.s32 %v6908, %v6910
        %v6912 = vrot.slane %v6904, %v6911
        %v6914 = vunpack.c.l.s4 1983009808
        %v6915 = vunpack.c.0.s8 %v6914
        %v6916 = vlaneseq
        %v6917 = vshrl.u32 %v6916, 7
        %v6918 = vsub.s32 %v6915, %v6917
        %v6919 = vrot.slane %v6905, %v6918
        %v6920 = vcombine.low %v6455, %v6471
        %v6921 = vcombine.high %v6455, %v6471
        %v6923 = vunpack.c.l.s4 1983009808
        %v6924 = vunpack.c.0.s8 %v6923
        %v6925 = vlaneseq
        %v6926 = vshrl.u32 %v6925, 7
        %v6927 = vsub.s32 %v6924, %v6926
        %v6928 = vrot.slane %v6920, %v6927
        %v6930 = vunpack.c.l.s4 1983009808
        %v6931 = vunpack.c.0.s8 %v6930
        %v6932 = vlaneseq
        %v6933 = vshrl.u32 %v6932, 7
        %v6934 = vsub.s32 %v6931, %v6933
        %v6935 = vrot.slane %v6921, %v6934
        %v6936 = vcombine.low %v6463, %v6479
        %v6937 = vcombine.high %v6463, %v6479
        %v6939 = vunpack.c.l.s4 1983009808
        %v6940 = vunpack.c.0.s8 %v6939
        %v6941 = vlaneseq
        %v6942 = vshrl.u32 %v6941, 7
        %v6943 = vsub.s32 %v6940, %v6942
        %v6944 = vrot.slane %v6936, %v6943
        %v6946 = vunpack.c.l.s4 1983009808
        %v6947 = vunpack.c.0.s8 %v6946
        %v6948 = vlaneseq
        %v6949 = vshrl.u32 %v6948, 7
        %v6950 = vsub.s32 %v6947, %v6949
        %v6951 = vrot.slane %v6937, %v6950
        %v6952 = vcombine.low %v6896, %v6912
        %v6953 = vcombine.high %v6896, %v6912
        %v6955 = vunpack.c.l.s4 1934713408
        %v6956 = vunpack.c.0.s8 %v6955
        %v6957 = vlaneseq
        %v6958 = vshrl.u32 %v6957, 7
        %v6959 = vsub.s32 %v6956, %v6958
        %v6960 = vrot.slane %v6952, %v6959
        %v6962 = vunpack.c.l.s4 1934713408
        %v6963 = vunpack.c.0.s8 %v6962
        %v6964 = vlaneseq
        %v6965 = vshrl.u32 %v6964, 7
        %v6966 = vsub.s32 %v6963, %v6965
        %v6967 = vrot.slane %v6953, %v6966
        %v6968 = vcombine.low %v6903, %v6919
        %v6969 = vcombine.high %v6903, %v6919
        %v6971 = vunpack.c.l.s4 1934713408
        %v6972 = vunpack.c.0.s8 %v6971
        %v6973 = vlaneseq
        %v6974 = vshrl.u32 %v6973, 7
        %v6975 = vsub.s32 %v6972, %v6974
        %v6976 = vrot.slane %v6968, %v6975
        %v6978 = vunpack.c.l.s4 1934713408
        %v6979 = vunpack.c.0.s8 %v6978
        %v6980 = vlaneseq
        %v6981 = vshrl.u32 %v6980, 7
        %v6982 = vsub.s32 %v6979, %v6981
        %v6983 = vrot.slane %v6969, %v6982
        %v6984 = vcombine.low %v6928, %v6944
        %v6985 = vcombine.high %v6928, %v6944
        %v6987 = vunpack.c.l.s4 1934713408
        %v6988 = vunpack.c.0.s8 %v6987
        %v6989 = vlaneseq
        %v6990 = vshrl.u32 %v6989, 7
        %v6991 = vsub.s32 %v6988, %v6990
        %v6992 = vrot.slane %v6984, %v6991
        %v6994 = vunpack.c.l.s4 1934713408
        %v6995 = vunpack.c.0.s8 %v6994
        %v6996 = vlaneseq
        %v6997 = vshrl.u32 %v6996, 7
        %v6998 = vsub.s32 %v6995, %v6997
        %v6999 = vrot.slane %v6985, %v6998
        %v7000 = vcombine.low %v6935, %v6951
        %v7001 = vcombine.high %v6935, %v6951
        %v7003 = vunpack.c.l.s4 1934713408
        %v7004 = vunpack.c.0.s8 %v7003
        %v7005 = vlaneseq
        %v7006 = vshrl.u32 %v7005, 7
        %v7007 = vsub.s32 %v7004, %v7006
        %v7008 = vrot.slane %v7000, %v7007
        %v7010 = vunpack.c.l.s4 1934713408
        %v7011 = vunpack.c.0.s8 %v7010
        %v7012 = vlaneseq
        %v7013 = vshrl.u32 %v7012, 7
        %v7014 = vsub.s32 %v7011, %v7013
        %v7015 = vrot.slane %v7001, %v7014
        %v7016 = vcombine.low %v6960, %v6992
        %v7017 = vcombine.high %v6960, %v6992
        %v7018 = vcombine.low %v6967, %v6999
        %v7019 = vcombine.high %v6967, %v6999
        %v7020 = vcombine.low %v6976, %v7008
        %v7021 = vcombine.high %v6976, %v7008
        %v7022 = vcombine.low %v6983, %v7015
        %v7023 = vcombine.high %v6983, %v7015
        %v7024 = vcombine.low %v6608, %v6610
        %v7025 = vcombine.high %v6608, %v6610
        %v7027 = vunpack.c.l.s4 1983009808
        %v7028 = vunpack.c.0.s8 %v7027
        %v7029 = vlaneseq
        %v7030 = vshrl.u32 %v7029, 7
        %v7031 = vsub.s32 %v7028, %v7030
        %v7032 = vrot.slane %v7024, %v7031
        %v7034 = vunpack.c.l.s4 1983009808
        %v7035 = vunpack.c.0.s8 %v7034
        %v7036 = vlaneseq
        %v7037 = vshrl.u32 %v7036, 7
        %v7038 = vsub.s32 %v7035, %v7037
        %v7039 = vrot.slane %v7025, %v7038
        %v7040 = vcombine.low %v6609, %v6611
        %v7041 = vcombine.high %v6609, %v6611
        %v7043 = vunpack.c.l.s4 1983009808
        %v7044 = vunpack.c.0.s8 %v7043
        %v7045 = vlaneseq
        %v7046 = vshrl.u32 %v7045, 7
        %v7047 = vsub.s32 %v7044, %v7046
        %v7048 = vrot.slane %v7040, %v7047
        %v7050 = vunpack.c.l.s4 1983009808
        %v7051 = vunpack.c.0.s8 %v7050
        %v7052 = vlaneseq
        %v7053 = vshrl.u32 %v7052, 7
        %v7054 = vsub.s32 %v7051, %v7053
        %v7055 = vrot.slane %v7041, %v7054
        %v7056 = vcombine.low %v6612, %v6614
        %v7057 = vcombine.high %v6612, %v6614
        %v7059 = vunpack.c.l.s4 1983009808
        %v7060 = vunpack.c.0.s8 %v7059
        %v7061 = vlaneseq
        %v7062 = vshrl.u32 %v7061, 7
        %v7063 = vsub.s32 %v7060, %v7062
        %v7064 = vrot.slane %v7056, %v7063
        %v7066 = vunpack.c.l.s4 1983009808
        %v7067 = vunpack.c.0.s8 %v7066
        %v7068 = vlaneseq
        %v7069 = vshrl.u32 %v7068, 7
        %v7070 = vsub.s32 %v7067, %v7069
        %v7071 = vrot.slane %v7057, %v7070
        %v7072 = vcombine.low %v6613, %v6615
        %v7073 = vcombine.high %v6613, %v6615
        %v7075 = vunpack.c.l.s4 1983009808
        %v7076 = vunpack.c.0.s8 %v7075
        %v7077 = vlaneseq
        %v7078 = vshrl.u32 %v7077, 7
        %v7079 = vsub.s32 %v7076, %v7078
        %v7080 = vrot.slane %v7072, %v7079
        %v7082 = vunpack.c.l.s4 1983009808
        %v7083 = vunpack.c.0.s8 %v7082
        %v7084 = vlaneseq
        %v7085 = vshrl.u32 %v7084, 7
        %v7086 = vsub.s32 %v7083, %v7085
        %v7087 = vrot.slane %v7073, %v7086
        %v7088 = vcombine.low %v7032, %v7048
        %v7089 = vcombine.high %v7032, %v7048
        %v7091 = vunpack.c.l.s4 1934713408
        %v7092 = vunpack.c.0.s8 %v7091
        %v7093 = vlaneseq
        %v7094 = vshrl.u32 %v7093, 7
        %v7095 = vsub.s32 %v7092, %v7094
        %v7096 = vrot.slane %v7088, %v7095
        %v7098 = vunpack.c.l.s4 1934713408
        %v7099 = vunpack.c.0.s8 %v7098
        %v7100 = vlaneseq
        %v7101 = vshrl.u32 %v7100, 7
        %v7102 = vsub.s32 %v7099, %v7101
        %v7103 = vrot.slane %v7089, %v7102
        %v7104 = vcombine.low %v7039, %v7055
        %v7105 = vcombine.high %v7039, %v7055
        %v7107 = vunpack.c.l.s4 1934713408
        %v7108 = vunpack.c.0.s8 %v7107
        %v7109 = vlaneseq
        %v7110 = vshrl.u32 %v7109, 7
        %v7111 = vsub.s32 %v7108, %v7110
        %v7112 = vrot.slane %v7104, %v7111
        %v7114 = vunpack.c.l.s4 1934713408
        %v7115 = vunpack.c.0.s8 %v7114
        %v7116 = vlaneseq
        %v7117 = vshrl.u32 %v7116, 7
        %v7118 = vsub.s32 %v7115, %v7117
        %v7119 = vrot.slane %v7105, %v7118
        %v7120 = vcombine.low %v7064, %v7080
        %v7121 = vcombine.high %v7064, %v7080
        %v7123 = vunpack.c.l.s4 1934713408
        %v7124 = vunpack.c.0.s8 %v7123
        %v7125 = vlaneseq
        %v7126 = vshrl.u32 %v7125, 7
        %v7127 = vsub.s32 %v7124, %v7126
        %v7128 = vrot.slane %v7120, %v7127
        %v7130 = vunpack.c.l.s4 1934713408
        %v7131 = vunpack.c.0.s8 %v7130
        %v7132 = vlaneseq
        %v7133 = vshrl.u32 %v7132, 7
        %v7134 = vsub.s32 %v7131, %v7133
        %v7135 = vrot.slane %v7121, %v7134
        %v7136 = vcombine.low %v7071, %v7087
        %v7137 = vcombine.high %v7071, %v7087
        %v7139 = vunpack.c.l.s4 1934713408
        %v7140 = vunpack.c.0.s8 %v7139
        %v7141 = vlaneseq
        %v7142 = vshrl.u32 %v7141, 7
        %v7143 = vsub.s32 %v7140, %v7142
        %v7144 = vrot.slane %v7136, %v7143
        %v7146 = vunpack.c.l.s4 1934713408
        %v7147 = vunpack.c.0.s8 %v7146
        %v7148 = vlaneseq
        %v7149 = vshrl.u32 %v7148, 7
        %v7150 = vsub.s32 %v7147, %v7149
        %v7151 = vrot.slane %v7137, %v7150
        %v7152 = vcombine.low %v7096, %v7128
        %v7153 = vcombine.high %v7096, %v7128
        %v7154 = vcombine.low %v7103, %v7135
        %v7155 = vcombine.high %v7103, %v7135
        %v7156 = vcombine.low %v7112, %v7144
        %v7157 = vcombine.high %v7112, %v7144
        %v7158 = vcombine.low %v7119, %v7151
        %v7159 = vcombine.high %v7119, %v7151
        %v7160 = vcombine.low %v6744, %v6746
        %v7161 = vcombine.high %v6744, %v6746
        %v7163 = vunpack.c.l.s4 1983009808
        %v7164 = vunpack.c.0.s8 %v7163
        %v7165 = vlaneseq
        %v7166 = vshrl.u32 %v7165, 7
        %v7167 = vsub.s32 %v7164, %v7166
        %v7168 = vrot.slane %v7160, %v7167
        %v7170 = vunpack.c.l.s4 1983009808
        %v7171 = vunpack.c.0.s8 %v7170
        %v7172 = vlaneseq
        %v7173 = vshrl.u32 %v7172, 7
        %v7174 = vsub.s32 %v7171, %v7173
        %v7175 = vrot.slane %v7161, %v7174
        %v7176 = vcombine.low %v6745, %v6747
        %v7177 = vcombine.high %v6745, %v6747
        %v7179 = vunpack.c.l.s4 1983009808
        %v7180 = vunpack.c.0.s8 %v7179
        %v7181 = vlaneseq
        %v7182 = vshrl.u32 %v7181, 7
        %v7183 = vsub.s32 %v7180, %v7182
        %v7184 = vrot.slane %v7176, %v7183
        %v7186 = vunpack.c.l.s4 1983009808
        %v7187 = vunpack.c.0.s8 %v7186
        %v7188 = vlaneseq
        %v7189 = vshrl.u32 %v7188, 7
        %v7190 = vsub.s32 %v7187, %v7189
        %v7191 = vrot.slane %v7177, %v7190
        %v7192 = vcombine.low %v6748, %v6750
        %v7193 = vcombine.high %v6748, %v6750
        %v7195 = vunpack.c.l.s4 1983009808
        %v7196 = vunpack.c.0.s8 %v7195
        %v7197 = vlaneseq
        %v7198 = vshrl.u32 %v7197, 7
        %v7199 = vsub.s32 %v7196, %v7198
        %v7200 = vrot.slane %v7192, %v7199
        %v7202 = vunpack.c.l.s4 1983009808
        %v7203 = vunpack.c.0.s8 %v7202
        %v7204 = vlaneseq
        %v7205 = vshrl.u32 %v7204, 7
        %v7206 = vsub.s32 %v7203, %v7205
        %v7207 = vrot.slane %v7193, %v7206
        %v7208 = vcombine.low %v6749, %v6751
        %v7209 = vcombine.high %v6749, %v6751
        %v7211 = vunpack.c.l.s4 1983009808
        %v7212 = vunpack.c.0.s8 %v7211
        %v7213 = vlaneseq
        %v7214 = vshrl.u32 %v7213, 7
        %v7215 = vsub.s32 %v7212, %v7214
        %v7216 = vrot.slane %v7208, %v7215
        %v7218 = vunpack.c.l.s4 1983009808
        %v7219 = vunpack.c.0.s8 %v7218
        %v7220 = vlaneseq
        %v7221 = vshrl.u32 %v7220, 7
        %v7222 = vsub.s32 %v7219, %v7221
        %v7223 = vrot.slane %v7209, %v7222
        %v7224 = vcombine.low %v7168, %v7184
        %v7225 = vcombine.high %v7168, %v7184
        %v7227 = vunpack.c.l.s4 1934713408
        %v7228 = vunpack.c.0.s8 %v7227
        %v7229 = vlaneseq
        %v7230 = vshrl.u32 %v7229, 7
        %v7231 = vsub.s32 %v7228, %v7230
        %v7232 = vrot.slane %v7224, %v7231
        %v7234 = vunpack.c.l.s4 1934713408
        %v7235 = vunpack.c.0.s8 %v7234
        %v7236 = vlaneseq
        %v7237 = vshrl.u32 %v7236, 7
        %v7238 = vsub.s32 %v7235, %v7237
        %v7239 = vrot.slane %v7225, %v7238
        %v7240 = vcombine.low %v7175, %v7191
        %v7241 = vcombine.high %v7175, %v7191
        %v7243 = vunpack.c.l.s4 1934713408
        %v7244 = vunpack.c.0.s8 %v7243
        %v7245 = vlaneseq
        %v7246 = vshrl.u32 %v7245, 7
        %v7247 = vsub.s32 %v7244, %v7246
        %v7248 = vrot.slane %v7240, %v7247
        %v7250 = vunpack.c.l.s4 1934713408
        %v7251 = vunpack.c.0.s8 %v7250
        %v7252 = vlaneseq
        %v7253 = vshrl.u32 %v7252, 7
        %v7254 = vsub.s32 %v7251, %v7253
        %v7255 = vrot.slane %v7241, %v7254
        %v7256 = vcombine.low %v7200, %v7216
        %v7257 = vcombine.high %v7200, %v7216
        %v7259 = vunpack.c.l.s4 1934713408
        %v7260 = vunpack.c.0.s8 %v7259
        %v7261 = vlaneseq
        %v7262 = vshrl.u32 %v7261, 7
        %v7263 = vsub.s32 %v7260, %v7262
        %v7264 = vrot.slane %v7256, %v7263
        %v7266 = vunpack.c.l.s4 1934713408
        %v7267 = vunpack.c.0.s8 %v7266
        %v7268 = vlaneseq
        %v7269 = vshrl.u32 %v7268, 7
        %v7270 = vsub.s32 %v7267, %v7269
        %v7271 = vrot.slane %v7257, %v7270
        %v7272 = vcombine.low %v7207, %v7223
        %v7273 = vcombine.high %v7207, %v7223
        %v7275 = vunpack.c.l.s4 1934713408
        %v7276 = vunpack.c.0.s8 %v7275
        %v7277 = vlaneseq
        %v7278 = vshrl.u32 %v7277, 7
        %v7279 = vsub.s32 %v7276, %v7278
        %v7280 = vrot.slane %v7272, %v7279
        %v7282 = vunpack.c.l.s4 1934713408
        %v7283 = vunpack.c.0.s8 %v7282
        %v7284 = vlaneseq
        %v7285 = vshrl.u32 %v7284, 7
        %v7286 = vsub.s32 %v7283, %v7285
        %v7287 = vrot.slane %v7273, %v7286
        %v7288 = vcombine.low %v7232, %v7264
        %v7289 = vcombine.high %v7232, %v7264
        %v7290 = vcombine.low %v7239, %v7271
        %v7291 = vcombine.high %v7239, %v7271
        %v7292 = vcombine.low %v7248, %v7280
        %v7293 = vcombine.high %v7248, %v7280
        %v7294 = vcombine.low %v7255, %v7287
        %v7295 = vcombine.high %v7255, %v7287
        %v7296 = vcombine.low %v6880, %v6882
        %v7297 = vcombine.high %v6880, %v6882
        %v7299 = vunpack.c.l.s4 1983009808
        %v7300 = vunpack.c.0.s8 %v7299
        %v7301 = vlaneseq
        %v7302 = vshrl.u32 %v7301, 7
        %v7303 = vsub.s32 %v7300, %v7302
        %v7304 = vrot.slane %v7296, %v7303
        %v7306 = vunpack.c.l.s4 1983009808
        %v7307 = vunpack.c.0.s8 %v7306
        %v7308 = vlaneseq
        %v7309 = vshrl.u32 %v7308, 7
        %v7310 = vsub.s32 %v7307, %v7309
        %v7311 = vrot.slane %v7297, %v7310
        %v7312 = vcombine.low %v6881, %v6883
        %v7313 = vcombine.high %v6881, %v6883
        %v7315 = vunpack.c.l.s4 1983009808
        %v7316 = vunpack.c.0.s8 %v7315
        %v7317 = vlaneseq
        %v7318 = vshrl.u32 %v7317, 7
        %v7319 = vsub.s32 %v7316, %v7318
        %v7320 = vrot.slane %v7312, %v7319
        %v7322 = vunpack.c.l.s4 1983009808
        %v7323 = vunpack.c.0.s8 %v7322
        %v7324 = vlaneseq
        %v7325 = vshrl.u32 %v7324, 7
        %v7326 = vsub.s32 %v7323, %v7325
        %v7327 = vrot.slane %v7313, %v7326
        %v7328 = vcombine.low %v6884, %v6886
        %v7329 = vcombine.high %v6884, %v6886
        %v7331 = vunpack.c.l.s4 1983009808
        %v7332 = vunpack.c.0.s8 %v7331
        %v7333 = vlaneseq
        %v7334 = vshrl.u32 %v7333, 7
        %v7335 = vsub.s32 %v7332, %v7334
        %v7336 = vrot.slane %v7328, %v7335
        %v7338 = vunpack.c.l.s4 1983009808
        %v7339 = vunpack.c.0.s8 %v7338
        %v7340 = vlaneseq
        %v7341 = vshrl.u32 %v7340, 7
        %v7342 = vsub.s32 %v7339, %v7341
        %v7343 = vrot.slane %v7329, %v7342
        %v7344 = vcombine.low %v6885, %v6887
        %v7345 = vcombine.high %v6885, %v6887
        %v7347 = vunpack.c.l.s4 1983009808
        %v7348 = vunpack.c.0.s8 %v7347
        %v7349 = vlaneseq
        %v7350 = vshrl.u32 %v7349, 7
        %v7351 = vsub.s32 %v7348, %v7350
        %v7352 = vrot.slane %v7344, %v7351
        %v7354 = vunpack.c.l.s4 1983009808
        %v7355 = vunpack.c.0.s8 %v7354
        %v7356 = vlaneseq
        %v7357 = vshrl.u32 %v7356, 7
        %v7358 = vsub.s32 %v7355, %v7357
        %v7359 = vrot.slane %v7345, %v7358
        %v7360 = vcombine.low %v7304, %v7320
        %v7361 = vcombine.high %v7304, %v7320
        %v7363 = vunpack.c.l.s4 1934713408
        %v7364 = vunpack.c.0.s8 %v7363
        %v7365 = vlaneseq
        %v7366 = vshrl.u32 %v7365, 7
        %v7367 = vsub.s32 %v7364, %v7366
        %v7368 = vrot.slane %v7360, %v7367
        %v7370 = vunpack.c.l.s4 1934713408
        %v7371 = vunpack.c.0.s8 %v7370
        %v7372 = vlaneseq
        %v7373 = vshrl.u32 %v7372, 7
        %v7374 = vsub.s32 %v7371, %v7373
        %v7375 = vrot.slane %v7361, %v7374
        %v7376 = vcombine.low %v7311, %v7327
        %v7377 = vcombine.high %v7311, %v7327
        %v7379 = vunpack.c.l.s4 1934713408
        %v7380 = vunpack.c.0.s8 %v7379
        %v7381 = vlaneseq
        %v7382 = vshrl.u32 %v7381, 7
        %v7383 = vsub.s32 %v7380, %v7382
        %v7384 = vrot.slane %v7376, %v7383
        %v7386 = vunpack.c.l.s4 1934713408
        %v7387 = vunpack.c.0.s8 %v7386
        %v7388 = vlaneseq
        %v7389 = vshrl.u32 %v7388, 7
        %v7390 = vsub.s32 %v7387, %v7389
        %v7391 = vrot.slane %v7377, %v7390
        %v7392 = vcombine.low %v7336, %v7352
        %v7393 = vcombine.high %v7336, %v7352
        %v7395 = vunpack.c.l.s4 1934713408
        %v7396 = vunpack.c.0.s8 %v7395
        %v7397 = vlaneseq
        %v7398 = vshrl.u32 %v7397, 7
        %v7399 = vsub.s32 %v7396, %v7398
        %v7400 = vrot.slane %v7392, %v7399
        %v7402 = vunpack.c.l.s4 1934713408
        %v7403 = vunpack.c.0.s8 %v7402
        %v7404 = vlaneseq
        %v7405 = vshrl.u32 %v7404, 7
        %v7406 = vsub.s32 %v7403, %v7405
        %v7407 = vrot.slane %v7393, %v7406
        %v7408 = vcombine.low %v7343, %v7359
        %v7409 = vcombine.high %v7343, %v7359
        %v7411 = vunpack.c.l.s4 1934713408
        %v7412 = vunpack.c.0.s8 %v7411
        %v7413 = vlaneseq
        %v7414 = vshrl.u32 %v7413, 7
        %v7415 = vsub.s32 %v7412, %v7414
        %v7416 = vrot.slane %v7408, %v7415
        %v7418 = vunpack.c.l.s4 1934713408
        %v7419 = vunpack.c.0.s8 %v7418
        %v7420 = vlaneseq
        %v7421 = vshrl.u32 %v7420, 7
        %v7422 = vsub.s32 %v7419, %v7421
        %v7423 = vrot.slane %v7409, %v7422
        %v7424 = vcombine.low %v7368, %v7400
        %v7425 = vcombine.high %v7368, %v7400
        %v7426 = vcombine.low %v7375, %v7407
        %v7427 = vcombine.high %v7375, %v7407
        %v7428 = vcombine.low %v7384, %v7416
        %v7429 = vcombine.high %v7384, %v7416
        %v7430 = vcombine.low %v7391, %v7423
        %v7431 = vcombine.high %v7391, %v7423
        %v7432 = vcombine.low %v7016, %v7018
        %v7433 = vcombine.high %v7016, %v7018
        %v7435 = vunpack.c.l.s4 1983009808
        %v7436 = vunpack.c.0.s8 %v7435
        %v7437 = vlaneseq
        %v7438 = vshrl.u32 %v7437, 7
        %v7439 = vsub.s32 %v7436, %v7438
        %v7440 = vrot.slane %v7432, %v7439
        %v7442 = vunpack.c.l.s4 1983009808
        %v7443 = vunpack.c.0.s8 %v7442
        %v7444 = vlaneseq
        %v7445 = vshrl.u32 %v7444, 7
        %v7446 = vsub.s32 %v7443, %v7445
        %v7447 = vrot.slane %v7433, %v7446
        %v7448 = vcombine.low %v7017, %v7019
        %v7449 = vcombine.high %v7017, %v7019
        %v7451 = vunpack.c.l.s4 1983009808
        %v7452 = vunpack.c.0.s8 %v7451
        %v7453 = vlaneseq
        %v7454 = vshrl.u32 %v7453, 7
        %v7455 = vsub.s32 %v7452, %v7454
        %v7456 = vrot.slane %v7448, %v7455
        %v7458 = vunpack.c.l.s4 1983009808
        %v7459 = vunpack.c.0.s8 %v7458
        %v7460 = vlaneseq
        %v7461 = vshrl.u32 %v7460, 7
        %v7462 = vsub.s32 %v7459, %v7461
        %v7463 = vrot.slane %v7449, %v7462
        %v7464 = vcombine.low %v7020, %v7022
        %v7465 = vcombine.high %v7020, %v7022
        %v7467 = vunpack.c.l.s4 1983009808
        %v7468 = vunpack.c.0.s8 %v7467
        %v7469 = vlaneseq
        %v7470 = vshrl.u32 %v7469, 7
        %v7471 = vsub.s32 %v7468, %v7470
        %v7472 = vrot.slane %v7464, %v7471
        %v7474 = vunpack.c.l.s4 1983009808
        %v7475 = vunpack.c.0.s8 %v7474
        %v7476 = vlaneseq
        %v7477 = vshrl.u32 %v7476, 7
        %v7478 = vsub.s32 %v7475, %v7477
        %v7479 = vrot.slane %v7465, %v7478
        %v7480 = vcombine.low %v7021, %v7023
        %v7481 = vcombine.high %v7021, %v7023
        %v7483 = vunpack.c.l.s4 1983009808
        %v7484 = vunpack.c.0.s8 %v7483
        %v7485 = vlaneseq
        %v7486 = vshrl.u32 %v7485, 7
        %v7487 = vsub.s32 %v7484, %v7486
        %v7488 = vrot.slane %v7480, %v7487
        %v7490 = vunpack.c.l.s4 1983009808
        %v7491 = vunpack.c.0.s8 %v7490
        %v7492 = vlaneseq
        %v7493 = vshrl.u32 %v7492, 7
        %v7494 = vsub.s32 %v7491, %v7493
        %v7495 = vrot.slane %v7481, %v7494
        %v7496 = vcombine.low %v7440, %v7456
        %v7497 = vcombine.high %v7440, %v7456
        %v7499 = vunpack.c.l.s4 1934713408
        %v7500 = vunpack.c.0.s8 %v7499
        %v7501 = vlaneseq
        %v7502 = vshrl.u32 %v7501, 7
        %v7503 = vsub.s32 %v7500, %v7502
        %v7504 = vrot.slane %v7496, %v7503
        %v7506 = vunpack.c.l.s4 1934713408
        %v7507 = vunpack.c.0.s8 %v7506
        %v7508 = vlaneseq
        %v7509 = vshrl.u32 %v7508, 7
        %v7510 = vsub.s32 %v7507, %v7509
        %v7511 = vrot.slane %v7497, %v7510
        %v7512 = vcombine.low %v7447, %v7463
        %v7513 = vcombine.high %v7447, %v7463
        %v7515 = vunpack.c.l.s4 1934713408
        %v7516 = vunpack.c.0.s8 %v7515
        %v7517 = vlaneseq
        %v7518 = vshrl.u32 %v7517, 7
        %v7519 = vsub.s32 %v7516, %v7518
        %v7520 = vrot.slane %v7512, %v7519
        %v7522 = vunpack.c.l.s4 1934713408
        %v7523 = vunpack.c.0.s8 %v7522
        %v7524 = vlaneseq
        %v7525 = vshrl.u32 %v7524, 7
        %v7526 = vsub.s32 %v7523, %v7525
        %v7527 = vrot.slane %v7513, %v7526
        %v7528 = vcombine.low %v7472, %v7488
        %v7529 = vcombine.high %v7472, %v7488
        %v7531 = vunpack.c.l.s4 1934713408
        %v7532 = vunpack.c.0.s8 %v7531
        %v7533 = vlaneseq
        %v7534 = vshrl.u32 %v7533, 7
        %v7535 = vsub.s32 %v7532, %v7534
        %v7536 = vrot.slane %v7528, %v7535
        %v7538 = vunpack.c.l.s4 1934713408
        %v7539 = vunpack.c.0.s8 %v7538
        %v7540 = vlaneseq
        %v7541 = vshrl.u32 %v7540, 7
        %v7542 = vsub.s32 %v7539, %v7541
        %v7543 = vrot.slane %v7529, %v7542
        %v7544 = vcombine.low %v7479, %v7495
        %v7545 = vcombine.high %v7479, %v7495
        %v7547 = vunpack.c.l.s4 1934713408
        %v7548 = vunpack.c.0.s8 %v7547
        %v7549 = vlaneseq
        %v7550 = vshrl.u32 %v7549, 7
        %v7551 = vsub.s32 %v7548, %v7550
        %v7552 = vrot.slane %v7544, %v7551
        %v7554 = vunpack.c.l.s4 1934713408
        %v7555 = vunpack.c.0.s8 %v7554
        %v7556 = vlaneseq
        %v7557 = vshrl.u32 %v7556, 7
        %v7558 = vsub.s32 %v7555, %v7557
        %v7559 = vrot.slane %v7545, %v7558
        %v7560 = vcombine.low %v7504, %v7536
        %v7561 = vcombine.high %v7504, %v7536
        %v7562 = vcombine.low %v7511, %v7543
        %v7563 = vcombine.high %v7511, %v7543
        %v7564 = vcombine.low %v7520, %v7552
        %v7565 = vcombine.high %v7520, %v7552
        %v7566 = vcombine.low %v7527, %v7559
        %v7567 = vcombine.high %v7527, %v7559
        %7572 = vrot.lane.b32.xlu0 %v7153, 16
        %v7573 = vpop.permute.xlu0 %7572
        %7574 = vrot.lane.b32.xlu0 %v7289, 16
        %v7575 = vpop.permute.xlu0 %7574
        %7576 = vrot.lane.b32.xlu0 %v7425, 16
        %v7577 = vpop.permute.xlu0 %7576
        %7578 = vrot.lane.b32.xlu0 %v7561, 16
        %v7579 = vpop.permute.xlu0 %7578
        %7588 = vrot.lane.b32.xlu0 %v7154, 32
        %v7589 = vpop.permute.xlu0 %7588
        %7590 = vrot.lane.b32.xlu0 %v7290, 32
        %v7591 = vpop.permute.xlu0 %7590
        %7592 = vrot.lane.b32.xlu0 %v7426, 32
        %v7593 = vpop.permute.xlu0 %7592
        %7594 = vrot.lane.b32.xlu0 %v7562, 32
        %v7595 = vpop.permute.xlu0 %7594
        %7604 = vrot.lane.b32.xlu0 %v7155, 48
        %v7605 = vpop.permute.xlu0 %7604
        %7606 = vrot.lane.b32.xlu0 %v7291, 48
        %v7607 = vpop.permute.xlu0 %7606
        %7608 = vrot.lane.b32.xlu0 %v7427, 48
        %v7609 = vpop.permute.xlu0 %7608
        %7610 = vrot.lane.b32.xlu0 %v7563, 48
        %v7611 = vpop.permute.xlu0 %7610
        %7620 = vrot.lane.b32.xlu0 %v7156, 64
        %v7621 = vpop.permute.xlu0 %7620
        %7622 = vrot.lane.b32.xlu0 %v7292, 64
        %v7623 = vpop.permute.xlu0 %7622
        %7624 = vrot.lane.b32.xlu0 %v7428, 64
        %v7625 = vpop.permute.xlu0 %7624
        %7626 = vrot.lane.b32.xlu0 %v7564, 64
        %v7627 = vpop.permute.xlu0 %7626
        %7636 = vrot.lane.b32.xlu0 %v7157, 80
        %v7637 = vpop.permute.xlu0 %7636
        %7638 = vrot.lane.b32.xlu0 %v7293, 80
        %v7639 = vpop.permute.xlu0 %7638
        %7640 = vrot.lane.b32.xlu0 %v7429, 80
        %v7641 = vpop.permute.xlu0 %7640
        %7642 = vrot.lane.b32.xlu0 %v7565, 80
        %v7643 = vpop.permute.xlu0 %7642
        %7652 = vrot.lane.b32.xlu0 %v7158, 96
        %v7653 = vpop.permute.xlu0 %7652
        %7654 = vrot.lane.b32.xlu0 %v7294, 96
        %v7655 = vpop.permute.xlu0 %7654
        %7656 = vrot.lane.b32.xlu0 %v7430, 96
        %v7657 = vpop.permute.xlu0 %7656
        %7658 = vrot.lane.b32.xlu0 %v7566, 96
        %v7659 = vpop.permute.xlu0 %7658
        %7668 = vrot.lane.b32.xlu0 %v7159, 112
        %v7669 = vpop.permute.xlu0 %7668
        %7670 = vrot.lane.b32.xlu0 %v7295, 112
        %v7671 = vpop.permute.xlu0 %7670
        %7672 = vrot.lane.b32.xlu0 %v7431, 112
        %v7673 = vpop.permute.xlu0 %7672
        %7674 = vrot.lane.b32.xlu0 %v7567, 112
        %v7675 = vpop.permute.xlu0 %7674
        %v7680 = vsel %vm4478, %v7152, %v7573
        %v7681 = vsel %vm4478, %v7288, %v7575
        %v7682 = vsel %vm4478, %v7424, %v7577
        %v7683 = vsel %vm4478, %v7560, %v7579
        %v7684 = vsel %vm5351, %v7680, %v7589
        %v7685 = vsel %vm5351, %v7681, %v7591
        %v7686 = vsel %vm5351, %v7682, %v7593
        %v7687 = vsel %vm5351, %v7683, %v7595
        %vm7688 = vcmask 392192
        %v7689 = vsel %vm7688, %v7684, %v7605
        %v7690 = vsel %vm7688, %v7685, %v7607
        %v7691 = vsel %vm7688, %v7686, %v7609
        %v7692 = vsel %vm7688, %v7687, %v7611
        %vm7693 = vcmask 523264
        %v7694 = vsel %vm7693, %v7689, %v7621
        %v7695 = vsel %vm7693, %v7690, %v7623
        %v7696 = vsel %vm7693, %v7691, %v7625
        %v7697 = vsel %vm7693, %v7692, %v7627
        %vm7698 = vcmask 654336
        %v7699 = vsel %vm7698, %v7694, %v7637
        %v7700 = vsel %vm7698, %v7695, %v7639
        %v7701 = vsel %vm7698, %v7696, %v7641
        %v7702 = vsel %vm7698, %v7697, %v7643
        %vm7703 = vcmask 785408
        %v7704 = vsel %vm7703, %v7699, %v7653
        %v7705 = vsel %vm7703, %v7700, %v7655
        %v7706 = vsel %vm7703, %v7701, %v7657
        %v7707 = vsel %vm7703, %v7702, %v7659
        %vm7708 = vcmask 916480
        %v7709 = vsel %vm7708, %v7704, %v7669
        %v7710 = vsel %vm7708, %v7705, %v7671
        %v7711 = vsel %vm7708, %v7706, %v7673
        %v7712 = vsel %vm7708, %v7707, %v7675
        %v7713 = vld [vmem:[#allocation8] sm:$0xff]
        %v7714 = vld [vmem:[#allocation8 + $0x8] sm:$0xff]
        %v7715 = vld [vmem:[#allocation8 + $0x10] sm:$0xff]
        %v7716 = vld [vmem:[#allocation8 + $0x18] sm:$0xff]
        %v7717 = vld [vmem:[#allocation8 + $0x20] sm:$0xff]
        %v7718 = vld [vmem:[#allocation8 + $0x28] sm:$0xff]
        %v7719 = vld [vmem:[#allocation8 + $0x30] sm:$0xff]
        %v7720 = vld [vmem:[#allocation8 + $0x38] sm:$0xff]
        %v7721 = vld [vmem:[#allocation8 + $0x40] sm:$0xff]
        %v7722 = vld [vmem:[#allocation8 + $0x48] sm:$0xff]
        %v7723 = vld [vmem:[#allocation8 + $0x50] sm:$0xff]
        %v7724 = vld [vmem:[#allocation8 + $0x58] sm:$0xff]
        %v7725 = vld [vmem:[#allocation8 + $0x60] sm:$0xff]
        %v7726 = vld [vmem:[#allocation8 + $0x68] sm:$0xff]
        %v7727 = vld [vmem:[#allocation8 + $0x70] sm:$0xff]
        %v7728 = vld [vmem:[#allocation8 + $0x78] sm:$0xff]
        %v7729 = vld [vmem:[#allocation10] sm:$0x1]
        %v7731 = vlaneseq
        %v7732 = vshrl.u32 %v7731, 7
        %v7733 = vsub.s32 0, %v7732
        %v7734 = vrot.slane %v7729, %v7733
        %7736 = vmatprep.subr.mxu0 0.0
        %7737 = vmatpush1.msra.mxu0 %v7713
        %7738 = vmatprep.subr.mxu0 0.0
        %7739 = vmatpush1.msra.mxu0 %v7714
        %7740 = vmatprep.subr.mxu0 0.0
        %7741 = vmatpush1.msra.mxu0 %v7715
        %7742 = vmatprep.subr.mxu0 0.0
        %7743 = vmatpush1.msra.mxu0 %v7716
        %7744 = vmatprep.subr.mxu0 0.0
        %7745 = vmatpush1.msra.mxu0 %v7717
        %7746 = vmatprep.subr.mxu0 0.0
        %7747 = vmatpush1.msra.mxu0 %v7718
        %7748 = vmatprep.subr.mxu0 0.0
        %7749 = vmatpush1.msra.mxu0 %v7719
        %7750 = vmatprep.subr.mxu0 0.0
        %7751 = vmatpush1.msra.mxu0 %v7720
        %7752 = vmatprep.subr.mxu0 0.0
        %7753 = vmatpush1.msra.mxu0 %v7721
        %7754 = vmatprep.subr.mxu0 0.0
        %7755 = vmatpush1.msra.mxu0 %v7722
        %7756 = vmatprep.subr.mxu0 0.0
        %7757 = vmatpush1.msra.mxu0 %v7723
        %7758 = vmatprep.subr.mxu0 0.0
        %7759 = vmatpush1.msra.mxu0 %v7724
        %7760 = vmatprep.subr.mxu0 0.0
        %7761 = vmatpush1.msra.mxu0 %v7725
        %7762 = vmatprep.subr.mxu0 0.0
        %7763 = vmatpush1.msra.mxu0 %v7726
        %7764 = vmatprep.subr.mxu0 0.0
        %7765 = vmatpush1.msra.mxu0 %v7727
        %7766 = vmatprep.subr.mxu0 0.0
        %7767 = vmatpush1.msra.mxu0 %v7728
        %7768 = vmatprep.subr.mxu0 0.0
        %7769 = vmatpush1.msra.mxu0 0.0
        %7770 = vmatprep.subr.mxu0 0.0
        %7771 = vmatpush1.msra.mxu0 0.0
        %7772 = vmatprep.subr.mxu0 0.0
        %7773 = vmatpush1.msra.mxu0 0.0
        %7774 = vmatprep.subr.mxu0 0.0
        %7775 = vmatpush1.msra.mxu0 0.0
        %7776 = vmatprep.subr.mxu0 0.0
        %7777 = vmatpush1.msra.mxu0 0.0
        %7778 = vmatprep.subr.mxu0 0.0
        %7779 = vmatpush1.msra.mxu0 0.0
        %7780 = vmatprep.subr.mxu0 0.0
        %7781 = vmatpush1.msra.mxu0 0.0
        %7782 = vmatprep.subr.mxu0 0.0
        %7783 = vmatpush1.msra.mxu0 0.0
        %7784 = vmatprep.subr.mxu0 0.0
        %7785 = vmatpush1.msra.mxu0 0.0
        %7786 = vmatprep.subr.mxu0 0.0
        %7787 = vmatpush1.msra.mxu0 0.0
        %7788 = vmatprep.subr.mxu0 0.0
        %7789 = vmatpush1.msra.mxu0 0.0
        %7790 = vmatprep.subr.mxu0 0.0
        %7791 = vmatpush1.msra.mxu0 0.0
        %7792 = vmatprep.subr.mxu0 0.0
        %7793 = vmatpush1.msra.mxu0 0.0
        %7794 = vmatprep.subr.mxu0 0.0
        %7795 = vmatpush1.msra.mxu0 0.0
        %7796 = vmatprep.subr.mxu0 0.0
        %7797 = vmatpush1.msra.mxu0 0.0
        %7798 = vmatprep.subr.mxu0 0.0
        %7799 = vmatpush1.msra.mxu0 0.0
        %7800 = vmatprep.mubr.f32.mxu0 0.0
        %7801 = vmatmul.mubr.f32.gmra.mrb[0].mxu0 %v7709
        %v7802 = vpop.f32.mrb[0].mxu0
        %v7803 = vadd.f32 %v7734, %v7802
        %v7804 = vpop.f32.mrb[0].mxu0
        %7805 = vmatprep.mubr.f32.mxu0 0.0
        %7806 = vmatmul.mubr.f32.gmra.mrb[0].mxu0 %v7710
        %v7807 = vpop.f32.mrb[0].mxu0
        %v7808 = vadd.f32 %v7734, %v7807
        %v7809 = vpop.f32.mrb[0].mxu0
        %7810 = vmatprep.mubr.f32.mxu0 0.0
        %7811 = vmatmul.mubr.f32.gmra.mrb[0].mxu0 %v7711
        %v7812 = vpop.f32.mrb[0].mxu0
        %v7813 = vadd.f32 %v7734, %v7812
        %v7814 = vpop.f32.mrb[0].mxu0
        %7815 = vmatprep.mubr.f32.mxu0 0.0
        %7816 = vmatmul.mubr.f32.gmra.mrb[0].mxu0 %v7712
        %v7817 = vpop.f32.mrb[0].mxu0
        %v7818 = vadd.f32 %v7734, %v7817
        %v7819 = vpop.f32.mrb[0].mxu0
        %7820 = vdwg.mxu0
        %v7821 = vadd.f32 %v621, %v7803
        %v7822 = vadd.f32 %v622, %v7808
        %v7823 = vadd.f32 %v623, %v7813
        %v7824 = vadd.f32 %v624, %v7818
        %v7825 = vld [vmem:[#allocation20] sm:$0x1]
        %v7826 = vld [vmem:[#allocation22] sm:$0x1]
        %7827 = vadd.xlane.f32.xlu0 %v7821
        %v7828 = vpop.xlane.xlu0 %7827
        %7829 = vadd.xlane.f32.xlu0 %v7822
        %v7830 = vpop.xlane.xlu0 %7829
        %7831 = vadd.xlane.f32.xlu0 %v7823
        %v7832 = vpop.xlane.xlu0 %7831
        %7833 = vadd.xlane.f32.xlu0 %v7824
        %v7834 = vpop.xlane.xlu0 %7833
        %v7835 = vmul.f32 %v7828, %v635
        %v7836 = vmul.f32 %v7830, %v635
        %v7837 = vmul.f32 %v7832, %v635
        %v7838 = vmul.f32 %v7834, %v635
        %v7839 = vsub.f32 %v7821, %v7835
        %v7840 = vsub.f32 %v7822, %v7836
        %v7841 = vsub.f32 %v7823, %v7837
        %v7842 = vsub.f32 %v7824, %v7838
        %v7843 = vmul.f32 %v7839, %v7839
        %v7844 = vmul.f32 %v7840, %v7840
        %v7845 = vmul.f32 %v7841, %v7841
        %v7846 = vmul.f32 %v7842, %v7842
        %7847 = vadd.xlane.f32.xlu0 %v7843
        %v7848 = vpop.xlane.xlu0 %7847
        %7849 = vadd.xlane.f32.xlu0 %v7844
        %v7850 = vpop.xlane.xlu0 %7849
        %7851 = vadd.xlane.f32.xlu0 %v7845
        %v7852 = vpop.xlane.xlu0 %7851
        %7853 = vadd.xlane.f32.xlu0 %v7846
        %v7854 = vpop.xlane.xlu0 %7853
        %v7855 = vmul.f32 %v7848, %v635
        %v7856 = vmul.f32 %v7850, %v635
        %v7857 = vmul.f32 %v7852, %v635
        %v7858 = vmul.f32 %v7854, %v635
        %v7859 = vadd.f32 %v7855, 1e-05
        %v7860 = vadd.f32 %v7856, 1e-05
        %v7861 = vadd.f32 %v7857, 1e-05
        %v7862 = vadd.f32 %v7858, 1e-05
        %v7863 = vrsqrt.pop %v7859
        %v7864 = vrsqrt.pop %v7860
        %v7865 = vrsqrt.pop %v7861
        %v7866 = vrsqrt.pop %v7862
        %v7867 = vmul.f32 %v7839, %v7863
        %v7868 = vmul.f32 %v7840, %v7864
        %v7869 = vmul.f32 %v7841, %v7865
        %v7870 = vmul.f32 %v7842, %v7866
        %v7872 = vlaneseq
        %v7873 = vshrl.u32 %v7872, 7
        %v7874 = vsub.s32 0, %v7873
        %v7875 = vrot.slane %v7825, %v7874
        %v7877 = vmul.f32 %v7867, %v7875
        %v7878 = vmul.f32 %v7868, %v7875
        %v7879 = vmul.f32 %v7869, %v7875
        %v7880 = vmul.f32 %v7870, %v7875
        %v7882 = vlaneseq
        %v7883 = vshrl.u32 %v7882, 7
        %v7884 = vsub.s32 0, %v7883
        %v7885 = vrot.slane %v7826, %v7884
        %v7887 = vadd.f32 %v7877, %v7885
        %v7888 = vadd.f32 %v7878, %v7885
        %v7889 = vadd.f32 %v7879, %v7885
        %v7890 = vadd.f32 %v7880, %v7885
        %v7891 = vld [vmem:[#allocation11] sm:$0xff]
        %v7892 = vld [vmem:[#allocation11 + $0x8] sm:$0xff]
        %v7893 = vld [vmem:[#allocation11 + $0x10] sm:$0xff]
        %v7894 = vld [vmem:[#allocation11 + $0x18] sm:$0xff]
        %v7895 = vld [vmem:[#allocation11 + $0x20] sm:$0xff]
        %v7896 = vld [vmem:[#allocation11 + $0x28] sm:$0xff]
        %v7897 = vld [vmem:[#allocation11 + $0x30] sm:$0xff]
        %v7898 = vld [vmem:[#allocation11 + $0x38] sm:$0xff]
        %v7899 = vld [vmem:[#allocation11 + $0x40] sm:$0xff]
        %v7900 = vld [vmem:[#allocation11 + $0x48] sm:$0xff]
        %v7901 = vld [vmem:[#allocation11 + $0x50] sm:$0xff]
        %v7902 = vld [vmem:[#allocation11 + $0x58] sm:$0xff]
        %v7903 = vld [vmem:[#allocation11 + $0x60] sm:$0xff]
        %v7904 = vld [vmem:[#allocation11 + $0x68] sm:$0xff]
        %v7905 = vld [vmem:[#allocation11 + $0x70] sm:$0xff]
        %v7906 = vld [vmem:[#allocation11 + $0x78] sm:$0xff]
        %v7907 = vld [vmem:[#allocation11 + $0x80] sm:$0xff]
        %v7908 = vld [vmem:[#allocation11 + $0x88] sm:$0xff]
        %v7909 = vld [vmem:[#allocation11 + $0x90] sm:$0xff]
        %v7910 = vld [vmem:[#allocation11 + $0x98] sm:$0xff]
        %v7911 = vld [vmem:[#allocation11 + $0xa0] sm:$0xff]
        %v7912 = vld [vmem:[#allocation11 + $0xa8] sm:$0xff]
        %v7913 = vld [vmem:[#allocation11 + $0xb0] sm:$0xff]
        %v7914 = vld [vmem:[#allocation11 + $0xb8] sm:$0xff]
        %v7915 = vld [vmem:[#allocation11 + $0xc0] sm:$0xff]
        %v7916 = vld [vmem:[#allocation11 + $0xc8] sm:$0xff]
        %v7917 = vld [vmem:[#allocation11 + $0xd0] sm:$0xff]
        %v7918 = vld [vmem:[#allocation11 + $0xd8] sm:$0xff]
        %v7919 = vld [vmem:[#allocation11 + $0xe0] sm:$0xff]
        %v7920 = vld [vmem:[#allocation11 + $0xe8] sm:$0xff]
        %v7921 = vld [vmem:[#allocation11 + $0xf0] sm:$0xff]
        %v7922 = vld [vmem:[#allocation11 + $0xf8] sm:$0xff]
        %v7923 = vld [vmem:[#allocation11 + $0x100] sm:$0xff]
        %v7924 = vld [vmem:[#allocation11 + $0x108] sm:$0xff]
        %v7925 = vld [vmem:[#allocation11 + $0x110] sm:$0xff]
        %v7926 = vld [vmem:[#allocation11 + $0x118] sm:$0xff]
        %v7927 = vld [vmem:[#allocation11 + $0x120] sm:$0xff]
        %v7928 = vld [vmem:[#allocation11 + $0x128] sm:$0xff]
        %v7929 = vld [vmem:[#allocation11 + $0x130] sm:$0xff]
        %v7930 = vld [vmem:[#allocation11 + $0x138] sm:$0xff]
        %v7931 = vld [vmem:[#allocation11 + $0x140] sm:$0xff]
        %v7932 = vld [vmem:[#allocation11 + $0x148] sm:$0xff]
        %v7933 = vld [vmem:[#allocation11 + $0x150] sm:$0xff]
        %v7934 = vld [vmem:[#allocation11 + $0x158] sm:$0xff]
        %v7935 = vld [vmem:[#allocation11 + $0x160] sm:$0xff]
        %v7936 = vld [vmem:[#allocation11 + $0x168] sm:$0xff]
        %v7937 = vld [vmem:[#allocation11 + $0x170] sm:$0xff]
        %v7938 = vld [vmem:[#allocation11 + $0x178] sm:$0xff]
        %v7939 = vld [vmem:[#allocation11 + $0x180] sm:$0xff]
        %v7940 = vld [vmem:[#allocation11 + $0x188] sm:$0xff]
        %v7941 = vld [vmem:[#allocation11 + $0x190] sm:$0xff]
        %v7942 = vld [vmem:[#allocation11 + $0x198] sm:$0xff]
        %v7943 = vld [vmem:[#allocation11 + $0x1a0] sm:$0xff]
        %v7944 = vld [vmem:[#allocation11 + $0x1a8] sm:$0xff]
        %v7945 = vld [vmem:[#allocation11 + $0x1b0] sm:$0xff]
        %v7946 = vld [vmem:[#allocation11 + $0x1b8] sm:$0xff]
        %v7947 = vld [vmem:[#allocation11 + $0x1c0] sm:$0xff]
        %v7948 = vld [vmem:[#allocation11 + $0x1c8] sm:$0xff]
        %v7949 = vld [vmem:[#allocation11 + $0x1d0] sm:$0xff]
        %v7950 = vld [vmem:[#allocation11 + $0x1d8] sm:$0xff]
        %v7951 = vld [vmem:[#allocation11 + $0x1e0] sm:$0xff]
        %v7952 = vld [vmem:[#allocation11 + $0x1e8] sm:$0xff]
        %v7953 = vld [vmem:[#allocation11 + $0x1f0] sm:$0xff]
        %v7954 = vld [vmem:[#allocation11 + $0x1f8] sm:$0xff]
        %v7955 = vld [vmem:[#allocation13] sm:$0xf]
        %v7957 = vlaneseq
        %v7958 = vshrl.u32 %v7957, 7
        %v7959 = vsub.s32 0, %v7958
        %v7960 = vrot.slane %v7955, %v7959
        %v7961 = vlaneseq
        %v7962 = vshrl.u32 %v7961, 7
        %v7963 = vsub.s32 1, %v7962
        %v7964 = vrot.slane %v7955, %v7963
        %v7965 = vlaneseq
        %v7966 = vshrl.u32 %v7965, 7
        %v7967 = vsub.s32 2, %v7966
        %v7968 = vrot.slane %v7955, %v7967
        %v7969 = vlaneseq
        %v7970 = vshrl.u32 %v7969, 7
        %v7971 = vsub.s32 3, %v7970
        %v7972 = vrot.slane %v7955, %v7971
        %7977 = vmatprep.subr.mxu0 %v7892
        %7978 = vmatpush1.msra.mxu0 %v7891
        %7979 = vmatprep.subr.mxu0 %v7896
        %7980 = vmatpush1.msra.mxu0 %v7895
        %7981 = vmatprep.subr.mxu0 %v7900
        %7982 = vmatpush1.msra.mxu0 %v7899
        %7983 = vmatprep.subr.mxu0 %v7904
        %7984 = vmatpush1.msra.mxu0 %v7903
        %7985 = vmatprep.subr.mxu0 %v7908
        %7986 = vmatpush1.msra.mxu0 %v7907
        %7987 = vmatprep.subr.mxu0 %v7912
        %7988 = vmatpush1.msra.mxu0 %v7911
        %7989 = vmatprep.subr.mxu0 %v7916
        %7990 = vmatpush1.msra.mxu0 %v7915
        %7991 = vmatprep.subr.mxu0 %v7920
        %7992 = vmatpush1.msra.mxu0 %v7919
        %7993 = vmatprep.subr.mxu0 %v7924
        %7994 = vmatpush1.msra.mxu0 %v7923
        %7995 = vmatprep.subr.mxu0 %v7928
        %7996 = vmatpush1.msra.mxu0 %v7927
        %7997 = vmatprep.subr.mxu0 %v7932
        %7998 = vmatpush1.msra.mxu0 %v7931
        %7999 = vmatprep.subr.mxu0 %v7936
        %8000 = vmatpush1.msra.mxu0 %v7935
        %8001 = vmatprep.subr.mxu0 %v7940
        %8002 = vmatpush1.msra.mxu0 %v7939
        %8003 = vmatprep.subr.mxu0 %v7944
        %8004 = vmatpush1.msra.mxu0 %v7943
        %8005 = vmatprep.subr.mxu0 %v7948
        %8006 = vmatpush1.msra.mxu0 %v7947
        %8007 = vmatprep.subr.mxu0 %v7952
        %8008 = vmatpush1.msra.mxu0 %v7951
        %8009 = vmatprep.subr.mxu0 0.0
        %8010 = vmatpush1.msra.mxu0 0.0
        %8011 = vmatprep.subr.mxu0 0.0
        %8012 = vmatpush1.msra.mxu0 0.0
        %8013 = vmatprep.subr.mxu0 0.0
        %8014 = vmatpush1.msra.mxu0 0.0
        %8015 = vmatprep.subr.mxu0 0.0
        %8016 = vmatpush1.msra.mxu0 0.0
        %8017 = vmatprep.subr.mxu0 0.0
        %8018 = vmatpush1.msra.mxu0 0.0
        %8019 = vmatprep.subr.mxu0 0.0
        %8020 = vmatpush1.msra.mxu0 0.0
        %8021 = vmatprep.subr.mxu0 0.0
        %8022 = vmatpush1.msra.mxu0 0.0
        %8023 = vmatprep.subr.mxu0 0.0
        %8024 = vmatpush1.msra.mxu0 0.0
        %8025 = vmatprep.subr.mxu0 0.0
        %8026 = vmatpush1.msra.mxu0 0.0
        %8027 = vmatprep.subr.mxu0 0.0
        %8028 = vmatpush1.msra.mxu0 0.0
        %8029 = vmatprep.subr.mxu0 0.0
        %8030 = vmatpush1.msra.mxu0 0.0
        %8031 = vmatprep.subr.mxu0 0.0
        %8032 = vmatpush1.msra.mxu0 0.0
        %8033 = vmatprep.subr.mxu0 0.0
        %8034 = vmatpush1.msra.mxu0 0.0
        %8035 = vmatprep.subr.mxu0 0.0
        %8036 = vmatpush1.msra.mxu0 0.0
        %8037 = vmatprep.subr.mxu0 0.0
        %8038 = vmatpush1.msra.mxu0 0.0
        %8039 = vmatprep.subr.mxu0 0.0
        %8040 = vmatpush1.msra.mxu0 0.0
        %8041 = vmatprep.mubr.f32.mxu0 0.0
        %8042 = vmatmul.mubr.f32.gmra.mrb[0].mxu0 %v7887
        %v8043 = vpop.f32.mrb[0].mxu0
        %v8044 = vadd.f32 %v7960, %v8043
        %v8045 = vpop.f32.mrb[0].mxu0
        %v8046 = vadd.f32 %v7964, %v8045
        %8047 = vmatprep.mubr.f32.mxu0 0.0
        %8048 = vmatmul.mubr.f32.gmra.mrb[0].mxu0 %v7888
        %v8049 = vpop.f32.mrb[0].mxu0
        %v8050 = vadd.f32 %v7960, %v8049
        %v8051 = vpop.f32.mrb[0].mxu0
        %v8052 = vadd.f32 %v7964, %v8051
        %8053 = vmatprep.mubr.f32.mxu0 0.0
        %8054 = vmatmul.mubr.f32.gmra.mrb[0].mxu0 %v7889
        %v8055 = vpop.f32.mrb[0].mxu0
        %v8056 = vadd.f32 %v7960, %v8055
        %v8057 = vpop.f32.mrb[0].mxu0
        %v8058 = vadd.f32 %v7964, %v8057
        %8059 = vmatprep.mubr.f32.mxu0 0.0
        %8060 = vmatmul.mubr.f32.gmra.mrb[0].mxu0 %v7890
        %v8061 = vpop.f32.mrb[0].mxu0
        %v8062 = vadd.f32 %v7960, %v8061
        %v8063 = vpop.f32.mrb[0].mxu0
        %v8064 = vadd.f32 %v7964, %v8063
        %8065 = vdwg.mxu0
        %8066 = vmatprep.subr.mxu0 %v7894
        %8067 = vmatpush1.msra.mxu0 %v7893
        %8068 = vmatprep.subr.mxu0 %v7898
        %8069 = vmatpush1.msra.mxu0 %v7897
        %8070 = vmatprep.subr.mxu0 %v7902
        %8071 = vmatpush1.msra.mxu0 %v7901
        %8072 = vmatprep.subr.mxu0 %v7906
        %8073 = vmatpush1.msra.mxu0 %v7905
        %8074 = vmatprep.subr.mxu0 %v7910
        %8075 = vmatpush1.msra.mxu0 %v7909
        %8076 = vmatprep.subr.mxu0 %v7914
        %8077 = vmatpush1.msra.mxu0 %v7913
        %8078 = vmatprep.subr.mxu0 %v7918
        %8079 = vmatpush1.msra.mxu0 %v7917
        %8080 = vmatprep.subr.mxu0 %v7922
        %8081 = vmatpush1.msra.mxu0 %v7921
        %8082 = vmatprep.subr.mxu0 %v7926
        %8083 = vmatpush1.msra.mxu0 %v7925
        %8084 = vmatprep.subr.mxu0 %v7930
        %8085 = vmatpush1.msra.mxu0 %v7929
        %8086 = vmatprep.subr.mxu0 %v7934
        %8087 = vmatpush1.msra.mxu0 %v7933
        %8088 = vmatprep.subr.mxu0 %v7938
        %8089 = vmatpush1.msra.mxu0 %v7937
        %8090 = vmatprep.subr.mxu0 %v7942
        %8091 = vmatpush1.msra.mxu0 %v7941
        %8092 = vmatprep.subr.mxu0 %v7946
        %8093 = vmatpush1.msra.mxu0 %v7945
        %8094 = vmatprep.subr.mxu0 %v7950
        %8095 = vmatpush1.msra.mxu0 %v7949
        %8096 = vmatprep.subr.mxu0 %v7954
        %8097 = vmatpush1.msra.mxu0 %v7953
        %8098 = vmatprep.subr.mxu0 0.0
        %8099 = vmatpush1.msra.mxu0 0.0
        %8100 = vmatprep.subr.mxu0 0.0
        %8101 = vmatpush1.msra.mxu0 0.0
        %8102 = vmatprep.subr.mxu0 0.0
        %8103 = vmatpush1.msra.mxu0 0.0
        %8104 = vmatprep.subr.mxu0 0.0
        %8105 = vmatpush1.msra.mxu0 0.0
        %8106 = vmatprep.subr.mxu0 0.0
        %8107 = vmatpush1.msra.mxu0 0.0
        %8108 = vmatprep.subr.mxu0 0.0
        %8109 = vmatpush1.msra.mxu0 0.0
        %8110 = vmatprep.subr.mxu0 0.0
        %8111 = vmatpush1.msra.mxu0 0.0
        %8112 = vmatprep.subr.mxu0 0.0
        %8113 = vmatpush1.msra.mxu0 0.0
        %8114 = vmatprep.subr.mxu0 0.0
        %8115 = vmatpush1.msra.mxu0 0.0
        %8116 = vmatprep.subr.mxu0 0.0
        %8117 = vmatpush1.msra.mxu0 0.0
        %8118 = vmatprep.subr.mxu0 0.0
        %8119 = vmatpush1.msra.mxu0 0.0
        %8120 = vmatprep.subr.mxu0 0.0
        %8121 = vmatpush1.msra.mxu0 0.0
        %8122 = vmatprep.subr.mxu0 0.0
        %8123 = vmatpush1.msra.mxu0 0.0
        %8124 = vmatprep.subr.mxu0 0.0
        %8125 = vmatpush1.msra.mxu0 0.0
        %8126 = vmatprep.subr.mxu0 0.0
        %8127 = vmatpush1.msra.mxu0 0.0
        %8128 = vmatprep.subr.mxu0 0.0
        %8129 = vmatpush1.msra.mxu0 0.0
        %8130 = vmatprep.mubr.f32.mxu0 0.0
        %8131 = vmatmul.mubr.f32.gmra.mrb[0].mxu0 %v7887
        %v8132 = vpop.f32.mrb[0].mxu0
        %v8133 = vadd.f32 %v7968, %v8132
        %v8134 = vpop.f32.mrb[0].mxu0
        %v8135 = vadd.f32 %v7972, %v8134
        %8136 = vmatprep.mubr.f32.mxu0 0.0
        %8137 = vmatmul.mubr.f32.gmra.mrb[0].mxu0 %v7888
        %v8138 = vpop.f32.mrb[0].mxu0
        %v8139 = vadd.f32 %v7968, %v8138
        %v8140 = vpop.f32.mrb[0].mxu0
        %v8141 = vadd.f32 %v7972, %v8140
        %8142 = vmatprep.mubr.f32.mxu0 0.0
        %8143 = vmatmul.mubr.f32.gmra.mrb[0].mxu0 %v7889
        %v8144 = vpop.f32.mrb[0].mxu0
        %v8145 = vadd.f32 %v7968, %v8144
        %v8146 = vpop.f32.mrb[0].mxu0
        %v8147 = vadd.f32 %v7972, %v8146
        %8148 = vmatprep.mubr.f32.mxu0 0.0
        %8149 = vmatmul.mubr.f32.gmra.mrb[0].mxu0 %v7890
        %v8150 = vpop.f32.mrb[0].mxu0
        %v8151 = vadd.f32 %v7968, %v8150
        %v8152 = vpop.f32.mrb[0].mxu0
        %v8153 = vadd.f32 %v7972, %v8152
        %8154 = vdwg.mxu0
        %v8155 = vmax.f32 %v8044, 0.0
        %v8156 = vmax.f32 %v8046, 0.0
        %v8157 = vmax.f32 %v8133, 0.0
        %v8158 = vmax.f32 %v8135, 0.0
        %v8159 = vmax.f32 %v8050, 0.0
        %v8160 = vmax.f32 %v8052, 0.0
        %v8161 = vmax.f32 %v8139, 0.0
        %v8162 = vmax.f32 %v8141, 0.0
        %v8163 = vmax.f32 %v8056, 0.0
        %v8164 = vmax.f32 %v8058, 0.0
        %v8165 = vmax.f32 %v8145, 0.0
        %v8166 = vmax.f32 %v8147, 0.0
        %v8167 = vmax.f32 %v8062, 0.0
        %v8168 = vmax.f32 %v8064, 0.0
        %v8169 = vmax.f32 %v8151, 0.0
        %v8170 = vmax.f32 %v8153, 0.0
        %v8171 = vld [vmem:[#allocation14] sm:$0xff]
        %v8172 = vld [vmem:[#allocation14 + $0x8] sm:$0xff]
        %v8173 = vld [vmem:[#allocation14 + $0x10] sm:$0xff]
        %v8174 = vld [vmem:[#allocation14 + $0x18] sm:$0xff]
        %v8175 = vld [vmem:[#allocation14 + $0x20] sm:$0xff]
        %v8176 = vld [vmem:[#allocation14 + $0x28] sm:$0xff]
        %v8177 = vld [vmem:[#allocation14 + $0x30] sm:$0xff]
        %v8178 = vld [vmem:[#allocation14 + $0x38] sm:$0xff]
        %v8179 = vld [vmem:[#allocation14 + $0x40] sm:$0xff]
        %v8180 = vld [vmem:[#allocation14 + $0x48] sm:$0xff]
        %v8181 = vld [vmem:[#allocation14 + $0x50] sm:$0xff]
        %v8182 = vld [vmem:[#allocation14 + $0x58] sm:$0xff]
        %v8183 = vld [vmem:[#allocation14 + $0x60] sm:$0xff]
        %v8184 = vld [vmem:[#allocation14 + $0x68] sm:$0xff]
        %v8185 = vld [vmem:[#allocation14 + $0x70] sm:$0xff]
        %v8186 = vld [vmem:[#allocation14 + $0x78] sm:$0xff]
        %v8187 = vld [vmem:[#allocation14 + $0x80] sm:$0xff]
        %v8188 = vld [vmem:[#allocation14 + $0x88] sm:$0xff]
        %v8189 = vld [vmem:[#allocation14 + $0x90] sm:$0xff]
        %v8190 = vld [vmem:[#allocation14 + $0x98] sm:$0xff]
        %v8191 = vld [vmem:[#allocation14 + $0xa0] sm:$0xff]
        %v8192 = vld [vmem:[#allocation14 + $0xa8] sm:$0xff]
        %v8193 = vld [vmem:[#allocation14 + $0xb0] sm:$0xff]
        %v8194 = vld [vmem:[#allocation14 + $0xb8] sm:$0xff]
        %v8195 = vld [vmem:[#allocation14 + $0xc0] sm:$0xff]
        %v8196 = vld [vmem:[#allocation14 + $0xc8] sm:$0xff]
        %v8197 = vld [vmem:[#allocation14 + $0xd0] sm:$0xff]
        %v8198 = vld [vmem:[#allocation14 + $0xd8] sm:$0xff]
        %v8199 = vld [vmem:[#allocation14 + $0xe0] sm:$0xff]
        %v8200 = vld [vmem:[#allocation14 + $0xe8] sm:$0xff]
        %v8201 = vld [vmem:[#allocation14 + $0xf0] sm:$0xff]
        %v8202 = vld [vmem:[#allocation14 + $0xf8] sm:$0xff]
        %v8203 = vld [vmem:[#allocation14 + $0x100] sm:$0xff]
        %v8204 = vld [vmem:[#allocation14 + $0x108] sm:$0xff]
        %v8205 = vld [vmem:[#allocation14 + $0x110] sm:$0xff]
        %v8206 = vld [vmem:[#allocation14 + $0x118] sm:$0xff]
        %v8207 = vld [vmem:[#allocation14 + $0x120] sm:$0xff]
        %v8208 = vld [vmem:[#allocation14 + $0x128] sm:$0xff]
        %v8209 = vld [vmem:[#allocation14 + $0x130] sm:$0xff]
        %v8210 = vld [vmem:[#allocation14 + $0x138] sm:$0xff]
        %v8211 = vld [vmem:[#allocation14 + $0x140] sm:$0xff]
        %v8212 = vld [vmem:[#allocation14 + $0x148] sm:$0xff]
        %v8213 = vld [vmem:[#allocation14 + $0x150] sm:$0xff]
        %v8214 = vld [vmem:[#allocation14 + $0x158] sm:$0xff]
        %v8215 = vld [vmem:[#allocation14 + $0x160] sm:$0xff]
        %v8216 = vld [vmem:[#allocation14 + $0x168] sm:$0xff]
        %v8217 = vld [vmem:[#allocation14 + $0x170] sm:$0xff]
        %v8218 = vld [vmem:[#allocation14 + $0x178] sm:$0xff]
        %v8219 = vld [vmem:[#allocation14 + $0x180] sm:$0xff]
        %v8220 = vld [vmem:[#allocation14 + $0x188] sm:$0xff]
        %v8221 = vld [vmem:[#allocation14 + $0x190] sm:$0xff]
        %v8222 = vld [vmem:[#allocation14 + $0x198] sm:$0xff]
        %v8223 = vld [vmem:[#allocation14 + $0x1a0] sm:$0xff]
        %v8224 = vld [vmem:[#allocation14 + $0x1a8] sm:$0xff]
        %v8225 = vld [vmem:[#allocation14 + $0x1b0] sm:$0xff]
        %v8226 = vld [vmem:[#allocation14 + $0x1b8] sm:$0xff]
        %v8227 = vld [vmem:[#allocation14 + $0x1c0] sm:$0xff]
        %v8228 = vld [vmem:[#allocation14 + $0x1c8] sm:$0xff]
        %v8229 = vld [vmem:[#allocation14 + $0x1d0] sm:$0xff]
        %v8230 = vld [vmem:[#allocation14 + $0x1d8] sm:$0xff]
        %v8231 = vld [vmem:[#allocation14 + $0x1e0] sm:$0xff]
        %v8232 = vld [vmem:[#allocation14 + $0x1e8] sm:$0xff]
        %v8233 = vld [vmem:[#allocation14 + $0x1f0] sm:$0xff]
        %v8234 = vld [vmem:[#allocation14 + $0x1f8] sm:$0xff]
        %v8235 = vld [vmem:[#allocation16] sm:$0x1]
        %v8237 = vlaneseq
        %v8238 = vshrl.u32 %v8237, 7
        %v8239 = vsub.s32 0, %v8238
        %v8240 = vrot.slane %v8235, %v8239
        %8242 = vmatprep.subr.mxu0 0.0
        %8243 = vmatpush1.msra.mxu0 %v8171
        %8244 = vmatprep.subr.mxu0 0.0
        %8245 = vmatpush1.msra.mxu0 %v8172
        %8246 = vmatprep.subr.mxu0 0.0
        %8247 = vmatpush1.msra.mxu0 %v8173
        %8248 = vmatprep.subr.mxu0 0.0
        %8249 = vmatpush1.msra.mxu0 %v8174
        %8250 = vmatprep.subr.mxu0 0.0
        %8251 = vmatpush1.msra.mxu0 %v8175
        %8252 = vmatprep.subr.mxu0 0.0
        %8253 = vmatpush1.msra.mxu0 %v8176
        %8254 = vmatprep.subr.mxu0 0.0
        %8255 = vmatpush1.msra.mxu0 %v8177
        %8256 = vmatprep.subr.mxu0 0.0
        %8257 = vmatpush1.msra.mxu0 %v8178
        %8258 = vmatprep.subr.mxu0 0.0
        %8259 = vmatpush1.msra.mxu0 %v8179
        %8260 = vmatprep.subr.mxu0 0.0
        %8261 = vmatpush1.msra.mxu0 %v8180
        %8262 = vmatprep.subr.mxu0 0.0
        %8263 = vmatpush1.msra.mxu0 %v8181
        %8264 = vmatprep.subr.mxu0 0.0
        %8265 = vmatpush1.msra.mxu0 %v8182
        %8266 = vmatprep.subr.mxu0 0.0
        %8267 = vmatpush1.msra.mxu0 %v8183
        %8268 = vmatprep.subr.mxu0 0.0
        %8269 = vmatpush1.msra.mxu0 %v8184
        %8270 = vmatprep.subr.mxu0 0.0
        %8271 = vmatpush1.msra.mxu0 %v8185
        %8272 = vmatprep.subr.mxu0 0.0
        %8273 = vmatpush1.msra.mxu0 %v8186
        %8274 = vmatprep.subr.mxu0 0.0
        %8275 = vmatpush1.msra.mxu0 %v8187
        %8276 = vmatprep.subr.mxu0 0.0
        %8277 = vmatpush1.msra.mxu0 %v8188
        %8278 = vmatprep.subr.mxu0 0.0
        %8279 = vmatpush1.msra.mxu0 %v8189
        %8280 = vmatprep.subr.mxu0 0.0
        %8281 = vmatpush1.msra.mxu0 %v8190
        %8282 = vmatprep.subr.mxu0 0.0
        %8283 = vmatpush1.msra.mxu0 %v8191
        %8284 = vmatprep.subr.mxu0 0.0
        %8285 = vmatpush1.msra.mxu0 %v8192
        %8286 = vmatprep.subr.mxu0 0.0
        %8287 = vmatpush1.msra.mxu0 %v8193
        %8288 = vmatprep.subr.mxu0 0.0
        %8289 = vmatpush1.msra.mxu0 %v8194
        %8290 = vmatprep.subr.mxu0 0.0
        %8291 = vmatpush1.msra.mxu0 %v8195
        %8292 = vmatprep.subr.mxu0 0.0
        %8293 = vmatpush1.msra.mxu0 %v8196
        %8294 = vmatprep.subr.mxu0 0.0
        %8295 = vmatpush1.msra.mxu0 %v8197
        %8296 = vmatprep.subr.mxu0 0.0
        %8297 = vmatpush1.msra.mxu0 %v8198
        %8298 = vmatprep.subr.mxu0 0.0
        %8299 = vmatpush1.msra.mxu0 %v8199
        %8300 = vmatprep.subr.mxu0 0.0
        %8301 = vmatpush1.msra.mxu0 %v8200
        %8302 = vmatprep.subr.mxu0 0.0
        %8303 = vmatpush1.msra.mxu0 %v8201
        %8304 = vmatprep.subr.mxu0 0.0
        %8305 = vmatpush1.msra.mxu0 %v8202
        %8306 = vmatprep.mubr.f32.mxu0 %v8156
        %8307 = vmatmul.mubr.f32.gmra.mrb[0].mxu0 %v8155
        %v8308 = vpop.f32.mrb[0].mxu0
        %v8309 = vadd.f32 %v8240, %v8308
        %v8310 = vpop.f32.mrb[0].mxu0
        %8311 = vmatprep.mubr.f32.mxu0 %v8160
        %8312 = vmatmul.mubr.f32.gmra.mrb[0].mxu0 %v8159
        %v8313 = vpop.f32.mrb[0].mxu0
        %v8314 = vadd.f32 %v8240, %v8313
        %v8315 = vpop.f32.mrb[0].mxu0
        %8316 = vmatprep.mubr.f32.mxu0 %v8164
        %8317 = vmatmul.mubr.f32.gmra.mrb[0].mxu0 %v8163
        %v8318 = vpop.f32.mrb[0].mxu0
        %v8319 = vadd.f32 %v8240, %v8318
        %v8320 = vpop.f32.mrb[0].mxu0
        %8321 = vmatprep.mubr.f32.mxu0 %v8168
        %8322 = vmatmul.mubr.f32.gmra.mrb[0].mxu0 %v8167
        %v8323 = vpop.f32.mrb[0].mxu0
        %v8324 = vadd.f32 %v8240, %v8323
        %v8325 = vpop.f32.mrb[0].mxu0
        %8326 = vdwg.mxu0
        %8327 = vmatprep.subr.mxu0 0.0
        %8328 = vmatpush1.msra.mxu0 %v8203
        %8329 = vmatprep.subr.mxu0 0.0
        %8330 = vmatpush1.msra.mxu0 %v8204
        %8331 = vmatprep.subr.mxu0 0.0
        %8332 = vmatpush1.msra.mxu0 %v8205
        %8333 = vmatprep.subr.mxu0 0.0
        %8334 = vmatpush1.msra.mxu0 %v8206
        %8335 = vmatprep.subr.mxu0 0.0
        %8336 = vmatpush1.msra.mxu0 %v8207
        %8337 = vmatprep.subr.mxu0 0.0
        %8338 = vmatpush1.msra.mxu0 %v8208
        %8339 = vmatprep.subr.mxu0 0.0
        %8340 = vmatpush1.msra.mxu0 %v8209
        %8341 = vmatprep.subr.mxu0 0.0
        %8342 = vmatpush1.msra.mxu0 %v8210
        %8343 = vmatprep.subr.mxu0 0.0
        %8344 = vmatpush1.msra.mxu0 %v8211
        %8345 = vmatprep.subr.mxu0 0.0
        %8346 = vmatpush1.msra.mxu0 %v8212
        %8347 = vmatprep.subr.mxu0 0.0
        %8348 = vmatpush1.msra.mxu0 %v8213
        %8349 = vmatprep.subr.mxu0 0.0
        %8350 = vmatpush1.msra.mxu0 %v8214
        %8351 = vmatprep.subr.mxu0 0.0
        %8352 = vmatpush1.msra.mxu0 %v8215
        %8353 = vmatprep.subr.mxu0 0.0
        %8354 = vmatpush1.msra.mxu0 %v8216
        %8355 = vmatprep.subr.mxu0 0.0
        %8356 = vmatpush1.msra.mxu0 %v8217
        %8357 = vmatprep.subr.mxu0 0.0
        %8358 = vmatpush1.msra.mxu0 %v8218
        %8359 = vmatprep.subr.mxu0 0.0
        %8360 = vmatpush1.msra.mxu0 %v8219
        %8361 = vmatprep.subr.mxu0 0.0
        %8362 = vmatpush1.msra.mxu0 %v8220
        %8363 = vmatprep.subr.mxu0 0.0
        %8364 = vmatpush1.msra.mxu0 %v8221
        %8365 = vmatprep.subr.mxu0 0.0
        %8366 = vmatpush1.msra.mxu0 %v8222
        %8367 = vmatprep.subr.mxu0 0.0
        %8368 = vmatpush1.msra.mxu0 %v8223
        %8369 = vmatprep.subr.mxu0 0.0
        %8370 = vmatpush1.msra.mxu0 %v8224
        %8371 = vmatprep.subr.mxu0 0.0
        %8372 = vmatpush1.msra.mxu0 %v8225
        %8373 = vmatprep.subr.mxu0 0.0
        %8374 = vmatpush1.msra.mxu0 %v8226
        %8375 = vmatprep.subr.mxu0 0.0
        %8376 = vmatpush1.msra.mxu0 %v8227
        %8377 = vmatprep.subr.mxu0 0.0
        %8378 = vmatpush1.msra.mxu0 %v8228
        %8379 = vmatprep.subr.mxu0 0.0
        %8380 = vmatpush1.msra.mxu0 %v8229
        %8381 = vmatprep.subr.mxu0 0.0
        %8382 = vmatpush1.msra.mxu0 %v8230
        %8383 = vmatprep.subr.mxu0 0.0
        %8384 = vmatpush1.msra.mxu0 %v8231
        %8385 = vmatprep.subr.mxu0 0.0
        %8386 = vmatpush1.msra.mxu0 %v8232
        %8387 = vmatprep.subr.mxu0 0.0
        %8388 = vmatpush1.msra.mxu0 %v8233
        %8389 = vmatprep.subr.mxu0 0.0
        %8390 = vmatpush1.msra.mxu0 %v8234
        %8391 = vmatprep.mubr.f32.mxu0 %v8158
        %8392 = vmatmul.mubr.f32.gmra.mrb[0].mxu0 %v8157
        %v8393 = vpop.f32.mrb[0].mxu0
        %v8394 = vadd.f32 %v8309, %v8393
        %v8395 = vpop.f32.mrb[0].mxu0
        %8396 = vmatprep.mubr.f32.mxu0 %v8162
        %8397 = vmatmul.mubr.f32.gmra.mrb[0].mxu0 %v8161
        %v8398 = vpop.f32.mrb[0].mxu0
        %v8399 = vadd.f32 %v8314, %v8398
        %v8400 = vpop.f32.mrb[0].mxu0
        %8401 = vmatprep.mubr.f32.mxu0 %v8166
        %8402 = vmatmul.mubr.f32.gmra.mrb[0].mxu0 %v8165
        %v8403 = vpop.f32.mrb[0].mxu0
        %v8404 = vadd.f32 %v8319, %v8403
        %v8405 = vpop.f32.mrb[0].mxu0
        %8406 = vmatprep.mubr.f32.mxu0 %v8170
        %8407 = vmatmul.mubr.f32.gmra.mrb[0].mxu0 %v8169
        %v8408 = vpop.f32.mrb[0].mxu0
        %v8409 = vadd.f32 %v8324, %v8408
        %v8410 = vpop.f32.mrb[0].mxu0
        %8411 = vdwg.mxu0
        %v8412 = vmax.f32 %v8394, 0.0
        %v8413 = vmax.f32 %v8399, 0.0
        %v8414 = vmax.f32 %v8404, 0.0
        %v8415 = vmax.f32 %v8409, 0.0
        %v8416 = vadd.f32 %v7821, %v8412
        %v8417 = vadd.f32 %v7822, %v8413
        %v8418 = vadd.f32 %v7823, %v8414
        %v8419 = vadd.f32 %v7824, %v8415
        %8420 = vst [vmem:[%s618] sm:$0xff] %v8416
        %8421 = vst [vmem:[%s618 + $0x8] sm:$0xff] %v8417
        %8422 = vst [vmem:[%s618 + $0x10] sm:$0xff] %v8418
        %8423 = vst [vmem:[%s618 + $0x18] sm:$0xff] %v8419
        %s8424 = sand.u32 %s322, 1
        %s8425 = scalar_lea.sflag [#allocation4], %s8424
        %s8426 = sand.u32 %s322, 1
        %s8427 = smul.addr %s8426, 32
        %s8428 = scalar_lea.vmem [#allocation23], %s8427
        // Predicated region
        $region125: #{tpu_custom_call.1} parent=71 // pred_check
          %p8429 = pneg %p332
        $region126: #{tpu_custom_call.1} parent=71 // pred_check_branch
          %8431 = sbr.rel (%p8429) target = $region128
        $region127: #{tpu_custom_call.1} parent=71 // pred_region
          %s8432 = smul.u32 4, %s36
          %s8434 = ssub.s32 512, 512
          %8435 = vsyncadd %s8425, %s8434
          %s8436 = smul.addr %s8432, 128
          %s8437 = scalar_lea.hbm %s13, %s8436
          %s8438 = sshll.u32 %s8428, 4
          %s8439 = int_to_ptr.vmem [resolvable:$true] %s8438
          %8444 = dma.vmem_to_hbm [thread:$0]  %s8439, 512, %s8437, %s8425, 128, 128, 8
        $region128: #{tpu_custom_call.1} parent=71 // pred_fallthru
          _
      $region72: #{tpu_custom_call.1} parent=5 // pred_fallthru
        _
      %p8445 = scmp.le.s32.totalorder 2, %s31
      // Predicated region
      $region129: #{tpu_custom_call.1} parent=5 // pred_check
        %p8446 = pneg %p8445
      $region130: #{tpu_custom_call.1} parent=5 // pred_check_branch
        %8448 = sbr.rel (%p8446) target = $region132
      $region131: #{tpu_custom_call.1} parent=5 // pred_region
        %s8449 = ssub.s32 %s31, 2
        // Predicated region
        $region133: #{tpu_custom_call.1} parent=131 // pred_check
          %p8450 = pneg %p338
        $region134: #{tpu_custom_call.1} parent=131 // pred_check_branch
          %8452 = sbr.rel (%p8450) target = $region136
        $region135: #{tpu_custom_call.1} parent=131 // pred_region
          %s8453 = sand.u32 %s323, 1
          %s8454 = scalar_lea.sflag [#allocation4], %s8453
          %s8455 = sand.u32 %s323, 1
          %s8456 = smul.addr %s8455, 32
          %s8457 = scalar_lea.vmem [#allocation23], %s8456
          %8458 = dma.done %s8454, 512
        $region136: #{tpu_custom_call.1} parent=131 // pred_fallthru
          _
      $region132: #{tpu_custom_call.1} parent=5 // pred_fallthru
        _
    $region6: #{tpu_custom_call.1} parent=1 // loop_footer
      %s35 = sadd.s32 1, %s31
    $region7: #{tpu_custom_call.1} parent=1 // loop_footer_branch
      %30 = sbr.rel target = $region3
    $region8: #{tpu_custom_call.1} parent=1 // loop_exit
      _
    %8459 = vsyncpa [#allocation3], 1
    %s8460 = scalar_lea.sflag [#allocation3], 1
    %8461 = vsyncpa %s8460, 1
    %8462 = vsyncpa [#allocation6], 1
    %8463 = vsyncpa [#allocation9], 1
    %8464 = vsyncpa [#allocation12], 1
    %8465 = vsyncpa [#allocation15], 1
    %8466 = vsyncpa [#allocation18], 1
    %8467 = vsyncpa [#allocation21], 1
    %8468 = vsyncpa [#allocation4], 1
    %s8469 = scalar_lea.sflag [#allocation4], 1
    %8470 = vsyncpa %s8469, 1

</llo_original>
